<compile_context>
chip_gen: v6e
topology: v6e:2x2x1
jax: 0.10.0
libtpu: 0.0.40
codegen_flags: <defaults>
</compile_context>

<pallas_src>
import jax
import jax.numpy as jnp
from jax.experimental import pallas as pl

IMAGE_SIZE   = 16
PATCH_SIZE   = 4
NUM_CHANNELS = 3
HIDDEN       = 32
NUM_HEADS    = 4
HEAD_DIM     = HIDDEN // NUM_HEADS
INTERMEDIATE = 64
NUM_LAYERS   = 2
NUM_PATCHES  = (IMAGE_SIZE // PATCH_SIZE) ** 2
SEQ          = NUM_PATCHES + 1                      # +1 CLS token
PATCH_DIM    = NUM_CHANNELS * PATCH_SIZE * PATCH_SIZE
LN_EPS       = 1e-12                                # HF ViT layer_norm_eps
NUM_ACTIONS  = 4                                    # num_labels; unused by forward


# ----------------------------- kernel helpers ------------------------------
def _layernorm(x, w, b):
    mean = jnp.mean(x, axis=-1, keepdims=True)
    var = jnp.mean(jnp.square(x - mean), axis=-1, keepdims=True)
    return (x - mean) * jax.lax.rsqrt(var + LN_EPS) * w + b


# ------------------------------ fused kernel --------------------------------
def _make_fused_kernel(batch):
    """Whole ViT forward in one kernel.  Activations are (batch*SEQ, HIDDEN)
    and stay in VMEM; the only HBM write is the final (batch, HIDDEN) result."""

    def kernel(patches_ref, cls_ref, pos_ref, pw_ref, pb_ref,
               ln1w_ref, ln1b_ref, wqkv_ref, bqkv_ref, wao_ref, bao_ref,
               ln2w_ref, ln2b_ref, wi_ref, bi_ref, wmo_ref, bmo_ref,
               flnw_ref, flnb_ref, out_ref):
        # ---- patch embedding for every token row at once --------------------
        # patches rows are laid out (b*SEQ + s); CLS rows (s == 0) are zeros, so
        # a single (B*S, P) @ (P, H) matmul embeds all patch tokens.
        emb = jnp.dot(patches_ref[...], pw_ref[...],
                      preferred_element_type=jnp.float32)            # (B*S, H)
        # per-token bias: CLS row -> cls + pos[0]; patch row s -> patch_b + pos[s]
        tok_bias = jnp.concatenate(
            [cls_ref[...] + pos_ref[0:1, :],
             pb_ref[...] + pos_ref[1:SEQ, :]], axis=0)                # (S, H)
        x = emb + jnp.concatenate([tok_bias] * batch, axis=0)         # (B*S, H)

        scale = 1.0 / float(HEAD_DIM) ** 0.5
        for l in range(NUM_LAYERS):                                   # static unroll
            # ---- attention block (pre-LN) -----------------------------------
            ln1 = _layernorm(x, ln1w_ref[l], ln1b_ref[l])
            # fused Q|K|V projection: one MXU push over all batch*SEQ rows
            qkv = jnp.dot(ln1, wqkv_ref[l],
                          preferred_element_type=jnp.float32) + bqkv_ref[l]
            q = qkv[:, 0:HIDDEN]
            k = qkv[:, HIDDEN:2 * HIDDEN]
            v = qkv[:, 2 * HIDDEN:3 * HIDDEN]
            wo = wao_ref[l]                                           # (H, H)

            attn_rows = []
            for b in range(batch):                                    # static unroll
                r0 = b * SEQ
                qb = q[r0:r0 + SEQ, :]
                kbT = k[r0:r0 + SEQ, :].T          # one XLU transpose per batch
                vb = v[r0:r0 + SEQ, :]
                ctx_proj = jnp.zeros((SEQ, HIDDEN), jnp.float32)
                for h in range(NUM_HEADS):                            # static unroll
                    sl = slice(h * HEAD_DIM, (h + 1) * HEAD_DIM)
                    scores = jnp.dot(qb[:, sl], kbT[sl, :],
                                     preferred_element_type=jnp.float32) * scale
                    # manual softmax: divide moved to EUP approx reciprocal
                    m = jnp.max(scores, axis=-1, keepdims=True)
                    e = jnp.exp(scores - m)
                    p = e * pl.reciprocal(jnp.sum(e, axis=-1, keepdims=True),
                                          approx=True)
                    ctx_h = jnp.dot(p, vb[:, sl],
                                    preferred_element_type=jnp.float32)   # (S, HD)
                    # fold the head concat into the output projection
                    ctx_proj = ctx_proj + jnp.dot(
                        ctx_h, wo[sl, :], preferred_element_type=jnp.float32)
                attn_rows.append(ctx_proj)
            attn = jnp.concatenate(attn_rows, axis=0) + bao_ref[l]
            h1 = x + attn                                             # residual 1

            # ---- MLP block ---------------------------------------------------
            ln2 = _layernorm(h1, ln2w_ref[l], ln2b_ref[l])
            # TODO(synk): HF ViT uses exact (erf) GELU; tanh-approximate GELU here.
            inter = jax.nn.gelu(
                jnp.dot(ln2, wi_ref[l],
                        preferred_element_type=jnp.float32) + bi_ref[l],
                approximate=True)
            mlp = jnp.dot(inter, wmo_ref[l],
                          preferred_element_type=jnp.float32) + bmo_ref[l]
            x = h1 + mlp                                              # residual 2

        # ---- final encoder LN + mean over tokens (dim=1, incl. CLS) ---------
        ln_f = _layernorm(x, flnw_ref[...], flnb_ref[...])
        means = [jnp.mean(ln_f[b * SEQ:(b + 1) * SEQ, :], axis=0, keepdims=True)
                 for b in range(batch)]
        out_ref[...] = jnp.concatenate(means, axis=0)                 # (B, H)

    return kernel


def _fused_forward(patches, params):
    batch = patches.shape[0] // SEQ
    kernel = _make_fused_kernel(batch)
    # No grid: single invocation, every operand resident as a full VMEM block.
    return pl.pallas_call(
        kernel,
        out_shape=jax.ShapeDtypeStruct((batch, HIDDEN), jnp.float32),
    )(patches,
      params["cls"], params["pos"], params["patch_w"], params["patch_b"],
      params["ln1_w"], params["ln1_b"], params["w_qkv"], params["b_qkv"],
      params["w_attn_out"], params["b_attn_out"],
      params["ln2_w"], params["ln2_b"],
      params["w_inter"], params["b_inter"],
      params["w_mlp_out"], params["b_mlp_out"],
      params["final_ln_w"], params["final_ln_b"])


# ------------------------------ forward --------------------------------------
@jax.jit
def transformer_dqn_forward(x, params):
    B = x.shape[0]
    nh = nw = IMAGE_SIZE // PATCH_SIZE
    # im2col patch extraction (single small XLA transpose on a ~6 KB tensor),
    # plus a zero row at each CLS slot so the kernel embeds every token row
    # with one matmul and the patch-embed output never leaves VMEM.
    # TODO(synk): the 6-D transpose itself stays outside the kernel (in-kernel
    # im2col at these tiny shapes is lowering risk with no measurable gain).
    p = x.reshape(B, NUM_CHANNELS, nh, PATCH_SIZE, nw, PATCH_SIZE)
    p = p.transpose(0, 2, 4, 1, 3, 5).reshape(B, NUM_PATCHES, PATCH_DIM)
    p = jnp.concatenate([jnp.zeros((B, 1, PATCH_DIM), p.dtype), p], axis=1)
    return _fused_forward(p.reshape(B * SEQ, PATCH_DIM), params)


# ------------------------------ parameters ----------------------------------
def init_params(key):
    keys = iter(jax.random.split(key, 8))

    def w(shape):
        return jax.random.normal(next(keys), shape, jnp.float32) * 0.02

    zeros = lambda s: jnp.zeros(s, jnp.float32)
    ones = lambda s: jnp.ones(s, jnp.float32)
    L = NUM_LAYERS

    return {
        "patch_w": w((PATCH_DIM, HIDDEN)),
        "patch_b": zeros((1, HIDDEN)),
        "cls": w((1, HIDDEN)),
        "pos": w((SEQ, HIDDEN)),
        "final_ln_w": ones((1, HIDDEN)),
        "final_ln_b": zeros((1, HIDDEN)),
        # per-layer weights stacked on a leading layer axis (indexed statically
        # inside the kernel; all layers live in VMEM for the whole forward)
        "ln1_w": ones((L, 1, HIDDEN)), "ln1_b": zeros((L, 1, HIDDEN)),
        "w_qkv": w((L, HIDDEN, 3 * HIDDEN)),          # fused query|key|value
        "b_qkv": zeros((L, 1, 3 * HIDDEN)),
        "w_attn_out": w((L, HIDDEN, HIDDEN)),
        "b_attn_out": zeros((L, 1, HIDDEN)),
        "ln2_w": ones((L, 1, HIDDEN)), "ln2_b": zeros((L, 1, HIDDEN)),
        "w_inter": w((L, HIDDEN, INTERMEDIATE)),
        "b_inter": zeros((L, 1, INTERMEDIATE)),
        "w_mlp_out": w((L, INTERMEDIATE, HIDDEN)),
        "b_mlp_out": zeros((L, 1, HIDDEN)),
    }


# --------------------------- pure-JAX reference ------------------------------
def reference_forward(x, params):
    B = x.shape[0]
    nh = nw = IMAGE_SIZE // PATCH_SIZE
    p = x.reshape(B, NUM_CHANNELS, nh, PATCH_SIZE, nw, PATCH_SIZE)
    p = p.transpose(0, 2, 4, 1, 3, 5).reshape(B, NUM_PATCHES, PATCH_DIM)
    emb = p @ params["patch_w"] + params["patch_b"]
    cls = jnp.broadcast_to(params["cls"][None], (B, 1, HIDDEN))
    h = jnp.concatenate([cls, emb], axis=1) + params["pos"][None]

    def ln(t, w, b):
        m = t.mean(-1, keepdims=True)
        v = ((t - m) ** 2).mean(-1, keepdims=True)
        return (t - m) * jax.lax.rsqrt(v + LN_EPS) * w + b

    for l in range(NUM_LAYERS):
        x1 = ln(h, params["ln1_w"][l], params["ln1_b"][l])
        qkv = x1 @ params["w_qkv"][l] + params["b_qkv"][l]
        q, k, v = jnp.split(qkv, 3, axis=-1)
        sh = lambda t: t.reshape(B, SEQ, NUM_HEADS, HEAD_DIM).transpose(0, 2, 1, 3)
        qh, kh, vh = sh(q), sh(k), sh(v)
        s = jnp.einsum('bhqd,bhkd->bhqk', qh, kh) / (HEAD_DIM ** 0.5)
        pr = jax.nn.softmax(s, axis=-1)
        ctx = jnp.einsum('bhqk,bhkd->bhqd', pr, vh)
        ctx = ctx.transpose(0, 2, 1, 3).reshape(B, SEQ, HIDDEN)
        h = h + ctx @ params["w_attn_out"][l] + params["b_attn_out"][l]
        x2 = ln(h, params["ln2_w"][l], params["ln2_b"][l])
        inter = jax.nn.gelu(x2 @ params["w_inter"][l] + params["b_inter"][l],
                            approximate=True)
        h = h + inter @ params["w_mlp_out"][l] + params["b_mlp_out"][l]
    h = ln(h, params["final_ln_w"], params["final_ln_b"])
    return h.mean(axis=1)


if __name__ == "__main__":
    key = jax.random.PRNGKey(0)
    pk, xk = jax.random.split(key)
    params = init_params(pk)
    x = jax.random.normal(xk, (2, NUM_CHANNELS, IMAGE_SIZE, IMAGE_SIZE), jnp.float32)

    out = transformer_dqn_forward(x, params)
    jax.block_until_ready(out)
    assert out.shape == (2, HIDDEN) and out.dtype == jnp.float32

    ref = reference_forward(x, params)
    assert jnp.allclose(out, ref, atol=2e-3, rtol=2e-2), \
        float(jnp.max(jnp.abs(out - ref)))
    print("KERNEL_OK")
</pallas_src>

<mosaic_0001>
module attributes {stable_mosaic.version = 11 : i64} {
  func.func @kernel(%arg0: memref<34x48xf32, #tpu.memory_space<vmem>>, %arg1: memref<1x32xf32, #tpu.memory_space<vmem>>, %arg2: memref<17x32xf32, #tpu.memory_space<vmem>>, %arg3: memref<48x32xf32, #tpu.memory_space<vmem>>, %arg4: memref<1x32xf32, #tpu.memory_space<vmem>>, %arg5: memref<2x1x32xf32, #tpu.memory_space<vmem>>, %arg6: memref<2x1x32xf32, #tpu.memory_space<vmem>>, %arg7: memref<2x32x96xf32, #tpu.memory_space<vmem>>, %arg8: memref<2x1x96xf32, #tpu.memory_space<vmem>>, %arg9: memref<2x32x32xf32, #tpu.memory_space<vmem>>, %arg10: memref<2x1x32xf32, #tpu.memory_space<vmem>>, %arg11: memref<2x1x32xf32, #tpu.memory_space<vmem>>, %arg12: memref<2x1x32xf32, #tpu.memory_space<vmem>>, %arg13: memref<2x32x64xf32, #tpu.memory_space<vmem>>, %arg14: memref<2x1x64xf32, #tpu.memory_space<vmem>>, %arg15: memref<2x64x32xf32, #tpu.memory_space<vmem>>, %arg16: memref<2x1x32xf32, #tpu.memory_space<vmem>>, %arg17: memref<1x32xf32, #tpu.memory_space<vmem>>, %arg18: memref<1x32xf32, #tpu.memory_space<vmem>>, %arg19: memref<2x32xf32, #tpu.memory_space<vmem>>) attributes {dimension_semantics = [], scalar_prefetch = 0 : i64, scratch_operands = 0 : i64, tpu.core_type = #tpu.core_type<tc>} {
    %c0 = arith.constant 0 : index
    %c0_0 = arith.constant 0 : index
    %0 = vector.load %arg0[%c0, %c0_0] : memref<34x48xf32, #tpu.memory_space<vmem>>, vector<34x48xf32>
    %c0_1 = arith.constant 0 : index
    %c0_2 = arith.constant 0 : index
    %1 = vector.load %arg3[%c0_1, %c0_2] : memref<48x32xf32, #tpu.memory_space<vmem>>, vector<48x32xf32>
    %cst = arith.constant dense<0.000000e+00> : vector<34x32xf32>
    %2 = tpu.matmul %0, %1, %cst {dimension_numbers = #tpu.dot_dimension_numbers<[1], [0], [0], [1], [0, 0, 1, 1], [], []>} : vector<34x48xf32>, vector<48x32xf32>, vector<34x32xf32> -> vector<34x32xf32>
    %c0_3 = arith.constant 0 : index
    %c0_4 = arith.constant 0 : index
    %3 = vector.load %arg1[%c0_3, %c0_4] : memref<1x32xf32, #tpu.memory_space<vmem>>, vector<1x32xf32>
    %c0_5 = arith.constant 0 : index
    %c0_6 = arith.constant 0 : index
    %4 = vector.load %arg2[%c0_5, %c0_6] : memref<17x32xf32, #tpu.memory_space<vmem>>, vector<1x32xf32>
    %5 = arith.addf %3, %4 : vector<1x32xf32>
    %c0_7 = arith.constant 0 : index
    %c0_8 = arith.constant 0 : index
    %6 = vector.load %arg4[%c0_7, %c0_8] : memref<1x32xf32, #tpu.memory_space<vmem>>, vector<1x32xf32>
    %c1 = arith.constant 1 : index
    %c0_9 = arith.constant 0 : index
    %7 = vector.load %arg2[%c1, %c0_9] : memref<17x32xf32, #tpu.memory_space<vmem>>, vector<16x32xf32>
    %8 = vector.broadcast %6 : vector<1x32xf32> to vector<16x32xf32>
    %9 = arith.addf %8, %7 : vector<16x32xf32>
    %10 = tpu.concatenate %5, %9 in 0 : vector<1x32xf32>, vector<16x32xf32> -> vector<17x32xf32>
    %11 = tpu.concatenate %10, %10 in 0 : vector<17x32xf32>, vector<17x32xf32> -> vector<34x32xf32>
    %12 = arith.addf %2, %11 : vector<34x32xf32>
    %c0_10 = arith.constant 0 : index
    %c0_11 = arith.constant 0 : index
    %c0_12 = arith.constant 0 : index
    %13 = vector.load %arg5[%c0_10, %c0_11, %c0_12] : memref<2x1x32xf32, #tpu.memory_space<vmem>>, vector<1x1x32xf32>
    %14 = vector.shape_cast %13 : vector<1x1x32xf32> to vector<1x32xf32>
    %c0_13 = arith.constant 0 : index
    %c0_14 = arith.constant 0 : index
    %c0_15 = arith.constant 0 : index
    %15 = vector.load %arg6[%c0_13, %c0_14, %c0_15] : memref<2x1x32xf32, #tpu.memory_space<vmem>>, vector<1x1x32xf32>
    %16 = vector.shape_cast %15 : vector<1x1x32xf32> to vector<1x32xf32>
    %cst_16 = arith.constant dense<0.000000e+00> : vector<34xf32>
    %17 = vector.multi_reduction <add>, %12, %cst_16 [1] : vector<34x32xf32> to vector<34xf32>
    %18 = vector.shape_cast %17 : vector<34xf32> to vector<34x1xf32>
    %cst_17 = arith.constant 3.200000e+01 : f32
    %19 = vector.broadcast %cst_17 : f32 to vector<34x1xf32>
    %20 = arith.divf %18, %19 : vector<34x1xf32>
    %21 = vector.broadcast %20 : vector<34x1xf32> to vector<34x32xf32>
    %22 = arith.subf %12, %21 : vector<34x32xf32>
    %23 = arith.mulf %22, %22 : vector<34x32xf32>
    %cst_18 = arith.constant dense<0.000000e+00> : vector<34xf32>
    %24 = vector.multi_reduction <add>, %23, %cst_18 [1] : vector<34x32xf32> to vector<34xf32>
    %25 = vector.shape_cast %24 : vector<34xf32> to vector<34x1xf32>
    %cst_19 = arith.constant 3.200000e+01 : f32
    %26 = vector.broadcast %cst_19 : f32 to vector<34x1xf32>
    %27 = arith.divf %25, %26 : vector<34x1xf32>
    %28 = vector.broadcast %20 : vector<34x1xf32> to vector<34x32xf32>
    %29 = arith.subf %12, %28 : vector<34x32xf32>
    %cst_20 = arith.constant 9.99999996E-13 : f32
    %30 = vector.broadcast %cst_20 : f32 to vector<34x1xf32>
    %31 = arith.addf %27, %30 : vector<34x1xf32>
    %32 = math.rsqrt %31 : vector<34x1xf32>
    %33 = vector.broadcast %32 : vector<34x1xf32> to vector<34x32xf32>
    %34 = arith.mulf %29, %33 : vector<34x32xf32>
    %35 = vector.broadcast %14 : vector<1x32xf32> to vector<34x32xf32>
    %36 = arith.mulf %34, %35 : vector<34x32xf32>
    %37 = vector.broadcast %16 : vector<1x32xf32> to vector<34x32xf32>
    %38 = arith.addf %36, %37 : vector<34x32xf32>
    %c0_21 = arith.constant 0 : index
    %c0_22 = arith.constant 0 : index
    %c0_23 = arith.constant 0 : index
    %39 = vector.load %arg7[%c0_21, %c0_22, %c0_23] : memref<2x32x96xf32, #tpu.memory_space<vmem>>, vector<1x32x96xf32>
    %40 = vector.shape_cast %39 : vector<1x32x96xf32> to vector<32x96xf32>
    %cst_24 = arith.constant dense<0.000000e+00> : vector<34x96xf32>
    %41 = tpu.matmul %38, %40, %cst_24 {dimension_numbers = #tpu.dot_dimension_numbers<[1], [0], [0], [1], [0, 0, 1, 1], [], []>} : vector<34x32xf32>, vector<32x96xf32>, vector<34x96xf32> -> vector<34x96xf32>
    %c0_25 = arith.constant 0 : index
    %c0_26 = arith.constant 0 : index
    %c0_27 = arith.constant 0 : index
    %42 = vector.load %arg8[%c0_25, %c0_26, %c0_27] : memref<2x1x96xf32, #tpu.memory_space<vmem>>, vector<1x1x96xf32>
    %43 = vector.shape_cast %42 : vector<1x1x96xf32> to vector<1x96xf32>
    %44 = vector.broadcast %43 : vector<1x96xf32> to vector<34x96xf32>
    %45 = arith.addf %41, %44 : vector<34x96xf32>
    %46 = vector.extract_strided_slice %45 {offsets = [0, 0], sizes = [34, 32], strides = [1, 1]} : vector<34x96xf32> to vector<34x32xf32>
    %47 = vector.extract_strided_slice %45 {offsets = [0, 32], sizes = [34, 32], strides = [1, 1]} : vector<34x96xf32> to vector<34x32xf32>
    %48 = vector.extract_strided_slice %45 {offsets = [0, 64], sizes = [34, 32], strides = [1, 1]} : vector<34x96xf32> to vector<34x32xf32>
    %c0_28 = arith.constant 0 : index
    %c0_29 = arith.constant 0 : index
    %c0_30 = arith.constant 0 : index
    %49 = vector.load %arg9[%c0_28, %c0_29, %c0_30] : memref<2x32x32xf32, #tpu.memory_space<vmem>>, vector<1x32x32xf32>
    %50 = vector.shape_cast %49 : vector<1x32x32xf32> to vector<32x32xf32>
    %51 = vector.extract_strided_slice %46 {offsets = [0, 0], sizes = [17, 32], strides = [1, 1]} : vector<34x32xf32> to vector<17x32xf32>
    %52 = vector.extract_strided_slice %47 {offsets = [0, 0], sizes = [17, 32], strides = [1, 1]} : vector<34x32xf32> to vector<17x32xf32>
    %53 = tpu.transpose %52, [1, 0] : vector<17x32xf32> -> vector<32x17xf32>
    %54 = vector.extract_strided_slice %48 {offsets = [0, 0], sizes = [17, 32], strides = [1, 1]} : vector<34x32xf32> to vector<17x32xf32>
    %cst_31 = arith.constant 0.000000e+00 : f32
    %55 = vector.broadcast %cst_31 : f32 to vector<17x32xf32>
    %56 = vector.extract_strided_slice %51 {offsets = [0, 0], sizes = [17, 8], strides = [1, 1]} : vector<17x32xf32> to vector<17x8xf32>
    %57 = vector.extract_strided_slice %53 {offsets = [0, 0], sizes = [8, 17], strides = [1, 1]} : vector<32x17xf32> to vector<8x17xf32>
    %cst_32 = arith.constant dense<0.000000e+00> : vector<17x17xf32>
    %58 = tpu.matmul %56, %57, %cst_32 {dimension_numbers = #tpu.dot_dimension_numbers<[1], [0], [0], [1], [0, 0, 1, 1], [], []>} : vector<17x8xf32>, vector<8x17xf32>, vector<17x17xf32> -> vector<17x17xf32>
    %cst_33 = arith.constant 0.353553385 : f32
    %59 = vector.broadcast %cst_33 : f32 to vector<17x17xf32>
    %60 = arith.mulf %58, %59 : vector<17x17xf32>
    %cst_34 = arith.constant dense<0xFF800000> : vector<17xf32>
    %61 = vector.multi_reduction <maximumf>, %60, %cst_34 [1] : vector<17x17xf32> to vector<17xf32>
    %62 = vector.shape_cast %61 : vector<17xf32> to vector<17x1xf32>
    %63 = vector.broadcast %62 : vector<17x1xf32> to vector<17x17xf32>
    %64 = arith.subf %60, %63 : vector<17x17xf32>
    %65 = math.exp %64 : vector<17x17xf32>
    %cst_35 = arith.constant dense<0.000000e+00> : vector<17xf32>
    %66 = vector.multi_reduction <add>, %65, %cst_35 [1] : vector<17x17xf32> to vector<17xf32>
    %67 = vector.shape_cast %66 : vector<17xf32> to vector<17x1xf32>
    %68 = tpu.reciprocal %67 {approx = true} : vector<17x1xf32> -> vector<17x1xf32>
    %69 = vector.broadcast %68 : vector<17x1xf32> to vector<17x17xf32>
    %70 = arith.mulf %65, %69 : vector<17x17xf32>
    %71 = vector.extract_strided_slice %54 {offsets = [0, 0], sizes = [17, 8], strides = [1, 1]} : vector<17x32xf32> to vector<17x8xf32>
    %cst_36 = arith.constant dense<0.000000e+00> : vector<17x8xf32>
    %72 = tpu.matmul %70, %71, %cst_36 {dimension_numbers = #tpu.dot_dimension_numbers<[1], [0], [0], [1], [0, 0, 1, 1], [], []>} : vector<17x17xf32>, vector<17x8xf32>, vector<17x8xf32> -> vector<17x8xf32>
    %73 = vector.extract_strided_slice %50 {offsets = [0, 0], sizes = [8, 32], strides = [1, 1]} : vector<32x32xf32> to vector<8x32xf32>
    %cst_37 = arith.constant dense<0.000000e+00> : vector<17x32xf32>
    %74 = tpu.matmul %72, %73, %cst_37 {dimension_numbers = #tpu.dot_dimension_numbers<[1], [0], [0], [1], [0, 0, 1, 1], [], []>} : vector<17x8xf32>, vector<8x32xf32>, vector<17x32xf32> -> vector<17x32xf32>
    %75 = arith.addf %55, %74 : vector<17x32xf32>
    %76 = vector.extract_strided_slice %51 {offsets = [0, 8], sizes = [17, 8], strides = [1, 1]} : vector<17x32xf32> to vector<17x8xf32>
    %77 = vector.extract_strided_slice %53 {offsets = [8, 0], sizes = [8, 17], strides = [1, 1]} : vector<32x17xf32> to vector<8x17xf32>
    %cst_38 = arith.constant dense<0.000000e+00> : vector<17x17xf32>
    %78 = tpu.matmul %76, %77, %cst_38 {dimension_numbers = #tpu.dot_dimension_numbers<[1], [0], [0], [1], [0, 0, 1, 1], [], []>} : vector<17x8xf32>, vector<8x17xf32>, vector<17x17xf32> -> vector<17x17xf32>
    %cst_39 = arith.constant 0.353553385 : f32
    %79 = vector.broadcast %cst_39 : f32 to vector<17x17xf32>
    %80 = arith.mulf %78, %79 : vector<17x17xf32>
    %cst_40 = arith.constant dense<0xFF800000> : vector<17xf32>
    %81 = vector.multi_reduction <maximumf>, %80, %cst_40 [1] : vector<17x17xf32> to vector<17xf32>
    %82 = vector.shape_cast %81 : vector<17xf32> to vector<17x1xf32>
    %83 = vector.broadcast %82 : vector<17x1xf32> to vector<17x17xf32>
    %84 = arith.subf %80, %83 : vector<17x17xf32>
    %85 = math.exp %84 : vector<17x17xf32>
    %cst_41 = arith.constant dense<0.000000e+00> : vector<17xf32>
    %86 = vector.multi_reduction <add>, %85, %cst_41 [1] : vector<17x17xf32> to vector<17xf32>
    %87 = vector.shape_cast %86 : vector<17xf32> to vector<17x1xf32>
    %88 = tpu.reciprocal %87 {approx = true} : vector<17x1xf32> -> vector<17x1xf32>
    %89 = vector.broadcast %88 : vector<17x1xf32> to vector<17x17xf32>
    %90 = arith.mulf %85, %89 : vector<17x17xf32>
    %91 = vector.extract_strided_slice %54 {offsets = [0, 8], sizes = [17, 8], strides = [1, 1]} : vector<17x32xf32> to vector<17x8xf32>
    %cst_42 = arith.constant dense<0.000000e+00> : vector<17x8xf32>
    %92 = tpu.matmul %90, %91, %cst_42 {dimension_numbers = #tpu.dot_dimension_numbers<[1], [0], [0], [1], [0, 0, 1, 1], [], []>} : vector<17x17xf32>, vector<17x8xf32>, vector<17x8xf32> -> vector<17x8xf32>
    %93 = vector.extract_strided_slice %50 {offsets = [8, 0], sizes = [8, 32], strides = [1, 1]} : vector<32x32xf32> to vector<8x32xf32>
    %cst_43 = arith.constant dense<0.000000e+00> : vector<17x32xf32>
    %94 = tpu.matmul %92, %93, %cst_43 {dimension_numbers = #tpu.dot_dimension_numbers<[1], [0], [0], [1], [0, 0, 1, 1], [], []>} : vector<17x8xf32>, vector<8x32xf32>, vector<17x32xf32> -> vector<17x32xf32>
    %95 = arith.addf %75, %94 : vector<17x32xf32>
    %96 = vector.extract_strided_slice %51 {offsets = [0, 16], sizes = [17, 8], strides = [1, 1]} : vector<17x32xf32> to vector<17x8xf32>
    %97 = vector.extract_strided_slice %53 {offsets = [16, 0], sizes = [8, 17], strides = [1, 1]} : vector<32x17xf32> to vector<8x17xf32>
    %cst_44 = arith.constant dense<0.000000e+00> : vector<17x17xf32>
    %98 = tpu.matmul %96, %97, %cst_44 {dimension_numbers = #tpu.dot_dimension_numbers<[1], [0], [0], [1], [0, 0, 1, 1], [], []>} : vector<17x8xf32>, vector<8x17xf32>, vector<17x17xf32> -> vector<17x17xf32>
    %cst_45 = arith.constant 0.353553385 : f32
    %99 = vector.broadcast %cst_45 : f32 to vector<17x17xf32>
    %100 = arith.mulf %98, %99 : vector<17x17xf32>
    %cst_46 = arith.constant dense<0xFF800000> : vector<17xf32>
    %101 = vector.multi_reduction <maximumf>, %100, %cst_46 [1] : vector<17x17xf32> to vector<17xf32>
    %102 = vector.shape_cast %101 : vector<17xf32> to vector<17x1xf32>
    %103 = vector.broadcast %102 : vector<17x1xf32> to vector<17x17xf32>
    %104 = arith.subf %100, %103 : vector<17x17xf32>
    %105 = math.exp %104 : vector<17x17xf32>
    %cst_47 = arith.constant dense<0.000000e+00> : vector<17xf32>
    %106 = vector.multi_reduction <add>, %105, %cst_47 [1] : vector<17x17xf32> to vector<17xf32>
    %107 = vector.shape_cast %106 : vector<17xf32> to vector<17x1xf32>
    %108 = tpu.reciprocal %107 {approx = true} : vector<17x1xf32> -> vector<17x1xf32>
    %109 = vector.broadcast %108 : vector<17x1xf32> to vector<17x17xf32>
    %110 = arith.mulf %105, %109 : vector<17x17xf32>
    %111 = vector.extract_strided_slice %54 {offsets = [0, 16], sizes = [17, 8], strides = [1, 1]} : vector<17x32xf32> to vector<17x8xf32>
    %cst_48 = arith.constant dense<0.000000e+00> : vector<17x8xf32>
    %112 = tpu.matmul %110, %111, %cst_48 {dimension_numbers = #tpu.dot_dimension_numbers<[1], [0], [0], [1], [0, 0, 1, 1], [], []>} : vector<17x17xf32>, vector<17x8xf32>, vector<17x8xf32> -> vector<17x8xf32>
    %113 = vector.extract_strided_slice %50 {offsets = [16, 0], sizes = [8, 32], strides = [1, 1]} : vector<32x32xf32> to vector<8x32xf32>
    %cst_49 = arith.constant dense<0.000000e+00> : vector<17x32xf32>
    %114 = tpu.matmul %112, %113, %cst_49 {dimension_numbers = #tpu.dot_dimension_numbers<[1], [0], [0], [1], [0, 0, 1, 1], [], []>} : vector<17x8xf32>, vector<8x32xf32>, vector<17x32xf32> -> vector<17x32xf32>
    %115 = arith.addf %95, %114 : vector<17x32xf32>
    %116 = vector.extract_strided_slice %51 {offsets = [0, 24], sizes = [17, 8], strides = [1, 1]} : vector<17x32xf32> to vector<17x8xf32>
    %117 = vector.extract_strided_slice %53 {offsets = [24, 0], sizes = [8, 17], strides = [1, 1]} : vector<32x17xf32> to vector<8x17xf32>
    %cst_50 = arith.constant dense<0.000000e+00> : vector<17x17xf32>
    %118 = tpu.matmul %116, %117, %cst_50 {dimension_numbers = #tpu.dot_dimension_numbers<[1], [0], [0], [1], [0, 0, 1, 1], [], []>} : vector<17x8xf32>, vector<8x17xf32>, vector<17x17xf32> -> vector<17x17xf32>
    %cst_51 = arith.constant 0.353553385 : f32
    %119 = vector.broadcast %cst_51 : f32 to vector<17x17xf32>
    %120 = arith.mulf %118, %119 : vector<17x17xf32>
    %cst_52 = arith.constant dense<0xFF800000> : vector<17xf32>
    %121 = vector.multi_reduction <maximumf>, %120, %cst_52 [1] : vector<17x17xf32> to vector<17xf32>
    %122 = vector.shape_cast %121 : vector<17xf32> to vector<17x1xf32>
    %123 = vector.broadcast %122 : vector<17x1xf32> to vector<17x17xf32>
    %124 = arith.subf %120, %123 : vector<17x17xf32>
    %125 = math.exp %124 : vector<17x17xf32>
    %cst_53 = arith.constant dense<0.000000e+00> : vector<17xf32>
    %126 = vector.multi_reduction <add>, %125, %cst_53 [1] : vector<17x17xf32> to vector<17xf32>
    %127 = vector.shape_cast %126 : vector<17xf32> to vector<17x1xf32>
    %128 = tpu.reciprocal %127 {approx = true} : vector<17x1xf32> -> vector<17x1xf32>
    %129 = vector.broadcast %128 : vector<17x1xf32> to vector<17x17xf32>
    %130 = arith.mulf %125, %129 : vector<17x17xf32>
    %131 = vector.extract_strided_slice %54 {offsets = [0, 24], sizes = [17, 8], strides = [1, 1]} : vector<17x32xf32> to vector<17x8xf32>
    %cst_54 = arith.constant dense<0.000000e+00> : vector<17x8xf32>
    %132 = tpu.matmul %130, %131, %cst_54 {dimension_numbers = #tpu.dot_dimension_numbers<[1], [0], [0], [1], [0, 0, 1, 1], [], []>} : vector<17x17xf32>, vector<17x8xf32>, vector<17x8xf32> -> vector<17x8xf32>
    %133 = vector.extract_strided_slice %50 {offsets = [24, 0], sizes = [8, 32], strides = [1, 1]} : vector<32x32xf32> to vector<8x32xf32>
    %cst_55 = arith.constant dense<0.000000e+00> : vector<17x32xf32>
    %134 = tpu.matmul %132, %133, %cst_55 {dimension_numbers = #tpu.dot_dimension_numbers<[1], [0], [0], [1], [0, 0, 1, 1], [], []>} : vector<17x8xf32>, vector<8x32xf32>, vector<17x32xf32> -> vector<17x32xf32>
    %135 = arith.addf %115, %134 : vector<17x32xf32>
    %136 = vector.extract_strided_slice %46 {offsets = [17, 0], sizes = [17, 32], strides = [1, 1]} : vector<34x32xf32> to vector<17x32xf32>
    %137 = vector.extract_strided_slice %47 {offsets = [17, 0], sizes = [17, 32], strides = [1, 1]} : vector<34x32xf32> to vector<17x32xf32>
    %138 = tpu.transpose %137, [1, 0] : vector<17x32xf32> -> vector<32x17xf32>
    %139 = vector.extract_strided_slice %48 {offsets = [17, 0], sizes = [17, 32], strides = [1, 1]} : vector<34x32xf32> to vector<17x32xf32>
    %cst_56 = arith.constant 0.000000e+00 : f32
    %140 = vector.broadcast %cst_56 : f32 to vector<17x32xf32>
    %141 = vector.extract_strided_slice %136 {offsets = [0, 0], sizes = [17, 8], strides = [1, 1]} : vector<17x32xf32> to vector<17x8xf32>
    %142 = vector.extract_strided_slice %138 {offsets = [0, 0], sizes = [8, 17], strides = [1, 1]} : vector<32x17xf32> to vector<8x17xf32>
    %cst_57 = arith.constant dense<0.000000e+00> : vector<17x17xf32>
    %143 = tpu.matmul %141, %142, %cst_57 {dimension_numbers = #tpu.dot_dimension_numbers<[1], [0], [0], [1], [0, 0, 1, 1], [], []>} : vector<17x8xf32>, vector<8x17xf32>, vector<17x17xf32> -> vector<17x17xf32>
    %cst_58 = arith.constant 0.353553385 : f32
    %144 = vector.broadcast %cst_58 : f32 to vector<17x17xf32>
    %145 = arith.mulf %143, %144 : vector<17x17xf32>
    %cst_59 = arith.constant dense<0xFF800000> : vector<17xf32>
    %146 = vector.multi_reduction <maximumf>, %145, %cst_59 [1] : vector<17x17xf32> to vector<17xf32>
    %147 = vector.shape_cast %146 : vector<17xf32> to vector<17x1xf32>
    %148 = vector.broadcast %147 : vector<17x1xf32> to vector<17x17xf32>
    %149 = arith.subf %145, %148 : vector<17x17xf32>
    %150 = math.exp %149 : vector<17x17xf32>
    %cst_60 = arith.constant dense<0.000000e+00> : vector<17xf32>
    %151 = vector.multi_reduction <add>, %150, %cst_60 [1] : vector<17x17xf32> to vector<17xf32>
    %152 = vector.shape_cast %151 : vector<17xf32> to vector<17x1xf32>
    %153 = tpu.reciprocal %152 {approx = true} : vector<17x1xf32> -> vector<17x1xf32>
    %154 = vector.broadcast %153 : vector<17x1xf32> to vector<17x17xf32>
    %155 = arith.mulf %150, %154 : vector<17x17xf32>
    %156 = vector.extract_strided_slice %139 {offsets = [0, 0], sizes = [17, 8], strides = [1, 1]} : vector<17x32xf32> to vector<17x8xf32>
    %cst_61 = arith.constant dense<0.000000e+00> : vector<17x8xf32>
    %157 = tpu.matmul %155, %156, %cst_61 {dimension_numbers = #tpu.dot_dimension_numbers<[1], [0], [0], [1], [0, 0, 1, 1], [], []>} : vector<17x17xf32>, vector<17x8xf32>, vector<17x8xf32> -> vector<17x8xf32>
    %158 = vector.extract_strided_slice %50 {offsets = [0, 0], sizes = [8, 32], strides = [1, 1]} : vector<32x32xf32> to vector<8x32xf32>
    %cst_62 = arith.constant dense<0.000000e+00> : vector<17x32xf32>
    %159 = tpu.matmul %157, %158, %cst_62 {dimension_numbers = #tpu.dot_dimension_numbers<[1], [0], [0], [1], [0, 0, 1, 1], [], []>} : vector<17x8xf32>, vector<8x32xf32>, vector<17x32xf32> -> vector<17x32xf32>
    %160 = arith.addf %140, %159 : vector<17x32xf32>
    %161 = vector.extract_strided_slice %136 {offsets = [0, 8], sizes = [17, 8], strides = [1, 1]} : vector<17x32xf32> to vector<17x8xf32>
    %162 = vector.extract_strided_slice %138 {offsets = [8, 0], sizes = [8, 17], strides = [1, 1]} : vector<32x17xf32> to vector<8x17xf32>
    %cst_63 = arith.constant dense<0.000000e+00> : vector<17x17xf32>
    %163 = tpu.matmul %161, %162, %cst_63 {dimension_numbers = #tpu.dot_dimension_numbers<[1], [0], [0], [1], [0, 0, 1, 1], [], []>} : vector<17x8xf32>, vector<8x17xf32>, vector<17x17xf32> -> vector<17x17xf32>
    %cst_64 = arith.constant 0.353553385 : f32
    %164 = vector.broadcast %cst_64 : f32 to vector<17x17xf32>
    %165 = arith.mulf %163, %164 : vector<17x17xf32>
    %cst_65 = arith.constant dense<0xFF800000> : vector<17xf32>
    %166 = vector.multi_reduction <maximumf>, %165, %cst_65 [1] : vector<17x17xf32> to vector<17xf32>
    %167 = vector.shape_cast %166 : vector<17xf32> to vector<17x1xf32>
    %168 = vector.broadcast %167 : vector<17x1xf32> to vector<17x17xf32>
    %169 = arith.subf %165, %168 : vector<17x17xf32>
    %170 = math.exp %169 : vector<17x17xf32>
    %cst_66 = arith.constant dense<0.000000e+00> : vector<17xf32>
    %171 = vector.multi_reduction <add>, %170, %cst_66 [1] : vector<17x17xf32> to vector<17xf32>
    %172 = vector.shape_cast %171 : vector<17xf32> to vector<17x1xf32>
    %173 = tpu.reciprocal %172 {approx = true} : vector<17x1xf32> -> vector<17x1xf32>
    %174 = vector.broadcast %173 : vector<17x1xf32> to vector<17x17xf32>
    %175 = arith.mulf %170, %174 : vector<17x17xf32>
    %176 = vector.extract_strided_slice %139 {offsets = [0, 8], sizes = [17, 8], strides = [1, 1]} : vector<17x32xf32> to vector<17x8xf32>
    %cst_67 = arith.constant dense<0.000000e+00> : vector<17x8xf32>
    %177 = tpu.matmul %175, %176, %cst_67 {dimension_numbers = #tpu.dot_dimension_numbers<[1], [0], [0], [1], [0, 0, 1, 1], [], []>} : vector<17x17xf32>, vector<17x8xf32>, vector<17x8xf32> -> vector<17x8xf32>
    %178 = vector.extract_strided_slice %50 {offsets = [8, 0], sizes = [8, 32], strides = [1, 1]} : vector<32x32xf32> to vector<8x32xf32>
    %cst_68 = arith.constant dense<0.000000e+00> : vector<17x32xf32>
    %179 = tpu.matmul %177, %178, %cst_68 {dimension_numbers = #tpu.dot_dimension_numbers<[1], [0], [0], [1], [0, 0, 1, 1], [], []>} : vector<17x8xf32>, vector<8x32xf32>, vector<17x32xf32> -> vector<17x32xf32>
    %180 = arith.addf %160, %179 : vector<17x32xf32>
    %181 = vector.extract_strided_slice %136 {offsets = [0, 16], sizes = [17, 8], strides = [1, 1]} : vector<17x32xf32> to vector<17x8xf32>
    %182 = vector.extract_strided_slice %138 {offsets = [16, 0], sizes = [8, 17], strides = [1, 1]} : vector<32x17xf32> to vector<8x17xf32>
    %cst_69 = arith.constant dense<0.000000e+00> : vector<17x17xf32>
    %183 = tpu.matmul %181, %182, %cst_69 {dimension_numbers = #tpu.dot_dimension_numbers<[1], [0], [0], [1], [0, 0, 1, 1], [], []>} : vector<17x8xf32>, vector<8x17xf32>, vector<17x17xf32> -> vector<17x17xf32>
    %cst_70 = arith.constant 0.353553385 : f32
    %184 = vector.broadcast %cst_70 : f32 to vector<17x17xf32>
    %185 = arith.mulf %183, %184 : vector<17x17xf32>
    %cst_71 = arith.constant dense<0xFF800000> : vector<17xf32>
    %186 = vector.multi_reduction <maximumf>, %185, %cst_71 [1] : vector<17x17xf32> to vector<17xf32>
    %187 = vector.shape_cast %186 : vector<17xf32> to vector<17x1xf32>
    %188 = vector.broadcast %187 : vector<17x1xf32> to vector<17x17xf32>
    %189 = arith.subf %185, %188 : vector<17x17xf32>
    %190 = math.exp %189 : vector<17x17xf32>
    %cst_72 = arith.constant dense<0.000000e+00> : vector<17xf32>
    %191 = vector.multi_reduction <add>, %190, %cst_72 [1] : vector<17x17xf32> to vector<17xf32>
    %192 = vector.shape_cast %191 : vector<17xf32> to vector<17x1xf32>
    %193 = tpu.reciprocal %192 {approx = true} : vector<17x1xf32> -> vector<17x1xf32>
    %194 = vector.broadcast %193 : vector<17x1xf32> to vector<17x17xf32>
    %195 = arith.mulf %190, %194 : vector<17x17xf32>
    %196 = vector.extract_strided_slice %139 {offsets = [0, 16], sizes = [17, 8], strides = [1, 1]} : vector<17x32xf32> to vector<17x8xf32>
    %cst_73 = arith.constant dense<0.000000e+00> : vector<17x8xf32>
    %197 = tpu.matmul %195, %196, %cst_73 {dimension_numbers = #tpu.dot_dimension_numbers<[1], [0], [0], [1], [0, 0, 1, 1], [], []>} : vector<17x17xf32>, vector<17x8xf32>, vector<17x8xf32> -> vector<17x8xf32>
    %198 = vector.extract_strided_slice %50 {offsets = [16, 0], sizes = [8, 32], strides = [1, 1]} : vector<32x32xf32> to vector<8x32xf32>
    %cst_74 = arith.constant dense<0.000000e+00> : vector<17x32xf32>
    %199 = tpu.matmul %197, %198, %cst_74 {dimension_numbers = #tpu.dot_dimension_numbers<[1], [0], [0], [1], [0, 0, 1, 1], [], []>} : vector<17x8xf32>, vector<8x32xf32>, vector<17x32xf32> -> vector<17x32xf32>
    %200 = arith.addf %180, %199 : vector<17x32xf32>
    %201 = vector.extract_strided_slice %136 {offsets = [0, 24], sizes = [17, 8], strides = [1, 1]} : vector<17x32xf32> to vector<17x8xf32>
    %202 = vector.extract_strided_slice %138 {offsets = [24, 0], sizes = [8, 17], strides = [1, 1]} : vector<32x17xf32> to vector<8x17xf32>
    %cst_75 = arith.constant dense<0.000000e+00> : vector<17x17xf32>
    %203 = tpu.matmul %201, %202, %cst_75 {dimension_numbers = #tpu.dot_dimension_numbers<[1], [0], [0], [1], [0, 0, 1, 1], [], []>} : vector<17x8xf32>, vector<8x17xf32>, vector<17x17xf32> -> vector<17x17xf32>
    %cst_76 = arith.constant 0.353553385 : f32
    %204 = vector.broadcast %cst_76 : f32 to vector<17x17xf32>
    %205 = arith.mulf %203, %204 : vector<17x17xf32>
    %cst_77 = arith.constant dense<0xFF800000> : vector<17xf32>
    %206 = vector.multi_reduction <maximumf>, %205, %cst_77 [1] : vector<17x17xf32> to vector<17xf32>
    %207 = vector.shape_cast %206 : vector<17xf32> to vector<17x1xf32>
    %208 = vector.broadcast %207 : vector<17x1xf32> to vector<17x17xf32>
    %209 = arith.subf %205, %208 : vector<17x17xf32>
    %210 = math.exp %209 : vector<17x17xf32>
    %cst_78 = arith.constant dense<0.000000e+00> : vector<17xf32>
    %211 = vector.multi_reduction <add>, %210, %cst_78 [1] : vector<17x17xf32> to vector<17xf32>
    %212 = vector.shape_cast %211 : vector<17xf32> to vector<17x1xf32>
    %213 = tpu.reciprocal %212 {approx = true} : vector<17x1xf32> -> vector<17x1xf32>
    %214 = vector.broadcast %213 : vector<17x1xf32> to vector<17x17xf32>
    %215 = arith.mulf %210, %214 : vector<17x17xf32>
    %216 = vector.extract_strided_slice %139 {offsets = [0, 24], sizes = [17, 8], strides = [1, 1]} : vector<17x32xf32> to vector<17x8xf32>
    %cst_79 = arith.constant dense<0.000000e+00> : vector<17x8xf32>
    %217 = tpu.matmul %215, %216, %cst_79 {dimension_numbers = #tpu.dot_dimension_numbers<[1], [0], [0], [1], [0, 0, 1, 1], [], []>} : vector<17x17xf32>, vector<17x8xf32>, vector<17x8xf32> -> vector<17x8xf32>
    %218 = vector.extract_strided_slice %50 {offsets = [24, 0], sizes = [8, 32], strides = [1, 1]} : vector<32x32xf32> to vector<8x32xf32>
    %cst_80 = arith.constant dense<0.000000e+00> : vector<17x32xf32>
    %219 = tpu.matmul %217, %218, %cst_80 {dimension_numbers = #tpu.dot_dimension_numbers<[1], [0], [0], [1], [0, 0, 1, 1], [], []>} : vector<17x8xf32>, vector<8x32xf32>, vector<17x32xf32> -> vector<17x32xf32>
    %220 = arith.addf %200, %219 : vector<17x32xf32>
    %221 = tpu.concatenate %135, %220 in 0 : vector<17x32xf32>, vector<17x32xf32> -> vector<34x32xf32>
    %c0_81 = arith.constant 0 : index
    %c0_82 = arith.constant 0 : index
    %c0_83 = arith.constant 0 : index
    %222 = vector.load %arg10[%c0_81, %c0_82, %c0_83] : memref<2x1x32xf32, #tpu.memory_space<vmem>>, vector<1x1x32xf32>
    %223 = vector.shape_cast %222 : vector<1x1x32xf32> to vector<1x32xf32>
    %224 = vector.broadcast %223 : vector<1x32xf32> to vector<34x32xf32>
    %225 = arith.addf %221, %224 : vector<34x32xf32>
    %226 = arith.addf %12, %225 : vector<34x32xf32>
    %c0_84 = arith.constant 0 : index
    %c0_85 = arith.constant 0 : index
    %c0_86 = arith.constant 0 : index
    %227 = vector.load %arg11[%c0_84, %c0_85, %c0_86] : memref<2x1x32xf32, #tpu.memory_space<vmem>>, vector<1x1x32xf32>
    %228 = vector.shape_cast %227 : vector<1x1x32xf32> to vector<1x32xf32>
    %c0_87 = arith.constant 0 : index
    %c0_88 = arith.constant 0 : index
    %c0_89 = arith.constant 0 : index
    %229 = vector.load %arg12[%c0_87, %c0_88, %c0_89] : memref<2x1x32xf32, #tpu.memory_space<vmem>>, vector<1x1x32xf32>
    %230 = vector.shape_cast %229 : vector<1x1x32xf32> to vector<1x32xf32>
    %cst_90 = arith.constant dense<0.000000e+00> : vector<34xf32>
    %231 = vector.multi_reduction <add>, %226, %cst_90 [1] : vector<34x32xf32> to vector<34xf32>
    %232 = vector.shape_cast %231 : vector<34xf32> to vector<34x1xf32>
    %cst_91 = arith.constant 3.200000e+01 : f32
    %233 = vector.broadcast %cst_91 : f32 to vector<34x1xf32>
    %234 = arith.divf %232, %233 : vector<34x1xf32>
    %235 = vector.broadcast %234 : vector<34x1xf32> to vector<34x32xf32>
    %236 = arith.subf %226, %235 : vector<34x32xf32>
    %237 = arith.mulf %236, %236 : vector<34x32xf32>
    %cst_92 = arith.constant dense<0.000000e+00> : vector<34xf32>
    %238 = vector.multi_reduction <add>, %237, %cst_92 [1] : vector<34x32xf32> to vector<34xf32>
    %239 = vector.shape_cast %238 : vector<34xf32> to vector<34x1xf32>
    %cst_93 = arith.constant 3.200000e+01 : f32
    %240 = vector.broadcast %cst_93 : f32 to vector<34x1xf32>
    %241 = arith.divf %239, %240 : vector<34x1xf32>
    %242 = vector.broadcast %234 : vector<34x1xf32> to vector<34x32xf32>
    %243 = arith.subf %226, %242 : vector<34x32xf32>
    %cst_94 = arith.constant 9.99999996E-13 : f32
    %244 = vector.broadcast %cst_94 : f32 to vector<34x1xf32>
    %245 = arith.addf %241, %244 : vector<34x1xf32>
    %246 = math.rsqrt %245 : vector<34x1xf32>
    %247 = vector.broadcast %246 : vector<34x1xf32> to vector<34x32xf32>
    %248 = arith.mulf %243, %247 : vector<34x32xf32>
    %249 = vector.broadcast %228 : vector<1x32xf32> to vector<34x32xf32>
    %250 = arith.mulf %248, %249 : vector<34x32xf32>
    %251 = vector.broadcast %230 : vector<1x32xf32> to vector<34x32xf32>
    %252 = arith.addf %250, %251 : vector<34x32xf32>
    %c0_95 = arith.constant 0 : index
    %c0_96 = arith.constant 0 : index
    %c0_97 = arith.constant 0 : index
    %253 = vector.load %arg13[%c0_95, %c0_96, %c0_97] : memref<2x32x64xf32, #tpu.memory_space<vmem>>, vector<1x32x64xf32>
    %254 = vector.shape_cast %253 : vector<1x32x64xf32> to vector<32x64xf32>
    %cst_98 = arith.constant dense<0.000000e+00> : vector<34x64xf32>
    %255 = tpu.matmul %252, %254, %cst_98 {dimension_numbers = #tpu.dot_dimension_numbers<[1], [0], [0], [1], [0, 0, 1, 1], [], []>} : vector<34x32xf32>, vector<32x64xf32>, vector<34x64xf32> -> vector<34x64xf32>
    %c0_99 = arith.constant 0 : index
    %c0_100 = arith.constant 0 : index
    %c0_101 = arith.constant 0 : index
    %256 = vector.load %arg14[%c0_99, %c0_100, %c0_101] : memref<2x1x64xf32, #tpu.memory_space<vmem>>, vector<1x1x64xf32>
    %257 = vector.shape_cast %256 : vector<1x1x64xf32> to vector<1x64xf32>
    %258 = vector.broadcast %257 : vector<1x64xf32> to vector<34x64xf32>
    %259 = arith.addf %255, %258 : vector<34x64xf32>
    %260 = arith.mulf %259, %259 : vector<34x64xf32>
    %261 = arith.mulf %259, %260 : vector<34x64xf32>
    %cst_102 = arith.constant 4.471500e-02 : f32
    %262 = vector.broadcast %cst_102 : f32 to vector<34x64xf32>
    %263 = arith.mulf %262, %261 : vector<34x64xf32>
    %264 = arith.addf %259, %263 : vector<34x64xf32>
    %cst_103 = arith.constant 0.797884583 : f32
    %265 = vector.broadcast %cst_103 : f32 to vector<34x64xf32>
    %266 = arith.mulf %265, %264 : vector<34x64xf32>
    %267 = math.tanh %266 : vector<34x64xf32>
    %cst_104 = arith.constant 1.000000e+00 : f32
    %268 = vector.broadcast %cst_104 : f32 to vector<34x64xf32>
    %269 = arith.addf %268, %267 : vector<34x64xf32>
    %cst_105 = arith.constant 5.000000e-01 : f32
    %270 = vector.broadcast %cst_105 : f32 to vector<34x64xf32>
    %271 = arith.mulf %270, %269 : vector<34x64xf32>
    %272 = arith.mulf %259, %271 : vector<34x64xf32>
    %c0_106 = arith.constant 0 : index
    %c0_107 = arith.constant 0 : index
    %c0_108 = arith.constant 0 : index
    %273 = vector.load %arg15[%c0_106, %c0_107, %c0_108] : memref<2x64x32xf32, #tpu.memory_space<vmem>>, vector<1x64x32xf32>
    %274 = vector.shape_cast %273 : vector<1x64x32xf32> to vector<64x32xf32>
    %cst_109 = arith.constant dense<0.000000e+00> : vector<34x32xf32>
    %275 = tpu.matmul %272, %274, %cst_109 {dimension_numbers = #tpu.dot_dimension_numbers<[1], [0], [0], [1], [0, 0, 1, 1], [], []>} : vector<34x64xf32>, vector<64x32xf32>, vector<34x32xf32> -> vector<34x32xf32>
    %c0_110 = arith.constant 0 : index
    %c0_111 = arith.constant 0 : index
    %c0_112 = arith.constant 0 : index
    %276 = vector.load %arg16[%c0_110, %c0_111, %c0_112] : memref<2x1x32xf32, #tpu.memory_space<vmem>>, vector<1x1x32xf32>
    %277 = vector.shape_cast %276 : vector<1x1x32xf32> to vector<1x32xf32>
    %278 = vector.broadcast %277 : vector<1x32xf32> to vector<34x32xf32>
    %279 = arith.addf %275, %278 : vector<34x32xf32>
    %280 = arith.addf %226, %279 : vector<34x32xf32>
    %c1_113 = arith.constant 1 : index
    %c0_114 = arith.constant 0 : index
    %c0_115 = arith.constant 0 : index
    %281 = vector.load %arg5[%c1_113, %c0_114, %c0_115] : memref<2x1x32xf32, #tpu.memory_space<vmem>>, vector<1x1x32xf32>
    %282 = vector.shape_cast %281 : vector<1x1x32xf32> to vector<1x32xf32>
    %c1_116 = arith.constant 1 : index
    %c0_117 = arith.constant 0 : index
    %c0_118 = arith.constant 0 : index
    %283 = vector.load %arg6[%c1_116, %c0_117, %c0_118] : memref<2x1x32xf32, #tpu.memory_space<vmem>>, vector<1x1x32xf32>
    %284 = vector.shape_cast %283 : vector<1x1x32xf32> to vector<1x32xf32>
    %cst_119 = arith.constant dense<0.000000e+00> : vector<34xf32>
    %285 = vector.multi_reduction <add>, %280, %cst_119 [1] : vector<34x32xf32> to vector<34xf32>
    %286 = vector.shape_cast %285 : vector<34xf32> to vector<34x1xf32>
    %cst_120 = arith.constant 3.200000e+01 : f32
    %287 = vector.broadcast %cst_120 : f32 to vector<34x1xf32>
    %288 = arith.divf %286, %287 : vector<34x1xf32>
    %289 = vector.broadcast %288 : vector<34x1xf32> to vector<34x32xf32>
    %290 = arith.subf %280, %289 : vector<34x32xf32>
    %291 = arith.mulf %290, %290 : vector<34x32xf32>
    %cst_121 = arith.constant dense<0.000000e+00> : vector<34xf32>
    %292 = vector.multi_reduction <add>, %291, %cst_121 [1] : vector<34x32xf32> to vector<34xf32>
    %293 = vector.shape_cast %292 : vector<34xf32> to vector<34x1xf32>
    %cst_122 = arith.constant 3.200000e+01 : f32
    %294 = vector.broadcast %cst_122 : f32 to vector<34x1xf32>
    %295 = arith.divf %293, %294 : vector<34x1xf32>
    %296 = vector.broadcast %288 : vector<34x1xf32> to vector<34x32xf32>
    %297 = arith.subf %280, %296 : vector<34x32xf32>
    %cst_123 = arith.constant 9.99999996E-13 : f32
    %298 = vector.broadcast %cst_123 : f32 to vector<34x1xf32>
    %299 = arith.addf %295, %298 : vector<34x1xf32>
    %300 = math.rsqrt %299 : vector<34x1xf32>
    %301 = vector.broadcast %300 : vector<34x1xf32> to vector<34x32xf32>
    %302 = arith.mulf %297, %301 : vector<34x32xf32>
    %303 = vector.broadcast %282 : vector<1x32xf32> to vector<34x32xf32>
    %304 = arith.mulf %302, %303 : vector<34x32xf32>
    %305 = vector.broadcast %284 : vector<1x32xf32> to vector<34x32xf32>
    %306 = arith.addf %304, %305 : vector<34x32xf32>
    %c1_124 = arith.constant 1 : index
    %c0_125 = arith.constant 0 : index
    %c0_126 = arith.constant 0 : index
    %307 = vector.load %arg7[%c1_124, %c0_125, %c0_126] : memref<2x32x96xf32, #tpu.memory_space<vmem>>, vector<1x32x96xf32>
    %308 = vector.shape_cast %307 : vector<1x32x96xf32> to vector<32x96xf32>
    %cst_127 = arith.constant dense<0.000000e+00> : vector<34x96xf32>
    %309 = tpu.matmul %306, %308, %cst_127 {dimension_numbers = #tpu.dot_dimension_numbers<[1], [0], [0], [1], [0, 0, 1, 1], [], []>} : vector<34x32xf32>, vector<32x96xf32>, vector<34x96xf32> -> vector<34x96xf32>
    %c1_128 = arith.constant 1 : index
    %c0_129 = arith.constant 0 : index
    %c0_130 = arith.constant 0 : index
    %310 = vector.load %arg8[%c1_128, %c0_129, %c0_130] : memref<2x1x96xf32, #tpu.memory_space<vmem>>, vector<1x1x96xf32>
    %311 = vector.shape_cast %310 : vector<1x1x96xf32> to vector<1x96xf32>
    %312 = vector.broadcast %311 : vector<1x96xf32> to vector<34x96xf32>
    %313 = arith.addf %309, %312 : vector<34x96xf32>
    %314 = vector.extract_strided_slice %313 {offsets = [0, 0], sizes = [34, 32], strides = [1, 1]} : vector<34x96xf32> to vector<34x32xf32>
    %315 = vector.extract_strided_slice %313 {offsets = [0, 32], sizes = [34, 32], strides = [1, 1]} : vector<34x96xf32> to vector<34x32xf32>
    %316 = vector.extract_strided_slice %313 {offsets = [0, 64], sizes = [34, 32], strides = [1, 1]} : vector<34x96xf32> to vector<34x32xf32>
    %c1_131 = arith.constant 1 : index
    %c0_132 = arith.constant 0 : index
    %c0_133 = arith.constant 0 : index
    %317 = vector.load %arg9[%c1_131, %c0_132, %c0_133] : memref<2x32x32xf32, #tpu.memory_space<vmem>>, vector<1x32x32xf32>
    %318 = vector.shape_cast %317 : vector<1x32x32xf32> to vector<32x32xf32>
    %319 = vector.extract_strided_slice %314 {offsets = [0, 0], sizes = [17, 32], strides = [1, 1]} : vector<34x32xf32> to vector<17x32xf32>
    %320 = vector.extract_strided_slice %315 {offsets = [0, 0], sizes = [17, 32], strides = [1, 1]} : vector<34x32xf32> to vector<17x32xf32>
    %321 = tpu.transpose %320, [1, 0] : vector<17x32xf32> -> vector<32x17xf32>
    %322 = vector.extract_strided_slice %316 {offsets = [0, 0], sizes = [17, 32], strides = [1, 1]} : vector<34x32xf32> to vector<17x32xf32>
    %cst_134 = arith.constant 0.000000e+00 : f32
    %323 = vector.broadcast %cst_134 : f32 to vector<17x32xf32>
    %324 = vector.extract_strided_slice %319 {offsets = [0, 0], sizes = [17, 8], strides = [1, 1]} : vector<17x32xf32> to vector<17x8xf32>
    %325 = vector.extract_strided_slice %321 {offsets = [0, 0], sizes = [8, 17], strides = [1, 1]} : vector<32x17xf32> to vector<8x17xf32>
    %cst_135 = arith.constant dense<0.000000e+00> : vector<17x17xf32>
    %326 = tpu.matmul %324, %325, %cst_135 {dimension_numbers = #tpu.dot_dimension_numbers<[1], [0], [0], [1], [0, 0, 1, 1], [], []>} : vector<17x8xf32>, vector<8x17xf32>, vector<17x17xf32> -> vector<17x17xf32>
    %cst_136 = arith.constant 0.353553385 : f32
    %327 = vector.broadcast %cst_136 : f32 to vector<17x17xf32>
    %328 = arith.mulf %326, %327 : vector<17x17xf32>
    %cst_137 = arith.constant dense<0xFF800000> : vector<17xf32>
    %329 = vector.multi_reduction <maximumf>, %328, %cst_137 [1] : vector<17x17xf32> to vector<17xf32>
    %330 = vector.shape_cast %329 : vector<17xf32> to vector<17x1xf32>
    %331 = vector.broadcast %330 : vector<17x1xf32> to vector<17x17xf32>
    %332 = arith.subf %328, %331 : vector<17x17xf32>
    %333 = math.exp %332 : vector<17x17xf32>
    %cst_138 = arith.constant dense<0.000000e+00> : vector<17xf32>
    %334 = vector.multi_reduction <add>, %333, %cst_138 [1] : vector<17x17xf32> to vector<17xf32>
    %335 = vector.shape_cast %334 : vector<17xf32> to vector<17x1xf32>
    %336 = tpu.reciprocal %335 {approx = true} : vector<17x1xf32> -> vector<17x1xf32>
    %337 = vector.broadcast %336 : vector<17x1xf32> to vector<17x17xf32>
    %338 = arith.mulf %333, %337 : vector<17x17xf32>
    %339 = vector.extract_strided_slice %322 {offsets = [0, 0], sizes = [17, 8], strides = [1, 1]} : vector<17x32xf32> to vector<17x8xf32>
    %cst_139 = arith.constant dense<0.000000e+00> : vector<17x8xf32>
    %340 = tpu.matmul %338, %339, %cst_139 {dimension_numbers = #tpu.dot_dimension_numbers<[1], [0], [0], [1], [0, 0, 1, 1], [], []>} : vector<17x17xf32>, vector<17x8xf32>, vector<17x8xf32> -> vector<17x8xf32>
    %341 = vector.extract_strided_slice %318 {offsets = [0, 0], sizes = [8, 32], strides = [1, 1]} : vector<32x32xf32> to vector<8x32xf32>
    %cst_140 = arith.constant dense<0.000000e+00> : vector<17x32xf32>
    %342 = tpu.matmul %340, %341, %cst_140 {dimension_numbers = #tpu.dot_dimension_numbers<[1], [0], [0], [1], [0, 0, 1, 1], [], []>} : vector<17x8xf32>, vector<8x32xf32>, vector<17x32xf32> -> vector<17x32xf32>
    %343 = arith.addf %323, %342 : vector<17x32xf32>
    %344 = vector.extract_strided_slice %319 {offsets = [0, 8], sizes = [17, 8], strides = [1, 1]} : vector<17x32xf32> to vector<17x8xf32>
    %345 = vector.extract_strided_slice %321 {offsets = [8, 0], sizes = [8, 17], strides = [1, 1]} : vector<32x17xf32> to vector<8x17xf32>
    %cst_141 = arith.constant dense<0.000000e+00> : vector<17x17xf32>
    %346 = tpu.matmul %344, %345, %cst_141 {dimension_numbers = #tpu.dot_dimension_numbers<[1], [0], [0], [1], [0, 0, 1, 1], [], []>} : vector<17x8xf32>, vector<8x17xf32>, vector<17x17xf32> -> vector<17x17xf32>
    %cst_142 = arith.constant 0.353553385 : f32
    %347 = vector.broadcast %cst_142 : f32 to vector<17x17xf32>
    %348 = arith.mulf %346, %347 : vector<17x17xf32>
    %cst_143 = arith.constant dense<0xFF800000> : vector<17xf32>
    %349 = vector.multi_reduction <maximumf>, %348, %cst_143 [1] : vector<17x17xf32> to vector<17xf32>
    %350 = vector.shape_cast %349 : vector<17xf32> to vector<17x1xf32>
    %351 = vector.broadcast %350 : vector<17x1xf32> to vector<17x17xf32>
    %352 = arith.subf %348, %351 : vector<17x17xf32>
    %353 = math.exp %352 : vector<17x17xf32>
    %cst_144 = arith.constant dense<0.000000e+00> : vector<17xf32>
    %354 = vector.multi_reduction <add>, %353, %cst_144 [1] : vector<17x17xf32> to vector<17xf32>
    %355 = vector.shape_cast %354 : vector<17xf32> to vector<17x1xf32>
    %356 = tpu.reciprocal %355 {approx = true} : vector<17x1xf32> -> vector<17x1xf32>
    %357 = vector.broadcast %356 : vector<17x1xf32> to vector<17x17xf32>
    %358 = arith.mulf %353, %357 : vector<17x17xf32>
    %359 = vector.extract_strided_slice %322 {offsets = [0, 8], sizes = [17, 8], strides = [1, 1]} : vector<17x32xf32> to vector<17x8xf32>
    %cst_145 = arith.constant dense<0.000000e+00> : vector<17x8xf32>
    %360 = tpu.matmul %358, %359, %cst_145 {dimension_numbers = #tpu.dot_dimension_numbers<[1], [0], [0], [1], [0, 0, 1, 1], [], []>} : vector<17x17xf32>, vector<17x8xf32>, vector<17x8xf32> -> vector<17x8xf32>
    %361 = vector.extract_strided_slice %318 {offsets = [8, 0], sizes = [8, 32], strides = [1, 1]} : vector<32x32xf32> to vector<8x32xf32>
    %cst_146 = arith.constant dense<0.000000e+00> : vector<17x32xf32>
    %362 = tpu.matmul %360, %361, %cst_146 {dimension_numbers = #tpu.dot_dimension_numbers<[1], [0], [0], [1], [0, 0, 1, 1], [], []>} : vector<17x8xf32>, vector<8x32xf32>, vector<17x32xf32> -> vector<17x32xf32>
    %363 = arith.addf %343, %362 : vector<17x32xf32>
    %364 = vector.extract_strided_slice %319 {offsets = [0, 16], sizes = [17, 8], strides = [1, 1]} : vector<17x32xf32> to vector<17x8xf32>
    %365 = vector.extract_strided_slice %321 {offsets = [16, 0], sizes = [8, 17], strides = [1, 1]} : vector<32x17xf32> to vector<8x17xf32>
    %cst_147 = arith.constant dense<0.000000e+00> : vector<17x17xf32>
    %366 = tpu.matmul %364, %365, %cst_147 {dimension_numbers = #tpu.dot_dimension_numbers<[1], [0], [0], [1], [0, 0, 1, 1], [], []>} : vector<17x8xf32>, vector<8x17xf32>, vector<17x17xf32> -> vector<17x17xf32>
    %cst_148 = arith.constant 0.353553385 : f32
    %367 = vector.broadcast %cst_148 : f32 to vector<17x17xf32>
    %368 = arith.mulf %366, %367 : vector<17x17xf32>
    %cst_149 = arith.constant dense<0xFF800000> : vector<17xf32>
    %369 = vector.multi_reduction <maximumf>, %368, %cst_149 [1] : vector<17x17xf32> to vector<17xf32>
    %370 = vector.shape_cast %369 : vector<17xf32> to vector<17x1xf32>
    %371 = vector.broadcast %370 : vector<17x1xf32> to vector<17x17xf32>
    %372 = arith.subf %368, %371 : vector<17x17xf32>
    %373 = math.exp %372 : vector<17x17xf32>
    %cst_150 = arith.constant dense<0.000000e+00> : vector<17xf32>
    %374 = vector.multi_reduction <add>, %373, %cst_150 [1] : vector<17x17xf32> to vector<17xf32>
    %375 = vector.shape_cast %374 : vector<17xf32> to vector<17x1xf32>
    %376 = tpu.reciprocal %375 {approx = true} : vector<17x1xf32> -> vector<17x1xf32>
    %377 = vector.broadcast %376 : vector<17x1xf32> to vector<17x17xf32>
    %378 = arith.mulf %373, %377 : vector<17x17xf32>
    %379 = vector.extract_strided_slice %322 {offsets = [0, 16], sizes = [17, 8], strides = [1, 1]} : vector<17x32xf32> to vector<17x8xf32>
    %cst_151 = arith.constant dense<0.000000e+00> : vector<17x8xf32>
    %380 = tpu.matmul %378, %379, %cst_151 {dimension_numbers = #tpu.dot_dimension_numbers<[1], [0], [0], [1], [0, 0, 1, 1], [], []>} : vector<17x17xf32>, vector<17x8xf32>, vector<17x8xf32> -> vector<17x8xf32>
    %381 = vector.extract_strided_slice %318 {offsets = [16, 0], sizes = [8, 32], strides = [1, 1]} : vector<32x32xf32> to vector<8x32xf32>
    %cst_152 = arith.constant dense<0.000000e+00> : vector<17x32xf32>
    %382 = tpu.matmul %380, %381, %cst_152 {dimension_numbers = #tpu.dot_dimension_numbers<[1], [0], [0], [1], [0, 0, 1, 1], [], []>} : vector<17x8xf32>, vector<8x32xf32>, vector<17x32xf32> -> vector<17x32xf32>
    %383 = arith.addf %363, %382 : vector<17x32xf32>
    %384 = vector.extract_strided_slice %319 {offsets = [0, 24], sizes = [17, 8], strides = [1, 1]} : vector<17x32xf32> to vector<17x8xf32>
    %385 = vector.extract_strided_slice %321 {offsets = [24, 0], sizes = [8, 17], strides = [1, 1]} : vector<32x17xf32> to vector<8x17xf32>
    %cst_153 = arith.constant dense<0.000000e+00> : vector<17x17xf32>
    %386 = tpu.matmul %384, %385, %cst_153 {dimension_numbers = #tpu.dot_dimension_numbers<[1], [0], [0], [1], [0, 0, 1, 1], [], []>} : vector<17x8xf32>, vector<8x17xf32>, vector<17x17xf32> -> vector<17x17xf32>
    %cst_154 = arith.constant 0.353553385 : f32
    %387 = vector.broadcast %cst_154 : f32 to vector<17x17xf32>
    %388 = arith.mulf %386, %387 : vector<17x17xf32>
    %cst_155 = arith.constant dense<0xFF800000> : vector<17xf32>
    %389 = vector.multi_reduction <maximumf>, %388, %cst_155 [1] : vector<17x17xf32> to vector<17xf32>
    %390 = vector.shape_cast %389 : vector<17xf32> to vector<17x1xf32>
    %391 = vector.broadcast %390 : vector<17x1xf32> to vector<17x17xf32>
    %392 = arith.subf %388, %391 : vector<17x17xf32>
    %393 = math.exp %392 : vector<17x17xf32>
    %cst_156 = arith.constant dense<0.000000e+00> : vector<17xf32>
    %394 = vector.multi_reduction <add>, %393, %cst_156 [1] : vector<17x17xf32> to vector<17xf32>
    %395 = vector.shape_cast %394 : vector<17xf32> to vector<17x1xf32>
    %396 = tpu.reciprocal %395 {approx = true} : vector<17x1xf32> -> vector<17x1xf32>
    %397 = vector.broadcast %396 : vector<17x1xf32> to vector<17x17xf32>
    %398 = arith.mulf %393, %397 : vector<17x17xf32>
    %399 = vector.extract_strided_slice %322 {offsets = [0, 24], sizes = [17, 8], strides = [1, 1]} : vector<17x32xf32> to vector<17x8xf32>
    %cst_157 = arith.constant dense<0.000000e+00> : vector<17x8xf32>
    %400 = tpu.matmul %398, %399, %cst_157 {dimension_numbers = #tpu.dot_dimension_numbers<[1], [0], [0], [1], [0, 0, 1, 1], [], []>} : vector<17x17xf32>, vector<17x8xf32>, vector<17x8xf32> -> vector<17x8xf32>
    %401 = vector.extract_strided_slice %318 {offsets = [24, 0], sizes = [8, 32], strides = [1, 1]} : vector<32x32xf32> to vector<8x32xf32>
    %cst_158 = arith.constant dense<0.000000e+00> : vector<17x32xf32>
    %402 = tpu.matmul %400, %401, %cst_158 {dimension_numbers = #tpu.dot_dimension_numbers<[1], [0], [0], [1], [0, 0, 1, 1], [], []>} : vector<17x8xf32>, vector<8x32xf32>, vector<17x32xf32> -> vector<17x32xf32>
    %403 = arith.addf %383, %402 : vector<17x32xf32>
    %404 = vector.extract_strided_slice %314 {offsets = [17, 0], sizes = [17, 32], strides = [1, 1]} : vector<34x32xf32> to vector<17x32xf32>
    %405 = vector.extract_strided_slice %315 {offsets = [17, 0], sizes = [17, 32], strides = [1, 1]} : vector<34x32xf32> to vector<17x32xf32>
    %406 = tpu.transpose %405, [1, 0] : vector<17x32xf32> -> vector<32x17xf32>
    %407 = vector.extract_strided_slice %316 {offsets = [17, 0], sizes = [17, 32], strides = [1, 1]} : vector<34x32xf32> to vector<17x32xf32>
    %cst_159 = arith.constant 0.000000e+00 : f32
    %408 = vector.broadcast %cst_159 : f32 to vector<17x32xf32>
    %409 = vector.extract_strided_slice %404 {offsets = [0, 0], sizes = [17, 8], strides = [1, 1]} : vector<17x32xf32> to vector<17x8xf32>
    %410 = vector.extract_strided_slice %406 {offsets = [0, 0], sizes = [8, 17], strides = [1, 1]} : vector<32x17xf32> to vector<8x17xf32>
    %cst_160 = arith.constant dense<0.000000e+00> : vector<17x17xf32>
    %411 = tpu.matmul %409, %410, %cst_160 {dimension_numbers = #tpu.dot_dimension_numbers<[1], [0], [0], [1], [0, 0, 1, 1], [], []>} : vector<17x8xf32>, vector<8x17xf32>, vector<17x17xf32> -> vector<17x17xf32>
    %cst_161 = arith.constant 0.353553385 : f32
    %412 = vector.broadcast %cst_161 : f32 to vector<17x17xf32>
    %413 = arith.mulf %411, %412 : vector<17x17xf32>
    %cst_162 = arith.constant dense<0xFF800000> : vector<17xf32>
    %414 = vector.multi_reduction <maximumf>, %413, %cst_162 [1] : vector<17x17xf32> to vector<17xf32>
    %415 = vector.shape_cast %414 : vector<17xf32> to vector<17x1xf32>
    %416 = vector.broadcast %415 : vector<17x1xf32> to vector<17x17xf32>
    %417 = arith.subf %413, %416 : vector<17x17xf32>
    %418 = math.exp %417 : vector<17x17xf32>
    %cst_163 = arith.constant dense<0.000000e+00> : vector<17xf32>
    %419 = vector.multi_reduction <add>, %418, %cst_163 [1] : vector<17x17xf32> to vector<17xf32>
    %420 = vector.shape_cast %419 : vector<17xf32> to vector<17x1xf32>
    %421 = tpu.reciprocal %420 {approx = true} : vector<17x1xf32> -> vector<17x1xf32>
    %422 = vector.broadcast %421 : vector<17x1xf32> to vector<17x17xf32>
    %423 = arith.mulf %418, %422 : vector<17x17xf32>
    %424 = vector.extract_strided_slice %407 {offsets = [0, 0], sizes = [17, 8], strides = [1, 1]} : vector<17x32xf32> to vector<17x8xf32>
    %cst_164 = arith.constant dense<0.000000e+00> : vector<17x8xf32>
    %425 = tpu.matmul %423, %424, %cst_164 {dimension_numbers = #tpu.dot_dimension_numbers<[1], [0], [0], [1], [0, 0, 1, 1], [], []>} : vector<17x17xf32>, vector<17x8xf32>, vector<17x8xf32> -> vector<17x8xf32>
    %426 = vector.extract_strided_slice %318 {offsets = [0, 0], sizes = [8, 32], strides = [1, 1]} : vector<32x32xf32> to vector<8x32xf32>
    %cst_165 = arith.constant dense<0.000000e+00> : vector<17x32xf32>
    %427 = tpu.matmul %425, %426, %cst_165 {dimension_numbers = #tpu.dot_dimension_numbers<[1], [0], [0], [1], [0, 0, 1, 1], [], []>} : vector<17x8xf32>, vector<8x32xf32>, vector<17x32xf32> -> vector<17x32xf32>
    %428 = arith.addf %408, %427 : vector<17x32xf32>
    %429 = vector.extract_strided_slice %404 {offsets = [0, 8], sizes = [17, 8], strides = [1, 1]} : vector<17x32xf32> to vector<17x8xf32>
    %430 = vector.extract_strided_slice %406 {offsets = [8, 0], sizes = [8, 17], strides = [1, 1]} : vector<32x17xf32> to vector<8x17xf32>
    %cst_166 = arith.constant dense<0.000000e+00> : vector<17x17xf32>
    %431 = tpu.matmul %429, %430, %cst_166 {dimension_numbers = #tpu.dot_dimension_numbers<[1], [0], [0], [1], [0, 0, 1, 1], [], []>} : vector<17x8xf32>, vector<8x17xf32>, vector<17x17xf32> -> vector<17x17xf32>
    %cst_167 = arith.constant 0.353553385 : f32
    %432 = vector.broadcast %cst_167 : f32 to vector<17x17xf32>
    %433 = arith.mulf %431, %432 : vector<17x17xf32>
    %cst_168 = arith.constant dense<0xFF800000> : vector<17xf32>
    %434 = vector.multi_reduction <maximumf>, %433, %cst_168 [1] : vector<17x17xf32> to vector<17xf32>
    %435 = vector.shape_cast %434 : vector<17xf32> to vector<17x1xf32>
    %436 = vector.broadcast %435 : vector<17x1xf32> to vector<17x17xf32>
    %437 = arith.subf %433, %436 : vector<17x17xf32>
    %438 = math.exp %437 : vector<17x17xf32>
    %cst_169 = arith.constant dense<0.000000e+00> : vector<17xf32>
    %439 = vector.multi_reduction <add>, %438, %cst_169 [1] : vector<17x17xf32> to vector<17xf32>
    %440 = vector.shape_cast %439 : vector<17xf32> to vector<17x1xf32>
    %441 = tpu.reciprocal %440 {approx = true} : vector<17x1xf32> -> vector<17x1xf32>
    %442 = vector.broadcast %441 : vector<17x1xf32> to vector<17x17xf32>
    %443 = arith.mulf %438, %442 : vector<17x17xf32>
    %444 = vector.extract_strided_slice %407 {offsets = [0, 8], sizes = [17, 8], strides = [1, 1]} : vector<17x32xf32> to vector<17x8xf32>
    %cst_170 = arith.constant dense<0.000000e+00> : vector<17x8xf32>
    %445 = tpu.matmul %443, %444, %cst_170 {dimension_numbers = #tpu.dot_dimension_numbers<[1], [0], [0], [1], [0, 0, 1, 1], [], []>} : vector<17x17xf32>, vector<17x8xf32>, vector<17x8xf32> -> vector<17x8xf32>
    %446 = vector.extract_strided_slice %318 {offsets = [8, 0], sizes = [8, 32], strides = [1, 1]} : vector<32x32xf32> to vector<8x32xf32>
    %cst_171 = arith.constant dense<0.000000e+00> : vector<17x32xf32>
    %447 = tpu.matmul %445, %446, %cst_171 {dimension_numbers = #tpu.dot_dimension_numbers<[1], [0], [0], [1], [0, 0, 1, 1], [], []>} : vector<17x8xf32>, vector<8x32xf32>, vector<17x32xf32> -> vector<17x32xf32>
    %448 = arith.addf %428, %447 : vector<17x32xf32>
    %449 = vector.extract_strided_slice %404 {offsets = [0, 16], sizes = [17, 8], strides = [1, 1]} : vector<17x32xf32> to vector<17x8xf32>
    %450 = vector.extract_strided_slice %406 {offsets = [16, 0], sizes = [8, 17], strides = [1, 1]} : vector<32x17xf32> to vector<8x17xf32>
    %cst_172 = arith.constant dense<0.000000e+00> : vector<17x17xf32>
    %451 = tpu.matmul %449, %450, %cst_172 {dimension_numbers = #tpu.dot_dimension_numbers<[1], [0], [0], [1], [0, 0, 1, 1], [], []>} : vector<17x8xf32>, vector<8x17xf32>, vector<17x17xf32> -> vector<17x17xf32>
    %cst_173 = arith.constant 0.353553385 : f32
    %452 = vector.broadcast %cst_173 : f32 to vector<17x17xf32>
    %453 = arith.mulf %451, %452 : vector<17x17xf32>
    %cst_174 = arith.constant dense<0xFF800000> : vector<17xf32>
    %454 = vector.multi_reduction <maximumf>, %453, %cst_174 [1] : vector<17x17xf32> to vector<17xf32>
    %455 = vector.shape_cast %454 : vector<17xf32> to vector<17x1xf32>
    %456 = vector.broadcast %455 : vector<17x1xf32> to vector<17x17xf32>
    %457 = arith.subf %453, %456 : vector<17x17xf32>
    %458 = math.exp %457 : vector<17x17xf32>
    %cst_175 = arith.constant dense<0.000000e+00> : vector<17xf32>
    %459 = vector.multi_reduction <add>, %458, %cst_175 [1] : vector<17x17xf32> to vector<17xf32>
    %460 = vector.shape_cast %459 : vector<17xf32> to vector<17x1xf32>
    %461 = tpu.reciprocal %460 {approx = true} : vector<17x1xf32> -> vector<17x1xf32>
    %462 = vector.broadcast %461 : vector<17x1xf32> to vector<17x17xf32>
    %463 = arith.mulf %458, %462 : vector<17x17xf32>
    %464 = vector.extract_strided_slice %407 {offsets = [0, 16], sizes = [17, 8], strides = [1, 1]} : vector<17x32xf32> to vector<17x8xf32>
    %cst_176 = arith.constant dense<0.000000e+00> : vector<17x8xf32>
    %465 = tpu.matmul %463, %464, %cst_176 {dimension_numbers = #tpu.dot_dimension_numbers<[1], [0], [0], [1], [0, 0, 1, 1], [], []>} : vector<17x17xf32>, vector<17x8xf32>, vector<17x8xf32> -> vector<17x8xf32>
    %466 = vector.extract_strided_slice %318 {offsets = [16, 0], sizes = [8, 32], strides = [1, 1]} : vector<32x32xf32> to vector<8x32xf32>
    %cst_177 = arith.constant dense<0.000000e+00> : vector<17x32xf32>
    %467 = tpu.matmul %465, %466, %cst_177 {dimension_numbers = #tpu.dot_dimension_numbers<[1], [0], [0], [1], [0, 0, 1, 1], [], []>} : vector<17x8xf32>, vector<8x32xf32>, vector<17x32xf32> -> vector<17x32xf32>
    %468 = arith.addf %448, %467 : vector<17x32xf32>
    %469 = vector.extract_strided_slice %404 {offsets = [0, 24], sizes = [17, 8], strides = [1, 1]} : vector<17x32xf32> to vector<17x8xf32>
    %470 = vector.extract_strided_slice %406 {offsets = [24, 0], sizes = [8, 17], strides = [1, 1]} : vector<32x17xf32> to vector<8x17xf32>
    %cst_178 = arith.constant dense<0.000000e+00> : vector<17x17xf32>
    %471 = tpu.matmul %469, %470, %cst_178 {dimension_numbers = #tpu.dot_dimension_numbers<[1], [0], [0], [1], [0, 0, 1, 1], [], []>} : vector<17x8xf32>, vector<8x17xf32>, vector<17x17xf32> -> vector<17x17xf32>
    %cst_179 = arith.constant 0.353553385 : f32
    %472 = vector.broadcast %cst_179 : f32 to vector<17x17xf32>
    %473 = arith.mulf %471, %472 : vector<17x17xf32>
    %cst_180 = arith.constant dense<0xFF800000> : vector<17xf32>
    %474 = vector.multi_reduction <maximumf>, %473, %cst_180 [1] : vector<17x17xf32> to vector<17xf32>
    %475 = vector.shape_cast %474 : vector<17xf32> to vector<17x1xf32>
    %476 = vector.broadcast %475 : vector<17x1xf32> to vector<17x17xf32>
    %477 = arith.subf %473, %476 : vector<17x17xf32>
    %478 = math.exp %477 : vector<17x17xf32>
    %cst_181 = arith.constant dense<0.000000e+00> : vector<17xf32>
    %479 = vector.multi_reduction <add>, %478, %cst_181 [1] : vector<17x17xf32> to vector<17xf32>
    %480 = vector.shape_cast %479 : vector<17xf32> to vector<17x1xf32>
    %481 = tpu.reciprocal %480 {approx = true} : vector<17x1xf32> -> vector<17x1xf32>
    %482 = vector.broadcast %481 : vector<17x1xf32> to vector<17x17xf32>
    %483 = arith.mulf %478, %482 : vector<17x17xf32>
    %484 = vector.extract_strided_slice %407 {offsets = [0, 24], sizes = [17, 8], strides = [1, 1]} : vector<17x32xf32> to vector<17x8xf32>
    %cst_182 = arith.constant dense<0.000000e+00> : vector<17x8xf32>
    %485 = tpu.matmul %483, %484, %cst_182 {dimension_numbers = #tpu.dot_dimension_numbers<[1], [0], [0], [1], [0, 0, 1, 1], [], []>} : vector<17x17xf32>, vector<17x8xf32>, vector<17x8xf32> -> vector<17x8xf32>
    %486 = vector.extract_strided_slice %318 {offsets = [24, 0], sizes = [8, 32], strides = [1, 1]} : vector<32x32xf32> to vector<8x32xf32>
    %cst_183 = arith.constant dense<0.000000e+00> : vector<17x32xf32>
    %487 = tpu.matmul %485, %486, %cst_183 {dimension_numbers = #tpu.dot_dimension_numbers<[1], [0], [0], [1], [0, 0, 1, 1], [], []>} : vector<17x8xf32>, vector<8x32xf32>, vector<17x32xf32> -> vector<17x32xf32>
    %488 = arith.addf %468, %487 : vector<17x32xf32>
    %489 = tpu.concatenate %403, %488 in 0 : vector<17x32xf32>, vector<17x32xf32> -> vector<34x32xf32>
    %c1_184 = arith.constant 1 : index
    %c0_185 = arith.constant 0 : index
    %c0_186 = arith.constant 0 : index
    %490 = vector.load %arg10[%c1_184, %c0_185, %c0_186] : memref<2x1x32xf32, #tpu.memory_space<vmem>>, vector<1x1x32xf32>
    %491 = vector.shape_cast %490 : vector<1x1x32xf32> to vector<1x32xf32>
    %492 = vector.broadcast %491 : vector<1x32xf32> to vector<34x32xf32>
    %493 = arith.addf %489, %492 : vector<34x32xf32>
    %494 = arith.addf %280, %493 : vector<34x32xf32>
    %c1_187 = arith.constant 1 : index
    %c0_188 = arith.constant 0 : index
    %c0_189 = arith.constant 0 : index
    %495 = vector.load %arg11[%c1_187, %c0_188, %c0_189] : memref<2x1x32xf32, #tpu.memory_space<vmem>>, vector<1x1x32xf32>
    %496 = vector.shape_cast %495 : vector<1x1x32xf32> to vector<1x32xf32>
    %c1_190 = arith.constant 1 : index
    %c0_191 = arith.constant 0 : index
    %c0_192 = arith.constant 0 : index
    %497 = vector.load %arg12[%c1_190, %c0_191, %c0_192] : memref<2x1x32xf32, #tpu.memory_space<vmem>>, vector<1x1x32xf32>
    %498 = vector.shape_cast %497 : vector<1x1x32xf32> to vector<1x32xf32>
    %cst_193 = arith.constant dense<0.000000e+00> : vector<34xf32>
    %499 = vector.multi_reduction <add>, %494, %cst_193 [1] : vector<34x32xf32> to vector<34xf32>
    %500 = vector.shape_cast %499 : vector<34xf32> to vector<34x1xf32>
    %cst_194 = arith.constant 3.200000e+01 : f32
    %501 = vector.broadcast %cst_194 : f32 to vector<34x1xf32>
    %502 = arith.divf %500, %501 : vector<34x1xf32>
    %503 = vector.broadcast %502 : vector<34x1xf32> to vector<34x32xf32>
    %504 = arith.subf %494, %503 : vector<34x32xf32>
    %505 = arith.mulf %504, %504 : vector<34x32xf32>
    %cst_195 = arith.constant dense<0.000000e+00> : vector<34xf32>
    %506 = vector.multi_reduction <add>, %505, %cst_195 [1] : vector<34x32xf32> to vector<34xf32>
    %507 = vector.shape_cast %506 : vector<34xf32> to vector<34x1xf32>
    %cst_196 = arith.constant 3.200000e+01 : f32
    %508 = vector.broadcast %cst_196 : f32 to vector<34x1xf32>
    %509 = arith.divf %507, %508 : vector<34x1xf32>
    %510 = vector.broadcast %502 : vector<34x1xf32> to vector<34x32xf32>
    %511 = arith.subf %494, %510 : vector<34x32xf32>
    %cst_197 = arith.constant 9.99999996E-13 : f32
    %512 = vector.broadcast %cst_197 : f32 to vector<34x1xf32>
    %513 = arith.addf %509, %512 : vector<34x1xf32>
    %514 = math.rsqrt %513 : vector<34x1xf32>
    %515 = vector.broadcast %514 : vector<34x1xf32> to vector<34x32xf32>
    %516 = arith.mulf %511, %515 : vector<34x32xf32>
    %517 = vector.broadcast %496 : vector<1x32xf32> to vector<34x32xf32>
    %518 = arith.mulf %516, %517 : vector<34x32xf32>
    %519 = vector.broadcast %498 : vector<1x32xf32> to vector<34x32xf32>
    %520 = arith.addf %518, %519 : vector<34x32xf32>
    %c1_198 = arith.constant 1 : index
    %c0_199 = arith.constant 0 : index
    %c0_200 = arith.constant 0 : index
    %521 = vector.load %arg13[%c1_198, %c0_199, %c0_200] : memref<2x32x64xf32, #tpu.memory_space<vmem>>, vector<1x32x64xf32>
    %522 = vector.shape_cast %521 : vector<1x32x64xf32> to vector<32x64xf32>
    %cst_201 = arith.constant dense<0.000000e+00> : vector<34x64xf32>
    %523 = tpu.matmul %520, %522, %cst_201 {dimension_numbers = #tpu.dot_dimension_numbers<[1], [0], [0], [1], [0, 0, 1, 1], [], []>} : vector<34x32xf32>, vector<32x64xf32>, vector<34x64xf32> -> vector<34x64xf32>
    %c1_202 = arith.constant 1 : index
    %c0_203 = arith.constant 0 : index
    %c0_204 = arith.constant 0 : index
    %524 = vector.load %arg14[%c1_202, %c0_203, %c0_204] : memref<2x1x64xf32, #tpu.memory_space<vmem>>, vector<1x1x64xf32>
    %525 = vector.shape_cast %524 : vector<1x1x64xf32> to vector<1x64xf32>
    %526 = vector.broadcast %525 : vector<1x64xf32> to vector<34x64xf32>
    %527 = arith.addf %523, %526 : vector<34x64xf32>
    %528 = arith.mulf %527, %527 : vector<34x64xf32>
    %529 = arith.mulf %527, %528 : vector<34x64xf32>
    %cst_205 = arith.constant 4.471500e-02 : f32
    %530 = vector.broadcast %cst_205 : f32 to vector<34x64xf32>
    %531 = arith.mulf %530, %529 : vector<34x64xf32>
    %532 = arith.addf %527, %531 : vector<34x64xf32>
    %cst_206 = arith.constant 0.797884583 : f32
    %533 = vector.broadcast %cst_206 : f32 to vector<34x64xf32>
    %534 = arith.mulf %533, %532 : vector<34x64xf32>
    %535 = math.tanh %534 : vector<34x64xf32>
    %cst_207 = arith.constant 1.000000e+00 : f32
    %536 = vector.broadcast %cst_207 : f32 to vector<34x64xf32>
    %537 = arith.addf %536, %535 : vector<34x64xf32>
    %cst_208 = arith.constant 5.000000e-01 : f32
    %538 = vector.broadcast %cst_208 : f32 to vector<34x64xf32>
    %539 = arith.mulf %538, %537 : vector<34x64xf32>
    %540 = arith.mulf %527, %539 : vector<34x64xf32>
    %c1_209 = arith.constant 1 : index
    %c0_210 = arith.constant 0 : index
    %c0_211 = arith.constant 0 : index
    %541 = vector.load %arg15[%c1_209, %c0_210, %c0_211] : memref<2x64x32xf32, #tpu.memory_space<vmem>>, vector<1x64x32xf32>
    %542 = vector.shape_cast %541 : vector<1x64x32xf32> to vector<64x32xf32>
    %cst_212 = arith.constant dense<0.000000e+00> : vector<34x32xf32>
    %543 = tpu.matmul %540, %542, %cst_212 {dimension_numbers = #tpu.dot_dimension_numbers<[1], [0], [0], [1], [0, 0, 1, 1], [], []>} : vector<34x64xf32>, vector<64x32xf32>, vector<34x32xf32> -> vector<34x32xf32>
    %c1_213 = arith.constant 1 : index
    %c0_214 = arith.constant 0 : index
    %c0_215 = arith.constant 0 : index
    %544 = vector.load %arg16[%c1_213, %c0_214, %c0_215] : memref<2x1x32xf32, #tpu.memory_space<vmem>>, vector<1x1x32xf32>
    %545 = vector.shape_cast %544 : vector<1x1x32xf32> to vector<1x32xf32>
    %546 = vector.broadcast %545 : vector<1x32xf32> to vector<34x32xf32>
    %547 = arith.addf %543, %546 : vector<34x32xf32>
    %548 = arith.addf %494, %547 : vector<34x32xf32>
    %c0_216 = arith.constant 0 : index
    %c0_217 = arith.constant 0 : index
    %549 = vector.load %arg17[%c0_216, %c0_217] : memref<1x32xf32, #tpu.memory_space<vmem>>, vector<1x32xf32>
    %c0_218 = arith.constant 0 : index
    %c0_219 = arith.constant 0 : index
    %550 = vector.load %arg18[%c0_218, %c0_219] : memref<1x32xf32, #tpu.memory_space<vmem>>, vector<1x32xf32>
    %cst_220 = arith.constant dense<0.000000e+00> : vector<34xf32>
    %551 = vector.multi_reduction <add>, %548, %cst_220 [1] : vector<34x32xf32> to vector<34xf32>
    %552 = vector.shape_cast %551 : vector<34xf32> to vector<34x1xf32>
    %cst_221 = arith.constant 3.200000e+01 : f32
    %553 = vector.broadcast %cst_221 : f32 to vector<34x1xf32>
    %554 = arith.divf %552, %553 : vector<34x1xf32>
    %555 = vector.broadcast %554 : vector<34x1xf32> to vector<34x32xf32>
    %556 = arith.subf %548, %555 : vector<34x32xf32>
    %557 = arith.mulf %556, %556 : vector<34x32xf32>
    %cst_222 = arith.constant dense<0.000000e+00> : vector<34xf32>
    %558 = vector.multi_reduction <add>, %557, %cst_222 [1] : vector<34x32xf32> to vector<34xf32>
    %559 = vector.shape_cast %558 : vector<34xf32> to vector<34x1xf32>
    %cst_223 = arith.constant 3.200000e+01 : f32
    %560 = vector.broadcast %cst_223 : f32 to vector<34x1xf32>
    %561 = arith.divf %559, %560 : vector<34x1xf32>
    %562 = vector.broadcast %554 : vector<34x1xf32> to vector<34x32xf32>
    %563 = arith.subf %548, %562 : vector<34x32xf32>
    %cst_224 = arith.constant 9.99999996E-13 : f32
    %564 = vector.broadcast %cst_224 : f32 to vector<34x1xf32>
    %565 = arith.addf %561, %564 : vector<34x1xf32>
    %566 = math.rsqrt %565 : vector<34x1xf32>
    %567 = vector.broadcast %566 : vector<34x1xf32> to vector<34x32xf32>
    %568 = arith.mulf %563, %567 : vector<34x32xf32>
    %569 = vector.broadcast %549 : vector<1x32xf32> to vector<34x32xf32>
    %570 = arith.mulf %568, %569 : vector<34x32xf32>
    %571 = vector.broadcast %550 : vector<1x32xf32> to vector<34x32xf32>
    %572 = arith.addf %570, %571 : vector<34x32xf32>
    %573 = vector.extract_strided_slice %572 {offsets = [0, 0], sizes = [17, 32], strides = [1, 1]} : vector<34x32xf32> to vector<17x32xf32>
    %cst_225 = arith.constant dense<0.000000e+00> : vector<32xf32>
    %574 = vector.multi_reduction <add>, %573, %cst_225 [0] : vector<17x32xf32> to vector<32xf32>
    %575 = vector.shape_cast %574 : vector<32xf32> to vector<1x32xf32>
    %cst_226 = arith.constant 1.700000e+01 : f32
    %576 = vector.broadcast %cst_226 : f32 to vector<1x32xf32>
    %577 = arith.divf %575, %576 : vector<1x32xf32>
    %578 = vector.extract_strided_slice %572 {offsets = [17, 0], sizes = [17, 32], strides = [1, 1]} : vector<34x32xf32> to vector<17x32xf32>
    %cst_227 = arith.constant dense<0.000000e+00> : vector<32xf32>
    %579 = vector.multi_reduction <add>, %578, %cst_227 [0] : vector<17x32xf32> to vector<32xf32>
    %580 = vector.shape_cast %579 : vector<32xf32> to vector<1x32xf32>
    %cst_228 = arith.constant 1.700000e+01 : f32
    %581 = vector.broadcast %cst_228 : f32 to vector<1x32xf32>
    %582 = arith.divf %580, %581 : vector<1x32xf32>
    %583 = tpu.concatenate %577, %582 in 0 : vector<1x32xf32>, vector<1x32xf32> -> vector<2x32xf32>
    %c0_229 = arith.constant 0 : index
    %c0_230 = arith.constant 0 : index
    %584 = vector.load %arg19[%c0_229, %c0_230] : memref<2x32xf32, #tpu.memory_space<vmem>>, vector<2x32xf32>
    tpu.vector_store %arg19[%c0_229, %c0_230], %583 {strides = array<i32>} : memref<2x32xf32, #tpu.memory_space<vmem>>, vector<2x32xf32>,
    return
  }
}

</mosaic_0001>

<llo_original>
// kernel: transformer_dqn_forward.1
$region0: #{transformer_dqn_forward.1}
  #allocation0 [shape = 'u32[]', space=smem, size = 0x4, offset = 0x4, fixed_abs, tag = 'smem constant byte address 0x4 - core index']
  #allocation1 [shape = 'u32[144,128]{1,0:T(1,128)}', space=vmem, size = 0x12000, scoped, tag = 'internal scratch']
  %s0 = inlined_call_operand.vmem [shape: f32[34,48], index: 0, kind: input, shape index: {}]
  %s1 = inlined_call_operand.vmem [shape: f32[1,32], index: 1, kind: input, shape index: {}]
  %s2 = inlined_call_operand.vmem [shape: f32[17,32], index: 2, kind: input, shape index: {}]
  %s3 = inlined_call_operand.vmem [shape: f32[48,32], index: 3, kind: input, shape index: {}]
  %s4 = inlined_call_operand.vmem [shape: f32[1,32], index: 4, kind: input, shape index: {}]
  %s5 = inlined_call_operand.vmem [shape: f32[2,1,32], index: 5, kind: input, shape index: {}]
  %s6 = inlined_call_operand.vmem [shape: f32[2,1,32], index: 6, kind: input, shape index: {}]
  %s7 = inlined_call_operand.vmem [shape: f32[2,32,96], index: 7, kind: input, shape index: {}]
  %s8 = inlined_call_operand.vmem [shape: f32[2,1,96], index: 8, kind: input, shape index: {}]
  %s9 = inlined_call_operand.vmem [shape: f32[2,32,32], index: 9, kind: input, shape index: {}]
  %s10 = inlined_call_operand.vmem [shape: f32[2,1,32], index: 10, kind: input, shape index: {}]
  %s11 = inlined_call_operand.vmem [shape: f32[2,1,32], index: 11, kind: input, shape index: {}]
  %s12 = inlined_call_operand.vmem [shape: f32[2,1,32], index: 12, kind: input, shape index: {}]
  %s13 = inlined_call_operand.vmem [shape: f32[2,32,64], index: 13, kind: input, shape index: {}]
  %s14 = inlined_call_operand.vmem [shape: f32[2,1,64], index: 14, kind: input, shape index: {}]
  %s15 = inlined_call_operand.vmem [shape: f32[2,64,32], index: 15, kind: input, shape index: {}]
  %s16 = inlined_call_operand.vmem [shape: f32[2,1,32], index: 16, kind: input, shape index: {}]
  %s17 = inlined_call_operand.vmem [shape: f32[1,32], index: 17, kind: input, shape index: {}]
  %s18 = inlined_call_operand.vmem [shape: f32[1,32], index: 18, kind: input, shape index: {}]
  %s19 = inlined_call_operand.hbm [shape: f32[2,32], index: 19, kind: output, shape index: {}]
  %s20 = sld [smem:[#allocation0]]
  $region86: #{transformer_dqn_forward.1} parent=0
    _
  %s22 = ssub.s32 1, %s20
  %s23 = scalar_select 0, %s22, %s20
  $region1: #{transformer_dqn_forward.1} parent=0
    #allocation2 [shape = 'u8[1024]{0}', space=vmem, size = 0x400, scoped, tag = 'output window, operand 0, single buffered']
    #allocation3 [shape = 's32[1]{0}', space=sflag, size = 0x4, scoped, tag = 'scoped memory for transformer_dqn_forward.1']
    %24 = vsyncpa [#allocation3], 0
    // Predicated region
    $region2: #{transformer_dqn_forward.1} parent=1 // pred_check
      _
    $region3: #{transformer_dqn_forward.1} parent=1 // pred_check_branch
      %26 = sbr.rel (0) target = $region5
    $region4: #{transformer_dqn_forward.1} parent=1 // pred_region
      _
    $region5: #{transformer_dqn_forward.1} parent=1 // pred_fallthru
      _
    // Predicated region
    $region6: #{transformer_dqn_forward.1} parent=1 // pred_check
      _
    $region7: #{transformer_dqn_forward.1} parent=1 // pred_check_branch
      %28 = sbr.rel (0) target = $region9
    $region8: #{transformer_dqn_forward.1} parent=1 // pred_region
      _
    $region9: #{transformer_dqn_forward.1} parent=1 // pred_fallthru
      _
    // Predicated region
    $region10: #{transformer_dqn_forward.1} parent=1 // pred_check
      _
    $region11: #{transformer_dqn_forward.1} parent=1 // pred_check_branch
      %30 = sbr.rel (0) target = $region13
    $region12: #{transformer_dqn_forward.1} parent=1 // pred_region
      _
    $region13: #{transformer_dqn_forward.1} parent=1 // pred_fallthru
      _
    // Predicated region
    $region14: #{transformer_dqn_forward.1} parent=1 // pred_check
      _
    $region15: #{transformer_dqn_forward.1} parent=1 // pred_check_branch
      %32 = sbr.rel (0) target = $region17
    $region16: #{transformer_dqn_forward.1} parent=1 // pred_region
      _
    $region17: #{transformer_dqn_forward.1} parent=1 // pred_fallthru
      _
    // Predicated region
    $region18: #{transformer_dqn_forward.1} parent=1 // pred_check
      _
    $region19: #{transformer_dqn_forward.1} parent=1 // pred_check_branch
      %34 = sbr.rel (0) target = $region21
    $region20: #{transformer_dqn_forward.1} parent=1 // pred_region
      _
    $region21: #{transformer_dqn_forward.1} parent=1 // pred_fallthru
      _
    // Predicated region
    $region22: #{transformer_dqn_forward.1} parent=1 // pred_check
      _
    $region23: #{transformer_dqn_forward.1} parent=1 // pred_check_branch
      %36 = sbr.rel (0) target = $region25
    $region24: #{transformer_dqn_forward.1} parent=1 // pred_region
      _
    $region25: #{transformer_dqn_forward.1} parent=1 // pred_fallthru
      _
    // Predicated region
    $region26: #{transformer_dqn_forward.1} parent=1 // pred_check
      _
    $region27: #{transformer_dqn_forward.1} parent=1 // pred_check_branch
      %38 = sbr.rel (0) target = $region29
    $region28: #{transformer_dqn_forward.1} parent=1 // pred_region
      _
    $region29: #{transformer_dqn_forward.1} parent=1 // pred_fallthru
      _
    // Predicated region
    $region30: #{transformer_dqn_forward.1} parent=1 // pred_check
      _
    $region31: #{transformer_dqn_forward.1} parent=1 // pred_check_branch
      %40 = sbr.rel (0) target = $region33
    $region32: #{transformer_dqn_forward.1} parent=1 // pred_region
      _
    $region33: #{transformer_dqn_forward.1} parent=1 // pred_fallthru
      _
    // Predicated region
    $region34: #{transformer_dqn_forward.1} parent=1 // pred_check
      _
    $region35: #{transformer_dqn_forward.1} parent=1 // pred_check_branch
      %42 = sbr.rel (0) target = $region37
    $region36: #{transformer_dqn_forward.1} parent=1 // pred_region
      _
    $region37: #{transformer_dqn_forward.1} parent=1 // pred_fallthru
      _
    // Predicated region
    $region38: #{transformer_dqn_forward.1} parent=1 // pred_check
      _
    $region39: #{transformer_dqn_forward.1} parent=1 // pred_check_branch
      %44 = sbr.rel (0) target = $region41
    $region40: #{transformer_dqn_forward.1} parent=1 // pred_region
      _
    $region41: #{transformer_dqn_forward.1} parent=1 // pred_fallthru
      _
    // Predicated region
    $region42: #{transformer_dqn_forward.1} parent=1 // pred_check
      _
    $region43: #{transformer_dqn_forward.1} parent=1 // pred_check_branch
      %46 = sbr.rel (0) target = $region45
    $region44: #{transformer_dqn_forward.1} parent=1 // pred_region
      _
    $region45: #{transformer_dqn_forward.1} parent=1 // pred_fallthru
      _
    // Predicated region
    $region46: #{transformer_dqn_forward.1} parent=1 // pred_check
      _
    $region47: #{transformer_dqn_forward.1} parent=1 // pred_check_branch
      %48 = sbr.rel (0) target = $region49
    $region48: #{transformer_dqn_forward.1} parent=1 // pred_region
      _
    $region49: #{transformer_dqn_forward.1} parent=1 // pred_fallthru
      _
    // Predicated region
    $region50: #{transformer_dqn_forward.1} parent=1 // pred_check
      _
    $region51: #{transformer_dqn_forward.1} parent=1 // pred_check_branch
      %50 = sbr.rel (0) target = $region53
    $region52: #{transformer_dqn_forward.1} parent=1 // pred_region
      _
    $region53: #{transformer_dqn_forward.1} parent=1 // pred_fallthru
      _
    // Predicated region
    $region54: #{transformer_dqn_forward.1} parent=1 // pred_check
      _
    $region55: #{transformer_dqn_forward.1} parent=1 // pred_check_branch
      %52 = sbr.rel (0) target = $region57
    $region56: #{transformer_dqn_forward.1} parent=1 // pred_region
      _
    $region57: #{transformer_dqn_forward.1} parent=1 // pred_fallthru
      _
    // Predicated region
    $region58: #{transformer_dqn_forward.1} parent=1 // pred_check
      _
    $region59: #{transformer_dqn_forward.1} parent=1 // pred_check_branch
      %54 = sbr.rel (0) target = $region61
    $region60: #{transformer_dqn_forward.1} parent=1 // pred_region
      _
    $region61: #{transformer_dqn_forward.1} parent=1 // pred_fallthru
      _
    // Predicated region
    $region62: #{transformer_dqn_forward.1} parent=1 // pred_check
      _
    $region63: #{transformer_dqn_forward.1} parent=1 // pred_check_branch
      %56 = sbr.rel (0) target = $region65
    $region64: #{transformer_dqn_forward.1} parent=1 // pred_region
      _
    $region65: #{transformer_dqn_forward.1} parent=1 // pred_fallthru
      _
    // Predicated region
    $region66: #{transformer_dqn_forward.1} parent=1 // pred_check
      _
    $region67: #{transformer_dqn_forward.1} parent=1 // pred_check_branch
      %58 = sbr.rel (0) target = $region69
    $region68: #{transformer_dqn_forward.1} parent=1 // pred_region
      _
    $region69: #{transformer_dqn_forward.1} parent=1 // pred_fallthru
      _
    // Predicated region
    $region70: #{transformer_dqn_forward.1} parent=1 // pred_check
      _
    $region71: #{transformer_dqn_forward.1} parent=1 // pred_check_branch
      %60 = sbr.rel (0) target = $region73
    $region72: #{transformer_dqn_forward.1} parent=1 // pred_region
      _
    $region73: #{transformer_dqn_forward.1} parent=1 // pred_fallthru
      _
    // Predicated region
    $region74: #{transformer_dqn_forward.1} parent=1 // pred_check
      _
    $region75: #{transformer_dqn_forward.1} parent=1 // pred_check_branch
      %62 = sbr.rel (0) target = $region77
    $region76: #{transformer_dqn_forward.1} parent=1 // pred_region
      _
    $region77: #{transformer_dqn_forward.1} parent=1 // pred_fallthru
      _
    %v63 = vld [vmem:[%s0] sm:$0xff]
    %v64 = vld [vmem:[%s0 + $0x8] sm:$0xff]
    %v65 = vld [vmem:[%s0 + $0x10] sm:$0xff]
    %v66 = vld [vmem:[%s0 + $0x18] sm:$0xff]
    %v67 = vld [vmem:[%s0 + $0x20] sm:$0x3]
    %v68 = vld [vmem:[%s3] sm:$0xff]
    %v69 = vld [vmem:[%s3 + $0x8] sm:$0xff]
    %v70 = vld [vmem:[%s3 + $0x10] sm:$0xff]
    %v71 = vld [vmem:[%s3 + $0x18] sm:$0xff]
    %v72 = vld [vmem:[%s3 + $0x20] sm:$0xff]
    %v73 = vld [vmem:[%s3 + $0x28] sm:$0xff]
    %v74 = vld [vmem:[%s1] sm:$0x1]
    %v75 = vld [vmem:[%s2] sm:$0x1]
    %v76 = vadd.f32 %v74, %v75
    %v77 = vld [vmem:[%s4] sm:$0x1]
    %v78 = vld [vmem:[%s2 + $0x1] sm:$0xff]
    %v79 = vld [vmem:[%s2 + $0x9] sm:$0xff]
    %v81 = vlaneseq
    %v82 = vshrl.u32 %v81, 7
    %v83 = vsub.s32 0, %v82
    %v84 = vrot.slane %v77, %v83
    %v86 = vadd.f32 %v84, %v78
    %v87 = vadd.f32 %v84, %v79
    %vm90 = vcmask 1040384
    %v91 = vrot.slane %v86, 7
    %v92 = vrot.slane %v87, 7
    %v93 = vsel %vm90, %v91, %v92
    %v97 = vsel %vm90, %v76, %v91
    %v99 = vrot.slane %v97, 7
    %v100 = vrot.slane %v93, 7
    %v101 = vsel %vm90, %v99, %v100
    %v102 = vrot.slane %v92, 7
    %v103 = vsel %vm90, %v100, %v102
    %v107 = vsel %vm90, %v92, %v99
    %vm108 = vcmask 392192
    %v110 = vsel %vm108, %v63, 0
    %v113 = vsel %vm108, %v64, 0
    %v116 = vsel %vm108, %v65, 0
    %v119 = vsel %vm108, %v66, 0
    %v122 = vsel %vm108, %v67, 0
    %124 = vmatprep.subr.mxu0 0.0
    %125 = vmatpush1.msra.mxu0 0.0
    %126 = vmatprep.subr.mxu0 0.0
    %127 = vmatpush1.msra.mxu0 0.0
    %128 = vmatprep.subr.mxu0 0.0
    %129 = vmatpush1.msra.mxu0 0.0
    %130 = vmatprep.subr.mxu0 0.0
    %131 = vmatpush1.msra.mxu0 0.0
    %132 = vmatprep.subr.mxu0 0.0
    %133 = vmatpush1.msra.mxu0 0.0
    %134 = vmatprep.subr.mxu0 0.0
    %135 = vmatpush1.msra.mxu0 0.0
    %136 = vmatprep.subr.mxu0 0.0
    %137 = vmatpush1.msra.mxu0 0.0
    %138 = vmatprep.subr.mxu0 0.0
    %139 = vmatpush1.msra.mxu0 0.0
    %140 = vmatprep.subr.mxu0 0.0
    %141 = vmatpush1.msra.mxu0 0.0
    %142 = vmatprep.subr.mxu0 0.0
    %143 = vmatpush1.msra.mxu0 0.0
    %144 = vmatprep.subr.mxu0 0.0
    %145 = vmatpush1.msra.mxu0 %v73
    %146 = vmatprep.subr.mxu0 0.0
    %147 = vmatpush1.msra.mxu0 %v72
    %148 = vmatprep.subr.mxu0 0.0
    %149 = vmatpush1.msra.mxu0 %v71
    %150 = vmatprep.subr.mxu0 0.0
    %151 = vmatpush1.msra.mxu0 %v70
    %152 = vmatprep.subr.mxu0 0.0
    %153 = vmatpush1.msra.mxu0 %v69
    %154 = vmatprep.subr.mxu0 0.0
    %155 = vmatpush1.msra.mxu0 %v68
    %156 = vmatprep.subr.mxu0 0.0
    %157 = vmatpush2.msra.mxu0 0.0
    %158 = vmatprep.subr.mxu0 0.0
    %159 = vmatpush2.msra.mxu0 0.0
    %160 = vmatprep.subr.mxu0 0.0
    %161 = vmatpush2.msra.mxu0 0.0
    %162 = vmatprep.subr.mxu0 0.0
    %163 = vmatpush2.msra.mxu0 0.0
    %164 = vmatprep.subr.mxu0 0.0
    %165 = vmatpush2.msra.mxu0 0.0
    %166 = vmatprep.subr.mxu0 0.0
    %167 = vmatpush2.msra.mxu0 0.0
    %168 = vmatprep.subr.mxu0 0.0
    %169 = vmatpush2.msra.mxu0 0.0
    %170 = vmatprep.subr.mxu0 0.0
    %171 = vmatpush2.msra.mxu0 0.0
    %172 = vmatprep.subr.mxu0 0.0
    %173 = vmatpush2.msra.mxu0 0.0
    %174 = vmatprep.subr.mxu0 0.0
    %175 = vmatpush2.msra.mxu0 0.0
    %176 = vmatprep.subr.mxu0 0.0
    %177 = vmatpush2.msra.mxu0 0.0
    %178 = vmatprep.subr.mxu0 0.0
    %179 = vmatpush2.msra.mxu0 0.0
    %180 = vmatprep.subr.mxu0 0.0
    %181 = vmatpush2.msra.mxu0 0.0
    %182 = vmatprep.subr.mxu0 0.0
    %183 = vmatpush2.msra.mxu0 0.0
    %184 = vmatprep.subr.mxu0 0.0
    %185 = vmatpush2.msra.mxu0 0.0
    %186 = vmatprep.subr.mxu0 0.0
    %187 = vmatpush2.msra.mxu0 0.0
    %188 = vmatprep.mubr.f32.mxu0 0.0
    %189 = vmatmul.mubr.f32.gmra.mxu0 %v110
    %v190 = vpop.f32.mrf.mxu0
    %v191 = vadd.f32 %v97, %v190
    %v192 = vpop.f32.mrf.mxu0
    %193 = vmatprep.mubr.f32.mxu0 0.0
    %194 = vmatmul.mubr.f32.gmra.mxu0 %v113
    %v195 = vpop.f32.mrf.mxu0
    %v196 = vadd.f32 %v93, %v195
    %v197 = vpop.f32.mrf.mxu0
    %198 = vmatprep.mubr.f32.mxu0 0.0
    %199 = vmatmul.mubr.f32.gmra.mxu0 %v116
    %v200 = vpop.f32.mrf.mxu0
    %v201 = vadd.f32 %v107, %v200
    %v202 = vpop.f32.mrf.mxu0
    %203 = vmatprep.mubr.f32.mxu0 0.0
    %204 = vmatmul.mubr.f32.gmra.mxu0 %v119
    %v205 = vpop.f32.mrf.mxu0
    %v206 = vadd.f32 %v101, %v205
    %v207 = vpop.f32.mrf.mxu0
    %208 = vmatprep.mubr.f32.mxu0 0.0
    %209 = vmatmul.mubr.f32.gmra.mxu0 %v122
    %v210 = vpop.f32.mrf.mxu0
    %v211 = vadd.f32 %v103, %v210
    %v212 = vpop.f32.mrf.mxu0
    %213 = vdwg.mxu0
    %v214 = vld [vmem:[%s5] sm:$0x1]
    %v215 = vld [vmem:[%s6] sm:$0x1]
    %vm216 = vcmask 261120
    %v217 = vsel %vm216, %v191, 0.0
    %218 = vadd.xlane.f32.xlu0 %v217
    %v219 = vpop.xlane.xlu0 %218
    %v220 = vsel %vm216, %v196, 0.0
    %221 = vadd.xlane.f32.xlu0 %v220
    %v222 = vpop.xlane.xlu0 %221
    %v223 = vsel %vm216, %v201, 0.0
    %224 = vadd.xlane.f32.xlu0 %v223
    %v225 = vpop.xlane.xlu0 %224
    %v226 = vsel %vm216, %v206, 0.0
    %227 = vadd.xlane.f32.xlu0 %v226
    %v228 = vpop.xlane.xlu0 %227
    %vm229 = vcmask 254976
    %v230 = vsel %vm229, %v211, 0.0
    %231 = vadd.xlane.f32.xlu0 %v230
    %v232 = vpop.xlane.xlu0 %231
    %v233 = vrcp.pop 32.0
    %v234 = vmul.f32 %v219, %v233
    %v235 = vmul.f32 %v222, %v233
    %v236 = vmul.f32 %v225, %v233
    %v237 = vmul.f32 %v228, %v233
    %v238 = vmul.f32 %v232, %v233
    %v239 = vsub.f32 %v191, %v234
    %v240 = vsub.f32 %v196, %v235
    %v241 = vsub.f32 %v201, %v236
    %v242 = vsub.f32 %v206, %v237
    %v243 = vsub.f32 %v211, %v238
    %v244 = vmul.f32 %v239, %v239
    %v245 = vmul.f32 %v240, %v240
    %v246 = vmul.f32 %v241, %v241
    %v247 = vmul.f32 %v242, %v242
    %v248 = vmul.f32 %v243, %v243
    %v249 = vsel %vm216, %v244, 0.0
    %250 = vadd.xlane.f32.xlu0 %v249
    %v251 = vpop.xlane.xlu0 %250
    %v252 = vsel %vm216, %v245, 0.0
    %253 = vadd.xlane.f32.xlu0 %v252
    %v254 = vpop.xlane.xlu0 %253
    %v255 = vsel %vm216, %v246, 0.0
    %256 = vadd.xlane.f32.xlu0 %v255
    %v257 = vpop.xlane.xlu0 %256
    %v258 = vsel %vm216, %v247, 0.0
    %259 = vadd.xlane.f32.xlu0 %v258
    %v260 = vpop.xlane.xlu0 %259
    %v261 = vsel %vm229, %v248, 0.0
    %262 = vadd.xlane.f32.xlu0 %v261
    %v263 = vpop.xlane.xlu0 %262
    %v264 = vmul.f32 %v251, %v233
    %v265 = vmul.f32 %v254, %v233
    %v266 = vmul.f32 %v257, %v233
    %v267 = vmul.f32 %v260, %v233
    %v268 = vmul.f32 %v263, %v233
    %v269 = vadd.f32 %v264, 1e-12
    %v270 = vadd.f32 %v265, 1e-12
    %v271 = vadd.f32 %v266, 1e-12
    %v272 = vadd.f32 %v267, 1e-12
    %v273 = vadd.f32 %v268, 1e-12
    %v274 = vrsqrt.pop %v269
    %v275 = vrsqrt.pop %v270
    %v276 = vrsqrt.pop %v271
    %v277 = vrsqrt.pop %v272
    %v278 = vrsqrt.pop %v273
    %v279 = vmul.f32 %v239, %v274
    %v280 = vmul.f32 %v240, %v275
    %v281 = vmul.f32 %v241, %v276
    %v282 = vmul.f32 %v242, %v277
    %v283 = vmul.f32 %v243, %v278
    %v285 = vlaneseq
    %v286 = vshrl.u32 %v285, 7
    %v287 = vsub.s32 0, %v286
    %v288 = vrot.slane %v214, %v287
    %v290 = vmul.f32 %v279, %v288
    %v291 = vmul.f32 %v280, %v288
    %v292 = vmul.f32 %v281, %v288
    %v293 = vmul.f32 %v282, %v288
    %v294 = vmul.f32 %v283, %v288
    %v296 = vlaneseq
    %v297 = vshrl.u32 %v296, 7
    %v298 = vsub.s32 0, %v297
    %v299 = vrot.slane %v215, %v298
    %v301 = vadd.f32 %v290, %v299
    %v302 = vadd.f32 %v291, %v299
    %v303 = vadd.f32 %v292, %v299
    %v304 = vadd.f32 %v293, %v299
    %v305 = vadd.f32 %v294, %v299
    %v306 = vld [vmem:[%s7] sm:$0xff]
    %v307 = vld [vmem:[%s7 + $0x8] sm:$0xff]
    %v308 = vld [vmem:[%s7 + $0x10] sm:$0xff]
    %v309 = vld [vmem:[%s7 + $0x18] sm:$0xff]
    %v310 = vld [vmem:[%s8] sm:$0x1]
    %v312 = vlaneseq
    %v313 = vshrl.u32 %v312, 7
    %v314 = vsub.s32 0, %v313
    %v315 = vrot.slane %v310, %v314
    %v318 = vsel %vm216, %v301, 0
    %v321 = vsel %vm216, %v302, 0
    %v324 = vsel %vm216, %v303, 0
    %v327 = vsel %vm216, %v304, 0
    %v330 = vsel %vm216, %v305, 0
    %332 = vmatprep.subr.mxu0 0.0
    %333 = vmatpush1.msra.mxu0 0.0
    %334 = vmatprep.subr.mxu0 0.0
    %335 = vmatpush1.msra.mxu0 0.0
    %336 = vmatprep.subr.mxu0 0.0
    %337 = vmatpush1.msra.mxu0 0.0
    %338 = vmatprep.subr.mxu0 0.0
    %339 = vmatpush1.msra.mxu0 0.0
    %340 = vmatprep.subr.mxu0 0.0
    %341 = vmatpush1.msra.mxu0 0.0
    %342 = vmatprep.subr.mxu0 0.0
    %343 = vmatpush1.msra.mxu0 0.0
    %344 = vmatprep.subr.mxu0 0.0
    %345 = vmatpush1.msra.mxu0 0.0
    %346 = vmatprep.subr.mxu0 0.0
    %347 = vmatpush1.msra.mxu0 0.0
    %348 = vmatprep.subr.mxu0 0.0
    %349 = vmatpush1.msra.mxu0 0.0
    %350 = vmatprep.subr.mxu0 0.0
    %351 = vmatpush1.msra.mxu0 0.0
    %352 = vmatprep.subr.mxu0 0.0
    %353 = vmatpush1.msra.mxu0 0.0
    %354 = vmatprep.subr.mxu0 0.0
    %355 = vmatpush1.msra.mxu0 0.0
    %356 = vmatprep.subr.mxu0 0.0
    %357 = vmatpush1.msra.mxu0 %v309
    %358 = vmatprep.subr.mxu0 0.0
    %359 = vmatpush1.msra.mxu0 %v308
    %360 = vmatprep.subr.mxu0 0.0
    %361 = vmatpush1.msra.mxu0 %v307
    %362 = vmatprep.subr.mxu0 0.0
    %363 = vmatpush1.msra.mxu0 %v306
    %364 = vmatprep.subr.mxu0 0.0
    %365 = vmatpush2.msra.mxu0 0.0
    %366 = vmatprep.subr.mxu0 0.0
    %367 = vmatpush2.msra.mxu0 0.0
    %368 = vmatprep.subr.mxu0 0.0
    %369 = vmatpush2.msra.mxu0 0.0
    %370 = vmatprep.subr.mxu0 0.0
    %371 = vmatpush2.msra.mxu0 0.0
    %372 = vmatprep.subr.mxu0 0.0
    %373 = vmatpush2.msra.mxu0 0.0
    %374 = vmatprep.subr.mxu0 0.0
    %375 = vmatpush2.msra.mxu0 0.0
    %376 = vmatprep.subr.mxu0 0.0
    %377 = vmatpush2.msra.mxu0 0.0
    %378 = vmatprep.subr.mxu0 0.0
    %379 = vmatpush2.msra.mxu0 0.0
    %380 = vmatprep.subr.mxu0 0.0
    %381 = vmatpush2.msra.mxu0 0.0
    %382 = vmatprep.subr.mxu0 0.0
    %383 = vmatpush2.msra.mxu0 0.0
    %384 = vmatprep.subr.mxu0 0.0
    %385 = vmatpush2.msra.mxu0 0.0
    %386 = vmatprep.subr.mxu0 0.0
    %387 = vmatpush2.msra.mxu0 0.0
    %388 = vmatprep.subr.mxu0 0.0
    %389 = vmatpush2.msra.mxu0 0.0
    %390 = vmatprep.subr.mxu0 0.0
    %391 = vmatpush2.msra.mxu0 0.0
    %392 = vmatprep.subr.mxu0 0.0
    %393 = vmatpush2.msra.mxu0 0.0
    %394 = vmatprep.subr.mxu0 0.0
    %395 = vmatpush2.msra.mxu0 0.0
    %396 = vmatprep.mubr.f32.mxu0 0.0
    %397 = vmatmul.mubr.f32.gmra.mxu0 %v318
    %v398 = vpop.f32.mrf.mxu0
    %v399 = vadd.f32 %v315, %v398
    %v400 = vpop.f32.mrf.mxu0
    %401 = vmatprep.mubr.f32.mxu0 0.0
    %402 = vmatmul.mubr.f32.gmra.mxu0 %v321
    %v403 = vpop.f32.mrf.mxu0
    %v404 = vadd.f32 %v315, %v403
    %v405 = vpop.f32.mrf.mxu0
    %406 = vmatprep.mubr.f32.mxu0 0.0
    %407 = vmatmul.mubr.f32.gmra.mxu0 %v324
    %v408 = vpop.f32.mrf.mxu0
    %v409 = vadd.f32 %v315, %v408
    %v410 = vpop.f32.mrf.mxu0
    %411 = vmatprep.mubr.f32.mxu0 0.0
    %412 = vmatmul.mubr.f32.gmra.mxu0 %v327
    %v413 = vpop.f32.mrf.mxu0
    %v414 = vadd.f32 %v315, %v413
    %v415 = vpop.f32.mrf.mxu0
    %416 = vmatprep.mubr.f32.mxu0 0.0
    %417 = vmatmul.mubr.f32.gmra.mxu0 %v330
    %v418 = vpop.f32.mrf.mxu0
    %v419 = vadd.f32 %v315, %v418
    %v420 = vpop.f32.mrf.mxu0
    %421 = vdwg.mxu0
    %v422 = vld [vmem:[%s9] sm:$0xff]
    %v423 = vld [vmem:[%s9 + $0x8] sm:$0xff]
    %v424 = vld [vmem:[%s9 + $0x10] sm:$0xff]
    %v425 = vld [vmem:[%s9 + $0x18] sm:$0xff]
    %429 = vrot.lane.b32.xlu0 %v399, 96
    %v430 = vpop.permute.xlu0 %429
    %431 = vrot.lane.b32.xlu0 %v404, 96
    %v432 = vpop.permute.xlu0 %431
    %433 = vrot.lane.b32.xlu0 %v409, 96
    %v434 = vpop.permute.xlu0 %433
    %vm435 = vcmask 64512
    %v436 = vsel %vm435, %v399, 0
    %v438 = vsel %vm435, %v404, 0
    %v440 = vsel %vm435, %v409, 0
    %v442 = vsel %vm435, %v430, 0
    %v444 = vsel %vm435, %v432, 0
    %v446 = vsel %vm435, %v434, 0
    %448 = vmatprep.subr.mxu0 0.0
    %449 = vmatpush1.xpose.msra.mxu0 0.0
    %450 = vmatprep.subr.mxu0 0.0
    %451 = vmatpush1.xpose.msra.mxu0 0.0
    %452 = vmatprep.subr.mxu0 0.0
    %453 = vmatpush1.xpose.msra.mxu0 0.0
    %454 = vmatprep.subr.mxu0 0.0
    %455 = vmatpush1.xpose.msra.mxu0 0.0
    %456 = vmatprep.subr.mxu0 0.0
    %457 = vmatpush1.xpose.msra.mxu0 0.0
    %458 = vmatprep.subr.mxu0 0.0
    %459 = vmatpush1.xpose.msra.mxu0 0.0
    %460 = vmatprep.subr.mxu0 0.0
    %461 = vmatpush1.xpose.msra.mxu0 0.0
    %462 = vmatprep.subr.mxu0 0.0
    %463 = vmatpush1.xpose.msra.mxu0 0.0
    %464 = vmatprep.subr.mxu0 0.0
    %465 = vmatpush1.xpose.msra.mxu0 0.0
    %466 = vmatprep.subr.mxu0 0.0
    %467 = vmatpush1.xpose.msra.mxu0 0.0
    %468 = vmatprep.subr.mxu0 0.0
    %469 = vmatpush1.xpose.msra.mxu0 0.0
    %470 = vmatprep.subr.mxu0 0.0
    %471 = vmatpush1.xpose.msra.mxu0 0.0
    %472 = vmatprep.subr.mxu0 0.0
    %473 = vmatpush1.xpose.msra.mxu0 0.0
    %474 = vmatprep.subr.mxu0 0.0
    %475 = vmatpush1.xpose.msra.mxu0 %v446
    %476 = vmatprep.subr.mxu0 0.0
    %477 = vmatpush1.xpose.msra.mxu0 %v444
    %478 = vmatprep.subr.mxu0 0.0
    %479 = vmatpush1.xpose.msra.mxu0 %v442
    %480 = vmatprep.subr.mxu0 0.0
    %481 = vmatpush2.xpose.msra.mxu0 0.0
    %482 = vmatprep.subr.mxu0 0.0
    %483 = vmatpush2.xpose.msra.mxu0 0.0
    %484 = vmatprep.subr.mxu0 0.0
    %485 = vmatpush2.xpose.msra.mxu0 0.0
    %486 = vmatprep.subr.mxu0 0.0
    %487 = vmatpush2.xpose.msra.mxu0 0.0
    %488 = vmatprep.subr.mxu0 0.0
    %489 = vmatpush2.xpose.msra.mxu0 0.0
    %490 = vmatprep.subr.mxu0 0.0
    %491 = vmatpush2.xpose.msra.mxu0 0.0
    %492 = vmatprep.subr.mxu0 0.0
    %493 = vmatpush2.xpose.msra.mxu0 0.0
    %494 = vmatprep.subr.mxu0 0.0
    %495 = vmatpush2.xpose.msra.mxu0 0.0
    %496 = vmatprep.subr.mxu0 0.0
    %497 = vmatpush2.xpose.msra.mxu0 0.0
    %498 = vmatprep.subr.mxu0 0.0
    %499 = vmatpush2.xpose.msra.mxu0 0.0
    %500 = vmatprep.subr.mxu0 0.0
    %501 = vmatpush2.xpose.msra.mxu0 0.0
    %502 = vmatprep.subr.mxu0 0.0
    %503 = vmatpush2.xpose.msra.mxu0 0.0
    %504 = vmatprep.subr.mxu0 0.0
    %505 = vmatpush2.xpose.msra.mxu0 0.0
    %506 = vmatprep.subr.mxu0 0.0
    %507 = vmatpush2.xpose.msra.mxu0 0.0
    %508 = vmatprep.subr.mxu0 0.0
    %509 = vmatpush2.xpose.msra.mxu0 0.0
    %510 = vmatprep.subr.mxu0 0.0
    %511 = vmatpush2.xpose.msra.mxu0 0.0
    %512 = vmatprep.mubr.f32.mxu0 0.0
    %513 = vmatmul.mubr.f32.gmra.mxu0 %v436
    %v514 = vpop.f32.mrf.mxu0
    %v515 = vadd.f32 0.0, %v514
    %v516 = vpop.f32.mrf.mxu0
    %517 = vmatprep.mubr.f32.mxu0 0.0
    %518 = vmatmul.mubr.f32.gmra.mxu0 %v438
    %v519 = vpop.f32.mrf.mxu0
    %v520 = vadd.f32 0.0, %v519
    %v521 = vpop.f32.mrf.mxu0
    %522 = vmatprep.mubr.f32.mxu0 0.0
    %523 = vmatmul.mubr.f32.gmra.mxu0 %v440
    %v524 = vpop.f32.mrf.mxu0
    %v525 = vadd.f32 0.0, %v524
    %v526 = vpop.f32.mrf.mxu0
    %527 = vdwg.mxu0
    %v528 = vmul.f32 %v515, 0.35355338
    %v529 = vmul.f32 %v520, 0.35355338
    %v530 = vmul.f32 %v525, 0.35355338
    %vm531 = vcmask 138240
    %v532 = vsel %vm531, %v528, -inf
    %533 = vmax.xlane.f32.xlu0 %v532
    %v534 = vpop.xlane.xlu0 %533
    %v535 = vsel %vm531, %v529, -inf
    %536 = vmax.xlane.f32.xlu0 %v535
    %v537 = vpop.xlane.xlu0 %536
    %vm538 = vcmask 131072
    %v539 = vsel %vm538, %v530, -inf
    %540 = vmax.xlane.f32.xlu0 %v539
    %v541 = vpop.xlane.xlu0 %540
    %v542 = vsub.f32 %v528, %v534
    %v543 = vsub.f32 %v529, %v537
    %v544 = vsub.f32 %v530, %v541
    %v545 = vmul.f32 %v542, 1.442695
    %v546 = vpow.pop %v545
    %v547 = vmul.f32 %v543, 1.442695
    %v548 = vpow.pop %v547
    %v549 = vmul.f32 %v544, 1.442695
    %v550 = vpow.pop %v549
    %v551 = vsel %vm531, %v546, 0.0
    %552 = vadd.xlane.f32.xlu0 %v551
    %v553 = vpop.xlane.xlu0 %552
    %v554 = vsel %vm531, %v548, 0.0
    %555 = vadd.xlane.f32.xlu0 %v554
    %v556 = vpop.xlane.xlu0 %555
    %v557 = vsel %vm538, %v550, 0.0
    %558 = vadd.xlane.f32.xlu0 %v557
    %v559 = vpop.xlane.xlu0 %558
    %v560 = vrcp.pop %v553
    %v561 = vrcp.pop %v556
    %v562 = vrcp.pop %v559
    %v563 = vmul.f32 %v546, %v560
    %v564 = vmul.f32 %v548, %v561
    %v565 = vmul.f32 %v550, %v562
    %566 = vrot.lane.b32.xlu0 %v399, 64
    %v567 = vpop.permute.xlu0 %566
    %568 = vrot.lane.b32.xlu0 %v404, 64
    %v569 = vpop.permute.xlu0 %568
    %570 = vrot.lane.b32.xlu0 %v409, 64
    %v571 = vpop.permute.xlu0 %570
    %v575 = vsel %vm531, %v563, 0
    %v578 = vsel %vm531, %v564, 0
    %v581 = vsel %vm531, %v565, 0
    %v583 = vsel %vm90, %v571, 0
    %585 = vmatprep.subr.mxu0 0.0
    %586 = vmatpush1.msra.mxu0 0.0
    %587 = vmatprep.subr.mxu0 0.0
    %588 = vmatpush1.msra.mxu0 0.0
    %589 = vmatprep.subr.mxu0 0.0
    %590 = vmatpush1.msra.mxu0 0.0
    %591 = vmatprep.subr.mxu0 0.0
    %592 = vmatpush1.msra.mxu0 0.0
    %593 = vmatprep.subr.mxu0 0.0
    %594 = vmatpush1.msra.mxu0 0.0
    %595 = vmatprep.subr.mxu0 0.0
    %596 = vmatpush1.msra.mxu0 0.0
    %597 = vmatprep.subr.mxu0 0.0
    %598 = vmatpush1.msra.mxu0 0.0
    %599 = vmatprep.subr.mxu0 0.0
    %600 = vmatpush1.msra.mxu0 0.0
    %601 = vmatprep.subr.mxu0 0.0
    %602 = vmatpush1.msra.mxu0 0.0
    %603 = vmatprep.subr.mxu0 0.0
    %604 = vmatpush1.msra.mxu0 0.0
    %605 = vmatprep.subr.mxu0 0.0
    %606 = vmatpush1.msra.mxu0 0.0
    %607 = vmatprep.subr.mxu0 0.0
    %608 = vmatpush1.msra.mxu0 0.0
    %609 = vmatprep.subr.mxu0 0.0
    %610 = vmatpush1.msra.mxu0 0.0
    %611 = vmatprep.subr.mxu0 0.0
    %612 = vmatpush1.msra.mxu0 %v583
    %613 = vmatprep.subr.mxu0 0.0
    %614 = vmatpush1.msra.mxu0 %v569
    %615 = vmatprep.subr.mxu0 0.0
    %616 = vmatpush1.msra.mxu0 %v567
    %617 = vmatprep.subr.mxu0 0.0
    %618 = vmatpush2.msra.mxu0 0.0
    %619 = vmatprep.subr.mxu0 0.0
    %620 = vmatpush2.msra.mxu0 0.0
    %621 = vmatprep.subr.mxu0 0.0
    %622 = vmatpush2.msra.mxu0 0.0
    %623 = vmatprep.subr.mxu0 0.0
    %624 = vmatpush2.msra.mxu0 0.0
    %625 = vmatprep.subr.mxu0 0.0
    %626 = vmatpush2.msra.mxu0 0.0
    %627 = vmatprep.subr.mxu0 0.0
    %628 = vmatpush2.msra.mxu0 0.0
    %629 = vmatprep.subr.mxu0 0.0
    %630 = vmatpush2.msra.mxu0 0.0
    %631 = vmatprep.subr.mxu0 0.0
    %632 = vmatpush2.msra.mxu0 0.0
    %633 = vmatprep.subr.mxu0 0.0
    %634 = vmatpush2.msra.mxu0 0.0
    %635 = vmatprep.subr.mxu0 0.0
    %636 = vmatpush2.msra.mxu0 0.0
    %637 = vmatprep.subr.mxu0 0.0
    %638 = vmatpush2.msra.mxu0 0.0
    %639 = vmatprep.subr.mxu0 0.0
    %640 = vmatpush2.msra.mxu0 0.0
    %641 = vmatprep.subr.mxu0 0.0
    %642 = vmatpush2.msra.mxu0 0.0
    %643 = vmatprep.subr.mxu0 0.0
    %644 = vmatpush2.msra.mxu0 0.0
    %645 = vmatprep.subr.mxu0 0.0
    %646 = vmatpush2.msra.mxu0 0.0
    %647 = vmatprep.subr.mxu0 0.0
    %648 = vmatpush2.msra.mxu0 0.0
    %649 = vmatprep.mubr.f32.mxu0 0.0
    %650 = vmatmul.mubr.f32.gmra.mxu0 %v575
    %v651 = vpop.f32.mrf.mxu0
    %v652 = vadd.f32 0.0, %v651
    %v653 = vpop.f32.mrf.mxu0
    %654 = vmatprep.mubr.f32.mxu0 0.0
    %655 = vmatmul.mubr.f32.gmra.mxu0 %v578
    %v656 = vpop.f32.mrf.mxu0
    %v657 = vadd.f32 0.0, %v656
    %v658 = vpop.f32.mrf.mxu0
    %659 = vmatprep.mubr.f32.mxu0 0.0
    %660 = vmatmul.mubr.f32.gmra.mxu0 %v581
    %v661 = vpop.f32.mrf.mxu0
    %v662 = vadd.f32 0.0, %v661
    %v663 = vpop.f32.mrf.mxu0
    %664 = vdwg.mxu0
    %665 = vrot.lane.b32.xlu0 %v399, 120
    %v666 = vpop.permute.xlu0 %665
    %667 = vrot.lane.b32.xlu0 %v404, 120
    %v668 = vpop.permute.xlu0 %667
    %669 = vrot.lane.b32.xlu0 %v409, 120
    %v670 = vpop.permute.xlu0 %669
    %671 = vrot.lane.b32.xlu0 %v399, 88
    %v672 = vpop.permute.xlu0 %671
    %673 = vrot.lane.b32.xlu0 %v404, 88
    %v674 = vpop.permute.xlu0 %673
    %675 = vrot.lane.b32.xlu0 %v409, 88
    %v676 = vpop.permute.xlu0 %675
    %v677 = vsel %vm435, %v666, 0
    %v679 = vsel %vm435, %v668, 0
    %v681 = vsel %vm435, %v670, 0
    %v683 = vsel %vm435, %v672, 0
    %v685 = vsel %vm435, %v674, 0
    %v687 = vsel %vm435, %v676, 0
    %689 = vmatprep.subr.mxu0 0.0
    %690 = vmatpush1.xpose.msra.mxu0 0.0
    %691 = vmatprep.subr.mxu0 0.0
    %692 = vmatpush1.xpose.msra.mxu0 0.0
    %693 = vmatprep.subr.mxu0 0.0
    %694 = vmatpush1.xpose.msra.mxu0 0.0
    %695 = vmatprep.subr.mxu0 0.0
    %696 = vmatpush1.xpose.msra.mxu0 0.0
    %697 = vmatprep.subr.mxu0 0.0
    %698 = vmatpush1.xpose.msra.mxu0 0.0
    %699 = vmatprep.subr.mxu0 0.0
    %700 = vmatpush1.xpose.msra.mxu0 0.0
    %701 = vmatprep.subr.mxu0 0.0
    %702 = vmatpush1.xpose.msra.mxu0 0.0
    %703 = vmatprep.subr.mxu0 0.0
    %704 = vmatpush1.xpose.msra.mxu0 0.0
    %705 = vmatprep.subr.mxu0 0.0
    %706 = vmatpush1.xpose.msra.mxu0 0.0
    %707 = vmatprep.subr.mxu0 0.0
    %708 = vmatpush1.xpose.msra.mxu0 0.0
    %709 = vmatprep.subr.mxu0 0.0
    %710 = vmatpush1.xpose.msra.mxu0 0.0
    %711 = vmatprep.subr.mxu0 0.0
    %712 = vmatpush1.xpose.msra.mxu0 0.0
    %713 = vmatprep.subr.mxu0 0.0
    %714 = vmatpush1.xpose.msra.mxu0 0.0
    %715 = vmatprep.subr.mxu0 0.0
    %716 = vmatpush1.xpose.msra.mxu0 %v687
    %717 = vmatprep.subr.mxu0 0.0
    %718 = vmatpush1.xpose.msra.mxu0 %v685
    %719 = vmatprep.subr.mxu0 0.0
    %720 = vmatpush1.xpose.msra.mxu0 %v683
    %721 = vmatprep.subr.mxu0 0.0
    %722 = vmatpush2.xpose.msra.mxu0 0.0
    %723 = vmatprep.subr.mxu0 0.0
    %724 = vmatpush2.xpose.msra.mxu0 0.0
    %725 = vmatprep.subr.mxu0 0.0
    %726 = vmatpush2.xpose.msra.mxu0 0.0
    %727 = vmatprep.subr.mxu0 0.0
    %728 = vmatpush2.xpose.msra.mxu0 0.0
    %729 = vmatprep.subr.mxu0 0.0
    %730 = vmatpush2.xpose.msra.mxu0 0.0
    %731 = vmatprep.subr.mxu0 0.0
    %732 = vmatpush2.xpose.msra.mxu0 0.0
    %733 = vmatprep.subr.mxu0 0.0
    %734 = vmatpush2.xpose.msra.mxu0 0.0
    %735 = vmatprep.subr.mxu0 0.0
    %736 = vmatpush2.xpose.msra.mxu0 0.0
    %737 = vmatprep.subr.mxu0 0.0
    %738 = vmatpush2.xpose.msra.mxu0 0.0
    %739 = vmatprep.subr.mxu0 0.0
    %740 = vmatpush2.xpose.msra.mxu0 0.0
    %741 = vmatprep.subr.mxu0 0.0
    %742 = vmatpush2.xpose.msra.mxu0 0.0
    %743 = vmatprep.subr.mxu0 0.0
    %744 = vmatpush2.xpose.msra.mxu0 0.0
    %745 = vmatprep.subr.mxu0 0.0
    %746 = vmatpush2.xpose.msra.mxu0 0.0
    %747 = vmatprep.subr.mxu0 0.0
    %748 = vmatpush2.xpose.msra.mxu0 0.0
    %749 = vmatprep.subr.mxu0 0.0
    %750 = vmatpush2.xpose.msra.mxu0 0.0
    %751 = vmatprep.subr.mxu0 0.0
    %752 = vmatpush2.xpose.msra.mxu0 0.0
    %753 = vmatprep.mubr.f32.mxu0 0.0
    %754 = vmatmul.mubr.f32.gmra.mxu0 %v677
    %v755 = vpop.f32.mrf.mxu0
    %v756 = vadd.f32 0.0, %v755
    %v757 = vpop.f32.mrf.mxu0
    %758 = vmatprep.mubr.f32.mxu0 0.0
    %759 = vmatmul.mubr.f32.gmra.mxu0 %v679
    %v760 = vpop.f32.mrf.mxu0
    %v761 = vadd.f32 0.0, %v760
    %v762 = vpop.f32.mrf.mxu0
    %763 = vmatprep.mubr.f32.mxu0 0.0
    %764 = vmatmul.mubr.f32.gmra.mxu0 %v681
    %v765 = vpop.f32.mrf.mxu0
    %v766 = vadd.f32 0.0, %v765
    %v767 = vpop.f32.mrf.mxu0
    %768 = vdwg.mxu0
    %v769 = vmul.f32 %v756, 0.35355338
    %v770 = vmul.f32 %v761, 0.35355338
    %v771 = vmul.f32 %v766, 0.35355338
    %v772 = vsel %vm531, %v769, -inf
    %773 = vmax.xlane.f32.xlu0 %v772
    %v774 = vpop.xlane.xlu0 %773
    %v775 = vsel %vm531, %v770, -inf
    %776 = vmax.xlane.f32.xlu0 %v775
    %v777 = vpop.xlane.xlu0 %776
    %v778 = vsel %vm538, %v771, -inf
    %779 = vmax.xlane.f32.xlu0 %v778
    %v780 = vpop.xlane.xlu0 %779
    %v781 = vsub.f32 %v769, %v774
    %v782 = vsub.f32 %v770, %v777
    %v783 = vsub.f32 %v771, %v780
    %v784 = vmul.f32 %v781, 1.442695
    %v785 = vpow.pop %v784
    %v786 = vmul.f32 %v782, 1.442695
    %v787 = vpow.pop %v786
    %v788 = vmul.f32 %v783, 1.442695
    %v789 = vpow.pop %v788
    %v790 = vsel %vm531, %v785, 0.0
    %791 = vadd.xlane.f32.xlu0 %v790
    %v792 = vpop.xlane.xlu0 %791
    %v793 = vsel %vm531, %v787, 0.0
    %794 = vadd.xlane.f32.xlu0 %v793
    %v795 = vpop.xlane.xlu0 %794
    %v796 = vsel %vm538, %v789, 0.0
    %797 = vadd.xlane.f32.xlu0 %v796
    %v798 = vpop.xlane.xlu0 %797
    %v799 = vrcp.pop %v792
    %v800 = vrcp.pop %v795
    %v801 = vrcp.pop %v798
    %v802 = vmul.f32 %v785, %v799
    %v803 = vmul.f32 %v787, %v800
    %v804 = vmul.f32 %v789, %v801
    %805 = vrot.lane.b32.xlu0 %v399, 56
    %v806 = vpop.permute.xlu0 %805
    %807 = vrot.lane.b32.xlu0 %v404, 56
    %v808 = vpop.permute.xlu0 %807
    %809 = vrot.lane.b32.xlu0 %v409, 56
    %v810 = vpop.permute.xlu0 %809
    %v814 = vsel %vm531, %v802, 0
    %v817 = vsel %vm531, %v803, 0
    %v820 = vsel %vm531, %v804, 0
    %v822 = vsel %vm90, %v810, 0
    %824 = vmatprep.subr.mxu0 0.0
    %825 = vmatpush1.msra.mxu0 0.0
    %826 = vmatprep.subr.mxu0 0.0
    %827 = vmatpush1.msra.mxu0 0.0
    %828 = vmatprep.subr.mxu0 0.0
    %829 = vmatpush1.msra.mxu0 0.0
    %830 = vmatprep.subr.mxu0 0.0
    %831 = vmatpush1.msra.mxu0 0.0
    %832 = vmatprep.subr.mxu0 0.0
    %833 = vmatpush1.msra.mxu0 0.0
    %834 = vmatprep.subr.mxu0 0.0
    %835 = vmatpush1.msra.mxu0 0.0
    %836 = vmatprep.subr.mxu0 0.0
    %837 = vmatpush1.msra.mxu0 0.0
    %838 = vmatprep.subr.mxu0 0.0
    %839 = vmatpush1.msra.mxu0 0.0
    %840 = vmatprep.subr.mxu0 0.0
    %841 = vmatpush1.msra.mxu0 0.0
    %842 = vmatprep.subr.mxu0 0.0
    %843 = vmatpush1.msra.mxu0 0.0
    %844 = vmatprep.subr.mxu0 0.0
    %845 = vmatpush1.msra.mxu0 0.0
    %846 = vmatprep.subr.mxu0 0.0
    %847 = vmatpush1.msra.mxu0 0.0
    %848 = vmatprep.subr.mxu0 0.0
    %849 = vmatpush1.msra.mxu0 0.0
    %850 = vmatprep.subr.mxu0 0.0
    %851 = vmatpush1.msra.mxu0 %v822
    %852 = vmatprep.subr.mxu0 0.0
    %853 = vmatpush1.msra.mxu0 %v808
    %854 = vmatprep.subr.mxu0 0.0
    %855 = vmatpush1.msra.mxu0 %v806
    %856 = vmatprep.subr.mxu0 0.0
    %857 = vmatpush2.msra.mxu0 0.0
    %858 = vmatprep.subr.mxu0 0.0
    %859 = vmatpush2.msra.mxu0 0.0
    %860 = vmatprep.subr.mxu0 0.0
    %861 = vmatpush2.msra.mxu0 0.0
    %862 = vmatprep.subr.mxu0 0.0
    %863 = vmatpush2.msra.mxu0 0.0
    %864 = vmatprep.subr.mxu0 0.0
    %865 = vmatpush2.msra.mxu0 0.0
    %866 = vmatprep.subr.mxu0 0.0
    %867 = vmatpush2.msra.mxu0 0.0
    %868 = vmatprep.subr.mxu0 0.0
    %869 = vmatpush2.msra.mxu0 0.0
    %870 = vmatprep.subr.mxu0 0.0
    %871 = vmatpush2.msra.mxu0 0.0
    %872 = vmatprep.subr.mxu0 0.0
    %873 = vmatpush2.msra.mxu0 0.0
    %874 = vmatprep.subr.mxu0 0.0
    %875 = vmatpush2.msra.mxu0 0.0
    %876 = vmatprep.subr.mxu0 0.0
    %877 = vmatpush2.msra.mxu0 0.0
    %878 = vmatprep.subr.mxu0 0.0
    %879 = vmatpush2.msra.mxu0 0.0
    %880 = vmatprep.subr.mxu0 0.0
    %881 = vmatpush2.msra.mxu0 0.0
    %882 = vmatprep.subr.mxu0 0.0
    %883 = vmatpush2.msra.mxu0 0.0
    %884 = vmatprep.subr.mxu0 0.0
    %885 = vmatpush2.msra.mxu0 0.0
    %886 = vmatprep.subr.mxu0 0.0
    %887 = vmatpush2.msra.mxu0 0.0
    %888 = vmatprep.mubr.f32.mxu0 0.0
    %889 = vmatmul.mubr.f32.gmra.mxu0 %v814
    %v890 = vpop.f32.mrf.mxu0
    %v891 = vadd.f32 0.0, %v890
    %v892 = vpop.f32.mrf.mxu0
    %893 = vmatprep.mubr.f32.mxu0 0.0
    %894 = vmatmul.mubr.f32.gmra.mxu0 %v817
    %v895 = vpop.f32.mrf.mxu0
    %v896 = vadd.f32 0.0, %v895
    %v897 = vpop.f32.mrf.mxu0
    %898 = vmatprep.mubr.f32.mxu0 0.0
    %899 = vmatmul.mubr.f32.gmra.mxu0 %v820
    %v900 = vpop.f32.mrf.mxu0
    %v901 = vadd.f32 0.0, %v900
    %v902 = vpop.f32.mrf.mxu0
    %903 = vdwg.mxu0
    %v905 = vsel %vm435, %v891, 0
    %v908 = vsel %vm435, %v896, 0
    %v911 = vsel %vm435, %v901, 0
    %913 = vmatprep.subr.mxu0 0.0
    %914 = vmatpush1.msra.mxu0 0.0
    %915 = vmatprep.subr.mxu0 0.0
    %916 = vmatpush1.msra.mxu0 0.0
    %917 = vmatprep.subr.mxu0 0.0
    %918 = vmatpush1.msra.mxu0 0.0
    %919 = vmatprep.subr.mxu0 0.0
    %920 = vmatpush1.msra.mxu0 0.0
    %921 = vmatprep.subr.mxu0 0.0
    %922 = vmatpush1.msra.mxu0 0.0
    %923 = vmatprep.subr.mxu0 0.0
    %924 = vmatpush1.msra.mxu0 0.0
    %925 = vmatprep.subr.mxu0 0.0
    %926 = vmatpush1.msra.mxu0 0.0
    %927 = vmatprep.subr.mxu0 0.0
    %928 = vmatpush1.msra.mxu0 0.0
    %929 = vmatprep.subr.mxu0 0.0
    %930 = vmatpush1.msra.mxu0 0.0
    %931 = vmatprep.subr.mxu0 0.0
    %932 = vmatpush1.msra.mxu0 0.0
    %933 = vmatprep.subr.mxu0 0.0
    %934 = vmatpush1.msra.mxu0 0.0
    %935 = vmatprep.subr.mxu0 0.0
    %936 = vmatpush1.msra.mxu0 0.0
    %937 = vmatprep.subr.mxu0 0.0
    %938 = vmatpush1.msra.mxu0 0.0
    %939 = vmatprep.subr.mxu0 0.0
    %940 = vmatpush1.msra.mxu0 0.0
    %941 = vmatprep.subr.mxu0 0.0
    %942 = vmatpush1.msra.mxu0 0.0
    %943 = vmatprep.subr.mxu0 0.0
    %944 = vmatpush1.msra.mxu0 %v423
    %945 = vmatprep.subr.mxu0 0.0
    %946 = vmatpush2.msra.mxu0 0.0
    %947 = vmatprep.subr.mxu0 0.0
    %948 = vmatpush2.msra.mxu0 0.0
    %949 = vmatprep.subr.mxu0 0.0
    %950 = vmatpush2.msra.mxu0 0.0
    %951 = vmatprep.subr.mxu0 0.0
    %952 = vmatpush2.msra.mxu0 0.0
    %953 = vmatprep.subr.mxu0 0.0
    %954 = vmatpush2.msra.mxu0 0.0
    %955 = vmatprep.subr.mxu0 0.0
    %956 = vmatpush2.msra.mxu0 0.0
    %957 = vmatprep.subr.mxu0 0.0
    %958 = vmatpush2.msra.mxu0 0.0
    %959 = vmatprep.subr.mxu0 0.0
    %960 = vmatpush2.msra.mxu0 0.0
    %961 = vmatprep.subr.mxu0 0.0
    %962 = vmatpush2.msra.mxu0 0.0
    %963 = vmatprep.subr.mxu0 0.0
    %964 = vmatpush2.msra.mxu0 0.0
    %965 = vmatprep.subr.mxu0 0.0
    %966 = vmatpush2.msra.mxu0 0.0
    %967 = vmatprep.subr.mxu0 0.0
    %968 = vmatpush2.msra.mxu0 0.0
    %969 = vmatprep.subr.mxu0 0.0
    %970 = vmatpush2.msra.mxu0 0.0
    %971 = vmatprep.subr.mxu0 0.0
    %972 = vmatpush2.msra.mxu0 0.0
    %973 = vmatprep.subr.mxu0 0.0
    %974 = vmatpush2.msra.mxu0 0.0
    %975 = vmatprep.subr.mxu0 0.0
    %976 = vmatpush2.msra.mxu0 0.0
    %977 = vmatprep.mubr.f32.mxu0 0.0
    %978 = vmatmul.mubr.f32.gmra.mxu0 %v905
    %v979 = vpop.f32.mrf.mxu0
    %v980 = vadd.f32 0.0, %v979
    %v981 = vpop.f32.mrf.mxu0
    %982 = vmatprep.mubr.f32.mxu0 0.0
    %983 = vmatmul.mubr.f32.gmra.mxu0 %v908
    %v984 = vpop.f32.mrf.mxu0
    %v985 = vadd.f32 0.0, %v984
    %v986 = vpop.f32.mrf.mxu0
    %987 = vmatprep.mubr.f32.mxu0 0.0
    %988 = vmatmul.mubr.f32.gmra.mxu0 %v911
    %v989 = vpop.f32.mrf.mxu0
    %v990 = vadd.f32 0.0, %v989
    %v991 = vpop.f32.mrf.mxu0
    %992 = vdwg.mxu0
    %v994 = vsel %vm435, %v652, 0
    %v997 = vsel %vm435, %v657, 0
    %v1000 = vsel %vm435, %v662, 0
    %1002 = vmatprep.subr.mxu0 0.0
    %1003 = vmatpush1.msra.mxu0 0.0
    %1004 = vmatprep.subr.mxu0 0.0
    %1005 = vmatpush1.msra.mxu0 0.0
    %1006 = vmatprep.subr.mxu0 0.0
    %1007 = vmatpush1.msra.mxu0 0.0
    %1008 = vmatprep.subr.mxu0 0.0
    %1009 = vmatpush1.msra.mxu0 0.0
    %1010 = vmatprep.subr.mxu0 0.0
    %1011 = vmatpush1.msra.mxu0 0.0
    %1012 = vmatprep.subr.mxu0 0.0
    %1013 = vmatpush1.msra.mxu0 0.0
    %1014 = vmatprep.subr.mxu0 0.0
    %1015 = vmatpush1.msra.mxu0 0.0
    %1016 = vmatprep.subr.mxu0 0.0
    %1017 = vmatpush1.msra.mxu0 0.0
    %1018 = vmatprep.subr.mxu0 0.0
    %1019 = vmatpush1.msra.mxu0 0.0
    %1020 = vmatprep.subr.mxu0 0.0
    %1021 = vmatpush1.msra.mxu0 0.0
    %1022 = vmatprep.subr.mxu0 0.0
    %1023 = vmatpush1.msra.mxu0 0.0
    %1024 = vmatprep.subr.mxu0 0.0
    %1025 = vmatpush1.msra.mxu0 0.0
    %1026 = vmatprep.subr.mxu0 0.0
    %1027 = vmatpush1.msra.mxu0 0.0
    %1028 = vmatprep.subr.mxu0 0.0
    %1029 = vmatpush1.msra.mxu0 0.0
    %1030 = vmatprep.subr.mxu0 0.0
    %1031 = vmatpush1.msra.mxu0 0.0
    %1032 = vmatprep.subr.mxu0 0.0
    %1033 = vmatpush1.msra.mxu0 %v422
    %1034 = vmatprep.subr.mxu0 0.0
    %1035 = vmatpush2.msra.mxu0 0.0
    %1036 = vmatprep.subr.mxu0 0.0
    %1037 = vmatpush2.msra.mxu0 0.0
    %1038 = vmatprep.subr.mxu0 0.0
    %1039 = vmatpush2.msra.mxu0 0.0
    %1040 = vmatprep.subr.mxu0 0.0
    %1041 = vmatpush2.msra.mxu0 0.0
    %1042 = vmatprep.subr.mxu0 0.0
    %1043 = vmatpush2.msra.mxu0 0.0
    %1044 = vmatprep.subr.mxu0 0.0
    %1045 = vmatpush2.msra.mxu0 0.0
    %1046 = vmatprep.subr.mxu0 0.0
    %1047 = vmatpush2.msra.mxu0 0.0
    %1048 = vmatprep.subr.mxu0 0.0
    %1049 = vmatpush2.msra.mxu0 0.0
    %1050 = vmatprep.subr.mxu0 0.0
    %1051 = vmatpush2.msra.mxu0 0.0
    %1052 = vmatprep.subr.mxu0 0.0
    %1053 = vmatpush2.msra.mxu0 0.0
    %1054 = vmatprep.subr.mxu0 0.0
    %1055 = vmatpush2.msra.mxu0 0.0
    %1056 = vmatprep.subr.mxu0 0.0
    %1057 = vmatpush2.msra.mxu0 0.0
    %1058 = vmatprep.subr.mxu0 0.0
    %1059 = vmatpush2.msra.mxu0 0.0
    %1060 = vmatprep.subr.mxu0 0.0
    %1061 = vmatpush2.msra.mxu0 0.0
    %1062 = vmatprep.subr.mxu0 0.0
    %1063 = vmatpush2.msra.mxu0 0.0
    %1064 = vmatprep.subr.mxu0 0.0
    %1065 = vmatpush2.msra.mxu0 0.0
    %1066 = vmatprep.mubr.f32.mxu0 0.0
    %1067 = vmatmul.mubr.f32.gmra.mxu0 %v994
    %v1068 = vpop.f32.mrf.mxu0
    %v1069 = vadd.f32 %v980, %v1068
    %v1070 = vpop.f32.mrf.mxu0
    %1071 = vmatprep.mubr.f32.mxu0 0.0
    %1072 = vmatmul.mubr.f32.gmra.mxu0 %v997
    %v1073 = vpop.f32.mrf.mxu0
    %v1074 = vadd.f32 %v985, %v1073
    %v1075 = vpop.f32.mrf.mxu0
    %1076 = vmatprep.mubr.f32.mxu0 0.0
    %1077 = vmatmul.mubr.f32.gmra.mxu0 %v1000
    %v1078 = vpop.f32.mrf.mxu0
    %v1079 = vadd.f32 %v990, %v1078
    %v1080 = vpop.f32.mrf.mxu0
    %1081 = vdwg.mxu0
    %1082 = vrot.lane.b32.xlu0 %v399, 112
    %v1083 = vpop.permute.xlu0 %1082
    %1084 = vrot.lane.b32.xlu0 %v404, 112
    %v1085 = vpop.permute.xlu0 %1084
    %1086 = vrot.lane.b32.xlu0 %v409, 112
    %v1087 = vpop.permute.xlu0 %1086
    %1088 = vrot.lane.b32.xlu0 %v399, 80
    %v1089 = vpop.permute.xlu0 %1088
    %1090 = vrot.lane.b32.xlu0 %v404, 80
    %v1091 = vpop.permute.xlu0 %1090
    %1092 = vrot.lane.b32.xlu0 %v409, 80
    %v1093 = vpop.permute.xlu0 %1092
    %v1094 = vsel %vm435, %v1083, 0
    %v1096 = vsel %vm435, %v1085, 0
    %v1098 = vsel %vm435, %v1087, 0
    %v1100 = vsel %vm435, %v1089, 0
    %v1102 = vsel %vm435, %v1091, 0
    %v1104 = vsel %vm435, %v1093, 0
    %1106 = vmatprep.subr.mxu0 0.0
    %1107 = vmatpush1.xpose.msra.mxu0 0.0
    %1108 = vmatprep.subr.mxu0 0.0
    %1109 = vmatpush1.xpose.msra.mxu0 0.0
    %1110 = vmatprep.subr.mxu0 0.0
    %1111 = vmatpush1.xpose.msra.mxu0 0.0
    %1112 = vmatprep.subr.mxu0 0.0
    %1113 = vmatpush1.xpose.msra.mxu0 0.0
    %1114 = vmatprep.subr.mxu0 0.0
    %1115 = vmatpush1.xpose.msra.mxu0 0.0
    %1116 = vmatprep.subr.mxu0 0.0
    %1117 = vmatpush1.xpose.msra.mxu0 0.0
    %1118 = vmatprep.subr.mxu0 0.0
    %1119 = vmatpush1.xpose.msra.mxu0 0.0
    %1120 = vmatprep.subr.mxu0 0.0
    %1121 = vmatpush1.xpose.msra.mxu0 0.0
    %1122 = vmatprep.subr.mxu0 0.0
    %1123 = vmatpush1.xpose.msra.mxu0 0.0
    %1124 = vmatprep.subr.mxu0 0.0
    %1125 = vmatpush1.xpose.msra.mxu0 0.0
    %1126 = vmatprep.subr.mxu0 0.0
    %1127 = vmatpush1.xpose.msra.mxu0 0.0
    %1128 = vmatprep.subr.mxu0 0.0
    %1129 = vmatpush1.xpose.msra.mxu0 0.0
    %1130 = vmatprep.subr.mxu0 0.0
    %1131 = vmatpush1.xpose.msra.mxu0 0.0
    %1132 = vmatprep.subr.mxu0 0.0
    %1133 = vmatpush1.xpose.msra.mxu0 %v1104
    %1134 = vmatprep.subr.mxu0 0.0
    %1135 = vmatpush1.xpose.msra.mxu0 %v1102
    %1136 = vmatprep.subr.mxu0 0.0
    %1137 = vmatpush1.xpose.msra.mxu0 %v1100
    %1138 = vmatprep.subr.mxu0 0.0
    %1139 = vmatpush2.xpose.msra.mxu0 0.0
    %1140 = vmatprep.subr.mxu0 0.0
    %1141 = vmatpush2.xpose.msra.mxu0 0.0
    %1142 = vmatprep.subr.mxu0 0.0
    %1143 = vmatpush2.xpose.msra.mxu0 0.0
    %1144 = vmatprep.subr.mxu0 0.0
    %1145 = vmatpush2.xpose.msra.mxu0 0.0
    %1146 = vmatprep.subr.mxu0 0.0
    %1147 = vmatpush2.xpose.msra.mxu0 0.0
    %1148 = vmatprep.subr.mxu0 0.0
    %1149 = vmatpush2.xpose.msra.mxu0 0.0
    %1150 = vmatprep.subr.mxu0 0.0
    %1151 = vmatpush2.xpose.msra.mxu0 0.0
    %1152 = vmatprep.subr.mxu0 0.0
    %1153 = vmatpush2.xpose.msra.mxu0 0.0
    %1154 = vmatprep.subr.mxu0 0.0
    %1155 = vmatpush2.xpose.msra.mxu0 0.0
    %1156 = vmatprep.subr.mxu0 0.0
    %1157 = vmatpush2.xpose.msra.mxu0 0.0
    %1158 = vmatprep.subr.mxu0 0.0
    %1159 = vmatpush2.xpose.msra.mxu0 0.0
    %1160 = vmatprep.subr.mxu0 0.0
    %1161 = vmatpush2.xpose.msra.mxu0 0.0
    %1162 = vmatprep.subr.mxu0 0.0
    %1163 = vmatpush2.xpose.msra.mxu0 0.0
    %1164 = vmatprep.subr.mxu0 0.0
    %1165 = vmatpush2.xpose.msra.mxu0 0.0
    %1166 = vmatprep.subr.mxu0 0.0
    %1167 = vmatpush2.xpose.msra.mxu0 0.0
    %1168 = vmatprep.subr.mxu0 0.0
    %1169 = vmatpush2.xpose.msra.mxu0 0.0
    %1170 = vmatprep.mubr.f32.mxu0 0.0
    %1171 = vmatmul.mubr.f32.gmra.mxu0 %v1094
    %v1172 = vpop.f32.mrf.mxu0
    %v1173 = vadd.f32 0.0, %v1172
    %v1174 = vpop.f32.mrf.mxu0
    %1175 = vmatprep.mubr.f32.mxu0 0.0
    %1176 = vmatmul.mubr.f32.gmra.mxu0 %v1096
    %v1177 = vpop.f32.mrf.mxu0
    %v1178 = vadd.f32 0.0, %v1177
    %v1179 = vpop.f32.mrf.mxu0
    %1180 = vmatprep.mubr.f32.mxu0 0.0
    %1181 = vmatmul.mubr.f32.gmra.mxu0 %v1098
    %v1182 = vpop.f32.mrf.mxu0
    %v1183 = vadd.f32 0.0, %v1182
    %v1184 = vpop.f32.mrf.mxu0
    %1185 = vdwg.mxu0
    %v1186 = vmul.f32 %v1173, 0.35355338
    %v1187 = vmul.f32 %v1178, 0.35355338
    %v1188 = vmul.f32 %v1183, 0.35355338
    %v1189 = vsel %vm531, %v1186, -inf
    %1190 = vmax.xlane.f32.xlu0 %v1189
    %v1191 = vpop.xlane.xlu0 %1190
    %v1192 = vsel %vm531, %v1187, -inf
    %1193 = vmax.xlane.f32.xlu0 %v1192
    %v1194 = vpop.xlane.xlu0 %1193
    %v1195 = vsel %vm538, %v1188, -inf
    %1196 = vmax.xlane.f32.xlu0 %v1195
    %v1197 = vpop.xlane.xlu0 %1196
    %v1198 = vsub.f32 %v1186, %v1191
    %v1199 = vsub.f32 %v1187, %v1194
    %v1200 = vsub.f32 %v1188, %v1197
    %v1201 = vmul.f32 %v1198, 1.442695
    %v1202 = vpow.pop %v1201
    %v1203 = vmul.f32 %v1199, 1.442695
    %v1204 = vpow.pop %v1203
    %v1205 = vmul.f32 %v1200, 1.442695
    %v1206 = vpow.pop %v1205
    %v1207 = vsel %vm531, %v1202, 0.0
    %1208 = vadd.xlane.f32.xlu0 %v1207
    %v1209 = vpop.xlane.xlu0 %1208
    %v1210 = vsel %vm531, %v1204, 0.0
    %1211 = vadd.xlane.f32.xlu0 %v1210
    %v1212 = vpop.xlane.xlu0 %1211
    %v1213 = vsel %vm538, %v1206, 0.0
    %1214 = vadd.xlane.f32.xlu0 %v1213
    %v1215 = vpop.xlane.xlu0 %1214
    %v1216 = vrcp.pop %v1209
    %v1217 = vrcp.pop %v1212
    %v1218 = vrcp.pop %v1215
    %v1219 = vmul.f32 %v1202, %v1216
    %v1220 = vmul.f32 %v1204, %v1217
    %v1221 = vmul.f32 %v1206, %v1218
    %1222 = vrot.lane.b32.xlu0 %v399, 48
    %v1223 = vpop.permute.xlu0 %1222
    %1224 = vrot.lane.b32.xlu0 %v404, 48
    %v1225 = vpop.permute.xlu0 %1224
    %1226 = vrot.lane.b32.xlu0 %v409, 48
    %v1227 = vpop.permute.xlu0 %1226
    %v1231 = vsel %vm531, %v1219, 0
    %v1234 = vsel %vm531, %v1220, 0
    %v1237 = vsel %vm531, %v1221, 0
    %v1239 = vsel %vm90, %v1227, 0
    %1241 = vmatprep.subr.mxu0 0.0
    %1242 = vmatpush1.msra.mxu0 0.0
    %1243 = vmatprep.subr.mxu0 0.0
    %1244 = vmatpush1.msra.mxu0 0.0
    %1245 = vmatprep.subr.mxu0 0.0
    %1246 = vmatpush1.msra.mxu0 0.0
    %1247 = vmatprep.subr.mxu0 0.0
    %1248 = vmatpush1.msra.mxu0 0.0
    %1249 = vmatprep.subr.mxu0 0.0
    %1250 = vmatpush1.msra.mxu0 0.0
    %1251 = vmatprep.subr.mxu0 0.0
    %1252 = vmatpush1.msra.mxu0 0.0
    %1253 = vmatprep.subr.mxu0 0.0
    %1254 = vmatpush1.msra.mxu0 0.0
    %1255 = vmatprep.subr.mxu0 0.0
    %1256 = vmatpush1.msra.mxu0 0.0
    %1257 = vmatprep.subr.mxu0 0.0
    %1258 = vmatpush1.msra.mxu0 0.0
    %1259 = vmatprep.subr.mxu0 0.0
    %1260 = vmatpush1.msra.mxu0 0.0
    %1261 = vmatprep.subr.mxu0 0.0
    %1262 = vmatpush1.msra.mxu0 0.0
    %1263 = vmatprep.subr.mxu0 0.0
    %1264 = vmatpush1.msra.mxu0 0.0
    %1265 = vmatprep.subr.mxu0 0.0
    %1266 = vmatpush1.msra.mxu0 0.0
    %1267 = vmatprep.subr.mxu0 0.0
    %1268 = vmatpush1.msra.mxu0 %v1239
    %1269 = vmatprep.subr.mxu0 0.0
    %1270 = vmatpush1.msra.mxu0 %v1225
    %1271 = vmatprep.subr.mxu0 0.0
    %1272 = vmatpush1.msra.mxu0 %v1223
    %1273 = vmatprep.subr.mxu0 0.0
    %1274 = vmatpush2.msra.mxu0 0.0
    %1275 = vmatprep.subr.mxu0 0.0
    %1276 = vmatpush2.msra.mxu0 0.0
    %1277 = vmatprep.subr.mxu0 0.0
    %1278 = vmatpush2.msra.mxu0 0.0
    %1279 = vmatprep.subr.mxu0 0.0
    %1280 = vmatpush2.msra.mxu0 0.0
    %1281 = vmatprep.subr.mxu0 0.0
    %1282 = vmatpush2.msra.mxu0 0.0
    %1283 = vmatprep.subr.mxu0 0.0
    %1284 = vmatpush2.msra.mxu0 0.0
    %1285 = vmatprep.subr.mxu0 0.0
    %1286 = vmatpush2.msra.mxu0 0.0
    %1287 = vmatprep.subr.mxu0 0.0
    %1288 = vmatpush2.msra.mxu0 0.0
    %1289 = vmatprep.subr.mxu0 0.0
    %1290 = vmatpush2.msra.mxu0 0.0
    %1291 = vmatprep.subr.mxu0 0.0
    %1292 = vmatpush2.msra.mxu0 0.0
    %1293 = vmatprep.subr.mxu0 0.0
    %1294 = vmatpush2.msra.mxu0 0.0
    %1295 = vmatprep.subr.mxu0 0.0
    %1296 = vmatpush2.msra.mxu0 0.0
    %1297 = vmatprep.subr.mxu0 0.0
    %1298 = vmatpush2.msra.mxu0 0.0
    %1299 = vmatprep.subr.mxu0 0.0
    %1300 = vmatpush2.msra.mxu0 0.0
    %1301 = vmatprep.subr.mxu0 0.0
    %1302 = vmatpush2.msra.mxu0 0.0
    %1303 = vmatprep.subr.mxu0 0.0
    %1304 = vmatpush2.msra.mxu0 0.0
    %1305 = vmatprep.mubr.f32.mxu0 0.0
    %1306 = vmatmul.mubr.f32.gmra.mxu0 %v1231
    %v1307 = vpop.f32.mrf.mxu0
    %v1308 = vadd.f32 0.0, %v1307
    %v1309 = vpop.f32.mrf.mxu0
    %1310 = vmatprep.mubr.f32.mxu0 0.0
    %1311 = vmatmul.mubr.f32.gmra.mxu0 %v1234
    %v1312 = vpop.f32.mrf.mxu0
    %v1313 = vadd.f32 0.0, %v1312
    %v1314 = vpop.f32.mrf.mxu0
    %1315 = vmatprep.mubr.f32.mxu0 0.0
    %1316 = vmatmul.mubr.f32.gmra.mxu0 %v1237
    %v1317 = vpop.f32.mrf.mxu0
    %v1318 = vadd.f32 0.0, %v1317
    %v1319 = vpop.f32.mrf.mxu0
    %1320 = vdwg.mxu0
    %v1322 = vsel %vm435, %v1308, 0
    %v1325 = vsel %vm435, %v1313, 0
    %v1328 = vsel %vm435, %v1318, 0
    %1330 = vmatprep.subr.mxu0 0.0
    %1331 = vmatpush1.msra.mxu0 0.0
    %1332 = vmatprep.subr.mxu0 0.0
    %1333 = vmatpush1.msra.mxu0 0.0
    %1334 = vmatprep.subr.mxu0 0.0
    %1335 = vmatpush1.msra.mxu0 0.0
    %1336 = vmatprep.subr.mxu0 0.0
    %1337 = vmatpush1.msra.mxu0 0.0
    %1338 = vmatprep.subr.mxu0 0.0
    %1339 = vmatpush1.msra.mxu0 0.0
    %1340 = vmatprep.subr.mxu0 0.0
    %1341 = vmatpush1.msra.mxu0 0.0
    %1342 = vmatprep.subr.mxu0 0.0
    %1343 = vmatpush1.msra.mxu0 0.0
    %1344 = vmatprep.subr.mxu0 0.0
    %1345 = vmatpush1.msra.mxu0 0.0
    %1346 = vmatprep.subr.mxu0 0.0
    %1347 = vmatpush1.msra.mxu0 0.0
    %1348 = vmatprep.subr.mxu0 0.0
    %1349 = vmatpush1.msra.mxu0 0.0
    %1350 = vmatprep.subr.mxu0 0.0
    %1351 = vmatpush1.msra.mxu0 0.0
    %1352 = vmatprep.subr.mxu0 0.0
    %1353 = vmatpush1.msra.mxu0 0.0
    %1354 = vmatprep.subr.mxu0 0.0
    %1355 = vmatpush1.msra.mxu0 0.0
    %1356 = vmatprep.subr.mxu0 0.0
    %1357 = vmatpush1.msra.mxu0 0.0
    %1358 = vmatprep.subr.mxu0 0.0
    %1359 = vmatpush1.msra.mxu0 0.0
    %1360 = vmatprep.subr.mxu0 0.0
    %1361 = vmatpush1.msra.mxu0 %v424
    %1362 = vmatprep.subr.mxu0 0.0
    %1363 = vmatpush2.msra.mxu0 0.0
    %1364 = vmatprep.subr.mxu0 0.0
    %1365 = vmatpush2.msra.mxu0 0.0
    %1366 = vmatprep.subr.mxu0 0.0
    %1367 = vmatpush2.msra.mxu0 0.0
    %1368 = vmatprep.subr.mxu0 0.0
    %1369 = vmatpush2.msra.mxu0 0.0
    %1370 = vmatprep.subr.mxu0 0.0
    %1371 = vmatpush2.msra.mxu0 0.0
    %1372 = vmatprep.subr.mxu0 0.0
    %1373 = vmatpush2.msra.mxu0 0.0
    %1374 = vmatprep.subr.mxu0 0.0
    %1375 = vmatpush2.msra.mxu0 0.0
    %1376 = vmatprep.subr.mxu0 0.0
    %1377 = vmatpush2.msra.mxu0 0.0
    %1378 = vmatprep.subr.mxu0 0.0
    %1379 = vmatpush2.msra.mxu0 0.0
    %1380 = vmatprep.subr.mxu0 0.0
    %1381 = vmatpush2.msra.mxu0 0.0
    %1382 = vmatprep.subr.mxu0 0.0
    %1383 = vmatpush2.msra.mxu0 0.0
    %1384 = vmatprep.subr.mxu0 0.0
    %1385 = vmatpush2.msra.mxu0 0.0
    %1386 = vmatprep.subr.mxu0 0.0
    %1387 = vmatpush2.msra.mxu0 0.0
    %1388 = vmatprep.subr.mxu0 0.0
    %1389 = vmatpush2.msra.mxu0 0.0
    %1390 = vmatprep.subr.mxu0 0.0
    %1391 = vmatpush2.msra.mxu0 0.0
    %1392 = vmatprep.subr.mxu0 0.0
    %1393 = vmatpush2.msra.mxu0 0.0
    %1394 = vmatprep.mubr.f32.mxu0 0.0
    %1395 = vmatmul.mubr.f32.gmra.mxu0 %v1322
    %v1396 = vpop.f32.mrf.mxu0
    %v1397 = vadd.f32 0.0, %v1396
    %v1398 = vpop.f32.mrf.mxu0
    %1399 = vmatprep.mubr.f32.mxu0 0.0
    %1400 = vmatmul.mubr.f32.gmra.mxu0 %v1325
    %v1401 = vpop.f32.mrf.mxu0
    %v1402 = vadd.f32 0.0, %v1401
    %v1403 = vpop.f32.mrf.mxu0
    %1404 = vmatprep.mubr.f32.mxu0 0.0
    %1405 = vmatmul.mubr.f32.gmra.mxu0 %v1328
    %v1406 = vpop.f32.mrf.mxu0
    %v1407 = vadd.f32 0.0, %v1406
    %v1408 = vpop.f32.mrf.mxu0
    %1409 = vdwg.mxu0
    %v1410 = vadd.f32 %v1069, %v1397
    %v1411 = vadd.f32 %v1074, %v1402
    %v1412 = vadd.f32 %v1079, %v1407
    %1413 = vrot.lane.b32.xlu0 %v399, 104
    %v1414 = vpop.permute.xlu0 %1413
    %1415 = vrot.lane.b32.xlu0 %v404, 104
    %v1416 = vpop.permute.xlu0 %1415
    %1417 = vrot.lane.b32.xlu0 %v409, 104
    %v1418 = vpop.permute.xlu0 %1417
    %1419 = vrot.lane.b32.xlu0 %v399, 72
    %v1420 = vpop.permute.xlu0 %1419
    %1421 = vrot.lane.b32.xlu0 %v404, 72
    %v1422 = vpop.permute.xlu0 %1421
    %1423 = vrot.lane.b32.xlu0 %v409, 72
    %v1424 = vpop.permute.xlu0 %1423
    %v1425 = vsel %vm435, %v1414, 0
    %v1427 = vsel %vm435, %v1416, 0
    %v1429 = vsel %vm435, %v1418, 0
    %v1431 = vsel %vm435, %v1420, 0
    %v1433 = vsel %vm435, %v1422, 0
    %v1435 = vsel %vm435, %v1424, 0
    %1437 = vmatprep.subr.mxu0 0.0
    %1438 = vmatpush1.xpose.msra.mxu0 0.0
    %1439 = vmatprep.subr.mxu0 0.0
    %1440 = vmatpush1.xpose.msra.mxu0 0.0
    %1441 = vmatprep.subr.mxu0 0.0
    %1442 = vmatpush1.xpose.msra.mxu0 0.0
    %1443 = vmatprep.subr.mxu0 0.0
    %1444 = vmatpush1.xpose.msra.mxu0 0.0
    %1445 = vmatprep.subr.mxu0 0.0
    %1446 = vmatpush1.xpose.msra.mxu0 0.0
    %1447 = vmatprep.subr.mxu0 0.0
    %1448 = vmatpush1.xpose.msra.mxu0 0.0
    %1449 = vmatprep.subr.mxu0 0.0
    %1450 = vmatpush1.xpose.msra.mxu0 0.0
    %1451 = vmatprep.subr.mxu0 0.0
    %1452 = vmatpush1.xpose.msra.mxu0 0.0
    %1453 = vmatprep.subr.mxu0 0.0
    %1454 = vmatpush1.xpose.msra.mxu0 0.0
    %1455 = vmatprep.subr.mxu0 0.0
    %1456 = vmatpush1.xpose.msra.mxu0 0.0
    %1457 = vmatprep.subr.mxu0 0.0
    %1458 = vmatpush1.xpose.msra.mxu0 0.0
    %1459 = vmatprep.subr.mxu0 0.0
    %1460 = vmatpush1.xpose.msra.mxu0 0.0
    %1461 = vmatprep.subr.mxu0 0.0
    %1462 = vmatpush1.xpose.msra.mxu0 0.0
    %1463 = vmatprep.subr.mxu0 0.0
    %1464 = vmatpush1.xpose.msra.mxu0 %v1435
    %1465 = vmatprep.subr.mxu0 0.0
    %1466 = vmatpush1.xpose.msra.mxu0 %v1433
    %1467 = vmatprep.subr.mxu0 0.0
    %1468 = vmatpush1.xpose.msra.mxu0 %v1431
    %1469 = vmatprep.subr.mxu0 0.0
    %1470 = vmatpush2.xpose.msra.mxu0 0.0
    %1471 = vmatprep.subr.mxu0 0.0
    %1472 = vmatpush2.xpose.msra.mxu0 0.0
    %1473 = vmatprep.subr.mxu0 0.0
    %1474 = vmatpush2.xpose.msra.mxu0 0.0
    %1475 = vmatprep.subr.mxu0 0.0
    %1476 = vmatpush2.xpose.msra.mxu0 0.0
    %1477 = vmatprep.subr.mxu0 0.0
    %1478 = vmatpush2.xpose.msra.mxu0 0.0
    %1479 = vmatprep.subr.mxu0 0.0
    %1480 = vmatpush2.xpose.msra.mxu0 0.0
    %1481 = vmatprep.subr.mxu0 0.0
    %1482 = vmatpush2.xpose.msra.mxu0 0.0
    %1483 = vmatprep.subr.mxu0 0.0
    %1484 = vmatpush2.xpose.msra.mxu0 0.0
    %1485 = vmatprep.subr.mxu0 0.0
    %1486 = vmatpush2.xpose.msra.mxu0 0.0
    %1487 = vmatprep.subr.mxu0 0.0
    %1488 = vmatpush2.xpose.msra.mxu0 0.0
    %1489 = vmatprep.subr.mxu0 0.0
    %1490 = vmatpush2.xpose.msra.mxu0 0.0
    %1491 = vmatprep.subr.mxu0 0.0
    %1492 = vmatpush2.xpose.msra.mxu0 0.0
    %1493 = vmatprep.subr.mxu0 0.0
    %1494 = vmatpush2.xpose.msra.mxu0 0.0
    %1495 = vmatprep.subr.mxu0 0.0
    %1496 = vmatpush2.xpose.msra.mxu0 0.0
    %1497 = vmatprep.subr.mxu0 0.0
    %1498 = vmatpush2.xpose.msra.mxu0 0.0
    %1499 = vmatprep.subr.mxu0 0.0
    %1500 = vmatpush2.xpose.msra.mxu0 0.0
    %1501 = vmatprep.mubr.f32.mxu0 0.0
    %1502 = vmatmul.mubr.f32.gmra.mxu0 %v1425
    %v1503 = vpop.f32.mrf.mxu0
    %v1504 = vadd.f32 0.0, %v1503
    %v1505 = vpop.f32.mrf.mxu0
    %1506 = vmatprep.mubr.f32.mxu0 0.0
    %1507 = vmatmul.mubr.f32.gmra.mxu0 %v1427
    %v1508 = vpop.f32.mrf.mxu0
    %v1509 = vadd.f32 0.0, %v1508
    %v1510 = vpop.f32.mrf.mxu0
    %1511 = vmatprep.mubr.f32.mxu0 0.0
    %1512 = vmatmul.mubr.f32.gmra.mxu0 %v1429
    %v1513 = vpop.f32.mrf.mxu0
    %v1514 = vadd.f32 0.0, %v1513
    %v1515 = vpop.f32.mrf.mxu0
    %1516 = vdwg.mxu0
    %v1517 = vmul.f32 %v1504, 0.35355338
    %v1518 = vmul.f32 %v1509, 0.35355338
    %v1519 = vmul.f32 %v1514, 0.35355338
    %v1520 = vsel %vm531, %v1517, -inf
    %1521 = vmax.xlane.f32.xlu0 %v1520
    %v1522 = vpop.xlane.xlu0 %1521
    %v1523 = vsel %vm531, %v1518, -inf
    %1524 = vmax.xlane.f32.xlu0 %v1523
    %v1525 = vpop.xlane.xlu0 %1524
    %v1526 = vsel %vm538, %v1519, -inf
    %1527 = vmax.xlane.f32.xlu0 %v1526
    %v1528 = vpop.xlane.xlu0 %1527
    %v1529 = vsub.f32 %v1517, %v1522
    %v1530 = vsub.f32 %v1518, %v1525
    %v1531 = vsub.f32 %v1519, %v1528
    %v1532 = vmul.f32 %v1529, 1.442695
    %v1533 = vpow.pop %v1532
    %v1534 = vmul.f32 %v1530, 1.442695
    %v1535 = vpow.pop %v1534
    %v1536 = vmul.f32 %v1531, 1.442695
    %v1537 = vpow.pop %v1536
    %v1538 = vsel %vm531, %v1533, 0.0
    %1539 = vadd.xlane.f32.xlu0 %v1538
    %v1540 = vpop.xlane.xlu0 %1539
    %v1541 = vsel %vm531, %v1535, 0.0
    %1542 = vadd.xlane.f32.xlu0 %v1541
    %v1543 = vpop.xlane.xlu0 %1542
    %v1544 = vsel %vm538, %v1537, 0.0
    %1545 = vadd.xlane.f32.xlu0 %v1544
    %v1546 = vpop.xlane.xlu0 %1545
    %v1547 = vrcp.pop %v1540
    %v1548 = vrcp.pop %v1543
    %v1549 = vrcp.pop %v1546
    %v1550 = vmul.f32 %v1533, %v1547
    %v1551 = vmul.f32 %v1535, %v1548
    %v1552 = vmul.f32 %v1537, %v1549
    %1553 = vrot.lane.b32.xlu0 %v399, 40
    %v1554 = vpop.permute.xlu0 %1553
    %1555 = vrot.lane.b32.xlu0 %v404, 40
    %v1556 = vpop.permute.xlu0 %1555
    %1557 = vrot.lane.b32.xlu0 %v409, 40
    %v1558 = vpop.permute.xlu0 %1557
    %v1562 = vsel %vm531, %v1550, 0
    %v1565 = vsel %vm531, %v1551, 0
    %v1568 = vsel %vm531, %v1552, 0
    %v1570 = vsel %vm90, %v1558, 0
    %1572 = vmatprep.subr.mxu0 0.0
    %1573 = vmatpush1.msra.mxu0 0.0
    %1574 = vmatprep.subr.mxu0 0.0
    %1575 = vmatpush1.msra.mxu0 0.0
    %1576 = vmatprep.subr.mxu0 0.0
    %1577 = vmatpush1.msra.mxu0 0.0
    %1578 = vmatprep.subr.mxu0 0.0
    %1579 = vmatpush1.msra.mxu0 0.0
    %1580 = vmatprep.subr.mxu0 0.0
    %1581 = vmatpush1.msra.mxu0 0.0
    %1582 = vmatprep.subr.mxu0 0.0
    %1583 = vmatpush1.msra.mxu0 0.0
    %1584 = vmatprep.subr.mxu0 0.0
    %1585 = vmatpush1.msra.mxu0 0.0
    %1586 = vmatprep.subr.mxu0 0.0
    %1587 = vmatpush1.msra.mxu0 0.0
    %1588 = vmatprep.subr.mxu0 0.0
    %1589 = vmatpush1.msra.mxu0 0.0
    %1590 = vmatprep.subr.mxu0 0.0
    %1591 = vmatpush1.msra.mxu0 0.0
    %1592 = vmatprep.subr.mxu0 0.0
    %1593 = vmatpush1.msra.mxu0 0.0
    %1594 = vmatprep.subr.mxu0 0.0
    %1595 = vmatpush1.msra.mxu0 0.0
    %1596 = vmatprep.subr.mxu0 0.0
    %1597 = vmatpush1.msra.mxu0 0.0
    %1598 = vmatprep.subr.mxu0 0.0
    %1599 = vmatpush1.msra.mxu0 %v1570
    %1600 = vmatprep.subr.mxu0 0.0
    %1601 = vmatpush1.msra.mxu0 %v1556
    %1602 = vmatprep.subr.mxu0 0.0
    %1603 = vmatpush1.msra.mxu0 %v1554
    %1604 = vmatprep.subr.mxu0 0.0
    %1605 = vmatpush2.msra.mxu0 0.0
    %1606 = vmatprep.subr.mxu0 0.0
    %1607 = vmatpush2.msra.mxu0 0.0
    %1608 = vmatprep.subr.mxu0 0.0
    %1609 = vmatpush2.msra.mxu0 0.0
    %1610 = vmatprep.subr.mxu0 0.0
    %1611 = vmatpush2.msra.mxu0 0.0
    %1612 = vmatprep.subr.mxu0 0.0
    %1613 = vmatpush2.msra.mxu0 0.0
    %1614 = vmatprep.subr.mxu0 0.0
    %1615 = vmatpush2.msra.mxu0 0.0
    %1616 = vmatprep.subr.mxu0 0.0
    %1617 = vmatpush2.msra.mxu0 0.0
    %1618 = vmatprep.subr.mxu0 0.0
    %1619 = vmatpush2.msra.mxu0 0.0
    %1620 = vmatprep.subr.mxu0 0.0
    %1621 = vmatpush2.msra.mxu0 0.0
    %1622 = vmatprep.subr.mxu0 0.0
    %1623 = vmatpush2.msra.mxu0 0.0
    %1624 = vmatprep.subr.mxu0 0.0
    %1625 = vmatpush2.msra.mxu0 0.0
    %1626 = vmatprep.subr.mxu0 0.0
    %1627 = vmatpush2.msra.mxu0 0.0
    %1628 = vmatprep.subr.mxu0 0.0
    %1629 = vmatpush2.msra.mxu0 0.0
    %1630 = vmatprep.subr.mxu0 0.0
    %1631 = vmatpush2.msra.mxu0 0.0
    %1632 = vmatprep.subr.mxu0 0.0
    %1633 = vmatpush2.msra.mxu0 0.0
    %1634 = vmatprep.subr.mxu0 0.0
    %1635 = vmatpush2.msra.mxu0 0.0
    %1636 = vmatprep.mubr.f32.mxu0 0.0
    %1637 = vmatmul.mubr.f32.gmra.mxu0 %v1562
    %v1638 = vpop.f32.mrf.mxu0
    %v1639 = vadd.f32 0.0, %v1638
    %v1640 = vpop.f32.mrf.mxu0
    %1641 = vmatprep.mubr.f32.mxu0 0.0
    %1642 = vmatmul.mubr.f32.gmra.mxu0 %v1565
    %v1643 = vpop.f32.mrf.mxu0
    %v1644 = vadd.f32 0.0, %v1643
    %v1645 = vpop.f32.mrf.mxu0
    %1646 = vmatprep.mubr.f32.mxu0 0.0
    %1647 = vmatmul.mubr.f32.gmra.mxu0 %v1568
    %v1648 = vpop.f32.mrf.mxu0
    %v1649 = vadd.f32 0.0, %v1648
    %v1650 = vpop.f32.mrf.mxu0
    %1651 = vdwg.mxu0
    %v1653 = vsel %vm435, %v1639, 0
    %v1656 = vsel %vm435, %v1644, 0
    %v1659 = vsel %vm435, %v1649, 0
    %1661 = vmatprep.subr.mxu0 0.0
    %1662 = vmatpush1.msra.mxu0 0.0
    %1663 = vmatprep.subr.mxu0 0.0
    %1664 = vmatpush1.msra.mxu0 0.0
    %1665 = vmatprep.subr.mxu0 0.0
    %1666 = vmatpush1.msra.mxu0 0.0
    %1667 = vmatprep.subr.mxu0 0.0
    %1668 = vmatpush1.msra.mxu0 0.0
    %1669 = vmatprep.subr.mxu0 0.0
    %1670 = vmatpush1.msra.mxu0 0.0
    %1671 = vmatprep.subr.mxu0 0.0
    %1672 = vmatpush1.msra.mxu0 0.0
    %1673 = vmatprep.subr.mxu0 0.0
    %1674 = vmatpush1.msra.mxu0 0.0
    %1675 = vmatprep.subr.mxu0 0.0
    %1676 = vmatpush1.msra.mxu0 0.0
    %1677 = vmatprep.subr.mxu0 0.0
    %1678 = vmatpush1.msra.mxu0 0.0
    %1679 = vmatprep.subr.mxu0 0.0
    %1680 = vmatpush1.msra.mxu0 0.0
    %1681 = vmatprep.subr.mxu0 0.0
    %1682 = vmatpush1.msra.mxu0 0.0
    %1683 = vmatprep.subr.mxu0 0.0
    %1684 = vmatpush1.msra.mxu0 0.0
    %1685 = vmatprep.subr.mxu0 0.0
    %1686 = vmatpush1.msra.mxu0 0.0
    %1687 = vmatprep.subr.mxu0 0.0
    %1688 = vmatpush1.msra.mxu0 0.0
    %1689 = vmatprep.subr.mxu0 0.0
    %1690 = vmatpush1.msra.mxu0 0.0
    %1691 = vmatprep.subr.mxu0 0.0
    %1692 = vmatpush1.msra.mxu0 %v425
    %1693 = vmatprep.subr.mxu0 0.0
    %1694 = vmatpush2.msra.mxu0 0.0
    %1695 = vmatprep.subr.mxu0 0.0
    %1696 = vmatpush2.msra.mxu0 0.0
    %1697 = vmatprep.subr.mxu0 0.0
    %1698 = vmatpush2.msra.mxu0 0.0
    %1699 = vmatprep.subr.mxu0 0.0
    %1700 = vmatpush2.msra.mxu0 0.0
    %1701 = vmatprep.subr.mxu0 0.0
    %1702 = vmatpush2.msra.mxu0 0.0
    %1703 = vmatprep.subr.mxu0 0.0
    %1704 = vmatpush2.msra.mxu0 0.0
    %1705 = vmatprep.subr.mxu0 0.0
    %1706 = vmatpush2.msra.mxu0 0.0
    %1707 = vmatprep.subr.mxu0 0.0
    %1708 = vmatpush2.msra.mxu0 0.0
    %1709 = vmatprep.subr.mxu0 0.0
    %1710 = vmatpush2.msra.mxu0 0.0
    %1711 = vmatprep.subr.mxu0 0.0
    %1712 = vmatpush2.msra.mxu0 0.0
    %1713 = vmatprep.subr.mxu0 0.0
    %1714 = vmatpush2.msra.mxu0 0.0
    %1715 = vmatprep.subr.mxu0 0.0
    %1716 = vmatpush2.msra.mxu0 0.0
    %1717 = vmatprep.subr.mxu0 0.0
    %1718 = vmatpush2.msra.mxu0 0.0
    %1719 = vmatprep.subr.mxu0 0.0
    %1720 = vmatpush2.msra.mxu0 0.0
    %1721 = vmatprep.subr.mxu0 0.0
    %1722 = vmatpush2.msra.mxu0 0.0
    %1723 = vmatprep.subr.mxu0 0.0
    %1724 = vmatpush2.msra.mxu0 0.0
    %1725 = vmatprep.mubr.f32.mxu0 0.0
    %1726 = vmatmul.mubr.f32.gmra.mxu0 %v1653
    %v1727 = vpop.f32.mrf.mxu0
    %v1728 = vadd.f32 0.0, %v1727
    %v1729 = vpop.f32.mrf.mxu0
    %1730 = vmatprep.mubr.f32.mxu0 0.0
    %1731 = vmatmul.mubr.f32.gmra.mxu0 %v1656
    %v1732 = vpop.f32.mrf.mxu0
    %v1733 = vadd.f32 0.0, %v1732
    %v1734 = vpop.f32.mrf.mxu0
    %1735 = vmatprep.mubr.f32.mxu0 0.0
    %1736 = vmatmul.mubr.f32.gmra.mxu0 %v1659
    %v1737 = vpop.f32.mrf.mxu0
    %v1738 = vadd.f32 0.0, %v1737
    %v1739 = vpop.f32.mrf.mxu0
    %1740 = vdwg.mxu0
    %v1741 = vadd.f32 %v1410, %v1728
    %v1742 = vadd.f32 %v1411, %v1733
    %v1743 = vadd.f32 %v1412, %v1738
    %vm1746 = vcmask 1046528
    %v1747 = vrot.slane %v409, 1
    %v1748 = vrot.slane %v414, 1
    %v1749 = vsel %vm1746, %v1747, %v1748
    %v1750 = vrot.slane %v419, 1
    %v1751 = vsel %vm1746, %v1748, %v1750
    %1752 = vrot.lane.b32.xlu0 %v1749, 96
    %v1753 = vpop.permute.xlu0 %1752
    %1754 = vrot.lane.b32.xlu0 %v1751, 96
    %v1755 = vpop.permute.xlu0 %1754
    %1756 = vrot.lane.b32.xlu0 %v1750, 96
    %v1757 = vpop.permute.xlu0 %1756
    %v1758 = vsel %vm435, %v1749, 0
    %v1760 = vsel %vm435, %v1751, 0
    %v1762 = vsel %vm435, %v1750, 0
    %v1764 = vsel %vm435, %v1753, 0
    %v1766 = vsel %vm435, %v1755, 0
    %v1768 = vsel %vm435, %v1757, 0
    %1770 = vmatprep.subr.mxu0 0.0
    %1771 = vmatpush1.xpose.msra.mxu0 0.0
    %1772 = vmatprep.subr.mxu0 0.0
    %1773 = vmatpush1.xpose.msra.mxu0 0.0
    %1774 = vmatprep.subr.mxu0 0.0
    %1775 = vmatpush1.xpose.msra.mxu0 0.0
    %1776 = vmatprep.subr.mxu0 0.0
    %1777 = vmatpush1.xpose.msra.mxu0 0.0
    %1778 = vmatprep.subr.mxu0 0.0
    %1779 = vmatpush1.xpose.msra.mxu0 0.0
    %1780 = vmatprep.subr.mxu0 0.0
    %1781 = vmatpush1.xpose.msra.mxu0 0.0
    %1782 = vmatprep.subr.mxu0 0.0
    %1783 = vmatpush1.xpose.msra.mxu0 0.0
    %1784 = vmatprep.subr.mxu0 0.0
    %1785 = vmatpush1.xpose.msra.mxu0 0.0
    %1786 = vmatprep.subr.mxu0 0.0
    %1787 = vmatpush1.xpose.msra.mxu0 0.0
    %1788 = vmatprep.subr.mxu0 0.0
    %1789 = vmatpush1.xpose.msra.mxu0 0.0
    %1790 = vmatprep.subr.mxu0 0.0
    %1791 = vmatpush1.xpose.msra.mxu0 0.0
    %1792 = vmatprep.subr.mxu0 0.0
    %1793 = vmatpush1.xpose.msra.mxu0 0.0
    %1794 = vmatprep.subr.mxu0 0.0
    %1795 = vmatpush1.xpose.msra.mxu0 0.0
    %1796 = vmatprep.subr.mxu0 0.0
    %1797 = vmatpush1.xpose.msra.mxu0 %v1768
    %1798 = vmatprep.subr.mxu0 0.0
    %1799 = vmatpush1.xpose.msra.mxu0 %v1766
    %1800 = vmatprep.subr.mxu0 0.0
    %1801 = vmatpush1.xpose.msra.mxu0 %v1764
    %1802 = vmatprep.subr.mxu0 0.0
    %1803 = vmatpush2.xpose.msra.mxu0 0.0
    %1804 = vmatprep.subr.mxu0 0.0
    %1805 = vmatpush2.xpose.msra.mxu0 0.0
    %1806 = vmatprep.subr.mxu0 0.0
    %1807 = vmatpush2.xpose.msra.mxu0 0.0
    %1808 = vmatprep.subr.mxu0 0.0
    %1809 = vmatpush2.xpose.msra.mxu0 0.0
    %1810 = vmatprep.subr.mxu0 0.0
    %1811 = vmatpush2.xpose.msra.mxu0 0.0
    %1812 = vmatprep.subr.mxu0 0.0
    %1813 = vmatpush2.xpose.msra.mxu0 0.0
    %1814 = vmatprep.subr.mxu0 0.0
    %1815 = vmatpush2.xpose.msra.mxu0 0.0
    %1816 = vmatprep.subr.mxu0 0.0
    %1817 = vmatpush2.xpose.msra.mxu0 0.0
    %1818 = vmatprep.subr.mxu0 0.0
    %1819 = vmatpush2.xpose.msra.mxu0 0.0
    %1820 = vmatprep.subr.mxu0 0.0
    %1821 = vmatpush2.xpose.msra.mxu0 0.0
    %1822 = vmatprep.subr.mxu0 0.0
    %1823 = vmatpush2.xpose.msra.mxu0 0.0
    %1824 = vmatprep.subr.mxu0 0.0
    %1825 = vmatpush2.xpose.msra.mxu0 0.0
    %1826 = vmatprep.subr.mxu0 0.0
    %1827 = vmatpush2.xpose.msra.mxu0 0.0
    %1828 = vmatprep.subr.mxu0 0.0
    %1829 = vmatpush2.xpose.msra.mxu0 0.0
    %1830 = vmatprep.subr.mxu0 0.0
    %1831 = vmatpush2.xpose.msra.mxu0 0.0
    %1832 = vmatprep.subr.mxu0 0.0
    %1833 = vmatpush2.xpose.msra.mxu0 0.0
    %1834 = vmatprep.mubr.f32.mxu0 0.0
    %1835 = vmatmul.mubr.f32.gmra.mxu0 %v1758
    %v1836 = vpop.f32.mrf.mxu0
    %v1837 = vadd.f32 0.0, %v1836
    %v1838 = vpop.f32.mrf.mxu0
    %1839 = vmatprep.mubr.f32.mxu0 0.0
    %1840 = vmatmul.mubr.f32.gmra.mxu0 %v1760
    %v1841 = vpop.f32.mrf.mxu0
    %v1842 = vadd.f32 0.0, %v1841
    %v1843 = vpop.f32.mrf.mxu0
    %1844 = vmatprep.mubr.f32.mxu0 0.0
    %1845 = vmatmul.mubr.f32.gmra.mxu0 %v1762
    %v1846 = vpop.f32.mrf.mxu0
    %v1847 = vadd.f32 0.0, %v1846
    %v1848 = vpop.f32.mrf.mxu0
    %1849 = vdwg.mxu0
    %v1850 = vmul.f32 %v1837, 0.35355338
    %v1851 = vmul.f32 %v1842, 0.35355338
    %v1852 = vmul.f32 %v1847, 0.35355338
    %v1853 = vsel %vm531, %v1850, -inf
    %1854 = vmax.xlane.f32.xlu0 %v1853
    %v1855 = vpop.xlane.xlu0 %1854
    %v1856 = vsel %vm531, %v1851, -inf
    %1857 = vmax.xlane.f32.xlu0 %v1856
    %v1858 = vpop.xlane.xlu0 %1857
    %v1859 = vsel %vm538, %v1852, -inf
    %1860 = vmax.xlane.f32.xlu0 %v1859
    %v1861 = vpop.xlane.xlu0 %1860
    %v1862 = vsub.f32 %v1850, %v1855
    %v1863 = vsub.f32 %v1851, %v1858
    %v1864 = vsub.f32 %v1852, %v1861
    %v1865 = vmul.f32 %v1862, 1.442695
    %v1866 = vpow.pop %v1865
    %v1867 = vmul.f32 %v1863, 1.442695
    %v1868 = vpow.pop %v1867
    %v1869 = vmul.f32 %v1864, 1.442695
    %v1870 = vpow.pop %v1869
    %v1871 = vsel %vm531, %v1866, 0.0
    %1872 = vadd.xlane.f32.xlu0 %v1871
    %v1873 = vpop.xlane.xlu0 %1872
    %v1874 = vsel %vm531, %v1868, 0.0
    %1875 = vadd.xlane.f32.xlu0 %v1874
    %v1876 = vpop.xlane.xlu0 %1875
    %v1877 = vsel %vm538, %v1870, 0.0
    %1878 = vadd.xlane.f32.xlu0 %v1877
    %v1879 = vpop.xlane.xlu0 %1878
    %v1880 = vrcp.pop %v1873
    %v1881 = vrcp.pop %v1876
    %v1882 = vrcp.pop %v1879
    %v1883 = vmul.f32 %v1866, %v1880
    %v1884 = vmul.f32 %v1868, %v1881
    %v1885 = vmul.f32 %v1870, %v1882
    %1886 = vrot.lane.b32.xlu0 %v1749, 64
    %v1887 = vpop.permute.xlu0 %1886
    %1888 = vrot.lane.b32.xlu0 %v1751, 64
    %v1889 = vpop.permute.xlu0 %1888
    %1890 = vrot.lane.b32.xlu0 %v1750, 64
    %v1891 = vpop.permute.xlu0 %1890
    %v1895 = vsel %vm531, %v1883, 0
    %v1898 = vsel %vm531, %v1884, 0
    %v1901 = vsel %vm531, %v1885, 0
    %v1903 = vsel %vm90, %v1891, 0
    %1905 = vmatprep.subr.mxu0 0.0
    %1906 = vmatpush1.msra.mxu0 0.0
    %1907 = vmatprep.subr.mxu0 0.0
    %1908 = vmatpush1.msra.mxu0 0.0
    %1909 = vmatprep.subr.mxu0 0.0
    %1910 = vmatpush1.msra.mxu0 0.0
    %1911 = vmatprep.subr.mxu0 0.0
    %1912 = vmatpush1.msra.mxu0 0.0
    %1913 = vmatprep.subr.mxu0 0.0
    %1914 = vmatpush1.msra.mxu0 0.0
    %1915 = vmatprep.subr.mxu0 0.0
    %1916 = vmatpush1.msra.mxu0 0.0
    %1917 = vmatprep.subr.mxu0 0.0
    %1918 = vmatpush1.msra.mxu0 0.0
    %1919 = vmatprep.subr.mxu0 0.0
    %1920 = vmatpush1.msra.mxu0 0.0
    %1921 = vmatprep.subr.mxu0 0.0
    %1922 = vmatpush1.msra.mxu0 0.0
    %1923 = vmatprep.subr.mxu0 0.0
    %1924 = vmatpush1.msra.mxu0 0.0
    %1925 = vmatprep.subr.mxu0 0.0
    %1926 = vmatpush1.msra.mxu0 0.0
    %1927 = vmatprep.subr.mxu0 0.0
    %1928 = vmatpush1.msra.mxu0 0.0
    %1929 = vmatprep.subr.mxu0 0.0
    %1930 = vmatpush1.msra.mxu0 0.0
    %1931 = vmatprep.subr.mxu0 0.0
    %1932 = vmatpush1.msra.mxu0 %v1903
    %1933 = vmatprep.subr.mxu0 0.0
    %1934 = vmatpush1.msra.mxu0 %v1889
    %1935 = vmatprep.subr.mxu0 0.0
    %1936 = vmatpush1.msra.mxu0 %v1887
    %1937 = vmatprep.subr.mxu0 0.0
    %1938 = vmatpush2.msra.mxu0 0.0
    %1939 = vmatprep.subr.mxu0 0.0
    %1940 = vmatpush2.msra.mxu0 0.0
    %1941 = vmatprep.subr.mxu0 0.0
    %1942 = vmatpush2.msra.mxu0 0.0
    %1943 = vmatprep.subr.mxu0 0.0
    %1944 = vmatpush2.msra.mxu0 0.0
    %1945 = vmatprep.subr.mxu0 0.0
    %1946 = vmatpush2.msra.mxu0 0.0
    %1947 = vmatprep.subr.mxu0 0.0
    %1948 = vmatpush2.msra.mxu0 0.0
    %1949 = vmatprep.subr.mxu0 0.0
    %1950 = vmatpush2.msra.mxu0 0.0
    %1951 = vmatprep.subr.mxu0 0.0
    %1952 = vmatpush2.msra.mxu0 0.0
    %1953 = vmatprep.subr.mxu0 0.0
    %1954 = vmatpush2.msra.mxu0 0.0
    %1955 = vmatprep.subr.mxu0 0.0
    %1956 = vmatpush2.msra.mxu0 0.0
    %1957 = vmatprep.subr.mxu0 0.0
    %1958 = vmatpush2.msra.mxu0 0.0
    %1959 = vmatprep.subr.mxu0 0.0
    %1960 = vmatpush2.msra.mxu0 0.0
    %1961 = vmatprep.subr.mxu0 0.0
    %1962 = vmatpush2.msra.mxu0 0.0
    %1963 = vmatprep.subr.mxu0 0.0
    %1964 = vmatpush2.msra.mxu0 0.0
    %1965 = vmatprep.subr.mxu0 0.0
    %1966 = vmatpush2.msra.mxu0 0.0
    %1967 = vmatprep.subr.mxu0 0.0
    %1968 = vmatpush2.msra.mxu0 0.0
    %1969 = vmatprep.mubr.f32.mxu0 0.0
    %1970 = vmatmul.mubr.f32.gmra.mxu0 %v1895
    %v1971 = vpop.f32.mrf.mxu0
    %v1972 = vadd.f32 0.0, %v1971
    %v1973 = vpop.f32.mrf.mxu0
    %1974 = vmatprep.mubr.f32.mxu0 0.0
    %1975 = vmatmul.mubr.f32.gmra.mxu0 %v1898
    %v1976 = vpop.f32.mrf.mxu0
    %v1977 = vadd.f32 0.0, %v1976
    %v1978 = vpop.f32.mrf.mxu0
    %1979 = vmatprep.mubr.f32.mxu0 0.0
    %1980 = vmatmul.mubr.f32.gmra.mxu0 %v1901
    %v1981 = vpop.f32.mrf.mxu0
    %v1982 = vadd.f32 0.0, %v1981
    %v1983 = vpop.f32.mrf.mxu0
    %1984 = vdwg.mxu0
    %1985 = vrot.lane.b32.xlu0 %v1749, 120
    %v1986 = vpop.permute.xlu0 %1985
    %1987 = vrot.lane.b32.xlu0 %v1751, 120
    %v1988 = vpop.permute.xlu0 %1987
    %1989 = vrot.lane.b32.xlu0 %v1750, 120
    %v1990 = vpop.permute.xlu0 %1989
    %1991 = vrot.lane.b32.xlu0 %v1749, 88
    %v1992 = vpop.permute.xlu0 %1991
    %1993 = vrot.lane.b32.xlu0 %v1751, 88
    %v1994 = vpop.permute.xlu0 %1993
    %1995 = vrot.lane.b32.xlu0 %v1750, 88
    %v1996 = vpop.permute.xlu0 %1995
    %v1997 = vsel %vm435, %v1986, 0
    %v1999 = vsel %vm435, %v1988, 0
    %v2001 = vsel %vm435, %v1990, 0
    %v2003 = vsel %vm435, %v1992, 0
    %v2005 = vsel %vm435, %v1994, 0
    %v2007 = vsel %vm435, %v1996, 0
    %2009 = vmatprep.subr.mxu0 0.0
    %2010 = vmatpush1.xpose.msra.mxu0 0.0
    %2011 = vmatprep.subr.mxu0 0.0
    %2012 = vmatpush1.xpose.msra.mxu0 0.0
    %2013 = vmatprep.subr.mxu0 0.0
    %2014 = vmatpush1.xpose.msra.mxu0 0.0
    %2015 = vmatprep.subr.mxu0 0.0
    %2016 = vmatpush1.xpose.msra.mxu0 0.0
    %2017 = vmatprep.subr.mxu0 0.0
    %2018 = vmatpush1.xpose.msra.mxu0 0.0
    %2019 = vmatprep.subr.mxu0 0.0
    %2020 = vmatpush1.xpose.msra.mxu0 0.0
    %2021 = vmatprep.subr.mxu0 0.0
    %2022 = vmatpush1.xpose.msra.mxu0 0.0
    %2023 = vmatprep.subr.mxu0 0.0
    %2024 = vmatpush1.xpose.msra.mxu0 0.0
    %2025 = vmatprep.subr.mxu0 0.0
    %2026 = vmatpush1.xpose.msra.mxu0 0.0
    %2027 = vmatprep.subr.mxu0 0.0
    %2028 = vmatpush1.xpose.msra.mxu0 0.0
    %2029 = vmatprep.subr.mxu0 0.0
    %2030 = vmatpush1.xpose.msra.mxu0 0.0
    %2031 = vmatprep.subr.mxu0 0.0
    %2032 = vmatpush1.xpose.msra.mxu0 0.0
    %2033 = vmatprep.subr.mxu0 0.0
    %2034 = vmatpush1.xpose.msra.mxu0 0.0
    %2035 = vmatprep.subr.mxu0 0.0
    %2036 = vmatpush1.xpose.msra.mxu0 %v2007
    %2037 = vmatprep.subr.mxu0 0.0
    %2038 = vmatpush1.xpose.msra.mxu0 %v2005
    %2039 = vmatprep.subr.mxu0 0.0
    %2040 = vmatpush1.xpose.msra.mxu0 %v2003
    %2041 = vmatprep.subr.mxu0 0.0
    %2042 = vmatpush2.xpose.msra.mxu0 0.0
    %2043 = vmatprep.subr.mxu0 0.0
    %2044 = vmatpush2.xpose.msra.mxu0 0.0
    %2045 = vmatprep.subr.mxu0 0.0
    %2046 = vmatpush2.xpose.msra.mxu0 0.0
    %2047 = vmatprep.subr.mxu0 0.0
    %2048 = vmatpush2.xpose.msra.mxu0 0.0
    %2049 = vmatprep.subr.mxu0 0.0
    %2050 = vmatpush2.xpose.msra.mxu0 0.0
    %2051 = vmatprep.subr.mxu0 0.0
    %2052 = vmatpush2.xpose.msra.mxu0 0.0
    %2053 = vmatprep.subr.mxu0 0.0
    %2054 = vmatpush2.xpose.msra.mxu0 0.0
    %2055 = vmatprep.subr.mxu0 0.0
    %2056 = vmatpush2.xpose.msra.mxu0 0.0
    %2057 = vmatprep.subr.mxu0 0.0
    %2058 = vmatpush2.xpose.msra.mxu0 0.0
    %2059 = vmatprep.subr.mxu0 0.0
    %2060 = vmatpush2.xpose.msra.mxu0 0.0
    %2061 = vmatprep.subr.mxu0 0.0
    %2062 = vmatpush2.xpose.msra.mxu0 0.0
    %2063 = vmatprep.subr.mxu0 0.0
    %2064 = vmatpush2.xpose.msra.mxu0 0.0
    %2065 = vmatprep.subr.mxu0 0.0
    %2066 = vmatpush2.xpose.msra.mxu0 0.0
    %2067 = vmatprep.subr.mxu0 0.0
    %2068 = vmatpush2.xpose.msra.mxu0 0.0
    %2069 = vmatprep.subr.mxu0 0.0
    %2070 = vmatpush2.xpose.msra.mxu0 0.0
    %2071 = vmatprep.subr.mxu0 0.0
    %2072 = vmatpush2.xpose.msra.mxu0 0.0
    %2073 = vmatprep.mubr.f32.mxu0 0.0
    %2074 = vmatmul.mubr.f32.gmra.mxu0 %v1997
    %v2075 = vpop.f32.mrf.mxu0
    %v2076 = vadd.f32 0.0, %v2075
    %v2077 = vpop.f32.mrf.mxu0
    %2078 = vmatprep.mubr.f32.mxu0 0.0
    %2079 = vmatmul.mubr.f32.gmra.mxu0 %v1999
    %v2080 = vpop.f32.mrf.mxu0
    %v2081 = vadd.f32 0.0, %v2080
    %v2082 = vpop.f32.mrf.mxu0
    %2083 = vmatprep.mubr.f32.mxu0 0.0
    %2084 = vmatmul.mubr.f32.gmra.mxu0 %v2001
    %v2085 = vpop.f32.mrf.mxu0
    %v2086 = vadd.f32 0.0, %v2085
    %v2087 = vpop.f32.mrf.mxu0
    %2088 = vdwg.mxu0
    %v2089 = vmul.f32 %v2076, 0.35355338
    %v2090 = vmul.f32 %v2081, 0.35355338
    %v2091 = vmul.f32 %v2086, 0.35355338
    %v2092 = vsel %vm531, %v2089, -inf
    %2093 = vmax.xlane.f32.xlu0 %v2092
    %v2094 = vpop.xlane.xlu0 %2093
    %v2095 = vsel %vm531, %v2090, -inf
    %2096 = vmax.xlane.f32.xlu0 %v2095
    %v2097 = vpop.xlane.xlu0 %2096
    %v2098 = vsel %vm538, %v2091, -inf
    %2099 = vmax.xlane.f32.xlu0 %v2098
    %v2100 = vpop.xlane.xlu0 %2099
    %v2101 = vsub.f32 %v2089, %v2094
    %v2102 = vsub.f32 %v2090, %v2097
    %v2103 = vsub.f32 %v2091, %v2100
    %v2104 = vmul.f32 %v2101, 1.442695
    %v2105 = vpow.pop %v2104
    %v2106 = vmul.f32 %v2102, 1.442695
    %v2107 = vpow.pop %v2106
    %v2108 = vmul.f32 %v2103, 1.442695
    %v2109 = vpow.pop %v2108
    %v2110 = vsel %vm531, %v2105, 0.0
    %2111 = vadd.xlane.f32.xlu0 %v2110
    %v2112 = vpop.xlane.xlu0 %2111
    %v2113 = vsel %vm531, %v2107, 0.0
    %2114 = vadd.xlane.f32.xlu0 %v2113
    %v2115 = vpop.xlane.xlu0 %2114
    %v2116 = vsel %vm538, %v2109, 0.0
    %2117 = vadd.xlane.f32.xlu0 %v2116
    %v2118 = vpop.xlane.xlu0 %2117
    %v2119 = vrcp.pop %v2112
    %v2120 = vrcp.pop %v2115
    %v2121 = vrcp.pop %v2118
    %v2122 = vmul.f32 %v2105, %v2119
    %v2123 = vmul.f32 %v2107, %v2120
    %v2124 = vmul.f32 %v2109, %v2121
    %2125 = vrot.lane.b32.xlu0 %v1749, 56
    %v2126 = vpop.permute.xlu0 %2125
    %2127 = vrot.lane.b32.xlu0 %v1751, 56
    %v2128 = vpop.permute.xlu0 %2127
    %2129 = vrot.lane.b32.xlu0 %v1750, 56
    %v2130 = vpop.permute.xlu0 %2129
    %v2134 = vsel %vm531, %v2122, 0
    %v2137 = vsel %vm531, %v2123, 0
    %v2140 = vsel %vm531, %v2124, 0
    %v2142 = vsel %vm90, %v2130, 0
    %2144 = vmatprep.subr.mxu0 0.0
    %2145 = vmatpush1.msra.mxu0 0.0
    %2146 = vmatprep.subr.mxu0 0.0
    %2147 = vmatpush1.msra.mxu0 0.0
    %2148 = vmatprep.subr.mxu0 0.0
    %2149 = vmatpush1.msra.mxu0 0.0
    %2150 = vmatprep.subr.mxu0 0.0
    %2151 = vmatpush1.msra.mxu0 0.0
    %2152 = vmatprep.subr.mxu0 0.0
    %2153 = vmatpush1.msra.mxu0 0.0
    %2154 = vmatprep.subr.mxu0 0.0
    %2155 = vmatpush1.msra.mxu0 0.0
    %2156 = vmatprep.subr.mxu0 0.0
    %2157 = vmatpush1.msra.mxu0 0.0
    %2158 = vmatprep.subr.mxu0 0.0
    %2159 = vmatpush1.msra.mxu0 0.0
    %2160 = vmatprep.subr.mxu0 0.0
    %2161 = vmatpush1.msra.mxu0 0.0
    %2162 = vmatprep.subr.mxu0 0.0
    %2163 = vmatpush1.msra.mxu0 0.0
    %2164 = vmatprep.subr.mxu0 0.0
    %2165 = vmatpush1.msra.mxu0 0.0
    %2166 = vmatprep.subr.mxu0 0.0
    %2167 = vmatpush1.msra.mxu0 0.0
    %2168 = vmatprep.subr.mxu0 0.0
    %2169 = vmatpush1.msra.mxu0 0.0
    %2170 = vmatprep.subr.mxu0 0.0
    %2171 = vmatpush1.msra.mxu0 %v2142
    %2172 = vmatprep.subr.mxu0 0.0
    %2173 = vmatpush1.msra.mxu0 %v2128
    %2174 = vmatprep.subr.mxu0 0.0
    %2175 = vmatpush1.msra.mxu0 %v2126
    %2176 = vmatprep.subr.mxu0 0.0
    %2177 = vmatpush2.msra.mxu0 0.0
    %2178 = vmatprep.subr.mxu0 0.0
    %2179 = vmatpush2.msra.mxu0 0.0
    %2180 = vmatprep.subr.mxu0 0.0
    %2181 = vmatpush2.msra.mxu0 0.0
    %2182 = vmatprep.subr.mxu0 0.0
    %2183 = vmatpush2.msra.mxu0 0.0
    %2184 = vmatprep.subr.mxu0 0.0
    %2185 = vmatpush2.msra.mxu0 0.0
    %2186 = vmatprep.subr.mxu0 0.0
    %2187 = vmatpush2.msra.mxu0 0.0
    %2188 = vmatprep.subr.mxu0 0.0
    %2189 = vmatpush2.msra.mxu0 0.0
    %2190 = vmatprep.subr.mxu0 0.0
    %2191 = vmatpush2.msra.mxu0 0.0
    %2192 = vmatprep.subr.mxu0 0.0
    %2193 = vmatpush2.msra.mxu0 0.0
    %2194 = vmatprep.subr.mxu0 0.0
    %2195 = vmatpush2.msra.mxu0 0.0
    %2196 = vmatprep.subr.mxu0 0.0
    %2197 = vmatpush2.msra.mxu0 0.0
    %2198 = vmatprep.subr.mxu0 0.0
    %2199 = vmatpush2.msra.mxu0 0.0
    %2200 = vmatprep.subr.mxu0 0.0
    %2201 = vmatpush2.msra.mxu0 0.0
    %2202 = vmatprep.subr.mxu0 0.0
    %2203 = vmatpush2.msra.mxu0 0.0
    %2204 = vmatprep.subr.mxu0 0.0
    %2205 = vmatpush2.msra.mxu0 0.0
    %2206 = vmatprep.subr.mxu0 0.0
    %2207 = vmatpush2.msra.mxu0 0.0
    %2208 = vmatprep.mubr.f32.mxu0 0.0
    %2209 = vmatmul.mubr.f32.gmra.mxu0 %v2134
    %v2210 = vpop.f32.mrf.mxu0
    %v2211 = vadd.f32 0.0, %v2210
    %v2212 = vpop.f32.mrf.mxu0
    %2213 = vmatprep.mubr.f32.mxu0 0.0
    %2214 = vmatmul.mubr.f32.gmra.mxu0 %v2137
    %v2215 = vpop.f32.mrf.mxu0
    %v2216 = vadd.f32 0.0, %v2215
    %v2217 = vpop.f32.mrf.mxu0
    %2218 = vmatprep.mubr.f32.mxu0 0.0
    %2219 = vmatmul.mubr.f32.gmra.mxu0 %v2140
    %v2220 = vpop.f32.mrf.mxu0
    %v2221 = vadd.f32 0.0, %v2220
    %v2222 = vpop.f32.mrf.mxu0
    %2223 = vdwg.mxu0
    %v2225 = vsel %vm435, %v2211, 0
    %v2228 = vsel %vm435, %v2216, 0
    %v2231 = vsel %vm435, %v2221, 0
    %2233 = vmatprep.subr.mxu0 0.0
    %2234 = vmatpush1.msra.mxu0 0.0
    %2235 = vmatprep.subr.mxu0 0.0
    %2236 = vmatpush1.msra.mxu0 0.0
    %2237 = vmatprep.subr.mxu0 0.0
    %2238 = vmatpush1.msra.mxu0 0.0
    %2239 = vmatprep.subr.mxu0 0.0
    %2240 = vmatpush1.msra.mxu0 0.0
    %2241 = vmatprep.subr.mxu0 0.0
    %2242 = vmatpush1.msra.mxu0 0.0
    %2243 = vmatprep.subr.mxu0 0.0
    %2244 = vmatpush1.msra.mxu0 0.0
    %2245 = vmatprep.subr.mxu0 0.0
    %2246 = vmatpush1.msra.mxu0 0.0
    %2247 = vmatprep.subr.mxu0 0.0
    %2248 = vmatpush1.msra.mxu0 0.0
    %2249 = vmatprep.subr.mxu0 0.0
    %2250 = vmatpush1.msra.mxu0 0.0
    %2251 = vmatprep.subr.mxu0 0.0
    %2252 = vmatpush1.msra.mxu0 0.0
    %2253 = vmatprep.subr.mxu0 0.0
    %2254 = vmatpush1.msra.mxu0 0.0
    %2255 = vmatprep.subr.mxu0 0.0
    %2256 = vmatpush1.msra.mxu0 0.0
    %2257 = vmatprep.subr.mxu0 0.0
    %2258 = vmatpush1.msra.mxu0 0.0
    %2259 = vmatprep.subr.mxu0 0.0
    %2260 = vmatpush1.msra.mxu0 0.0
    %2261 = vmatprep.subr.mxu0 0.0
    %2262 = vmatpush1.msra.mxu0 0.0
    %2263 = vmatprep.subr.mxu0 0.0
    %2264 = vmatpush1.msra.mxu0 %v423
    %2265 = vmatprep.subr.mxu0 0.0
    %2266 = vmatpush2.msra.mxu0 0.0
    %2267 = vmatprep.subr.mxu0 0.0
    %2268 = vmatpush2.msra.mxu0 0.0
    %2269 = vmatprep.subr.mxu0 0.0
    %2270 = vmatpush2.msra.mxu0 0.0
    %2271 = vmatprep.subr.mxu0 0.0
    %2272 = vmatpush2.msra.mxu0 0.0
    %2273 = vmatprep.subr.mxu0 0.0
    %2274 = vmatpush2.msra.mxu0 0.0
    %2275 = vmatprep.subr.mxu0 0.0
    %2276 = vmatpush2.msra.mxu0 0.0
    %2277 = vmatprep.subr.mxu0 0.0
    %2278 = vmatpush2.msra.mxu0 0.0
    %2279 = vmatprep.subr.mxu0 0.0
    %2280 = vmatpush2.msra.mxu0 0.0
    %2281 = vmatprep.subr.mxu0 0.0
    %2282 = vmatpush2.msra.mxu0 0.0
    %2283 = vmatprep.subr.mxu0 0.0
    %2284 = vmatpush2.msra.mxu0 0.0
    %2285 = vmatprep.subr.mxu0 0.0
    %2286 = vmatpush2.msra.mxu0 0.0
    %2287 = vmatprep.subr.mxu0 0.0
    %2288 = vmatpush2.msra.mxu0 0.0
    %2289 = vmatprep.subr.mxu0 0.0
    %2290 = vmatpush2.msra.mxu0 0.0
    %2291 = vmatprep.subr.mxu0 0.0
    %2292 = vmatpush2.msra.mxu0 0.0
    %2293 = vmatprep.subr.mxu0 0.0
    %2294 = vmatpush2.msra.mxu0 0.0
    %2295 = vmatprep.subr.mxu0 0.0
    %2296 = vmatpush2.msra.mxu0 0.0
    %2297 = vmatprep.mubr.f32.mxu0 0.0
    %2298 = vmatmul.mubr.f32.gmra.mxu0 %v2225
    %v2299 = vpop.f32.mrf.mxu0
    %v2300 = vadd.f32 0.0, %v2299
    %v2301 = vpop.f32.mrf.mxu0
    %2302 = vmatprep.mubr.f32.mxu0 0.0
    %2303 = vmatmul.mubr.f32.gmra.mxu0 %v2228
    %v2304 = vpop.f32.mrf.mxu0
    %v2305 = vadd.f32 0.0, %v2304
    %v2306 = vpop.f32.mrf.mxu0
    %2307 = vmatprep.mubr.f32.mxu0 0.0
    %2308 = vmatmul.mubr.f32.gmra.mxu0 %v2231
    %v2309 = vpop.f32.mrf.mxu0
    %v2310 = vadd.f32 0.0, %v2309
    %v2311 = vpop.f32.mrf.mxu0
    %2312 = vdwg.mxu0
    %v2314 = vsel %vm435, %v1972, 0
    %v2317 = vsel %vm435, %v1977, 0
    %v2320 = vsel %vm435, %v1982, 0
    %2322 = vmatprep.subr.mxu0 0.0
    %2323 = vmatpush1.msra.mxu0 0.0
    %2324 = vmatprep.subr.mxu0 0.0
    %2325 = vmatpush1.msra.mxu0 0.0
    %2326 = vmatprep.subr.mxu0 0.0
    %2327 = vmatpush1.msra.mxu0 0.0
    %2328 = vmatprep.subr.mxu0 0.0
    %2329 = vmatpush1.msra.mxu0 0.0
    %2330 = vmatprep.subr.mxu0 0.0
    %2331 = vmatpush1.msra.mxu0 0.0
    %2332 = vmatprep.subr.mxu0 0.0
    %2333 = vmatpush1.msra.mxu0 0.0
    %2334 = vmatprep.subr.mxu0 0.0
    %2335 = vmatpush1.msra.mxu0 0.0
    %2336 = vmatprep.subr.mxu0 0.0
    %2337 = vmatpush1.msra.mxu0 0.0
    %2338 = vmatprep.subr.mxu0 0.0
    %2339 = vmatpush1.msra.mxu0 0.0
    %2340 = vmatprep.subr.mxu0 0.0
    %2341 = vmatpush1.msra.mxu0 0.0
    %2342 = vmatprep.subr.mxu0 0.0
    %2343 = vmatpush1.msra.mxu0 0.0
    %2344 = vmatprep.subr.mxu0 0.0
    %2345 = vmatpush1.msra.mxu0 0.0
    %2346 = vmatprep.subr.mxu0 0.0
    %2347 = vmatpush1.msra.mxu0 0.0
    %2348 = vmatprep.subr.mxu0 0.0
    %2349 = vmatpush1.msra.mxu0 0.0
    %2350 = vmatprep.subr.mxu0 0.0
    %2351 = vmatpush1.msra.mxu0 0.0
    %2352 = vmatprep.subr.mxu0 0.0
    %2353 = vmatpush1.msra.mxu0 %v422
    %2354 = vmatprep.subr.mxu0 0.0
    %2355 = vmatpush2.msra.mxu0 0.0
    %2356 = vmatprep.subr.mxu0 0.0
    %2357 = vmatpush2.msra.mxu0 0.0
    %2358 = vmatprep.subr.mxu0 0.0
    %2359 = vmatpush2.msra.mxu0 0.0
    %2360 = vmatprep.subr.mxu0 0.0
    %2361 = vmatpush2.msra.mxu0 0.0
    %2362 = vmatprep.subr.mxu0 0.0
    %2363 = vmatpush2.msra.mxu0 0.0
    %2364 = vmatprep.subr.mxu0 0.0
    %2365 = vmatpush2.msra.mxu0 0.0
    %2366 = vmatprep.subr.mxu0 0.0
    %2367 = vmatpush2.msra.mxu0 0.0
    %2368 = vmatprep.subr.mxu0 0.0
    %2369 = vmatpush2.msra.mxu0 0.0
    %2370 = vmatprep.subr.mxu0 0.0
    %2371 = vmatpush2.msra.mxu0 0.0
    %2372 = vmatprep.subr.mxu0 0.0
    %2373 = vmatpush2.msra.mxu0 0.0
    %2374 = vmatprep.subr.mxu0 0.0
    %2375 = vmatpush2.msra.mxu0 0.0
    %2376 = vmatprep.subr.mxu0 0.0
    %2377 = vmatpush2.msra.mxu0 0.0
    %2378 = vmatprep.subr.mxu0 0.0
    %2379 = vmatpush2.msra.mxu0 0.0
    %2380 = vmatprep.subr.mxu0 0.0
    %2381 = vmatpush2.msra.mxu0 0.0
    %2382 = vmatprep.subr.mxu0 0.0
    %2383 = vmatpush2.msra.mxu0 0.0
    %2384 = vmatprep.subr.mxu0 0.0
    %2385 = vmatpush2.msra.mxu0 0.0
    %2386 = vmatprep.mubr.f32.mxu0 0.0
    %2387 = vmatmul.mubr.f32.gmra.mxu0 %v2314
    %v2388 = vpop.f32.mrf.mxu0
    %v2389 = vadd.f32 %v2300, %v2388
    %v2390 = vpop.f32.mrf.mxu0
    %2391 = vmatprep.mubr.f32.mxu0 0.0
    %2392 = vmatmul.mubr.f32.gmra.mxu0 %v2317
    %v2393 = vpop.f32.mrf.mxu0
    %v2394 = vadd.f32 %v2305, %v2393
    %v2395 = vpop.f32.mrf.mxu0
    %2396 = vmatprep.mubr.f32.mxu0 0.0
    %2397 = vmatmul.mubr.f32.gmra.mxu0 %v2320
    %v2398 = vpop.f32.mrf.mxu0
    %v2399 = vadd.f32 %v2310, %v2398
    %v2400 = vpop.f32.mrf.mxu0
    %2401 = vdwg.mxu0
    %2402 = vrot.lane.b32.xlu0 %v1749, 112
    %v2403 = vpop.permute.xlu0 %2402
    %2404 = vrot.lane.b32.xlu0 %v1751, 112
    %v2405 = vpop.permute.xlu0 %2404
    %2406 = vrot.lane.b32.xlu0 %v1750, 112
    %v2407 = vpop.permute.xlu0 %2406
    %2408 = vrot.lane.b32.xlu0 %v1749, 80
    %v2409 = vpop.permute.xlu0 %2408
    %2410 = vrot.lane.b32.xlu0 %v1751, 80
    %v2411 = vpop.permute.xlu0 %2410
    %2412 = vrot.lane.b32.xlu0 %v1750, 80
    %v2413 = vpop.permute.xlu0 %2412
    %v2414 = vsel %vm435, %v2403, 0
    %v2416 = vsel %vm435, %v2405, 0
    %v2418 = vsel %vm435, %v2407, 0
    %v2420 = vsel %vm435, %v2409, 0
    %v2422 = vsel %vm435, %v2411, 0
    %v2424 = vsel %vm435, %v2413, 0
    %2426 = vmatprep.subr.mxu0 0.0
    %2427 = vmatpush1.xpose.msra.mxu0 0.0
    %2428 = vmatprep.subr.mxu0 0.0
    %2429 = vmatpush1.xpose.msra.mxu0 0.0
    %2430 = vmatprep.subr.mxu0 0.0
    %2431 = vmatpush1.xpose.msra.mxu0 0.0
    %2432 = vmatprep.subr.mxu0 0.0
    %2433 = vmatpush1.xpose.msra.mxu0 0.0
    %2434 = vmatprep.subr.mxu0 0.0
    %2435 = vmatpush1.xpose.msra.mxu0 0.0
    %2436 = vmatprep.subr.mxu0 0.0
    %2437 = vmatpush1.xpose.msra.mxu0 0.0
    %2438 = vmatprep.subr.mxu0 0.0
    %2439 = vmatpush1.xpose.msra.mxu0 0.0
    %2440 = vmatprep.subr.mxu0 0.0
    %2441 = vmatpush1.xpose.msra.mxu0 0.0
    %2442 = vmatprep.subr.mxu0 0.0
    %2443 = vmatpush1.xpose.msra.mxu0 0.0
    %2444 = vmatprep.subr.mxu0 0.0
    %2445 = vmatpush1.xpose.msra.mxu0 0.0
    %2446 = vmatprep.subr.mxu0 0.0
    %2447 = vmatpush1.xpose.msra.mxu0 0.0
    %2448 = vmatprep.subr.mxu0 0.0
    %2449 = vmatpush1.xpose.msra.mxu0 0.0
    %2450 = vmatprep.subr.mxu0 0.0
    %2451 = vmatpush1.xpose.msra.mxu0 0.0
    %2452 = vmatprep.subr.mxu0 0.0
    %2453 = vmatpush1.xpose.msra.mxu0 %v2424
    %2454 = vmatprep.subr.mxu0 0.0
    %2455 = vmatpush1.xpose.msra.mxu0 %v2422
    %2456 = vmatprep.subr.mxu0 0.0
    %2457 = vmatpush1.xpose.msra.mxu0 %v2420
    %2458 = vmatprep.subr.mxu0 0.0
    %2459 = vmatpush2.xpose.msra.mxu0 0.0
    %2460 = vmatprep.subr.mxu0 0.0
    %2461 = vmatpush2.xpose.msra.mxu0 0.0
    %2462 = vmatprep.subr.mxu0 0.0
    %2463 = vmatpush2.xpose.msra.mxu0 0.0
    %2464 = vmatprep.subr.mxu0 0.0
    %2465 = vmatpush2.xpose.msra.mxu0 0.0
    %2466 = vmatprep.subr.mxu0 0.0
    %2467 = vmatpush2.xpose.msra.mxu0 0.0
    %2468 = vmatprep.subr.mxu0 0.0
    %2469 = vmatpush2.xpose.msra.mxu0 0.0
    %2470 = vmatprep.subr.mxu0 0.0
    %2471 = vmatpush2.xpose.msra.mxu0 0.0
    %2472 = vmatprep.subr.mxu0 0.0
    %2473 = vmatpush2.xpose.msra.mxu0 0.0
    %2474 = vmatprep.subr.mxu0 0.0
    %2475 = vmatpush2.xpose.msra.mxu0 0.0
    %2476 = vmatprep.subr.mxu0 0.0
    %2477 = vmatpush2.xpose.msra.mxu0 0.0
    %2478 = vmatprep.subr.mxu0 0.0
    %2479 = vmatpush2.xpose.msra.mxu0 0.0
    %2480 = vmatprep.subr.mxu0 0.0
    %2481 = vmatpush2.xpose.msra.mxu0 0.0
    %2482 = vmatprep.subr.mxu0 0.0
    %2483 = vmatpush2.xpose.msra.mxu0 0.0
    %2484 = vmatprep.subr.mxu0 0.0
    %2485 = vmatpush2.xpose.msra.mxu0 0.0
    %2486 = vmatprep.subr.mxu0 0.0
    %2487 = vmatpush2.xpose.msra.mxu0 0.0
    %2488 = vmatprep.subr.mxu0 0.0
    %2489 = vmatpush2.xpose.msra.mxu0 0.0
    %2490 = vmatprep.mubr.f32.mxu0 0.0
    %2491 = vmatmul.mubr.f32.gmra.mxu0 %v2414
    %v2492 = vpop.f32.mrf.mxu0
    %v2493 = vadd.f32 0.0, %v2492
    %v2494 = vpop.f32.mrf.mxu0
    %2495 = vmatprep.mubr.f32.mxu0 0.0
    %2496 = vmatmul.mubr.f32.gmra.mxu0 %v2416
    %v2497 = vpop.f32.mrf.mxu0
    %v2498 = vadd.f32 0.0, %v2497
    %v2499 = vpop.f32.mrf.mxu0
    %2500 = vmatprep.mubr.f32.mxu0 0.0
    %2501 = vmatmul.mubr.f32.gmra.mxu0 %v2418
    %v2502 = vpop.f32.mrf.mxu0
    %v2503 = vadd.f32 0.0, %v2502
    %v2504 = vpop.f32.mrf.mxu0
    %2505 = vdwg.mxu0
    %v2506 = vmul.f32 %v2493, 0.35355338
    %v2507 = vmul.f32 %v2498, 0.35355338
    %v2508 = vmul.f32 %v2503, 0.35355338
    %v2509 = vsel %vm531, %v2506, -inf
    %2510 = vmax.xlane.f32.xlu0 %v2509
    %v2511 = vpop.xlane.xlu0 %2510
    %v2512 = vsel %vm531, %v2507, -inf
    %2513 = vmax.xlane.f32.xlu0 %v2512
    %v2514 = vpop.xlane.xlu0 %2513
    %v2515 = vsel %vm538, %v2508, -inf
    %2516 = vmax.xlane.f32.xlu0 %v2515
    %v2517 = vpop.xlane.xlu0 %2516
    %v2518 = vsub.f32 %v2506, %v2511
    %v2519 = vsub.f32 %v2507, %v2514
    %v2520 = vsub.f32 %v2508, %v2517
    %v2521 = vmul.f32 %v2518, 1.442695
    %v2522 = vpow.pop %v2521
    %v2523 = vmul.f32 %v2519, 1.442695
    %v2524 = vpow.pop %v2523
    %v2525 = vmul.f32 %v2520, 1.442695
    %v2526 = vpow.pop %v2525
    %v2527 = vsel %vm531, %v2522, 0.0
    %2528 = vadd.xlane.f32.xlu0 %v2527
    %v2529 = vpop.xlane.xlu0 %2528
    %v2530 = vsel %vm531, %v2524, 0.0
    %2531 = vadd.xlane.f32.xlu0 %v2530
    %v2532 = vpop.xlane.xlu0 %2531
    %v2533 = vsel %vm538, %v2526, 0.0
    %2534 = vadd.xlane.f32.xlu0 %v2533
    %v2535 = vpop.xlane.xlu0 %2534
    %v2536 = vrcp.pop %v2529
    %v2537 = vrcp.pop %v2532
    %v2538 = vrcp.pop %v2535
    %v2539 = vmul.f32 %v2522, %v2536
    %v2540 = vmul.f32 %v2524, %v2537
    %v2541 = vmul.f32 %v2526, %v2538
    %2542 = vrot.lane.b32.xlu0 %v1749, 48
    %v2543 = vpop.permute.xlu0 %2542
    %2544 = vrot.lane.b32.xlu0 %v1751, 48
    %v2545 = vpop.permute.xlu0 %2544
    %2546 = vrot.lane.b32.xlu0 %v1750, 48
    %v2547 = vpop.permute.xlu0 %2546
    %v2551 = vsel %vm531, %v2539, 0
    %v2554 = vsel %vm531, %v2540, 0
    %v2557 = vsel %vm531, %v2541, 0
    %v2559 = vsel %vm90, %v2547, 0
    %2561 = vmatprep.subr.mxu0 0.0
    %2562 = vmatpush1.msra.mxu0 0.0
    %2563 = vmatprep.subr.mxu0 0.0
    %2564 = vmatpush1.msra.mxu0 0.0
    %2565 = vmatprep.subr.mxu0 0.0
    %2566 = vmatpush1.msra.mxu0 0.0
    %2567 = vmatprep.subr.mxu0 0.0
    %2568 = vmatpush1.msra.mxu0 0.0
    %2569 = vmatprep.subr.mxu0 0.0
    %2570 = vmatpush1.msra.mxu0 0.0
    %2571 = vmatprep.subr.mxu0 0.0
    %2572 = vmatpush1.msra.mxu0 0.0
    %2573 = vmatprep.subr.mxu0 0.0
    %2574 = vmatpush1.msra.mxu0 0.0
    %2575 = vmatprep.subr.mxu0 0.0
    %2576 = vmatpush1.msra.mxu0 0.0
    %2577 = vmatprep.subr.mxu0 0.0
    %2578 = vmatpush1.msra.mxu0 0.0
    %2579 = vmatprep.subr.mxu0 0.0
    %2580 = vmatpush1.msra.mxu0 0.0
    %2581 = vmatprep.subr.mxu0 0.0
    %2582 = vmatpush1.msra.mxu0 0.0
    %2583 = vmatprep.subr.mxu0 0.0
    %2584 = vmatpush1.msra.mxu0 0.0
    %2585 = vmatprep.subr.mxu0 0.0
    %2586 = vmatpush1.msra.mxu0 0.0
    %2587 = vmatprep.subr.mxu0 0.0
    %2588 = vmatpush1.msra.mxu0 %v2559
    %2589 = vmatprep.subr.mxu0 0.0
    %2590 = vmatpush1.msra.mxu0 %v2545
    %2591 = vmatprep.subr.mxu0 0.0
    %2592 = vmatpush1.msra.mxu0 %v2543
    %2593 = vmatprep.subr.mxu0 0.0
    %2594 = vmatpush2.msra.mxu0 0.0
    %2595 = vmatprep.subr.mxu0 0.0
    %2596 = vmatpush2.msra.mxu0 0.0
    %2597 = vmatprep.subr.mxu0 0.0
    %2598 = vmatpush2.msra.mxu0 0.0
    %2599 = vmatprep.subr.mxu0 0.0
    %2600 = vmatpush2.msra.mxu0 0.0
    %2601 = vmatprep.subr.mxu0 0.0
    %2602 = vmatpush2.msra.mxu0 0.0
    %2603 = vmatprep.subr.mxu0 0.0
    %2604 = vmatpush2.msra.mxu0 0.0
    %2605 = vmatprep.subr.mxu0 0.0
    %2606 = vmatpush2.msra.mxu0 0.0
    %2607 = vmatprep.subr.mxu0 0.0
    %2608 = vmatpush2.msra.mxu0 0.0
    %2609 = vmatprep.subr.mxu0 0.0
    %2610 = vmatpush2.msra.mxu0 0.0
    %2611 = vmatprep.subr.mxu0 0.0
    %2612 = vmatpush2.msra.mxu0 0.0
    %2613 = vmatprep.subr.mxu0 0.0
    %2614 = vmatpush2.msra.mxu0 0.0
    %2615 = vmatprep.subr.mxu0 0.0
    %2616 = vmatpush2.msra.mxu0 0.0
    %2617 = vmatprep.subr.mxu0 0.0
    %2618 = vmatpush2.msra.mxu0 0.0
    %2619 = vmatprep.subr.mxu0 0.0
    %2620 = vmatpush2.msra.mxu0 0.0
    %2621 = vmatprep.subr.mxu0 0.0
    %2622 = vmatpush2.msra.mxu0 0.0
    %2623 = vmatprep.subr.mxu0 0.0
    %2624 = vmatpush2.msra.mxu0 0.0
    %2625 = vmatprep.mubr.f32.mxu0 0.0
    %2626 = vmatmul.mubr.f32.gmra.mxu0 %v2551
    %v2627 = vpop.f32.mrf.mxu0
    %v2628 = vadd.f32 0.0, %v2627
    %v2629 = vpop.f32.mrf.mxu0
    %2630 = vmatprep.mubr.f32.mxu0 0.0
    %2631 = vmatmul.mubr.f32.gmra.mxu0 %v2554
    %v2632 = vpop.f32.mrf.mxu0
    %v2633 = vadd.f32 0.0, %v2632
    %v2634 = vpop.f32.mrf.mxu0
    %2635 = vmatprep.mubr.f32.mxu0 0.0
    %2636 = vmatmul.mubr.f32.gmra.mxu0 %v2557
    %v2637 = vpop.f32.mrf.mxu0
    %v2638 = vadd.f32 0.0, %v2637
    %v2639 = vpop.f32.mrf.mxu0
    %2640 = vdwg.mxu0
    %v2642 = vsel %vm435, %v2628, 0
    %v2645 = vsel %vm435, %v2633, 0
    %v2648 = vsel %vm435, %v2638, 0
    %2650 = vmatprep.subr.mxu0 0.0
    %2651 = vmatpush1.msra.mxu0 0.0
    %2652 = vmatprep.subr.mxu0 0.0
    %2653 = vmatpush1.msra.mxu0 0.0
    %2654 = vmatprep.subr.mxu0 0.0
    %2655 = vmatpush1.msra.mxu0 0.0
    %2656 = vmatprep.subr.mxu0 0.0
    %2657 = vmatpush1.msra.mxu0 0.0
    %2658 = vmatprep.subr.mxu0 0.0
    %2659 = vmatpush1.msra.mxu0 0.0
    %2660 = vmatprep.subr.mxu0 0.0
    %2661 = vmatpush1.msra.mxu0 0.0
    %2662 = vmatprep.subr.mxu0 0.0
    %2663 = vmatpush1.msra.mxu0 0.0
    %2664 = vmatprep.subr.mxu0 0.0
    %2665 = vmatpush1.msra.mxu0 0.0
    %2666 = vmatprep.subr.mxu0 0.0
    %2667 = vmatpush1.msra.mxu0 0.0
    %2668 = vmatprep.subr.mxu0 0.0
    %2669 = vmatpush1.msra.mxu0 0.0
    %2670 = vmatprep.subr.mxu0 0.0
    %2671 = vmatpush1.msra.mxu0 0.0
    %2672 = vmatprep.subr.mxu0 0.0
    %2673 = vmatpush1.msra.mxu0 0.0
    %2674 = vmatprep.subr.mxu0 0.0
    %2675 = vmatpush1.msra.mxu0 0.0
    %2676 = vmatprep.subr.mxu0 0.0
    %2677 = vmatpush1.msra.mxu0 0.0
    %2678 = vmatprep.subr.mxu0 0.0
    %2679 = vmatpush1.msra.mxu0 0.0
    %2680 = vmatprep.subr.mxu0 0.0
    %2681 = vmatpush1.msra.mxu0 %v424
    %2682 = vmatprep.subr.mxu0 0.0
    %2683 = vmatpush2.msra.mxu0 0.0
    %2684 = vmatprep.subr.mxu0 0.0
    %2685 = vmatpush2.msra.mxu0 0.0
    %2686 = vmatprep.subr.mxu0 0.0
    %2687 = vmatpush2.msra.mxu0 0.0
    %2688 = vmatprep.subr.mxu0 0.0
    %2689 = vmatpush2.msra.mxu0 0.0
    %2690 = vmatprep.subr.mxu0 0.0
    %2691 = vmatpush2.msra.mxu0 0.0
    %2692 = vmatprep.subr.mxu0 0.0
    %2693 = vmatpush2.msra.mxu0 0.0
    %2694 = vmatprep.subr.mxu0 0.0
    %2695 = vmatpush2.msra.mxu0 0.0
    %2696 = vmatprep.subr.mxu0 0.0
    %2697 = vmatpush2.msra.mxu0 0.0
    %2698 = vmatprep.subr.mxu0 0.0
    %2699 = vmatpush2.msra.mxu0 0.0
    %2700 = vmatprep.subr.mxu0 0.0
    %2701 = vmatpush2.msra.mxu0 0.0
    %2702 = vmatprep.subr.mxu0 0.0
    %2703 = vmatpush2.msra.mxu0 0.0
    %2704 = vmatprep.subr.mxu0 0.0
    %2705 = vmatpush2.msra.mxu0 0.0
    %2706 = vmatprep.subr.mxu0 0.0
    %2707 = vmatpush2.msra.mxu0 0.0
    %2708 = vmatprep.subr.mxu0 0.0
    %2709 = vmatpush2.msra.mxu0 0.0
    %2710 = vmatprep.subr.mxu0 0.0
    %2711 = vmatpush2.msra.mxu0 0.0
    %2712 = vmatprep.subr.mxu0 0.0
    %2713 = vmatpush2.msra.mxu0 0.0
    %2714 = vmatprep.mubr.f32.mxu0 0.0
    %2715 = vmatmul.mubr.f32.gmra.mxu0 %v2642
    %v2716 = vpop.f32.mrf.mxu0
    %v2717 = vadd.f32 0.0, %v2716
    %v2718 = vpop.f32.mrf.mxu0
    %2719 = vmatprep.mubr.f32.mxu0 0.0
    %2720 = vmatmul.mubr.f32.gmra.mxu0 %v2645
    %v2721 = vpop.f32.mrf.mxu0
    %v2722 = vadd.f32 0.0, %v2721
    %v2723 = vpop.f32.mrf.mxu0
    %2724 = vmatprep.mubr.f32.mxu0 0.0
    %2725 = vmatmul.mubr.f32.gmra.mxu0 %v2648
    %v2726 = vpop.f32.mrf.mxu0
    %v2727 = vadd.f32 0.0, %v2726
    %v2728 = vpop.f32.mrf.mxu0
    %2729 = vdwg.mxu0
    %v2730 = vadd.f32 %v2389, %v2717
    %v2731 = vadd.f32 %v2394, %v2722
    %v2732 = vadd.f32 %v2399, %v2727
    %2733 = vrot.lane.b32.xlu0 %v1749, 104
    %v2734 = vpop.permute.xlu0 %2733
    %2735 = vrot.lane.b32.xlu0 %v1751, 104
    %v2736 = vpop.permute.xlu0 %2735
    %2737 = vrot.lane.b32.xlu0 %v1750, 104
    %v2738 = vpop.permute.xlu0 %2737
    %2739 = vrot.lane.b32.xlu0 %v1749, 72
    %v2740 = vpop.permute.xlu0 %2739
    %2741 = vrot.lane.b32.xlu0 %v1751, 72
    %v2742 = vpop.permute.xlu0 %2741
    %2743 = vrot.lane.b32.xlu0 %v1750, 72
    %v2744 = vpop.permute.xlu0 %2743
    %v2745 = vsel %vm435, %v2734, 0
    %v2747 = vsel %vm435, %v2736, 0
    %v2749 = vsel %vm435, %v2738, 0
    %v2751 = vsel %vm435, %v2740, 0
    %v2753 = vsel %vm435, %v2742, 0
    %v2755 = vsel %vm435, %v2744, 0
    %2757 = vmatprep.subr.mxu0 0.0
    %2758 = vmatpush1.xpose.msra.mxu0 0.0
    %2759 = vmatprep.subr.mxu0 0.0
    %2760 = vmatpush1.xpose.msra.mxu0 0.0
    %2761 = vmatprep.subr.mxu0 0.0
    %2762 = vmatpush1.xpose.msra.mxu0 0.0
    %2763 = vmatprep.subr.mxu0 0.0
    %2764 = vmatpush1.xpose.msra.mxu0 0.0
    %2765 = vmatprep.subr.mxu0 0.0
    %2766 = vmatpush1.xpose.msra.mxu0 0.0
    %2767 = vmatprep.subr.mxu0 0.0
    %2768 = vmatpush1.xpose.msra.mxu0 0.0
    %2769 = vmatprep.subr.mxu0 0.0
    %2770 = vmatpush1.xpose.msra.mxu0 0.0
    %2771 = vmatprep.subr.mxu0 0.0
    %2772 = vmatpush1.xpose.msra.mxu0 0.0
    %2773 = vmatprep.subr.mxu0 0.0
    %2774 = vmatpush1.xpose.msra.mxu0 0.0
    %2775 = vmatprep.subr.mxu0 0.0
    %2776 = vmatpush1.xpose.msra.mxu0 0.0
    %2777 = vmatprep.subr.mxu0 0.0
    %2778 = vmatpush1.xpose.msra.mxu0 0.0
    %2779 = vmatprep.subr.mxu0 0.0
    %2780 = vmatpush1.xpose.msra.mxu0 0.0
    %2781 = vmatprep.subr.mxu0 0.0
    %2782 = vmatpush1.xpose.msra.mxu0 0.0
    %2783 = vmatprep.subr.mxu0 0.0
    %2784 = vmatpush1.xpose.msra.mxu0 %v2755
    %2785 = vmatprep.subr.mxu0 0.0
    %2786 = vmatpush1.xpose.msra.mxu0 %v2753
    %2787 = vmatprep.subr.mxu0 0.0
    %2788 = vmatpush1.xpose.msra.mxu0 %v2751
    %2789 = vmatprep.subr.mxu0 0.0
    %2790 = vmatpush2.xpose.msra.mxu0 0.0
    %2791 = vmatprep.subr.mxu0 0.0
    %2792 = vmatpush2.xpose.msra.mxu0 0.0
    %2793 = vmatprep.subr.mxu0 0.0
    %2794 = vmatpush2.xpose.msra.mxu0 0.0
    %2795 = vmatprep.subr.mxu0 0.0
    %2796 = vmatpush2.xpose.msra.mxu0 0.0
    %2797 = vmatprep.subr.mxu0 0.0
    %2798 = vmatpush2.xpose.msra.mxu0 0.0
    %2799 = vmatprep.subr.mxu0 0.0
    %2800 = vmatpush2.xpose.msra.mxu0 0.0
    %2801 = vmatprep.subr.mxu0 0.0
    %2802 = vmatpush2.xpose.msra.mxu0 0.0
    %2803 = vmatprep.subr.mxu0 0.0
    %2804 = vmatpush2.xpose.msra.mxu0 0.0
    %2805 = vmatprep.subr.mxu0 0.0
    %2806 = vmatpush2.xpose.msra.mxu0 0.0
    %2807 = vmatprep.subr.mxu0 0.0
    %2808 = vmatpush2.xpose.msra.mxu0 0.0
    %2809 = vmatprep.subr.mxu0 0.0
    %2810 = vmatpush2.xpose.msra.mxu0 0.0
    %2811 = vmatprep.subr.mxu0 0.0
    %2812 = vmatpush2.xpose.msra.mxu0 0.0
    %2813 = vmatprep.subr.mxu0 0.0
    %2814 = vmatpush2.xpose.msra.mxu0 0.0
    %2815 = vmatprep.subr.mxu0 0.0
    %2816 = vmatpush2.xpose.msra.mxu0 0.0
    %2817 = vmatprep.subr.mxu0 0.0
    %2818 = vmatpush2.xpose.msra.mxu0 0.0
    %2819 = vmatprep.subr.mxu0 0.0
    %2820 = vmatpush2.xpose.msra.mxu0 0.0
    %2821 = vmatprep.mubr.f32.mxu0 0.0
    %2822 = vmatmul.mubr.f32.gmra.mxu0 %v2745
    %v2823 = vpop.f32.mrf.mxu0
    %v2824 = vadd.f32 0.0, %v2823
    %v2825 = vpop.f32.mrf.mxu0
    %2826 = vmatprep.mubr.f32.mxu0 0.0
    %2827 = vmatmul.mubr.f32.gmra.mxu0 %v2747
    %v2828 = vpop.f32.mrf.mxu0
    %v2829 = vadd.f32 0.0, %v2828
    %v2830 = vpop.f32.mrf.mxu0
    %2831 = vmatprep.mubr.f32.mxu0 0.0
    %2832 = vmatmul.mubr.f32.gmra.mxu0 %v2749
    %v2833 = vpop.f32.mrf.mxu0
    %v2834 = vadd.f32 0.0, %v2833
    %v2835 = vpop.f32.mrf.mxu0
    %2836 = vdwg.mxu0
    %v2837 = vmul.f32 %v2824, 0.35355338
    %v2838 = vmul.f32 %v2829, 0.35355338
    %v2839 = vmul.f32 %v2834, 0.35355338
    %v2840 = vsel %vm531, %v2837, -inf
    %2841 = vmax.xlane.f32.xlu0 %v2840
    %v2842 = vpop.xlane.xlu0 %2841
    %v2843 = vsel %vm531, %v2838, -inf
    %2844 = vmax.xlane.f32.xlu0 %v2843
    %v2845 = vpop.xlane.xlu0 %2844
    %v2846 = vsel %vm538, %v2839, -inf
    %2847 = vmax.xlane.f32.xlu0 %v2846
    %v2848 = vpop.xlane.xlu0 %2847
    %v2849 = vsub.f32 %v2837, %v2842
    %v2850 = vsub.f32 %v2838, %v2845
    %v2851 = vsub.f32 %v2839, %v2848
    %v2852 = vmul.f32 %v2849, 1.442695
    %v2853 = vpow.pop %v2852
    %v2854 = vmul.f32 %v2850, 1.442695
    %v2855 = vpow.pop %v2854
    %v2856 = vmul.f32 %v2851, 1.442695
    %v2857 = vpow.pop %v2856
    %v2858 = vsel %vm531, %v2853, 0.0
    %2859 = vadd.xlane.f32.xlu0 %v2858
    %v2860 = vpop.xlane.xlu0 %2859
    %v2861 = vsel %vm531, %v2855, 0.0
    %2862 = vadd.xlane.f32.xlu0 %v2861
    %v2863 = vpop.xlane.xlu0 %2862
    %v2864 = vsel %vm538, %v2857, 0.0
    %2865 = vadd.xlane.f32.xlu0 %v2864
    %v2866 = vpop.xlane.xlu0 %2865
    %v2867 = vrcp.pop %v2860
    %v2868 = vrcp.pop %v2863
    %v2869 = vrcp.pop %v2866
    %v2870 = vmul.f32 %v2853, %v2867
    %v2871 = vmul.f32 %v2855, %v2868
    %v2872 = vmul.f32 %v2857, %v2869
    %2873 = vrot.lane.b32.xlu0 %v1749, 40
    %v2874 = vpop.permute.xlu0 %2873
    %2875 = vrot.lane.b32.xlu0 %v1751, 40
    %v2876 = vpop.permute.xlu0 %2875
    %2877 = vrot.lane.b32.xlu0 %v1750, 40
    %v2878 = vpop.permute.xlu0 %2877
    %v2882 = vsel %vm531, %v2870, 0
    %v2885 = vsel %vm531, %v2871, 0
    %v2888 = vsel %vm531, %v2872, 0
    %v2890 = vsel %vm90, %v2878, 0
    %2892 = vmatprep.subr.mxu0 0.0
    %2893 = vmatpush1.msra.mxu0 0.0
    %2894 = vmatprep.subr.mxu0 0.0
    %2895 = vmatpush1.msra.mxu0 0.0
    %2896 = vmatprep.subr.mxu0 0.0
    %2897 = vmatpush1.msra.mxu0 0.0
    %2898 = vmatprep.subr.mxu0 0.0
    %2899 = vmatpush1.msra.mxu0 0.0
    %2900 = vmatprep.subr.mxu0 0.0
    %2901 = vmatpush1.msra.mxu0 0.0
    %2902 = vmatprep.subr.mxu0 0.0
    %2903 = vmatpush1.msra.mxu0 0.0
    %2904 = vmatprep.subr.mxu0 0.0
    %2905 = vmatpush1.msra.mxu0 0.0
    %2906 = vmatprep.subr.mxu0 0.0
    %2907 = vmatpush1.msra.mxu0 0.0
    %2908 = vmatprep.subr.mxu0 0.0
    %2909 = vmatpush1.msra.mxu0 0.0
    %2910 = vmatprep.subr.mxu0 0.0
    %2911 = vmatpush1.msra.mxu0 0.0
    %2912 = vmatprep.subr.mxu0 0.0
    %2913 = vmatpush1.msra.mxu0 0.0
    %2914 = vmatprep.subr.mxu0 0.0
    %2915 = vmatpush1.msra.mxu0 0.0
    %2916 = vmatprep.subr.mxu0 0.0
    %2917 = vmatpush1.msra.mxu0 0.0
    %2918 = vmatprep.subr.mxu0 0.0
    %2919 = vmatpush1.msra.mxu0 %v2890
    %2920 = vmatprep.subr.mxu0 0.0
    %2921 = vmatpush1.msra.mxu0 %v2876
    %2922 = vmatprep.subr.mxu0 0.0
    %2923 = vmatpush1.msra.mxu0 %v2874
    %2924 = vmatprep.subr.mxu0 0.0
    %2925 = vmatpush2.msra.mxu0 0.0
    %2926 = vmatprep.subr.mxu0 0.0
    %2927 = vmatpush2.msra.mxu0 0.0
    %2928 = vmatprep.subr.mxu0 0.0
    %2929 = vmatpush2.msra.mxu0 0.0
    %2930 = vmatprep.subr.mxu0 0.0
    %2931 = vmatpush2.msra.mxu0 0.0
    %2932 = vmatprep.subr.mxu0 0.0
    %2933 = vmatpush2.msra.mxu0 0.0
    %2934 = vmatprep.subr.mxu0 0.0
    %2935 = vmatpush2.msra.mxu0 0.0
    %2936 = vmatprep.subr.mxu0 0.0
    %2937 = vmatpush2.msra.mxu0 0.0
    %2938 = vmatprep.subr.mxu0 0.0
    %2939 = vmatpush2.msra.mxu0 0.0
    %2940 = vmatprep.subr.mxu0 0.0
    %2941 = vmatpush2.msra.mxu0 0.0
    %2942 = vmatprep.subr.mxu0 0.0
    %2943 = vmatpush2.msra.mxu0 0.0
    %2944 = vmatprep.subr.mxu0 0.0
    %2945 = vmatpush2.msra.mxu0 0.0
    %2946 = vmatprep.subr.mxu0 0.0
    %2947 = vmatpush2.msra.mxu0 0.0
    %2948 = vmatprep.subr.mxu0 0.0
    %2949 = vmatpush2.msra.mxu0 0.0
    %2950 = vmatprep.subr.mxu0 0.0
    %2951 = vmatpush2.msra.mxu0 0.0
    %2952 = vmatprep.subr.mxu0 0.0
    %2953 = vmatpush2.msra.mxu0 0.0
    %2954 = vmatprep.subr.mxu0 0.0
    %2955 = vmatpush2.msra.mxu0 0.0
    %2956 = vmatprep.mubr.f32.mxu0 0.0
    %2957 = vmatmul.mubr.f32.gmra.mxu0 %v2882
    %v2958 = vpop.f32.mrf.mxu0
    %v2959 = vadd.f32 0.0, %v2958
    %v2960 = vpop.f32.mrf.mxu0
    %2961 = vmatprep.mubr.f32.mxu0 0.0
    %2962 = vmatmul.mubr.f32.gmra.mxu0 %v2885
    %v2963 = vpop.f32.mrf.mxu0
    %v2964 = vadd.f32 0.0, %v2963
    %v2965 = vpop.f32.mrf.mxu0
    %2966 = vmatprep.mubr.f32.mxu0 0.0
    %2967 = vmatmul.mubr.f32.gmra.mxu0 %v2888
    %v2968 = vpop.f32.mrf.mxu0
    %v2969 = vadd.f32 0.0, %v2968
    %v2970 = vpop.f32.mrf.mxu0
    %2971 = vdwg.mxu0
    %v2973 = vsel %vm435, %v2959, 0
    %v2976 = vsel %vm435, %v2964, 0
    %v2979 = vsel %vm435, %v2969, 0
    %2981 = vmatprep.subr.mxu0 0.0
    %2982 = vmatpush1.msra.mxu0 0.0
    %2983 = vmatprep.subr.mxu0 0.0
    %2984 = vmatpush1.msra.mxu0 0.0
    %2985 = vmatprep.subr.mxu0 0.0
    %2986 = vmatpush1.msra.mxu0 0.0
    %2987 = vmatprep.subr.mxu0 0.0
    %2988 = vmatpush1.msra.mxu0 0.0
    %2989 = vmatprep.subr.mxu0 0.0
    %2990 = vmatpush1.msra.mxu0 0.0
    %2991 = vmatprep.subr.mxu0 0.0
    %2992 = vmatpush1.msra.mxu0 0.0
    %2993 = vmatprep.subr.mxu0 0.0
    %2994 = vmatpush1.msra.mxu0 0.0
    %2995 = vmatprep.subr.mxu0 0.0
    %2996 = vmatpush1.msra.mxu0 0.0
    %2997 = vmatprep.subr.mxu0 0.0
    %2998 = vmatpush1.msra.mxu0 0.0
    %2999 = vmatprep.subr.mxu0 0.0
    %3000 = vmatpush1.msra.mxu0 0.0
    %3001 = vmatprep.subr.mxu0 0.0
    %3002 = vmatpush1.msra.mxu0 0.0
    %3003 = vmatprep.subr.mxu0 0.0
    %3004 = vmatpush1.msra.mxu0 0.0
    %3005 = vmatprep.subr.mxu0 0.0
    %3006 = vmatpush1.msra.mxu0 0.0
    %3007 = vmatprep.subr.mxu0 0.0
    %3008 = vmatpush1.msra.mxu0 0.0
    %3009 = vmatprep.subr.mxu0 0.0
    %3010 = vmatpush1.msra.mxu0 0.0
    %3011 = vmatprep.subr.mxu0 0.0
    %3012 = vmatpush1.msra.mxu0 %v425
    %3013 = vmatprep.subr.mxu0 0.0
    %3014 = vmatpush2.msra.mxu0 0.0
    %3015 = vmatprep.subr.mxu0 0.0
    %3016 = vmatpush2.msra.mxu0 0.0
    %3017 = vmatprep.subr.mxu0 0.0
    %3018 = vmatpush2.msra.mxu0 0.0
    %3019 = vmatprep.subr.mxu0 0.0
    %3020 = vmatpush2.msra.mxu0 0.0
    %3021 = vmatprep.subr.mxu0 0.0
    %3022 = vmatpush2.msra.mxu0 0.0
    %3023 = vmatprep.subr.mxu0 0.0
    %3024 = vmatpush2.msra.mxu0 0.0
    %3025 = vmatprep.subr.mxu0 0.0
    %3026 = vmatpush2.msra.mxu0 0.0
    %3027 = vmatprep.subr.mxu0 0.0
    %3028 = vmatpush2.msra.mxu0 0.0
    %3029 = vmatprep.subr.mxu0 0.0
    %3030 = vmatpush2.msra.mxu0 0.0
    %3031 = vmatprep.subr.mxu0 0.0
    %3032 = vmatpush2.msra.mxu0 0.0
    %3033 = vmatprep.subr.mxu0 0.0
    %3034 = vmatpush2.msra.mxu0 0.0
    %3035 = vmatprep.subr.mxu0 0.0
    %3036 = vmatpush2.msra.mxu0 0.0
    %3037 = vmatprep.subr.mxu0 0.0
    %3038 = vmatpush2.msra.mxu0 0.0
    %3039 = vmatprep.subr.mxu0 0.0
    %3040 = vmatpush2.msra.mxu0 0.0
    %3041 = vmatprep.subr.mxu0 0.0
    %3042 = vmatpush2.msra.mxu0 0.0
    %3043 = vmatprep.subr.mxu0 0.0
    %3044 = vmatpush2.msra.mxu0 0.0
    %3045 = vmatprep.mubr.f32.mxu0 0.0
    %3046 = vmatmul.mubr.f32.gmra.mxu0 %v2973
    %v3047 = vpop.f32.mrf.mxu0
    %v3048 = vadd.f32 0.0, %v3047
    %v3049 = vpop.f32.mrf.mxu0
    %3050 = vmatprep.mubr.f32.mxu0 0.0
    %3051 = vmatmul.mubr.f32.gmra.mxu0 %v2976
    %v3052 = vpop.f32.mrf.mxu0
    %v3053 = vadd.f32 0.0, %v3052
    %v3054 = vpop.f32.mrf.mxu0
    %3055 = vmatprep.mubr.f32.mxu0 0.0
    %3056 = vmatmul.mubr.f32.gmra.mxu0 %v2979
    %v3057 = vpop.f32.mrf.mxu0
    %v3058 = vadd.f32 0.0, %v3057
    %v3059 = vpop.f32.mrf.mxu0
    %3060 = vdwg.mxu0
    %v3061 = vadd.f32 %v2730, %v3048
    %v3062 = vadd.f32 %v2731, %v3053
    %v3063 = vadd.f32 %v2732, %v3058
    %v3067 = vrot.slane %v3061, 7
    %v3068 = vrot.slane %v3062, 7
    %v3069 = vsel %vm90, %v3067, %v3068
    %v3070 = vrot.slane %v3063, 7
    %v3071 = vsel %vm90, %v3068, %v3070
    %v3075 = vsel %vm90, %v1743, %v3067
    %v3076 = vld [vmem:[%s10] sm:$0x1]
    %v3078 = vlaneseq
    %v3079 = vshrl.u32 %v3078, 7
    %v3080 = vsub.s32 0, %v3079
    %v3081 = vrot.slane %v3076, %v3080
    %v3083 = vadd.f32 %v1741, %v3081
    %v3084 = vadd.f32 %v1742, %v3081
    %v3085 = vadd.f32 %v3075, %v3081
    %v3086 = vadd.f32 %v3069, %v3081
    %v3087 = vadd.f32 %v3071, %v3081
    %v3088 = vadd.f32 %v191, %v3083
    %v3089 = vadd.f32 %v196, %v3084
    %v3090 = vadd.f32 %v201, %v3085
    %v3091 = vadd.f32 %v206, %v3086
    %v3092 = vadd.f32 %v211, %v3087
    %v3093 = vld [vmem:[%s11] sm:$0x1]
    %v3094 = vld [vmem:[%s12] sm:$0x1]
    %v3095 = vsel %vm216, %v3088, 0.0
    %3096 = vadd.xlane.f32.xlu0 %v3095
    %v3097 = vpop.xlane.xlu0 %3096
    %v3098 = vsel %vm216, %v3089, 0.0
    %3099 = vadd.xlane.f32.xlu0 %v3098
    %v3100 = vpop.xlane.xlu0 %3099
    %v3101 = vsel %vm216, %v3090, 0.0
    %3102 = vadd.xlane.f32.xlu0 %v3101
    %v3103 = vpop.xlane.xlu0 %3102
    %v3104 = vsel %vm216, %v3091, 0.0
    %3105 = vadd.xlane.f32.xlu0 %v3104
    %v3106 = vpop.xlane.xlu0 %3105
    %v3107 = vsel %vm229, %v3092, 0.0
    %3108 = vadd.xlane.f32.xlu0 %v3107
    %v3109 = vpop.xlane.xlu0 %3108
    %v3110 = vmul.f32 %v3097, %v233
    %v3111 = vmul.f32 %v3100, %v233
    %v3112 = vmul.f32 %v3103, %v233
    %v3113 = vmul.f32 %v3106, %v233
    %v3114 = vmul.f32 %v3109, %v233
    %v3115 = vsub.f32 %v3088, %v3110
    %v3116 = vsub.f32 %v3089, %v3111
    %v3117 = vsub.f32 %v3090, %v3112
    %v3118 = vsub.f32 %v3091, %v3113
    %v3119 = vsub.f32 %v3092, %v3114
    %v3120 = vmul.f32 %v3115, %v3115
    %v3121 = vmul.f32 %v3116, %v3116
    %v3122 = vmul.f32 %v3117, %v3117
    %v3123 = vmul.f32 %v3118, %v3118
    %v3124 = vmul.f32 %v3119, %v3119
    %v3125 = vsel %vm216, %v3120, 0.0
    %3126 = vadd.xlane.f32.xlu0 %v3125
    %v3127 = vpop.xlane.xlu0 %3126
    %v3128 = vsel %vm216, %v3121, 0.0
    %3129 = vadd.xlane.f32.xlu0 %v3128
    %v3130 = vpop.xlane.xlu0 %3129
    %v3131 = vsel %vm216, %v3122, 0.0
    %3132 = vadd.xlane.f32.xlu0 %v3131
    %v3133 = vpop.xlane.xlu0 %3132
    %v3134 = vsel %vm216, %v3123, 0.0
    %3135 = vadd.xlane.f32.xlu0 %v3134
    %v3136 = vpop.xlane.xlu0 %3135
    %v3137 = vsel %vm229, %v3124, 0.0
    %3138 = vadd.xlane.f32.xlu0 %v3137
    %v3139 = vpop.xlane.xlu0 %3138
    %v3140 = vmul.f32 %v3127, %v233
    %v3141 = vmul.f32 %v3130, %v233
    %v3142 = vmul.f32 %v3133, %v233
    %v3143 = vmul.f32 %v3136, %v233
    %v3144 = vmul.f32 %v3139, %v233
    %v3145 = vadd.f32 %v3140, 1e-12
    %v3146 = vadd.f32 %v3141, 1e-12
    %v3147 = vadd.f32 %v3142, 1e-12
    %v3148 = vadd.f32 %v3143, 1e-12
    %v3149 = vadd.f32 %v3144, 1e-12
    %v3150 = vrsqrt.pop %v3145
    %v3151 = vrsqrt.pop %v3146
    %v3152 = vrsqrt.pop %v3147
    %v3153 = vrsqrt.pop %v3148
    %v3154 = vrsqrt.pop %v3149
    %v3155 = vmul.f32 %v3115, %v3150
    %v3156 = vmul.f32 %v3116, %v3151
    %v3157 = vmul.f32 %v3117, %v3152
    %v3158 = vmul.f32 %v3118, %v3153
    %v3159 = vmul.f32 %v3119, %v3154
    %v3161 = vlaneseq
    %v3162 = vshrl.u32 %v3161, 7
    %v3163 = vsub.s32 0, %v3162
    %v3164 = vrot.slane %v3093, %v3163
    %v3166 = vmul.f32 %v3155, %v3164
    %v3167 = vmul.f32 %v3156, %v3164
    %v3168 = vmul.f32 %v3157, %v3164
    %v3169 = vmul.f32 %v3158, %v3164
    %v3170 = vmul.f32 %v3159, %v3164
    %v3172 = vlaneseq
    %v3173 = vshrl.u32 %v3172, 7
    %v3174 = vsub.s32 0, %v3173
    %v3175 = vrot.slane %v3094, %v3174
    %v3177 = vadd.f32 %v3166, %v3175
    %v3178 = vadd.f32 %v3167, %v3175
    %v3179 = vadd.f32 %v3168, %v3175
    %v3180 = vadd.f32 %v3169, %v3175
    %v3181 = vadd.f32 %v3170, %v3175
    %v3182 = vld [vmem:[%s13] sm:$0xff]
    %v3183 = vld [vmem:[%s13 + $0x8] sm:$0xff]
    %v3184 = vld [vmem:[%s13 + $0x10] sm:$0xff]
    %v3185 = vld [vmem:[%s13 + $0x18] sm:$0xff]
    %v3186 = vld [vmem:[%s14] sm:$0x1]
    %v3188 = vlaneseq
    %v3189 = vshrl.u32 %v3188, 7
    %v3190 = vsub.s32 0, %v3189
    %v3191 = vrot.slane %v3186, %v3190
    %v3194 = vsel %vm216, %v3177, 0
    %v3197 = vsel %vm216, %v3178, 0
    %v3200 = vsel %vm216, %v3179, 0
    %v3203 = vsel %vm216, %v3180, 0
    %v3206 = vsel %vm216, %v3181, 0
    %3208 = vmatprep.subr.mxu0 0.0
    %3209 = vmatpush1.msra.mxu0 0.0
    %3210 = vmatprep.subr.mxu0 0.0
    %3211 = vmatpush1.msra.mxu0 0.0
    %3212 = vmatprep.subr.mxu0 0.0
    %3213 = vmatpush1.msra.mxu0 0.0
    %3214 = vmatprep.subr.mxu0 0.0
    %3215 = vmatpush1.msra.mxu0 0.0
    %3216 = vmatprep.subr.mxu0 0.0
    %3217 = vmatpush1.msra.mxu0 0.0
    %3218 = vmatprep.subr.mxu0 0.0
    %3219 = vmatpush1.msra.mxu0 0.0
    %3220 = vmatprep.subr.mxu0 0.0
    %3221 = vmatpush1.msra.mxu0 0.0
    %3222 = vmatprep.subr.mxu0 0.0
    %3223 = vmatpush1.msra.mxu0 0.0
    %3224 = vmatprep.subr.mxu0 0.0
    %3225 = vmatpush1.msra.mxu0 0.0
    %3226 = vmatprep.subr.mxu0 0.0
    %3227 = vmatpush1.msra.mxu0 0.0
    %3228 = vmatprep.subr.mxu0 0.0
    %3229 = vmatpush1.msra.mxu0 0.0
    %3230 = vmatprep.subr.mxu0 0.0
    %3231 = vmatpush1.msra.mxu0 0.0
    %3232 = vmatprep.subr.mxu0 0.0
    %3233 = vmatpush1.msra.mxu0 %v3185
    %3234 = vmatprep.subr.mxu0 0.0
    %3235 = vmatpush1.msra.mxu0 %v3184
    %3236 = vmatprep.subr.mxu0 0.0
    %3237 = vmatpush1.msra.mxu0 %v3183
    %3238 = vmatprep.subr.mxu0 0.0
    %3239 = vmatpush1.msra.mxu0 %v3182
    %3240 = vmatprep.subr.mxu0 0.0
    %3241 = vmatpush2.msra.mxu0 0.0
    %3242 = vmatprep.subr.mxu0 0.0
    %3243 = vmatpush2.msra.mxu0 0.0
    %3244 = vmatprep.subr.mxu0 0.0
    %3245 = vmatpush2.msra.mxu0 0.0
    %3246 = vmatprep.subr.mxu0 0.0
    %3247 = vmatpush2.msra.mxu0 0.0
    %3248 = vmatprep.subr.mxu0 0.0
    %3249 = vmatpush2.msra.mxu0 0.0
    %3250 = vmatprep.subr.mxu0 0.0
    %3251 = vmatpush2.msra.mxu0 0.0
    %3252 = vmatprep.subr.mxu0 0.0
    %3253 = vmatpush2.msra.mxu0 0.0
    %3254 = vmatprep.subr.mxu0 0.0
    %3255 = vmatpush2.msra.mxu0 0.0
    %3256 = vmatprep.subr.mxu0 0.0
    %3257 = vmatpush2.msra.mxu0 0.0
    %3258 = vmatprep.subr.mxu0 0.0
    %3259 = vmatpush2.msra.mxu0 0.0
    %3260 = vmatprep.subr.mxu0 0.0
    %3261 = vmatpush2.msra.mxu0 0.0
    %3262 = vmatprep.subr.mxu0 0.0
    %3263 = vmatpush2.msra.mxu0 0.0
    %3264 = vmatprep.subr.mxu0 0.0
    %3265 = vmatpush2.msra.mxu0 0.0
    %3266 = vmatprep.subr.mxu0 0.0
    %3267 = vmatpush2.msra.mxu0 0.0
    %3268 = vmatprep.subr.mxu0 0.0
    %3269 = vmatpush2.msra.mxu0 0.0
    %3270 = vmatprep.subr.mxu0 0.0
    %3271 = vmatpush2.msra.mxu0 0.0
    %3272 = vmatprep.mubr.f32.mxu0 0.0
    %3273 = vmatmul.mubr.f32.gmra.mxu0 %v3194
    %v3274 = vpop.f32.mrf.mxu0
    %v3275 = vadd.f32 %v3191, %v3274
    %v3276 = vpop.f32.mrf.mxu0
    %3277 = vmatprep.mubr.f32.mxu0 0.0
    %3278 = vmatmul.mubr.f32.gmra.mxu0 %v3197
    %v3279 = vpop.f32.mrf.mxu0
    %v3280 = vadd.f32 %v3191, %v3279
    %v3281 = vpop.f32.mrf.mxu0
    %3282 = vmatprep.mubr.f32.mxu0 0.0
    %3283 = vmatmul.mubr.f32.gmra.mxu0 %v3200
    %v3284 = vpop.f32.mrf.mxu0
    %v3285 = vadd.f32 %v3191, %v3284
    %v3286 = vpop.f32.mrf.mxu0
    %3287 = vmatprep.mubr.f32.mxu0 0.0
    %3288 = vmatmul.mubr.f32.gmra.mxu0 %v3203
    %v3289 = vpop.f32.mrf.mxu0
    %v3290 = vadd.f32 %v3191, %v3289
    %v3291 = vpop.f32.mrf.mxu0
    %3292 = vmatprep.mubr.f32.mxu0 0.0
    %3293 = vmatmul.mubr.f32.gmra.mxu0 %v3206
    %v3294 = vpop.f32.mrf.mxu0
    %v3295 = vadd.f32 %v3191, %v3294
    %v3296 = vpop.f32.mrf.mxu0
    %3297 = vdwg.mxu0
    %v3298 = vmul.f32 %v3275, %v3275
    %v3299 = vmul.f32 %v3280, %v3280
    %v3300 = vmul.f32 %v3285, %v3285
    %v3301 = vmul.f32 %v3290, %v3290
    %v3302 = vmul.f32 %v3295, %v3295
    %v3303 = vmul.f32 %v3275, %v3298
    %v3304 = vmul.f32 %v3280, %v3299
    %v3305 = vmul.f32 %v3285, %v3300
    %v3306 = vmul.f32 %v3290, %v3301
    %v3307 = vmul.f32 %v3295, %v3302
    %v3308 = vmul.f32 %v3303, 0.044715
    %v3309 = vmul.f32 %v3304, 0.044715
    %v3310 = vmul.f32 %v3305, 0.044715
    %v3311 = vmul.f32 %v3306, 0.044715
    %v3312 = vmul.f32 %v3307, 0.044715
    %v3313 = vadd.f32 %v3275, %v3308
    %v3314 = vadd.f32 %v3280, %v3309
    %v3315 = vadd.f32 %v3285, %v3310
    %v3316 = vadd.f32 %v3290, %v3311
    %v3317 = vadd.f32 %v3295, %v3312
    %v3318 = vmul.f32 %v3313, 0.7978846
    %v3319 = vmul.f32 %v3314, 0.7978846
    %v3320 = vmul.f32 %v3315, 0.7978846
    %v3321 = vmul.f32 %v3316, 0.7978846
    %v3322 = vmul.f32 %v3317, 0.7978846
    %v3323 = vtanh.pop %v3318
    %v3324 = vtanh.pop %v3319
    %v3325 = vtanh.pop %v3320
    %v3326 = vtanh.pop %v3321
    %v3327 = vtanh.pop %v3322
    %v3328 = vadd.f32 %v3323, 1.0
    %v3329 = vadd.f32 %v3324, 1.0
    %v3330 = vadd.f32 %v3325, 1.0
    %v3331 = vadd.f32 %v3326, 1.0
    %v3332 = vadd.f32 %v3327, 1.0
    %v3333 = vmul.f32 %v3328, 0.5
    %v3334 = vmul.f32 %v3329, 0.5
    %v3335 = vmul.f32 %v3330, 0.5
    %v3336 = vmul.f32 %v3331, 0.5
    %v3337 = vmul.f32 %v3332, 0.5
    %v3338 = vmul.f32 %v3275, %v3333
    %v3339 = vmul.f32 %v3280, %v3334
    %v3340 = vmul.f32 %v3285, %v3335
    %v3341 = vmul.f32 %v3290, %v3336
    %v3342 = vmul.f32 %v3295, %v3337
    %v3343 = vld [vmem:[%s15] sm:$0xff]
    %v3344 = vld [vmem:[%s15 + $0x8] sm:$0xff]
    %v3345 = vld [vmem:[%s15 + $0x10] sm:$0xff]
    %v3346 = vld [vmem:[%s15 + $0x18] sm:$0xff]
    %v3347 = vld [vmem:[%s15 + $0x20] sm:$0xff]
    %v3348 = vld [vmem:[%s15 + $0x28] sm:$0xff]
    %v3349 = vld [vmem:[%s15 + $0x30] sm:$0xff]
    %v3350 = vld [vmem:[%s15 + $0x38] sm:$0xff]
    %v3351 = vld [vmem:[%s16] sm:$0x1]
    %v3353 = vlaneseq
    %v3354 = vshrl.u32 %v3353, 7
    %v3355 = vsub.s32 0, %v3354
    %v3356 = vrot.slane %v3351, %v3355
    %vm3358 = vcmask 523264
    %v3360 = vsel %vm3358, %v3338, 0
    %v3363 = vsel %vm3358, %v3339, 0
    %v3366 = vsel %vm3358, %v3340, 0
    %v3369 = vsel %vm3358, %v3341, 0
    %v3372 = vsel %vm3358, %v3342, 0
    %3374 = vmatprep.subr.mxu0 0.0
    %3375 = vmatpush1.msra.mxu0 0.0
    %3376 = vmatprep.subr.mxu0 0.0
    %3377 = vmatpush1.msra.mxu0 0.0
    %3378 = vmatprep.subr.mxu0 0.0
    %3379 = vmatpush1.msra.mxu0 0.0
    %3380 = vmatprep.subr.mxu0 0.0
    %3381 = vmatpush1.msra.mxu0 0.0
    %3382 = vmatprep.subr.mxu0 0.0
    %3383 = vmatpush1.msra.mxu0 0.0
    %3384 = vmatprep.subr.mxu0 0.0
    %3385 = vmatpush1.msra.mxu0 0.0
    %3386 = vmatprep.subr.mxu0 0.0
    %3387 = vmatpush1.msra.mxu0 0.0
    %3388 = vmatprep.subr.mxu0 0.0
    %3389 = vmatpush1.msra.mxu0 0.0
    %3390 = vmatprep.subr.mxu0 0.0
    %3391 = vmatpush1.msra.mxu0 %v3350
    %3392 = vmatprep.subr.mxu0 0.0
    %3393 = vmatpush1.msra.mxu0 %v3349
    %3394 = vmatprep.subr.mxu0 0.0
    %3395 = vmatpush1.msra.mxu0 %v3348
    %3396 = vmatprep.subr.mxu0 0.0
    %3397 = vmatpush1.msra.mxu0 %v3347
    %3398 = vmatprep.subr.mxu0 0.0
    %3399 = vmatpush1.msra.mxu0 %v3346
    %3400 = vmatprep.subr.mxu0 0.0
    %3401 = vmatpush1.msra.mxu0 %v3345
    %3402 = vmatprep.subr.mxu0 0.0
    %3403 = vmatpush1.msra.mxu0 %v3344
    %3404 = vmatprep.subr.mxu0 0.0
    %3405 = vmatpush1.msra.mxu0 %v3343
    %3406 = vmatprep.subr.mxu0 0.0
    %3407 = vmatpush2.msra.mxu0 0.0
    %3408 = vmatprep.subr.mxu0 0.0
    %3409 = vmatpush2.msra.mxu0 0.0
    %3410 = vmatprep.subr.mxu0 0.0
    %3411 = vmatpush2.msra.mxu0 0.0
    %3412 = vmatprep.subr.mxu0 0.0
    %3413 = vmatpush2.msra.mxu0 0.0
    %3414 = vmatprep.subr.mxu0 0.0
    %3415 = vmatpush2.msra.mxu0 0.0
    %3416 = vmatprep.subr.mxu0 0.0
    %3417 = vmatpush2.msra.mxu0 0.0
    %3418 = vmatprep.subr.mxu0 0.0
    %3419 = vmatpush2.msra.mxu0 0.0
    %3420 = vmatprep.subr.mxu0 0.0
    %3421 = vmatpush2.msra.mxu0 0.0
    %3422 = vmatprep.subr.mxu0 0.0
    %3423 = vmatpush2.msra.mxu0 0.0
    %3424 = vmatprep.subr.mxu0 0.0
    %3425 = vmatpush2.msra.mxu0 0.0
    %3426 = vmatprep.subr.mxu0 0.0
    %3427 = vmatpush2.msra.mxu0 0.0
    %3428 = vmatprep.subr.mxu0 0.0
    %3429 = vmatpush2.msra.mxu0 0.0
    %3430 = vmatprep.subr.mxu0 0.0
    %3431 = vmatpush2.msra.mxu0 0.0
    %3432 = vmatprep.subr.mxu0 0.0
    %3433 = vmatpush2.msra.mxu0 0.0
    %3434 = vmatprep.subr.mxu0 0.0
    %3435 = vmatpush2.msra.mxu0 0.0
    %3436 = vmatprep.subr.mxu0 0.0
    %3437 = vmatpush2.msra.mxu0 0.0
    %3438 = vmatprep.mubr.f32.mxu0 0.0
    %3439 = vmatmul.mubr.f32.gmra.mxu0 %v3360
    %v3440 = vpop.f32.mrf.mxu0
    %v3441 = vadd.f32 %v3356, %v3440
    %v3442 = vpop.f32.mrf.mxu0
    %3443 = vmatprep.mubr.f32.mxu0 0.0
    %3444 = vmatmul.mubr.f32.gmra.mxu0 %v3363
    %v3445 = vpop.f32.mrf.mxu0
    %v3446 = vadd.f32 %v3356, %v3445
    %v3447 = vpop.f32.mrf.mxu0
    %3448 = vmatprep.mubr.f32.mxu0 0.0
    %3449 = vmatmul.mubr.f32.gmra.mxu0 %v3366
    %v3450 = vpop.f32.mrf.mxu0
    %v3451 = vadd.f32 %v3356, %v3450
    %v3452 = vpop.f32.mrf.mxu0
    %3453 = vmatprep.mubr.f32.mxu0 0.0
    %3454 = vmatmul.mubr.f32.gmra.mxu0 %v3369
    %v3455 = vpop.f32.mrf.mxu0
    %v3456 = vadd.f32 %v3356, %v3455
    %v3457 = vpop.f32.mrf.mxu0
    %3458 = vmatprep.mubr.f32.mxu0 0.0
    %3459 = vmatmul.mubr.f32.gmra.mxu0 %v3372
    %v3460 = vpop.f32.mrf.mxu0
    %v3461 = vadd.f32 %v3356, %v3460
    %v3462 = vpop.f32.mrf.mxu0
    %3463 = vdwg.mxu0
    %v3464 = vadd.f32 %v3088, %v3441
    %v3465 = vadd.f32 %v3089, %v3446
    %v3466 = vadd.f32 %v3090, %v3451
    %v3467 = vadd.f32 %v3091, %v3456
    %v3468 = vadd.f32 %v3092, %v3461
    %s3469 = scalar_lea.vmem %s5, 1
    %v3470 = vld [vmem:[%s3469] sm:$0x1]
    %s3471 = scalar_lea.vmem %s6, 1
    %v3472 = vld [vmem:[%s3471] sm:$0x1]
    %v3473 = vsel %vm216, %v3464, 0.0
    %3474 = vadd.xlane.f32.xlu0 %v3473
    %v3475 = vpop.xlane.xlu0 %3474
    %v3476 = vsel %vm216, %v3465, 0.0
    %3477 = vadd.xlane.f32.xlu0 %v3476
    %v3478 = vpop.xlane.xlu0 %3477
    %v3479 = vsel %vm216, %v3466, 0.0
    %3480 = vadd.xlane.f32.xlu0 %v3479
    %v3481 = vpop.xlane.xlu0 %3480
    %v3482 = vsel %vm216, %v3467, 0.0
    %3483 = vadd.xlane.f32.xlu0 %v3482
    %v3484 = vpop.xlane.xlu0 %3483
    %v3485 = vsel %vm229, %v3468, 0.0
    %3486 = vadd.xlane.f32.xlu0 %v3485
    %v3487 = vpop.xlane.xlu0 %3486
    %v3488 = vmul.f32 %v3475, %v233
    %v3489 = vmul.f32 %v3478, %v233
    %v3490 = vmul.f32 %v3481, %v233
    %v3491 = vmul.f32 %v3484, %v233
    %v3492 = vmul.f32 %v3487, %v233
    %v3493 = vsub.f32 %v3464, %v3488
    %v3494 = vsub.f32 %v3465, %v3489
    %v3495 = vsub.f32 %v3466, %v3490
    %v3496 = vsub.f32 %v3467, %v3491
    %v3497 = vsub.f32 %v3468, %v3492
    %v3498 = vmul.f32 %v3493, %v3493
    %v3499 = vmul.f32 %v3494, %v3494
    %v3500 = vmul.f32 %v3495, %v3495
    %v3501 = vmul.f32 %v3496, %v3496
    %v3502 = vmul.f32 %v3497, %v3497
    %v3503 = vsel %vm216, %v3498, 0.0
    %3504 = vadd.xlane.f32.xlu0 %v3503
    %v3505 = vpop.xlane.xlu0 %3504
    %v3506 = vsel %vm216, %v3499, 0.0
    %3507 = vadd.xlane.f32.xlu0 %v3506
    %v3508 = vpop.xlane.xlu0 %3507
    %v3509 = vsel %vm216, %v3500, 0.0
    %3510 = vadd.xlane.f32.xlu0 %v3509
    %v3511 = vpop.xlane.xlu0 %3510
    %v3512 = vsel %vm216, %v3501, 0.0
    %3513 = vadd.xlane.f32.xlu0 %v3512
    %v3514 = vpop.xlane.xlu0 %3513
    %v3515 = vsel %vm229, %v3502, 0.0
    %3516 = vadd.xlane.f32.xlu0 %v3515
    %v3517 = vpop.xlane.xlu0 %3516
    %v3518 = vmul.f32 %v3505, %v233
    %v3519 = vmul.f32 %v3508, %v233
    %v3520 = vmul.f32 %v3511, %v233
    %v3521 = vmul.f32 %v3514, %v233
    %v3522 = vmul.f32 %v3517, %v233
    %v3523 = vadd.f32 %v3518, 1e-12
    %v3524 = vadd.f32 %v3519, 1e-12
    %v3525 = vadd.f32 %v3520, 1e-12
    %v3526 = vadd.f32 %v3521, 1e-12
    %v3527 = vadd.f32 %v3522, 1e-12
    %v3528 = vrsqrt.pop %v3523
    %v3529 = vrsqrt.pop %v3524
    %v3530 = vrsqrt.pop %v3525
    %v3531 = vrsqrt.pop %v3526
    %v3532 = vrsqrt.pop %v3527
    %v3533 = vmul.f32 %v3493, %v3528
    %v3534 = vmul.f32 %v3494, %v3529
    %v3535 = vmul.f32 %v3495, %v3530
    %v3536 = vmul.f32 %v3496, %v3531
    %v3537 = vmul.f32 %v3497, %v3532
    %v3539 = vlaneseq
    %v3540 = vshrl.u32 %v3539, 7
    %v3541 = vsub.s32 0, %v3540
    %v3542 = vrot.slane %v3470, %v3541
    %v3544 = vmul.f32 %v3533, %v3542
    %v3545 = vmul.f32 %v3534, %v3542
    %v3546 = vmul.f32 %v3535, %v3542
    %v3547 = vmul.f32 %v3536, %v3542
    %v3548 = vmul.f32 %v3537, %v3542
    %v3550 = vlaneseq
    %v3551 = vshrl.u32 %v3550, 7
    %v3552 = vsub.s32 0, %v3551
    %v3553 = vrot.slane %v3472, %v3552
    %v3555 = vadd.f32 %v3544, %v3553
    %v3556 = vadd.f32 %v3545, %v3553
    %v3557 = vadd.f32 %v3546, %v3553
    %v3558 = vadd.f32 %v3547, %v3553
    %v3559 = vadd.f32 %v3548, %v3553
    %s3560 = scalar_lea.vmem %s7, 32
    %v3561 = vld [vmem:[%s3560] sm:$0xff]
    %v3562 = vld [vmem:[%s3560 + $0x8] sm:$0xff]
    %v3563 = vld [vmem:[%s3560 + $0x10] sm:$0xff]
    %v3564 = vld [vmem:[%s3560 + $0x18] sm:$0xff]
    %s3565 = scalar_lea.vmem %s8, 1
    %v3566 = vld [vmem:[%s3565] sm:$0x1]
    %v3568 = vlaneseq
    %v3569 = vshrl.u32 %v3568, 7
    %v3570 = vsub.s32 0, %v3569
    %v3571 = vrot.slane %v3566, %v3570
    %v3574 = vsel %vm216, %v3555, 0
    %v3577 = vsel %vm216, %v3556, 0
    %v3580 = vsel %vm216, %v3557, 0
    %v3583 = vsel %vm216, %v3558, 0
    %v3586 = vsel %vm216, %v3559, 0
    %3588 = vmatprep.subr.mxu0 0.0
    %3589 = vmatpush1.msra.mxu0 0.0
    %3590 = vmatprep.subr.mxu0 0.0
    %3591 = vmatpush1.msra.mxu0 0.0
    %3592 = vmatprep.subr.mxu0 0.0
    %3593 = vmatpush1.msra.mxu0 0.0
    %3594 = vmatprep.subr.mxu0 0.0
    %3595 = vmatpush1.msra.mxu0 0.0
    %3596 = vmatprep.subr.mxu0 0.0
    %3597 = vmatpush1.msra.mxu0 0.0
    %3598 = vmatprep.subr.mxu0 0.0
    %3599 = vmatpush1.msra.mxu0 0.0
    %3600 = vmatprep.subr.mxu0 0.0
    %3601 = vmatpush1.msra.mxu0 0.0
    %3602 = vmatprep.subr.mxu0 0.0
    %3603 = vmatpush1.msra.mxu0 0.0
    %3604 = vmatprep.subr.mxu0 0.0
    %3605 = vmatpush1.msra.mxu0 0.0
    %3606 = vmatprep.subr.mxu0 0.0
    %3607 = vmatpush1.msra.mxu0 0.0
    %3608 = vmatprep.subr.mxu0 0.0
    %3609 = vmatpush1.msra.mxu0 0.0
    %3610 = vmatprep.subr.mxu0 0.0
    %3611 = vmatpush1.msra.mxu0 0.0
    %3612 = vmatprep.subr.mxu0 0.0
    %3613 = vmatpush1.msra.mxu0 %v3564
    %3614 = vmatprep.subr.mxu0 0.0
    %3615 = vmatpush1.msra.mxu0 %v3563
    %3616 = vmatprep.subr.mxu0 0.0
    %3617 = vmatpush1.msra.mxu0 %v3562
    %3618 = vmatprep.subr.mxu0 0.0
    %3619 = vmatpush1.msra.mxu0 %v3561
    %3620 = vmatprep.subr.mxu0 0.0
    %3621 = vmatpush2.msra.mxu0 0.0
    %3622 = vmatprep.subr.mxu0 0.0
    %3623 = vmatpush2.msra.mxu0 0.0
    %3624 = vmatprep.subr.mxu0 0.0
    %3625 = vmatpush2.msra.mxu0 0.0
    %3626 = vmatprep.subr.mxu0 0.0
    %3627 = vmatpush2.msra.mxu0 0.0
    %3628 = vmatprep.subr.mxu0 0.0
    %3629 = vmatpush2.msra.mxu0 0.0
    %3630 = vmatprep.subr.mxu0 0.0
    %3631 = vmatpush2.msra.mxu0 0.0
    %3632 = vmatprep.subr.mxu0 0.0
    %3633 = vmatpush2.msra.mxu0 0.0
    %3634 = vmatprep.subr.mxu0 0.0
    %3635 = vmatpush2.msra.mxu0 0.0
    %3636 = vmatprep.subr.mxu0 0.0
    %3637 = vmatpush2.msra.mxu0 0.0
    %3638 = vmatprep.subr.mxu0 0.0
    %3639 = vmatpush2.msra.mxu0 0.0
    %3640 = vmatprep.subr.mxu0 0.0
    %3641 = vmatpush2.msra.mxu0 0.0
    %3642 = vmatprep.subr.mxu0 0.0
    %3643 = vmatpush2.msra.mxu0 0.0
    %3644 = vmatprep.subr.mxu0 0.0
    %3645 = vmatpush2.msra.mxu0 0.0
    %3646 = vmatprep.subr.mxu0 0.0
    %3647 = vmatpush2.msra.mxu0 0.0
    %3648 = vmatprep.subr.mxu0 0.0
    %3649 = vmatpush2.msra.mxu0 0.0
    %3650 = vmatprep.subr.mxu0 0.0
    %3651 = vmatpush2.msra.mxu0 0.0
    %3652 = vmatprep.mubr.f32.mxu0 0.0
    %3653 = vmatmul.mubr.f32.gmra.mxu0 %v3574
    %v3654 = vpop.f32.mrf.mxu0
    %v3655 = vadd.f32 %v3571, %v3654
    %v3656 = vpop.f32.mrf.mxu0
    %3657 = vmatprep.mubr.f32.mxu0 0.0
    %3658 = vmatmul.mubr.f32.gmra.mxu0 %v3577
    %v3659 = vpop.f32.mrf.mxu0
    %v3660 = vadd.f32 %v3571, %v3659
    %v3661 = vpop.f32.mrf.mxu0
    %3662 = vmatprep.mubr.f32.mxu0 0.0
    %3663 = vmatmul.mubr.f32.gmra.mxu0 %v3580
    %v3664 = vpop.f32.mrf.mxu0
    %v3665 = vadd.f32 %v3571, %v3664
    %v3666 = vpop.f32.mrf.mxu0
    %3667 = vmatprep.mubr.f32.mxu0 0.0
    %3668 = vmatmul.mubr.f32.gmra.mxu0 %v3583
    %v3669 = vpop.f32.mrf.mxu0
    %v3670 = vadd.f32 %v3571, %v3669
    %v3671 = vpop.f32.mrf.mxu0
    %3672 = vmatprep.mubr.f32.mxu0 0.0
    %3673 = vmatmul.mubr.f32.gmra.mxu0 %v3586
    %v3674 = vpop.f32.mrf.mxu0
    %v3675 = vadd.f32 %v3571, %v3674
    %v3676 = vpop.f32.mrf.mxu0
    %3677 = vdwg.mxu0
    %s3678 = scalar_lea.vmem %s9, 32
    %v3679 = vld [vmem:[%s3678] sm:$0xff]
    %v3680 = vld [vmem:[%s3678 + $0x8] sm:$0xff]
    %v3681 = vld [vmem:[%s3678 + $0x10] sm:$0xff]
    %v3682 = vld [vmem:[%s3678 + $0x18] sm:$0xff]
    %3686 = vrot.lane.b32.xlu0 %v3655, 96
    %v3687 = vpop.permute.xlu0 %3686
    %3688 = vrot.lane.b32.xlu0 %v3660, 96
    %v3689 = vpop.permute.xlu0 %3688
    %3690 = vrot.lane.b32.xlu0 %v3665, 96
    %v3691 = vpop.permute.xlu0 %3690
    %v3692 = vsel %vm435, %v3655, 0
    %v3694 = vsel %vm435, %v3660, 0
    %v3696 = vsel %vm435, %v3665, 0
    %v3698 = vsel %vm435, %v3687, 0
    %v3700 = vsel %vm435, %v3689, 0
    %v3702 = vsel %vm435, %v3691, 0
    %3704 = vmatprep.subr.mxu0 0.0
    %3705 = vmatpush1.xpose.msra.mxu0 0.0
    %3706 = vmatprep.subr.mxu0 0.0
    %3707 = vmatpush1.xpose.msra.mxu0 0.0
    %3708 = vmatprep.subr.mxu0 0.0
    %3709 = vmatpush1.xpose.msra.mxu0 0.0
    %3710 = vmatprep.subr.mxu0 0.0
    %3711 = vmatpush1.xpose.msra.mxu0 0.0
    %3712 = vmatprep.subr.mxu0 0.0
    %3713 = vmatpush1.xpose.msra.mxu0 0.0
    %3714 = vmatprep.subr.mxu0 0.0
    %3715 = vmatpush1.xpose.msra.mxu0 0.0
    %3716 = vmatprep.subr.mxu0 0.0
    %3717 = vmatpush1.xpose.msra.mxu0 0.0
    %3718 = vmatprep.subr.mxu0 0.0
    %3719 = vmatpush1.xpose.msra.mxu0 0.0
    %3720 = vmatprep.subr.mxu0 0.0
    %3721 = vmatpush1.xpose.msra.mxu0 0.0
    %3722 = vmatprep.subr.mxu0 0.0
    %3723 = vmatpush1.xpose.msra.mxu0 0.0
    %3724 = vmatprep.subr.mxu0 0.0
    %3725 = vmatpush1.xpose.msra.mxu0 0.0
    %3726 = vmatprep.subr.mxu0 0.0
    %3727 = vmatpush1.xpose.msra.mxu0 0.0
    %3728 = vmatprep.subr.mxu0 0.0
    %3729 = vmatpush1.xpose.msra.mxu0 0.0
    %3730 = vmatprep.subr.mxu0 0.0
    %3731 = vmatpush1.xpose.msra.mxu0 %v3702
    %3732 = vmatprep.subr.mxu0 0.0
    %3733 = vmatpush1.xpose.msra.mxu0 %v3700
    %3734 = vmatprep.subr.mxu0 0.0
    %3735 = vmatpush1.xpose.msra.mxu0 %v3698
    %3736 = vmatprep.subr.mxu0 0.0
    %3737 = vmatpush2.xpose.msra.mxu0 0.0
    %3738 = vmatprep.subr.mxu0 0.0
    %3739 = vmatpush2.xpose.msra.mxu0 0.0
    %3740 = vmatprep.subr.mxu0 0.0
    %3741 = vmatpush2.xpose.msra.mxu0 0.0
    %3742 = vmatprep.subr.mxu0 0.0
    %3743 = vmatpush2.xpose.msra.mxu0 0.0
    %3744 = vmatprep.subr.mxu0 0.0
    %3745 = vmatpush2.xpose.msra.mxu0 0.0
    %3746 = vmatprep.subr.mxu0 0.0
    %3747 = vmatpush2.xpose.msra.mxu0 0.0
    %3748 = vmatprep.subr.mxu0 0.0
    %3749 = vmatpush2.xpose.msra.mxu0 0.0
    %3750 = vmatprep.subr.mxu0 0.0
    %3751 = vmatpush2.xpose.msra.mxu0 0.0
    %3752 = vmatprep.subr.mxu0 0.0
    %3753 = vmatpush2.xpose.msra.mxu0 0.0
    %3754 = vmatprep.subr.mxu0 0.0
    %3755 = vmatpush2.xpose.msra.mxu0 0.0
    %3756 = vmatprep.subr.mxu0 0.0
    %3757 = vmatpush2.xpose.msra.mxu0 0.0
    %3758 = vmatprep.subr.mxu0 0.0
    %3759 = vmatpush2.xpose.msra.mxu0 0.0
    %3760 = vmatprep.subr.mxu0 0.0
    %3761 = vmatpush2.xpose.msra.mxu0 0.0
    %3762 = vmatprep.subr.mxu0 0.0
    %3763 = vmatpush2.xpose.msra.mxu0 0.0
    %3764 = vmatprep.subr.mxu0 0.0
    %3765 = vmatpush2.xpose.msra.mxu0 0.0
    %3766 = vmatprep.subr.mxu0 0.0
    %3767 = vmatpush2.xpose.msra.mxu0 0.0
    %3768 = vmatprep.mubr.f32.mxu0 0.0
    %3769 = vmatmul.mubr.f32.gmra.mxu0 %v3692
    %v3770 = vpop.f32.mrf.mxu0
    %v3771 = vadd.f32 0.0, %v3770
    %v3772 = vpop.f32.mrf.mxu0
    %3773 = vmatprep.mubr.f32.mxu0 0.0
    %3774 = vmatmul.mubr.f32.gmra.mxu0 %v3694
    %v3775 = vpop.f32.mrf.mxu0
    %v3776 = vadd.f32 0.0, %v3775
    %v3777 = vpop.f32.mrf.mxu0
    %3778 = vmatprep.mubr.f32.mxu0 0.0
    %3779 = vmatmul.mubr.f32.gmra.mxu0 %v3696
    %v3780 = vpop.f32.mrf.mxu0
    %v3781 = vadd.f32 0.0, %v3780
    %v3782 = vpop.f32.mrf.mxu0
    %3783 = vdwg.mxu0
    %v3784 = vmul.f32 %v3771, 0.35355338
    %v3785 = vmul.f32 %v3776, 0.35355338
    %v3786 = vmul.f32 %v3781, 0.35355338
    %v3787 = vsel %vm531, %v3784, -inf
    %3788 = vmax.xlane.f32.xlu0 %v3787
    %v3789 = vpop.xlane.xlu0 %3788
    %v3790 = vsel %vm531, %v3785, -inf
    %3791 = vmax.xlane.f32.xlu0 %v3790
    %v3792 = vpop.xlane.xlu0 %3791
    %v3793 = vsel %vm538, %v3786, -inf
    %3794 = vmax.xlane.f32.xlu0 %v3793
    %v3795 = vpop.xlane.xlu0 %3794
    %v3796 = vsub.f32 %v3784, %v3789
    %v3797 = vsub.f32 %v3785, %v3792
    %v3798 = vsub.f32 %v3786, %v3795
    %v3799 = vmul.f32 %v3796, 1.442695
    %v3800 = vpow.pop %v3799
    %v3801 = vmul.f32 %v3797, 1.442695
    %v3802 = vpow.pop %v3801
    %v3803 = vmul.f32 %v3798, 1.442695
    %v3804 = vpow.pop %v3803
    %v3805 = vsel %vm531, %v3800, 0.0
    %3806 = vadd.xlane.f32.xlu0 %v3805
    %v3807 = vpop.xlane.xlu0 %3806
    %v3808 = vsel %vm531, %v3802, 0.0
    %3809 = vadd.xlane.f32.xlu0 %v3808
    %v3810 = vpop.xlane.xlu0 %3809
    %v3811 = vsel %vm538, %v3804, 0.0
    %3812 = vadd.xlane.f32.xlu0 %v3811
    %v3813 = vpop.xlane.xlu0 %3812
    %v3814 = vrcp.pop %v3807
    %v3815 = vrcp.pop %v3810
    %v3816 = vrcp.pop %v3813
    %v3817 = vmul.f32 %v3800, %v3814
    %v3818 = vmul.f32 %v3802, %v3815
    %v3819 = vmul.f32 %v3804, %v3816
    %3820 = vrot.lane.b32.xlu0 %v3655, 64
    %v3821 = vpop.permute.xlu0 %3820
    %3822 = vrot.lane.b32.xlu0 %v3660, 64
    %v3823 = vpop.permute.xlu0 %3822
    %3824 = vrot.lane.b32.xlu0 %v3665, 64
    %v3825 = vpop.permute.xlu0 %3824
    %v3829 = vsel %vm531, %v3817, 0
    %v3832 = vsel %vm531, %v3818, 0
    %v3835 = vsel %vm531, %v3819, 0
    %v3837 = vsel %vm90, %v3825, 0
    %3839 = vmatprep.subr.mxu0 0.0
    %3840 = vmatpush1.msra.mxu0 0.0
    %3841 = vmatprep.subr.mxu0 0.0
    %3842 = vmatpush1.msra.mxu0 0.0
    %3843 = vmatprep.subr.mxu0 0.0
    %3844 = vmatpush1.msra.mxu0 0.0
    %3845 = vmatprep.subr.mxu0 0.0
    %3846 = vmatpush1.msra.mxu0 0.0
    %3847 = vmatprep.subr.mxu0 0.0
    %3848 = vmatpush1.msra.mxu0 0.0
    %3849 = vmatprep.subr.mxu0 0.0
    %3850 = vmatpush1.msra.mxu0 0.0
    %3851 = vmatprep.subr.mxu0 0.0
    %3852 = vmatpush1.msra.mxu0 0.0
    %3853 = vmatprep.subr.mxu0 0.0
    %3854 = vmatpush1.msra.mxu0 0.0
    %3855 = vmatprep.subr.mxu0 0.0
    %3856 = vmatpush1.msra.mxu0 0.0
    %3857 = vmatprep.subr.mxu0 0.0
    %3858 = vmatpush1.msra.mxu0 0.0
    %3859 = vmatprep.subr.mxu0 0.0
    %3860 = vmatpush1.msra.mxu0 0.0
    %3861 = vmatprep.subr.mxu0 0.0
    %3862 = vmatpush1.msra.mxu0 0.0
    %3863 = vmatprep.subr.mxu0 0.0
    %3864 = vmatpush1.msra.mxu0 0.0
    %3865 = vmatprep.subr.mxu0 0.0
    %3866 = vmatpush1.msra.mxu0 %v3837
    %3867 = vmatprep.subr.mxu0 0.0
    %3868 = vmatpush1.msra.mxu0 %v3823
    %3869 = vmatprep.subr.mxu0 0.0
    %3870 = vmatpush1.msra.mxu0 %v3821
    %3871 = vmatprep.subr.mxu0 0.0
    %3872 = vmatpush2.msra.mxu0 0.0
    %3873 = vmatprep.subr.mxu0 0.0
    %3874 = vmatpush2.msra.mxu0 0.0
    %3875 = vmatprep.subr.mxu0 0.0
    %3876 = vmatpush2.msra.mxu0 0.0
    %3877 = vmatprep.subr.mxu0 0.0
    %3878 = vmatpush2.msra.mxu0 0.0
    %3879 = vmatprep.subr.mxu0 0.0
    %3880 = vmatpush2.msra.mxu0 0.0
    %3881 = vmatprep.subr.mxu0 0.0
    %3882 = vmatpush2.msra.mxu0 0.0
    %3883 = vmatprep.subr.mxu0 0.0
    %3884 = vmatpush2.msra.mxu0 0.0
    %3885 = vmatprep.subr.mxu0 0.0
    %3886 = vmatpush2.msra.mxu0 0.0
    %3887 = vmatprep.subr.mxu0 0.0
    %3888 = vmatpush2.msra.mxu0 0.0
    %3889 = vmatprep.subr.mxu0 0.0
    %3890 = vmatpush2.msra.mxu0 0.0
    %3891 = vmatprep.subr.mxu0 0.0
    %3892 = vmatpush2.msra.mxu0 0.0
    %3893 = vmatprep.subr.mxu0 0.0
    %3894 = vmatpush2.msra.mxu0 0.0
    %3895 = vmatprep.subr.mxu0 0.0
    %3896 = vmatpush2.msra.mxu0 0.0
    %3897 = vmatprep.subr.mxu0 0.0
    %3898 = vmatpush2.msra.mxu0 0.0
    %3899 = vmatprep.subr.mxu0 0.0
    %3900 = vmatpush2.msra.mxu0 0.0
    %3901 = vmatprep.subr.mxu0 0.0
    %3902 = vmatpush2.msra.mxu0 0.0
    %3903 = vmatprep.mubr.f32.mxu0 0.0
    %3904 = vmatmul.mubr.f32.gmra.mxu0 %v3829
    %v3905 = vpop.f32.mrf.mxu0
    %v3906 = vadd.f32 0.0, %v3905
    %v3907 = vpop.f32.mrf.mxu0
    %3908 = vmatprep.mubr.f32.mxu0 0.0
    %3909 = vmatmul.mubr.f32.gmra.mxu0 %v3832
    %v3910 = vpop.f32.mrf.mxu0
    %v3911 = vadd.f32 0.0, %v3910
    %v3912 = vpop.f32.mrf.mxu0
    %3913 = vmatprep.mubr.f32.mxu0 0.0
    %3914 = vmatmul.mubr.f32.gmra.mxu0 %v3835
    %v3915 = vpop.f32.mrf.mxu0
    %v3916 = vadd.f32 0.0, %v3915
    %v3917 = vpop.f32.mrf.mxu0
    %3918 = vdwg.mxu0
    %3919 = vrot.lane.b32.xlu0 %v3655, 120
    %v3920 = vpop.permute.xlu0 %3919
    %3921 = vrot.lane.b32.xlu0 %v3660, 120
    %v3922 = vpop.permute.xlu0 %3921
    %3923 = vrot.lane.b32.xlu0 %v3665, 120
    %v3924 = vpop.permute.xlu0 %3923
    %3925 = vrot.lane.b32.xlu0 %v3655, 88
    %v3926 = vpop.permute.xlu0 %3925
    %3927 = vrot.lane.b32.xlu0 %v3660, 88
    %v3928 = vpop.permute.xlu0 %3927
    %3929 = vrot.lane.b32.xlu0 %v3665, 88
    %v3930 = vpop.permute.xlu0 %3929
    %v3931 = vsel %vm435, %v3920, 0
    %v3933 = vsel %vm435, %v3922, 0
    %v3935 = vsel %vm435, %v3924, 0
    %v3937 = vsel %vm435, %v3926, 0
    %v3939 = vsel %vm435, %v3928, 0
    %v3941 = vsel %vm435, %v3930, 0
    %3943 = vmatprep.subr.mxu0 0.0
    %3944 = vmatpush1.xpose.msra.mxu0 0.0
    %3945 = vmatprep.subr.mxu0 0.0
    %3946 = vmatpush1.xpose.msra.mxu0 0.0
    %3947 = vmatprep.subr.mxu0 0.0
    %3948 = vmatpush1.xpose.msra.mxu0 0.0
    %3949 = vmatprep.subr.mxu0 0.0
    %3950 = vmatpush1.xpose.msra.mxu0 0.0
    %3951 = vmatprep.subr.mxu0 0.0
    %3952 = vmatpush1.xpose.msra.mxu0 0.0
    %3953 = vmatprep.subr.mxu0 0.0
    %3954 = vmatpush1.xpose.msra.mxu0 0.0
    %3955 = vmatprep.subr.mxu0 0.0
    %3956 = vmatpush1.xpose.msra.mxu0 0.0
    %3957 = vmatprep.subr.mxu0 0.0
    %3958 = vmatpush1.xpose.msra.mxu0 0.0
    %3959 = vmatprep.subr.mxu0 0.0
    %3960 = vmatpush1.xpose.msra.mxu0 0.0
    %3961 = vmatprep.subr.mxu0 0.0
    %3962 = vmatpush1.xpose.msra.mxu0 0.0
    %3963 = vmatprep.subr.mxu0 0.0
    %3964 = vmatpush1.xpose.msra.mxu0 0.0
    %3965 = vmatprep.subr.mxu0 0.0
    %3966 = vmatpush1.xpose.msra.mxu0 0.0
    %3967 = vmatprep.subr.mxu0 0.0
    %3968 = vmatpush1.xpose.msra.mxu0 0.0
    %3969 = vmatprep.subr.mxu0 0.0
    %3970 = vmatpush1.xpose.msra.mxu0 %v3941
    %3971 = vmatprep.subr.mxu0 0.0
    %3972 = vmatpush1.xpose.msra.mxu0 %v3939
    %3973 = vmatprep.subr.mxu0 0.0
    %3974 = vmatpush1.xpose.msra.mxu0 %v3937
    %3975 = vmatprep.subr.mxu0 0.0
    %3976 = vmatpush2.xpose.msra.mxu0 0.0
    %3977 = vmatprep.subr.mxu0 0.0
    %3978 = vmatpush2.xpose.msra.mxu0 0.0
    %3979 = vmatprep.subr.mxu0 0.0
    %3980 = vmatpush2.xpose.msra.mxu0 0.0
    %3981 = vmatprep.subr.mxu0 0.0
    %3982 = vmatpush2.xpose.msra.mxu0 0.0
    %3983 = vmatprep.subr.mxu0 0.0
    %3984 = vmatpush2.xpose.msra.mxu0 0.0
    %3985 = vmatprep.subr.mxu0 0.0
    %3986 = vmatpush2.xpose.msra.mxu0 0.0
    %3987 = vmatprep.subr.mxu0 0.0
    %3988 = vmatpush2.xpose.msra.mxu0 0.0
    %3989 = vmatprep.subr.mxu0 0.0
    %3990 = vmatpush2.xpose.msra.mxu0 0.0
    %3991 = vmatprep.subr.mxu0 0.0
    %3992 = vmatpush2.xpose.msra.mxu0 0.0
    %3993 = vmatprep.subr.mxu0 0.0
    %3994 = vmatpush2.xpose.msra.mxu0 0.0
    %3995 = vmatprep.subr.mxu0 0.0
    %3996 = vmatpush2.xpose.msra.mxu0 0.0
    %3997 = vmatprep.subr.mxu0 0.0
    %3998 = vmatpush2.xpose.msra.mxu0 0.0
    %3999 = vmatprep.subr.mxu0 0.0
    %4000 = vmatpush2.xpose.msra.mxu0 0.0
    %4001 = vmatprep.subr.mxu0 0.0
    %4002 = vmatpush2.xpose.msra.mxu0 0.0
    %4003 = vmatprep.subr.mxu0 0.0
    %4004 = vmatpush2.xpose.msra.mxu0 0.0
    %4005 = vmatprep.subr.mxu0 0.0
    %4006 = vmatpush2.xpose.msra.mxu0 0.0
    %4007 = vmatprep.mubr.f32.mxu0 0.0
    %4008 = vmatmul.mubr.f32.gmra.mxu0 %v3931
    %v4009 = vpop.f32.mrf.mxu0
    %v4010 = vadd.f32 0.0, %v4009
    %v4011 = vpop.f32.mrf.mxu0
    %4012 = vmatprep.mubr.f32.mxu0 0.0
    %4013 = vmatmul.mubr.f32.gmra.mxu0 %v3933
    %v4014 = vpop.f32.mrf.mxu0
    %v4015 = vadd.f32 0.0, %v4014
    %v4016 = vpop.f32.mrf.mxu0
    %4017 = vmatprep.mubr.f32.mxu0 0.0
    %4018 = vmatmul.mubr.f32.gmra.mxu0 %v3935
    %v4019 = vpop.f32.mrf.mxu0
    %v4020 = vadd.f32 0.0, %v4019
    %v4021 = vpop.f32.mrf.mxu0
    %4022 = vdwg.mxu0
    %v4023 = vmul.f32 %v4010, 0.35355338
    %v4024 = vmul.f32 %v4015, 0.35355338
    %v4025 = vmul.f32 %v4020, 0.35355338
    %v4026 = vsel %vm531, %v4023, -inf
    %4027 = vmax.xlane.f32.xlu0 %v4026
    %v4028 = vpop.xlane.xlu0 %4027
    %v4029 = vsel %vm531, %v4024, -inf
    %4030 = vmax.xlane.f32.xlu0 %v4029
    %v4031 = vpop.xlane.xlu0 %4030
    %v4032 = vsel %vm538, %v4025, -inf
    %4033 = vmax.xlane.f32.xlu0 %v4032
    %v4034 = vpop.xlane.xlu0 %4033
    %v4035 = vsub.f32 %v4023, %v4028
    %v4036 = vsub.f32 %v4024, %v4031
    %v4037 = vsub.f32 %v4025, %v4034
    %v4038 = vmul.f32 %v4035, 1.442695
    %v4039 = vpow.pop %v4038
    %v4040 = vmul.f32 %v4036, 1.442695
    %v4041 = vpow.pop %v4040
    %v4042 = vmul.f32 %v4037, 1.442695
    %v4043 = vpow.pop %v4042
    %v4044 = vsel %vm531, %v4039, 0.0
    %4045 = vadd.xlane.f32.xlu0 %v4044
    %v4046 = vpop.xlane.xlu0 %4045
    %v4047 = vsel %vm531, %v4041, 0.0
    %4048 = vadd.xlane.f32.xlu0 %v4047
    %v4049 = vpop.xlane.xlu0 %4048
    %v4050 = vsel %vm538, %v4043, 0.0
    %4051 = vadd.xlane.f32.xlu0 %v4050
    %v4052 = vpop.xlane.xlu0 %4051
    %v4053 = vrcp.pop %v4046
    %v4054 = vrcp.pop %v4049
    %v4055 = vrcp.pop %v4052
    %v4056 = vmul.f32 %v4039, %v4053
    %v4057 = vmul.f32 %v4041, %v4054
    %v4058 = vmul.f32 %v4043, %v4055
    %4059 = vrot.lane.b32.xlu0 %v3655, 56
    %v4060 = vpop.permute.xlu0 %4059
    %4061 = vrot.lane.b32.xlu0 %v3660, 56
    %v4062 = vpop.permute.xlu0 %4061
    %4063 = vrot.lane.b32.xlu0 %v3665, 56
    %v4064 = vpop.permute.xlu0 %4063
    %v4068 = vsel %vm531, %v4056, 0
    %v4071 = vsel %vm531, %v4057, 0
    %v4074 = vsel %vm531, %v4058, 0
    %v4076 = vsel %vm90, %v4064, 0
    %4078 = vmatprep.subr.mxu0 0.0
    %4079 = vmatpush1.msra.mxu0 0.0
    %4080 = vmatprep.subr.mxu0 0.0
    %4081 = vmatpush1.msra.mxu0 0.0
    %4082 = vmatprep.subr.mxu0 0.0
    %4083 = vmatpush1.msra.mxu0 0.0
    %4084 = vmatprep.subr.mxu0 0.0
    %4085 = vmatpush1.msra.mxu0 0.0
    %4086 = vmatprep.subr.mxu0 0.0
    %4087 = vmatpush1.msra.mxu0 0.0
    %4088 = vmatprep.subr.mxu0 0.0
    %4089 = vmatpush1.msra.mxu0 0.0
    %4090 = vmatprep.subr.mxu0 0.0
    %4091 = vmatpush1.msra.mxu0 0.0
    %4092 = vmatprep.subr.mxu0 0.0
    %4093 = vmatpush1.msra.mxu0 0.0
    %4094 = vmatprep.subr.mxu0 0.0
    %4095 = vmatpush1.msra.mxu0 0.0
    %4096 = vmatprep.subr.mxu0 0.0
    %4097 = vmatpush1.msra.mxu0 0.0
    %4098 = vmatprep.subr.mxu0 0.0
    %4099 = vmatpush1.msra.mxu0 0.0
    %4100 = vmatprep.subr.mxu0 0.0
    %4101 = vmatpush1.msra.mxu0 0.0
    %4102 = vmatprep.subr.mxu0 0.0
    %4103 = vmatpush1.msra.mxu0 0.0
    %4104 = vmatprep.subr.mxu0 0.0
    %4105 = vmatpush1.msra.mxu0 %v4076
    %4106 = vmatprep.subr.mxu0 0.0
    %4107 = vmatpush1.msra.mxu0 %v4062
    %4108 = vmatprep.subr.mxu0 0.0
    %4109 = vmatpush1.msra.mxu0 %v4060
    %4110 = vmatprep.subr.mxu0 0.0
    %4111 = vmatpush2.msra.mxu0 0.0
    %4112 = vmatprep.subr.mxu0 0.0
    %4113 = vmatpush2.msra.mxu0 0.0
    %4114 = vmatprep.subr.mxu0 0.0
    %4115 = vmatpush2.msra.mxu0 0.0
    %4116 = vmatprep.subr.mxu0 0.0
    %4117 = vmatpush2.msra.mxu0 0.0
    %4118 = vmatprep.subr.mxu0 0.0
    %4119 = vmatpush2.msra.mxu0 0.0
    %4120 = vmatprep.subr.mxu0 0.0
    %4121 = vmatpush2.msra.mxu0 0.0
    %4122 = vmatprep.subr.mxu0 0.0
    %4123 = vmatpush2.msra.mxu0 0.0
    %4124 = vmatprep.subr.mxu0 0.0
    %4125 = vmatpush2.msra.mxu0 0.0
    %4126 = vmatprep.subr.mxu0 0.0
    %4127 = vmatpush2.msra.mxu0 0.0
    %4128 = vmatprep.subr.mxu0 0.0
    %4129 = vmatpush2.msra.mxu0 0.0
    %4130 = vmatprep.subr.mxu0 0.0
    %4131 = vmatpush2.msra.mxu0 0.0
    %4132 = vmatprep.subr.mxu0 0.0
    %4133 = vmatpush2.msra.mxu0 0.0
    %4134 = vmatprep.subr.mxu0 0.0
    %4135 = vmatpush2.msra.mxu0 0.0
    %4136 = vmatprep.subr.mxu0 0.0
    %4137 = vmatpush2.msra.mxu0 0.0
    %4138 = vmatprep.subr.mxu0 0.0
    %4139 = vmatpush2.msra.mxu0 0.0
    %4140 = vmatprep.subr.mxu0 0.0
    %4141 = vmatpush2.msra.mxu0 0.0
    %4142 = vmatprep.mubr.f32.mxu0 0.0
    %4143 = vmatmul.mubr.f32.gmra.mxu0 %v4068
    %v4144 = vpop.f32.mrf.mxu0
    %v4145 = vadd.f32 0.0, %v4144
    %v4146 = vpop.f32.mrf.mxu0
    %4147 = vmatprep.mubr.f32.mxu0 0.0
    %4148 = vmatmul.mubr.f32.gmra.mxu0 %v4071
    %v4149 = vpop.f32.mrf.mxu0
    %v4150 = vadd.f32 0.0, %v4149
    %v4151 = vpop.f32.mrf.mxu0
    %4152 = vmatprep.mubr.f32.mxu0 0.0
    %4153 = vmatmul.mubr.f32.gmra.mxu0 %v4074
    %v4154 = vpop.f32.mrf.mxu0
    %v4155 = vadd.f32 0.0, %v4154
    %v4156 = vpop.f32.mrf.mxu0
    %4157 = vdwg.mxu0
    %v4159 = vsel %vm435, %v4145, 0
    %v4162 = vsel %vm435, %v4150, 0
    %v4165 = vsel %vm435, %v4155, 0
    %4167 = vmatprep.subr.mxu0 0.0
    %4168 = vmatpush1.msra.mxu0 0.0
    %4169 = vmatprep.subr.mxu0 0.0
    %4170 = vmatpush1.msra.mxu0 0.0
    %4171 = vmatprep.subr.mxu0 0.0
    %4172 = vmatpush1.msra.mxu0 0.0
    %4173 = vmatprep.subr.mxu0 0.0
    %4174 = vmatpush1.msra.mxu0 0.0
    %4175 = vmatprep.subr.mxu0 0.0
    %4176 = vmatpush1.msra.mxu0 0.0
    %4177 = vmatprep.subr.mxu0 0.0
    %4178 = vmatpush1.msra.mxu0 0.0
    %4179 = vmatprep.subr.mxu0 0.0
    %4180 = vmatpush1.msra.mxu0 0.0
    %4181 = vmatprep.subr.mxu0 0.0
    %4182 = vmatpush1.msra.mxu0 0.0
    %4183 = vmatprep.subr.mxu0 0.0
    %4184 = vmatpush1.msra.mxu0 0.0
    %4185 = vmatprep.subr.mxu0 0.0
    %4186 = vmatpush1.msra.mxu0 0.0
    %4187 = vmatprep.subr.mxu0 0.0
    %4188 = vmatpush1.msra.mxu0 0.0
    %4189 = vmatprep.subr.mxu0 0.0
    %4190 = vmatpush1.msra.mxu0 0.0
    %4191 = vmatprep.subr.mxu0 0.0
    %4192 = vmatpush1.msra.mxu0 0.0
    %4193 = vmatprep.subr.mxu0 0.0
    %4194 = vmatpush1.msra.mxu0 0.0
    %4195 = vmatprep.subr.mxu0 0.0
    %4196 = vmatpush1.msra.mxu0 0.0
    %4197 = vmatprep.subr.mxu0 0.0
    %4198 = vmatpush1.msra.mxu0 %v3680
    %4199 = vmatprep.subr.mxu0 0.0
    %4200 = vmatpush2.msra.mxu0 0.0
    %4201 = vmatprep.subr.mxu0 0.0
    %4202 = vmatpush2.msra.mxu0 0.0
    %4203 = vmatprep.subr.mxu0 0.0
    %4204 = vmatpush2.msra.mxu0 0.0
    %4205 = vmatprep.subr.mxu0 0.0
    %4206 = vmatpush2.msra.mxu0 0.0
    %4207 = vmatprep.subr.mxu0 0.0
    %4208 = vmatpush2.msra.mxu0 0.0
    %4209 = vmatprep.subr.mxu0 0.0
    %4210 = vmatpush2.msra.mxu0 0.0
    %4211 = vmatprep.subr.mxu0 0.0
    %4212 = vmatpush2.msra.mxu0 0.0
    %4213 = vmatprep.subr.mxu0 0.0
    %4214 = vmatpush2.msra.mxu0 0.0
    %4215 = vmatprep.subr.mxu0 0.0
    %4216 = vmatpush2.msra.mxu0 0.0
    %4217 = vmatprep.subr.mxu0 0.0
    %4218 = vmatpush2.msra.mxu0 0.0
    %4219 = vmatprep.subr.mxu0 0.0
    %4220 = vmatpush2.msra.mxu0 0.0
    %4221 = vmatprep.subr.mxu0 0.0
    %4222 = vmatpush2.msra.mxu0 0.0
    %4223 = vmatprep.subr.mxu0 0.0
    %4224 = vmatpush2.msra.mxu0 0.0
    %4225 = vmatprep.subr.mxu0 0.0
    %4226 = vmatpush2.msra.mxu0 0.0
    %4227 = vmatprep.subr.mxu0 0.0
    %4228 = vmatpush2.msra.mxu0 0.0
    %4229 = vmatprep.subr.mxu0 0.0
    %4230 = vmatpush2.msra.mxu0 0.0
    %4231 = vmatprep.mubr.f32.mxu0 0.0
    %4232 = vmatmul.mubr.f32.gmra.mxu0 %v4159
    %v4233 = vpop.f32.mrf.mxu0
    %v4234 = vadd.f32 0.0, %v4233
    %v4235 = vpop.f32.mrf.mxu0
    %4236 = vmatprep.mubr.f32.mxu0 0.0
    %4237 = vmatmul.mubr.f32.gmra.mxu0 %v4162
    %v4238 = vpop.f32.mrf.mxu0
    %v4239 = vadd.f32 0.0, %v4238
    %v4240 = vpop.f32.mrf.mxu0
    %4241 = vmatprep.mubr.f32.mxu0 0.0
    %4242 = vmatmul.mubr.f32.gmra.mxu0 %v4165
    %v4243 = vpop.f32.mrf.mxu0
    %v4244 = vadd.f32 0.0, %v4243
    %v4245 = vpop.f32.mrf.mxu0
    %4246 = vdwg.mxu0
    %v4248 = vsel %vm435, %v3906, 0
    %v4251 = vsel %vm435, %v3911, 0
    %v4254 = vsel %vm435, %v3916, 0
    %4256 = vmatprep.subr.mxu0 0.0
    %4257 = vmatpush1.msra.mxu0 0.0
    %4258 = vmatprep.subr.mxu0 0.0
    %4259 = vmatpush1.msra.mxu0 0.0
    %4260 = vmatprep.subr.mxu0 0.0
    %4261 = vmatpush1.msra.mxu0 0.0
    %4262 = vmatprep.subr.mxu0 0.0
    %4263 = vmatpush1.msra.mxu0 0.0
    %4264 = vmatprep.subr.mxu0 0.0
    %4265 = vmatpush1.msra.mxu0 0.0
    %4266 = vmatprep.subr.mxu0 0.0
    %4267 = vmatpush1.msra.mxu0 0.0
    %4268 = vmatprep.subr.mxu0 0.0
    %4269 = vmatpush1.msra.mxu0 0.0
    %4270 = vmatprep.subr.mxu0 0.0
    %4271 = vmatpush1.msra.mxu0 0.0
    %4272 = vmatprep.subr.mxu0 0.0
    %4273 = vmatpush1.msra.mxu0 0.0
    %4274 = vmatprep.subr.mxu0 0.0
    %4275 = vmatpush1.msra.mxu0 0.0
    %4276 = vmatprep.subr.mxu0 0.0
    %4277 = vmatpush1.msra.mxu0 0.0
    %4278 = vmatprep.subr.mxu0 0.0
    %4279 = vmatpush1.msra.mxu0 0.0
    %4280 = vmatprep.subr.mxu0 0.0
    %4281 = vmatpush1.msra.mxu0 0.0
    %4282 = vmatprep.subr.mxu0 0.0
    %4283 = vmatpush1.msra.mxu0 0.0
    %4284 = vmatprep.subr.mxu0 0.0
    %4285 = vmatpush1.msra.mxu0 0.0
    %4286 = vmatprep.subr.mxu0 0.0
    %4287 = vmatpush1.msra.mxu0 %v3679
    %4288 = vmatprep.subr.mxu0 0.0
    %4289 = vmatpush2.msra.mxu0 0.0
    %4290 = vmatprep.subr.mxu0 0.0
    %4291 = vmatpush2.msra.mxu0 0.0
    %4292 = vmatprep.subr.mxu0 0.0
    %4293 = vmatpush2.msra.mxu0 0.0
    %4294 = vmatprep.subr.mxu0 0.0
    %4295 = vmatpush2.msra.mxu0 0.0
    %4296 = vmatprep.subr.mxu0 0.0
    %4297 = vmatpush2.msra.mxu0 0.0
    %4298 = vmatprep.subr.mxu0 0.0
    %4299 = vmatpush2.msra.mxu0 0.0
    %4300 = vmatprep.subr.mxu0 0.0
    %4301 = vmatpush2.msra.mxu0 0.0
    %4302 = vmatprep.subr.mxu0 0.0
    %4303 = vmatpush2.msra.mxu0 0.0
    %4304 = vmatprep.subr.mxu0 0.0
    %4305 = vmatpush2.msra.mxu0 0.0
    %4306 = vmatprep.subr.mxu0 0.0
    %4307 = vmatpush2.msra.mxu0 0.0
    %4308 = vmatprep.subr.mxu0 0.0
    %4309 = vmatpush2.msra.mxu0 0.0
    %4310 = vmatprep.subr.mxu0 0.0
    %4311 = vmatpush2.msra.mxu0 0.0
    %4312 = vmatprep.subr.mxu0 0.0
    %4313 = vmatpush2.msra.mxu0 0.0
    %4314 = vmatprep.subr.mxu0 0.0
    %4315 = vmatpush2.msra.mxu0 0.0
    %4316 = vmatprep.subr.mxu0 0.0
    %4317 = vmatpush2.msra.mxu0 0.0
    %4318 = vmatprep.subr.mxu0 0.0
    %4319 = vmatpush2.msra.mxu0 0.0
    %4320 = vmatprep.mubr.f32.mxu0 0.0
    %4321 = vmatmul.mubr.f32.gmra.mxu0 %v4248
    %v4322 = vpop.f32.mrf.mxu0
    %v4323 = vadd.f32 %v4234, %v4322
    %v4324 = vpop.f32.mrf.mxu0
    %4325 = vmatprep.mubr.f32.mxu0 0.0
    %4326 = vmatmul.mubr.f32.gmra.mxu0 %v4251
    %v4327 = vpop.f32.mrf.mxu0
    %v4328 = vadd.f32 %v4239, %v4327
    %v4329 = vpop.f32.mrf.mxu0
    %4330 = vmatprep.mubr.f32.mxu0 0.0
    %4331 = vmatmul.mubr.f32.gmra.mxu0 %v4254
    %v4332 = vpop.f32.mrf.mxu0
    %v4333 = vadd.f32 %v4244, %v4332
    %v4334 = vpop.f32.mrf.mxu0
    %4335 = vdwg.mxu0
    %4336 = vrot.lane.b32.xlu0 %v3655, 112
    %v4337 = vpop.permute.xlu0 %4336
    %4338 = vrot.lane.b32.xlu0 %v3660, 112
    %v4339 = vpop.permute.xlu0 %4338
    %4340 = vrot.lane.b32.xlu0 %v3665, 112
    %v4341 = vpop.permute.xlu0 %4340
    %4342 = vrot.lane.b32.xlu0 %v3655, 80
    %v4343 = vpop.permute.xlu0 %4342
    %4344 = vrot.lane.b32.xlu0 %v3660, 80
    %v4345 = vpop.permute.xlu0 %4344
    %4346 = vrot.lane.b32.xlu0 %v3665, 80
    %v4347 = vpop.permute.xlu0 %4346
    %v4348 = vsel %vm435, %v4337, 0
    %v4350 = vsel %vm435, %v4339, 0
    %v4352 = vsel %vm435, %v4341, 0
    %v4354 = vsel %vm435, %v4343, 0
    %v4356 = vsel %vm435, %v4345, 0
    %v4358 = vsel %vm435, %v4347, 0
    %4360 = vmatprep.subr.mxu0 0.0
    %4361 = vmatpush1.xpose.msra.mxu0 0.0
    %4362 = vmatprep.subr.mxu0 0.0
    %4363 = vmatpush1.xpose.msra.mxu0 0.0
    %4364 = vmatprep.subr.mxu0 0.0
    %4365 = vmatpush1.xpose.msra.mxu0 0.0
    %4366 = vmatprep.subr.mxu0 0.0
    %4367 = vmatpush1.xpose.msra.mxu0 0.0
    %4368 = vmatprep.subr.mxu0 0.0
    %4369 = vmatpush1.xpose.msra.mxu0 0.0
    %4370 = vmatprep.subr.mxu0 0.0
    %4371 = vmatpush1.xpose.msra.mxu0 0.0
    %4372 = vmatprep.subr.mxu0 0.0
    %4373 = vmatpush1.xpose.msra.mxu0 0.0
    %4374 = vmatprep.subr.mxu0 0.0
    %4375 = vmatpush1.xpose.msra.mxu0 0.0
    %4376 = vmatprep.subr.mxu0 0.0
    %4377 = vmatpush1.xpose.msra.mxu0 0.0
    %4378 = vmatprep.subr.mxu0 0.0
    %4379 = vmatpush1.xpose.msra.mxu0 0.0
    %4380 = vmatprep.subr.mxu0 0.0
    %4381 = vmatpush1.xpose.msra.mxu0 0.0
    %4382 = vmatprep.subr.mxu0 0.0
    %4383 = vmatpush1.xpose.msra.mxu0 0.0
    %4384 = vmatprep.subr.mxu0 0.0
    %4385 = vmatpush1.xpose.msra.mxu0 0.0
    %4386 = vmatprep.subr.mxu0 0.0
    %4387 = vmatpush1.xpose.msra.mxu0 %v4358
    %4388 = vmatprep.subr.mxu0 0.0
    %4389 = vmatpush1.xpose.msra.mxu0 %v4356
    %4390 = vmatprep.subr.mxu0 0.0
    %4391 = vmatpush1.xpose.msra.mxu0 %v4354
    %4392 = vmatprep.subr.mxu0 0.0
    %4393 = vmatpush2.xpose.msra.mxu0 0.0
    %4394 = vmatprep.subr.mxu0 0.0
    %4395 = vmatpush2.xpose.msra.mxu0 0.0
    %4396 = vmatprep.subr.mxu0 0.0
    %4397 = vmatpush2.xpose.msra.mxu0 0.0
    %4398 = vmatprep.subr.mxu0 0.0
    %4399 = vmatpush2.xpose.msra.mxu0 0.0
    %4400 = vmatprep.subr.mxu0 0.0
    %4401 = vmatpush2.xpose.msra.mxu0 0.0
    %4402 = vmatprep.subr.mxu0 0.0
    %4403 = vmatpush2.xpose.msra.mxu0 0.0
    %4404 = vmatprep.subr.mxu0 0.0
    %4405 = vmatpush2.xpose.msra.mxu0 0.0
    %4406 = vmatprep.subr.mxu0 0.0
    %4407 = vmatpush2.xpose.msra.mxu0 0.0
    %4408 = vmatprep.subr.mxu0 0.0
    %4409 = vmatpush2.xpose.msra.mxu0 0.0
    %4410 = vmatprep.subr.mxu0 0.0
    %4411 = vmatpush2.xpose.msra.mxu0 0.0
    %4412 = vmatprep.subr.mxu0 0.0
    %4413 = vmatpush2.xpose.msra.mxu0 0.0
    %4414 = vmatprep.subr.mxu0 0.0
    %4415 = vmatpush2.xpose.msra.mxu0 0.0
    %4416 = vmatprep.subr.mxu0 0.0
    %4417 = vmatpush2.xpose.msra.mxu0 0.0
    %4418 = vmatprep.subr.mxu0 0.0
    %4419 = vmatpush2.xpose.msra.mxu0 0.0
    %4420 = vmatprep.subr.mxu0 0.0
    %4421 = vmatpush2.xpose.msra.mxu0 0.0
    %4422 = vmatprep.subr.mxu0 0.0
    %4423 = vmatpush2.xpose.msra.mxu0 0.0
    %4424 = vmatprep.mubr.f32.mxu0 0.0
    %4425 = vmatmul.mubr.f32.gmra.mxu0 %v4348
    %v4426 = vpop.f32.mrf.mxu0
    %v4427 = vadd.f32 0.0, %v4426
    %v4428 = vpop.f32.mrf.mxu0
    %4429 = vmatprep.mubr.f32.mxu0 0.0
    %4430 = vmatmul.mubr.f32.gmra.mxu0 %v4350
    %v4431 = vpop.f32.mrf.mxu0
    %v4432 = vadd.f32 0.0, %v4431
    %v4433 = vpop.f32.mrf.mxu0
    %4434 = vmatprep.mubr.f32.mxu0 0.0
    %4435 = vmatmul.mubr.f32.gmra.mxu0 %v4352
    %v4436 = vpop.f32.mrf.mxu0
    %v4437 = vadd.f32 0.0, %v4436
    %v4438 = vpop.f32.mrf.mxu0
    %4439 = vdwg.mxu0
    %v4440 = vmul.f32 %v4427, 0.35355338
    %v4441 = vmul.f32 %v4432, 0.35355338
    %v4442 = vmul.f32 %v4437, 0.35355338
    %v4443 = vsel %vm531, %v4440, -inf
    %4444 = vmax.xlane.f32.xlu0 %v4443
    %v4445 = vpop.xlane.xlu0 %4444
    %v4446 = vsel %vm531, %v4441, -inf
    %4447 = vmax.xlane.f32.xlu0 %v4446
    %v4448 = vpop.xlane.xlu0 %4447
    %v4449 = vsel %vm538, %v4442, -inf
    %4450 = vmax.xlane.f32.xlu0 %v4449
    %v4451 = vpop.xlane.xlu0 %4450
    %v4452 = vsub.f32 %v4440, %v4445
    %v4453 = vsub.f32 %v4441, %v4448
    %v4454 = vsub.f32 %v4442, %v4451
    %v4455 = vmul.f32 %v4452, 1.442695
    %v4456 = vpow.pop %v4455
    %v4457 = vmul.f32 %v4453, 1.442695
    %v4458 = vpow.pop %v4457
    %v4459 = vmul.f32 %v4454, 1.442695
    %v4460 = vpow.pop %v4459
    %v4461 = vsel %vm531, %v4456, 0.0
    %4462 = vadd.xlane.f32.xlu0 %v4461
    %v4463 = vpop.xlane.xlu0 %4462
    %v4464 = vsel %vm531, %v4458, 0.0
    %4465 = vadd.xlane.f32.xlu0 %v4464
    %v4466 = vpop.xlane.xlu0 %4465
    %v4467 = vsel %vm538, %v4460, 0.0
    %4468 = vadd.xlane.f32.xlu0 %v4467
    %v4469 = vpop.xlane.xlu0 %4468
    %v4470 = vrcp.pop %v4463
    %v4471 = vrcp.pop %v4466
    %v4472 = vrcp.pop %v4469
    %v4473 = vmul.f32 %v4456, %v4470
    %v4474 = vmul.f32 %v4458, %v4471
    %v4475 = vmul.f32 %v4460, %v4472
    %4476 = vrot.lane.b32.xlu0 %v3655, 48
    %v4477 = vpop.permute.xlu0 %4476
    %4478 = vrot.lane.b32.xlu0 %v3660, 48
    %v4479 = vpop.permute.xlu0 %4478
    %4480 = vrot.lane.b32.xlu0 %v3665, 48
    %v4481 = vpop.permute.xlu0 %4480
    %v4485 = vsel %vm531, %v4473, 0
    %v4488 = vsel %vm531, %v4474, 0
    %v4491 = vsel %vm531, %v4475, 0
    %v4493 = vsel %vm90, %v4481, 0
    %4495 = vmatprep.subr.mxu0 0.0
    %4496 = vmatpush1.msra.mxu0 0.0
    %4497 = vmatprep.subr.mxu0 0.0
    %4498 = vmatpush1.msra.mxu0 0.0
    %4499 = vmatprep.subr.mxu0 0.0
    %4500 = vmatpush1.msra.mxu0 0.0
    %4501 = vmatprep.subr.mxu0 0.0
    %4502 = vmatpush1.msra.mxu0 0.0
    %4503 = vmatprep.subr.mxu0 0.0
    %4504 = vmatpush1.msra.mxu0 0.0
    %4505 = vmatprep.subr.mxu0 0.0
    %4506 = vmatpush1.msra.mxu0 0.0
    %4507 = vmatprep.subr.mxu0 0.0
    %4508 = vmatpush1.msra.mxu0 0.0
    %4509 = vmatprep.subr.mxu0 0.0
    %4510 = vmatpush1.msra.mxu0 0.0
    %4511 = vmatprep.subr.mxu0 0.0
    %4512 = vmatpush1.msra.mxu0 0.0
    %4513 = vmatprep.subr.mxu0 0.0
    %4514 = vmatpush1.msra.mxu0 0.0
    %4515 = vmatprep.subr.mxu0 0.0
    %4516 = vmatpush1.msra.mxu0 0.0
    %4517 = vmatprep.subr.mxu0 0.0
    %4518 = vmatpush1.msra.mxu0 0.0
    %4519 = vmatprep.subr.mxu0 0.0
    %4520 = vmatpush1.msra.mxu0 0.0
    %4521 = vmatprep.subr.mxu0 0.0
    %4522 = vmatpush1.msra.mxu0 %v4493
    %4523 = vmatprep.subr.mxu0 0.0
    %4524 = vmatpush1.msra.mxu0 %v4479
    %4525 = vmatprep.subr.mxu0 0.0
    %4526 = vmatpush1.msra.mxu0 %v4477
    %4527 = vmatprep.subr.mxu0 0.0
    %4528 = vmatpush2.msra.mxu0 0.0
    %4529 = vmatprep.subr.mxu0 0.0
    %4530 = vmatpush2.msra.mxu0 0.0
    %4531 = vmatprep.subr.mxu0 0.0
    %4532 = vmatpush2.msra.mxu0 0.0
    %4533 = vmatprep.subr.mxu0 0.0
    %4534 = vmatpush2.msra.mxu0 0.0
    %4535 = vmatprep.subr.mxu0 0.0
    %4536 = vmatpush2.msra.mxu0 0.0
    %4537 = vmatprep.subr.mxu0 0.0
    %4538 = vmatpush2.msra.mxu0 0.0
    %4539 = vmatprep.subr.mxu0 0.0
    %4540 = vmatpush2.msra.mxu0 0.0
    %4541 = vmatprep.subr.mxu0 0.0
    %4542 = vmatpush2.msra.mxu0 0.0
    %4543 = vmatprep.subr.mxu0 0.0
    %4544 = vmatpush2.msra.mxu0 0.0
    %4545 = vmatprep.subr.mxu0 0.0
    %4546 = vmatpush2.msra.mxu0 0.0
    %4547 = vmatprep.subr.mxu0 0.0
    %4548 = vmatpush2.msra.mxu0 0.0
    %4549 = vmatprep.subr.mxu0 0.0
    %4550 = vmatpush2.msra.mxu0 0.0
    %4551 = vmatprep.subr.mxu0 0.0
    %4552 = vmatpush2.msra.mxu0 0.0
    %4553 = vmatprep.subr.mxu0 0.0
    %4554 = vmatpush2.msra.mxu0 0.0
    %4555 = vmatprep.subr.mxu0 0.0
    %4556 = vmatpush2.msra.mxu0 0.0
    %4557 = vmatprep.subr.mxu0 0.0
    %4558 = vmatpush2.msra.mxu0 0.0
    %4559 = vmatprep.mubr.f32.mxu0 0.0
    %4560 = vmatmul.mubr.f32.gmra.mxu0 %v4485
    %v4561 = vpop.f32.mrf.mxu0
    %v4562 = vadd.f32 0.0, %v4561
    %v4563 = vpop.f32.mrf.mxu0
    %4564 = vmatprep.mubr.f32.mxu0 0.0
    %4565 = vmatmul.mubr.f32.gmra.mxu0 %v4488
    %v4566 = vpop.f32.mrf.mxu0
    %v4567 = vadd.f32 0.0, %v4566
    %v4568 = vpop.f32.mrf.mxu0
    %4569 = vmatprep.mubr.f32.mxu0 0.0
    %4570 = vmatmul.mubr.f32.gmra.mxu0 %v4491
    %v4571 = vpop.f32.mrf.mxu0
    %v4572 = vadd.f32 0.0, %v4571
    %v4573 = vpop.f32.mrf.mxu0
    %4574 = vdwg.mxu0
    %v4576 = vsel %vm435, %v4562, 0
    %v4579 = vsel %vm435, %v4567, 0
    %v4582 = vsel %vm435, %v4572, 0
    %4584 = vmatprep.subr.mxu0 0.0
    %4585 = vmatpush1.msra.mxu0 0.0
    %4586 = vmatprep.subr.mxu0 0.0
    %4587 = vmatpush1.msra.mxu0 0.0
    %4588 = vmatprep.subr.mxu0 0.0
    %4589 = vmatpush1.msra.mxu0 0.0
    %4590 = vmatprep.subr.mxu0 0.0
    %4591 = vmatpush1.msra.mxu0 0.0
    %4592 = vmatprep.subr.mxu0 0.0
    %4593 = vmatpush1.msra.mxu0 0.0
    %4594 = vmatprep.subr.mxu0 0.0
    %4595 = vmatpush1.msra.mxu0 0.0
    %4596 = vmatprep.subr.mxu0 0.0
    %4597 = vmatpush1.msra.mxu0 0.0
    %4598 = vmatprep.subr.mxu0 0.0
    %4599 = vmatpush1.msra.mxu0 0.0
    %4600 = vmatprep.subr.mxu0 0.0
    %4601 = vmatpush1.msra.mxu0 0.0
    %4602 = vmatprep.subr.mxu0 0.0
    %4603 = vmatpush1.msra.mxu0 0.0
    %4604 = vmatprep.subr.mxu0 0.0
    %4605 = vmatpush1.msra.mxu0 0.0
    %4606 = vmatprep.subr.mxu0 0.0
    %4607 = vmatpush1.msra.mxu0 0.0
    %4608 = vmatprep.subr.mxu0 0.0
    %4609 = vmatpush1.msra.mxu0 0.0
    %4610 = vmatprep.subr.mxu0 0.0
    %4611 = vmatpush1.msra.mxu0 0.0
    %4612 = vmatprep.subr.mxu0 0.0
    %4613 = vmatpush1.msra.mxu0 0.0
    %4614 = vmatprep.subr.mxu0 0.0
    %4615 = vmatpush1.msra.mxu0 %v3681
    %4616 = vmatprep.subr.mxu0 0.0
    %4617 = vmatpush2.msra.mxu0 0.0
    %4618 = vmatprep.subr.mxu0 0.0
    %4619 = vmatpush2.msra.mxu0 0.0
    %4620 = vmatprep.subr.mxu0 0.0
    %4621 = vmatpush2.msra.mxu0 0.0
    %4622 = vmatprep.subr.mxu0 0.0
    %4623 = vmatpush2.msra.mxu0 0.0
    %4624 = vmatprep.subr.mxu0 0.0
    %4625 = vmatpush2.msra.mxu0 0.0
    %4626 = vmatprep.subr.mxu0 0.0
    %4627 = vmatpush2.msra.mxu0 0.0
    %4628 = vmatprep.subr.mxu0 0.0
    %4629 = vmatpush2.msra.mxu0 0.0
    %4630 = vmatprep.subr.mxu0 0.0
    %4631 = vmatpush2.msra.mxu0 0.0
    %4632 = vmatprep.subr.mxu0 0.0
    %4633 = vmatpush2.msra.mxu0 0.0
    %4634 = vmatprep.subr.mxu0 0.0
    %4635 = vmatpush2.msra.mxu0 0.0
    %4636 = vmatprep.subr.mxu0 0.0
    %4637 = vmatpush2.msra.mxu0 0.0
    %4638 = vmatprep.subr.mxu0 0.0
    %4639 = vmatpush2.msra.mxu0 0.0
    %4640 = vmatprep.subr.mxu0 0.0
    %4641 = vmatpush2.msra.mxu0 0.0
    %4642 = vmatprep.subr.mxu0 0.0
    %4643 = vmatpush2.msra.mxu0 0.0
    %4644 = vmatprep.subr.mxu0 0.0
    %4645 = vmatpush2.msra.mxu0 0.0
    %4646 = vmatprep.subr.mxu0 0.0
    %4647 = vmatpush2.msra.mxu0 0.0
    %4648 = vmatprep.mubr.f32.mxu0 0.0
    %4649 = vmatmul.mubr.f32.gmra.mxu0 %v4576
    %v4650 = vpop.f32.mrf.mxu0
    %v4651 = vadd.f32 0.0, %v4650
    %v4652 = vpop.f32.mrf.mxu0
    %4653 = vmatprep.mubr.f32.mxu0 0.0
    %4654 = vmatmul.mubr.f32.gmra.mxu0 %v4579
    %v4655 = vpop.f32.mrf.mxu0
    %v4656 = vadd.f32 0.0, %v4655
    %v4657 = vpop.f32.mrf.mxu0
    %4658 = vmatprep.mubr.f32.mxu0 0.0
    %4659 = vmatmul.mubr.f32.gmra.mxu0 %v4582
    %v4660 = vpop.f32.mrf.mxu0
    %v4661 = vadd.f32 0.0, %v4660
    %v4662 = vpop.f32.mrf.mxu0
    %4663 = vdwg.mxu0
    %v4664 = vadd.f32 %v4323, %v4651
    %v4665 = vadd.f32 %v4328, %v4656
    %v4666 = vadd.f32 %v4333, %v4661
    %4667 = vrot.lane.b32.xlu0 %v3655, 104
    %v4668 = vpop.permute.xlu0 %4667
    %4669 = vrot.lane.b32.xlu0 %v3660, 104
    %v4670 = vpop.permute.xlu0 %4669
    %4671 = vrot.lane.b32.xlu0 %v3665, 104
    %v4672 = vpop.permute.xlu0 %4671
    %4673 = vrot.lane.b32.xlu0 %v3655, 72
    %v4674 = vpop.permute.xlu0 %4673
    %4675 = vrot.lane.b32.xlu0 %v3660, 72
    %v4676 = vpop.permute.xlu0 %4675
    %4677 = vrot.lane.b32.xlu0 %v3665, 72
    %v4678 = vpop.permute.xlu0 %4677
    %v4679 = vsel %vm435, %v4668, 0
    %v4681 = vsel %vm435, %v4670, 0
    %v4683 = vsel %vm435, %v4672, 0
    %v4685 = vsel %vm435, %v4674, 0
    %v4687 = vsel %vm435, %v4676, 0
    %v4689 = vsel %vm435, %v4678, 0
    %4691 = vmatprep.subr.mxu0 0.0
    %4692 = vmatpush1.xpose.msra.mxu0 0.0
    %4693 = vmatprep.subr.mxu0 0.0
    %4694 = vmatpush1.xpose.msra.mxu0 0.0
    %4695 = vmatprep.subr.mxu0 0.0
    %4696 = vmatpush1.xpose.msra.mxu0 0.0
    %4697 = vmatprep.subr.mxu0 0.0
    %4698 = vmatpush1.xpose.msra.mxu0 0.0
    %4699 = vmatprep.subr.mxu0 0.0
    %4700 = vmatpush1.xpose.msra.mxu0 0.0
    %4701 = vmatprep.subr.mxu0 0.0
    %4702 = vmatpush1.xpose.msra.mxu0 0.0
    %4703 = vmatprep.subr.mxu0 0.0
    %4704 = vmatpush1.xpose.msra.mxu0 0.0
    %4705 = vmatprep.subr.mxu0 0.0
    %4706 = vmatpush1.xpose.msra.mxu0 0.0
    %4707 = vmatprep.subr.mxu0 0.0
    %4708 = vmatpush1.xpose.msra.mxu0 0.0
    %4709 = vmatprep.subr.mxu0 0.0
    %4710 = vmatpush1.xpose.msra.mxu0 0.0
    %4711 = vmatprep.subr.mxu0 0.0
    %4712 = vmatpush1.xpose.msra.mxu0 0.0
    %4713 = vmatprep.subr.mxu0 0.0
    %4714 = vmatpush1.xpose.msra.mxu0 0.0
    %4715 = vmatprep.subr.mxu0 0.0
    %4716 = vmatpush1.xpose.msra.mxu0 0.0
    %4717 = vmatprep.subr.mxu0 0.0
    %4718 = vmatpush1.xpose.msra.mxu0 %v4689
    %4719 = vmatprep.subr.mxu0 0.0
    %4720 = vmatpush1.xpose.msra.mxu0 %v4687
    %4721 = vmatprep.subr.mxu0 0.0
    %4722 = vmatpush1.xpose.msra.mxu0 %v4685
    %4723 = vmatprep.subr.mxu0 0.0
    %4724 = vmatpush2.xpose.msra.mxu0 0.0
    %4725 = vmatprep.subr.mxu0 0.0
    %4726 = vmatpush2.xpose.msra.mxu0 0.0
    %4727 = vmatprep.subr.mxu0 0.0
    %4728 = vmatpush2.xpose.msra.mxu0 0.0
    %4729 = vmatprep.subr.mxu0 0.0
    %4730 = vmatpush2.xpose.msra.mxu0 0.0
    %4731 = vmatprep.subr.mxu0 0.0
    %4732 = vmatpush2.xpose.msra.mxu0 0.0
    %4733 = vmatprep.subr.mxu0 0.0
    %4734 = vmatpush2.xpose.msra.mxu0 0.0
    %4735 = vmatprep.subr.mxu0 0.0
    %4736 = vmatpush2.xpose.msra.mxu0 0.0
    %4737 = vmatprep.subr.mxu0 0.0
    %4738 = vmatpush2.xpose.msra.mxu0 0.0
    %4739 = vmatprep.subr.mxu0 0.0
    %4740 = vmatpush2.xpose.msra.mxu0 0.0
    %4741 = vmatprep.subr.mxu0 0.0
    %4742 = vmatpush2.xpose.msra.mxu0 0.0
    %4743 = vmatprep.subr.mxu0 0.0
    %4744 = vmatpush2.xpose.msra.mxu0 0.0
    %4745 = vmatprep.subr.mxu0 0.0
    %4746 = vmatpush2.xpose.msra.mxu0 0.0
    %4747 = vmatprep.subr.mxu0 0.0
    %4748 = vmatpush2.xpose.msra.mxu0 0.0
    %4749 = vmatprep.subr.mxu0 0.0
    %4750 = vmatpush2.xpose.msra.mxu0 0.0
    %4751 = vmatprep.subr.mxu0 0.0
    %4752 = vmatpush2.xpose.msra.mxu0 0.0
    %4753 = vmatprep.subr.mxu0 0.0
    %4754 = vmatpush2.xpose.msra.mxu0 0.0
    %4755 = vmatprep.mubr.f32.mxu0 0.0
    %4756 = vmatmul.mubr.f32.gmra.mxu0 %v4679
    %v4757 = vpop.f32.mrf.mxu0
    %v4758 = vadd.f32 0.0, %v4757
    %v4759 = vpop.f32.mrf.mxu0
    %4760 = vmatprep.mubr.f32.mxu0 0.0
    %4761 = vmatmul.mubr.f32.gmra.mxu0 %v4681
    %v4762 = vpop.f32.mrf.mxu0
    %v4763 = vadd.f32 0.0, %v4762
    %v4764 = vpop.f32.mrf.mxu0
    %4765 = vmatprep.mubr.f32.mxu0 0.0
    %4766 = vmatmul.mubr.f32.gmra.mxu0 %v4683
    %v4767 = vpop.f32.mrf.mxu0
    %v4768 = vadd.f32 0.0, %v4767
    %v4769 = vpop.f32.mrf.mxu0
    %4770 = vdwg.mxu0
    %v4771 = vmul.f32 %v4758, 0.35355338
    %v4772 = vmul.f32 %v4763, 0.35355338
    %v4773 = vmul.f32 %v4768, 0.35355338
    %v4774 = vsel %vm531, %v4771, -inf
    %4775 = vmax.xlane.f32.xlu0 %v4774
    %v4776 = vpop.xlane.xlu0 %4775
    %v4777 = vsel %vm531, %v4772, -inf
    %4778 = vmax.xlane.f32.xlu0 %v4777
    %v4779 = vpop.xlane.xlu0 %4778
    %v4780 = vsel %vm538, %v4773, -inf
    %4781 = vmax.xlane.f32.xlu0 %v4780
    %v4782 = vpop.xlane.xlu0 %4781
    %v4783 = vsub.f32 %v4771, %v4776
    %v4784 = vsub.f32 %v4772, %v4779
    %v4785 = vsub.f32 %v4773, %v4782
    %v4786 = vmul.f32 %v4783, 1.442695
    %v4787 = vpow.pop %v4786
    %v4788 = vmul.f32 %v4784, 1.442695
    %v4789 = vpow.pop %v4788
    %v4790 = vmul.f32 %v4785, 1.442695
    %v4791 = vpow.pop %v4790
    %v4792 = vsel %vm531, %v4787, 0.0
    %4793 = vadd.xlane.f32.xlu0 %v4792
    %v4794 = vpop.xlane.xlu0 %4793
    %v4795 = vsel %vm531, %v4789, 0.0
    %4796 = vadd.xlane.f32.xlu0 %v4795
    %v4797 = vpop.xlane.xlu0 %4796
    %v4798 = vsel %vm538, %v4791, 0.0
    %4799 = vadd.xlane.f32.xlu0 %v4798
    %v4800 = vpop.xlane.xlu0 %4799
    %v4801 = vrcp.pop %v4794
    %v4802 = vrcp.pop %v4797
    %v4803 = vrcp.pop %v4800
    %v4804 = vmul.f32 %v4787, %v4801
    %v4805 = vmul.f32 %v4789, %v4802
    %v4806 = vmul.f32 %v4791, %v4803
    %4807 = vrot.lane.b32.xlu0 %v3655, 40
    %v4808 = vpop.permute.xlu0 %4807
    %4809 = vrot.lane.b32.xlu0 %v3660, 40
    %v4810 = vpop.permute.xlu0 %4809
    %4811 = vrot.lane.b32.xlu0 %v3665, 40
    %v4812 = vpop.permute.xlu0 %4811
    %v4816 = vsel %vm531, %v4804, 0
    %v4819 = vsel %vm531, %v4805, 0
    %v4822 = vsel %vm531, %v4806, 0
    %v4824 = vsel %vm90, %v4812, 0
    %4826 = vmatprep.subr.mxu0 0.0
    %4827 = vmatpush1.msra.mxu0 0.0
    %4828 = vmatprep.subr.mxu0 0.0
    %4829 = vmatpush1.msra.mxu0 0.0
    %4830 = vmatprep.subr.mxu0 0.0
    %4831 = vmatpush1.msra.mxu0 0.0
    %4832 = vmatprep.subr.mxu0 0.0
    %4833 = vmatpush1.msra.mxu0 0.0
    %4834 = vmatprep.subr.mxu0 0.0
    %4835 = vmatpush1.msra.mxu0 0.0
    %4836 = vmatprep.subr.mxu0 0.0
    %4837 = vmatpush1.msra.mxu0 0.0
    %4838 = vmatprep.subr.mxu0 0.0
    %4839 = vmatpush1.msra.mxu0 0.0
    %4840 = vmatprep.subr.mxu0 0.0
    %4841 = vmatpush1.msra.mxu0 0.0
    %4842 = vmatprep.subr.mxu0 0.0
    %4843 = vmatpush1.msra.mxu0 0.0
    %4844 = vmatprep.subr.mxu0 0.0
    %4845 = vmatpush1.msra.mxu0 0.0
    %4846 = vmatprep.subr.mxu0 0.0
    %4847 = vmatpush1.msra.mxu0 0.0
    %4848 = vmatprep.subr.mxu0 0.0
    %4849 = vmatpush1.msra.mxu0 0.0
    %4850 = vmatprep.subr.mxu0 0.0
    %4851 = vmatpush1.msra.mxu0 0.0
    %4852 = vmatprep.subr.mxu0 0.0
    %4853 = vmatpush1.msra.mxu0 %v4824
    %4854 = vmatprep.subr.mxu0 0.0
    %4855 = vmatpush1.msra.mxu0 %v4810
    %4856 = vmatprep.subr.mxu0 0.0
    %4857 = vmatpush1.msra.mxu0 %v4808
    %4858 = vmatprep.subr.mxu0 0.0
    %4859 = vmatpush2.msra.mxu0 0.0
    %4860 = vmatprep.subr.mxu0 0.0
    %4861 = vmatpush2.msra.mxu0 0.0
    %4862 = vmatprep.subr.mxu0 0.0
    %4863 = vmatpush2.msra.mxu0 0.0
    %4864 = vmatprep.subr.mxu0 0.0
    %4865 = vmatpush2.msra.mxu0 0.0
    %4866 = vmatprep.subr.mxu0 0.0
    %4867 = vmatpush2.msra.mxu0 0.0
    %4868 = vmatprep.subr.mxu0 0.0
    %4869 = vmatpush2.msra.mxu0 0.0
    %4870 = vmatprep.subr.mxu0 0.0
    %4871 = vmatpush2.msra.mxu0 0.0
    %4872 = vmatprep.subr.mxu0 0.0
    %4873 = vmatpush2.msra.mxu0 0.0
    %4874 = vmatprep.subr.mxu0 0.0
    %4875 = vmatpush2.msra.mxu0 0.0
    %4876 = vmatprep.subr.mxu0 0.0
    %4877 = vmatpush2.msra.mxu0 0.0
    %4878 = vmatprep.subr.mxu0 0.0
    %4879 = vmatpush2.msra.mxu0 0.0
    %4880 = vmatprep.subr.mxu0 0.0
    %4881 = vmatpush2.msra.mxu0 0.0
    %4882 = vmatprep.subr.mxu0 0.0
    %4883 = vmatpush2.msra.mxu0 0.0
    %4884 = vmatprep.subr.mxu0 0.0
    %4885 = vmatpush2.msra.mxu0 0.0
    %4886 = vmatprep.subr.mxu0 0.0
    %4887 = vmatpush2.msra.mxu0 0.0
    %4888 = vmatprep.subr.mxu0 0.0
    %4889 = vmatpush2.msra.mxu0 0.0
    %4890 = vmatprep.mubr.f32.mxu0 0.0
    %4891 = vmatmul.mubr.f32.gmra.mxu0 %v4816
    %v4892 = vpop.f32.mrf.mxu0
    %v4893 = vadd.f32 0.0, %v4892
    %v4894 = vpop.f32.mrf.mxu0
    %4895 = vmatprep.mubr.f32.mxu0 0.0
    %4896 = vmatmul.mubr.f32.gmra.mxu0 %v4819
    %v4897 = vpop.f32.mrf.mxu0
    %v4898 = vadd.f32 0.0, %v4897
    %v4899 = vpop.f32.mrf.mxu0
    %4900 = vmatprep.mubr.f32.mxu0 0.0
    %4901 = vmatmul.mubr.f32.gmra.mxu0 %v4822
    %v4902 = vpop.f32.mrf.mxu0
    %v4903 = vadd.f32 0.0, %v4902
    %v4904 = vpop.f32.mrf.mxu0
    %4905 = vdwg.mxu0
    %v4907 = vsel %vm435, %v4893, 0
    %v4910 = vsel %vm435, %v4898, 0
    %v4913 = vsel %vm435, %v4903, 0
    %4915 = vmatprep.subr.mxu0 0.0
    %4916 = vmatpush1.msra.mxu0 0.0
    %4917 = vmatprep.subr.mxu0 0.0
    %4918 = vmatpush1.msra.mxu0 0.0
    %4919 = vmatprep.subr.mxu0 0.0
    %4920 = vmatpush1.msra.mxu0 0.0
    %4921 = vmatprep.subr.mxu0 0.0
    %4922 = vmatpush1.msra.mxu0 0.0
    %4923 = vmatprep.subr.mxu0 0.0
    %4924 = vmatpush1.msra.mxu0 0.0
    %4925 = vmatprep.subr.mxu0 0.0
    %4926 = vmatpush1.msra.mxu0 0.0
    %4927 = vmatprep.subr.mxu0 0.0
    %4928 = vmatpush1.msra.mxu0 0.0
    %4929 = vmatprep.subr.mxu0 0.0
    %4930 = vmatpush1.msra.mxu0 0.0
    %4931 = vmatprep.subr.mxu0 0.0
    %4932 = vmatpush1.msra.mxu0 0.0
    %4933 = vmatprep.subr.mxu0 0.0
    %4934 = vmatpush1.msra.mxu0 0.0
    %4935 = vmatprep.subr.mxu0 0.0
    %4936 = vmatpush1.msra.mxu0 0.0
    %4937 = vmatprep.subr.mxu0 0.0
    %4938 = vmatpush1.msra.mxu0 0.0
    %4939 = vmatprep.subr.mxu0 0.0
    %4940 = vmatpush1.msra.mxu0 0.0
    %4941 = vmatprep.subr.mxu0 0.0
    %4942 = vmatpush1.msra.mxu0 0.0
    %4943 = vmatprep.subr.mxu0 0.0
    %4944 = vmatpush1.msra.mxu0 0.0
    %4945 = vmatprep.subr.mxu0 0.0
    %4946 = vmatpush1.msra.mxu0 %v3682
    %4947 = vmatprep.subr.mxu0 0.0
    %4948 = vmatpush2.msra.mxu0 0.0
    %4949 = vmatprep.subr.mxu0 0.0
    %4950 = vmatpush2.msra.mxu0 0.0
    %4951 = vmatprep.subr.mxu0 0.0
    %4952 = vmatpush2.msra.mxu0 0.0
    %4953 = vmatprep.subr.mxu0 0.0
    %4954 = vmatpush2.msra.mxu0 0.0
    %4955 = vmatprep.subr.mxu0 0.0
    %4956 = vmatpush2.msra.mxu0 0.0
    %4957 = vmatprep.subr.mxu0 0.0
    %4958 = vmatpush2.msra.mxu0 0.0
    %4959 = vmatprep.subr.mxu0 0.0
    %4960 = vmatpush2.msra.mxu0 0.0
    %4961 = vmatprep.subr.mxu0 0.0
    %4962 = vmatpush2.msra.mxu0 0.0
    %4963 = vmatprep.subr.mxu0 0.0
    %4964 = vmatpush2.msra.mxu0 0.0
    %4965 = vmatprep.subr.mxu0 0.0
    %4966 = vmatpush2.msra.mxu0 0.0
    %4967 = vmatprep.subr.mxu0 0.0
    %4968 = vmatpush2.msra.mxu0 0.0
    %4969 = vmatprep.subr.mxu0 0.0
    %4970 = vmatpush2.msra.mxu0 0.0
    %4971 = vmatprep.subr.mxu0 0.0
    %4972 = vmatpush2.msra.mxu0 0.0
    %4973 = vmatprep.subr.mxu0 0.0
    %4974 = vmatpush2.msra.mxu0 0.0
    %4975 = vmatprep.subr.mxu0 0.0
    %4976 = vmatpush2.msra.mxu0 0.0
    %4977 = vmatprep.subr.mxu0 0.0
    %4978 = vmatpush2.msra.mxu0 0.0
    %4979 = vmatprep.mubr.f32.mxu0 0.0
    %4980 = vmatmul.mubr.f32.gmra.mxu0 %v4907
    %v4981 = vpop.f32.mrf.mxu0
    %v4982 = vadd.f32 0.0, %v4981
    %v4983 = vpop.f32.mrf.mxu0
    %4984 = vmatprep.mubr.f32.mxu0 0.0
    %4985 = vmatmul.mubr.f32.gmra.mxu0 %v4910
    %v4986 = vpop.f32.mrf.mxu0
    %v4987 = vadd.f32 0.0, %v4986
    %v4988 = vpop.f32.mrf.mxu0
    %4989 = vmatprep.mubr.f32.mxu0 0.0
    %4990 = vmatmul.mubr.f32.gmra.mxu0 %v4913
    %v4991 = vpop.f32.mrf.mxu0
    %v4992 = vadd.f32 0.0, %v4991
    %v4993 = vpop.f32.mrf.mxu0
    %4994 = vdwg.mxu0
    %v4995 = vadd.f32 %v4664, %v4982
    %v4996 = vadd.f32 %v4665, %v4987
    %v4997 = vadd.f32 %v4666, %v4992
    %v5000 = vrot.slane %v3665, 1
    %v5001 = vrot.slane %v3670, 1
    %v5002 = vsel %vm1746, %v5000, %v5001
    %v5003 = vrot.slane %v3675, 1
    %v5004 = vsel %vm1746, %v5001, %v5003
    %5005 = vrot.lane.b32.xlu0 %v5002, 96
    %v5006 = vpop.permute.xlu0 %5005
    %5007 = vrot.lane.b32.xlu0 %v5004, 96
    %v5008 = vpop.permute.xlu0 %5007
    %5009 = vrot.lane.b32.xlu0 %v5003, 96
    %v5010 = vpop.permute.xlu0 %5009
    %v5011 = vsel %vm435, %v5002, 0
    %v5013 = vsel %vm435, %v5004, 0
    %v5015 = vsel %vm435, %v5003, 0
    %v5017 = vsel %vm435, %v5006, 0
    %v5019 = vsel %vm435, %v5008, 0
    %v5021 = vsel %vm435, %v5010, 0
    %5023 = vmatprep.subr.mxu0 0.0
    %5024 = vmatpush1.xpose.msra.mxu0 0.0
    %5025 = vmatprep.subr.mxu0 0.0
    %5026 = vmatpush1.xpose.msra.mxu0 0.0
    %5027 = vmatprep.subr.mxu0 0.0
    %5028 = vmatpush1.xpose.msra.mxu0 0.0
    %5029 = vmatprep.subr.mxu0 0.0
    %5030 = vmatpush1.xpose.msra.mxu0 0.0
    %5031 = vmatprep.subr.mxu0 0.0
    %5032 = vmatpush1.xpose.msra.mxu0 0.0
    %5033 = vmatprep.subr.mxu0 0.0
    %5034 = vmatpush1.xpose.msra.mxu0 0.0
    %5035 = vmatprep.subr.mxu0 0.0
    %5036 = vmatpush1.xpose.msra.mxu0 0.0
    %5037 = vmatprep.subr.mxu0 0.0
    %5038 = vmatpush1.xpose.msra.mxu0 0.0
    %5039 = vmatprep.subr.mxu0 0.0
    %5040 = vmatpush1.xpose.msra.mxu0 0.0
    %5041 = vmatprep.subr.mxu0 0.0
    %5042 = vmatpush1.xpose.msra.mxu0 0.0
    %5043 = vmatprep.subr.mxu0 0.0
    %5044 = vmatpush1.xpose.msra.mxu0 0.0
    %5045 = vmatprep.subr.mxu0 0.0
    %5046 = vmatpush1.xpose.msra.mxu0 0.0
    %5047 = vmatprep.subr.mxu0 0.0
    %5048 = vmatpush1.xpose.msra.mxu0 0.0
    %5049 = vmatprep.subr.mxu0 0.0
    %5050 = vmatpush1.xpose.msra.mxu0 %v5021
    %5051 = vmatprep.subr.mxu0 0.0
    %5052 = vmatpush1.xpose.msra.mxu0 %v5019
    %5053 = vmatprep.subr.mxu0 0.0
    %5054 = vmatpush1.xpose.msra.mxu0 %v5017
    %5055 = vmatprep.subr.mxu0 0.0
    %5056 = vmatpush2.xpose.msra.mxu0 0.0
    %5057 = vmatprep.subr.mxu0 0.0
    %5058 = vmatpush2.xpose.msra.mxu0 0.0
    %5059 = vmatprep.subr.mxu0 0.0
    %5060 = vmatpush2.xpose.msra.mxu0 0.0
    %5061 = vmatprep.subr.mxu0 0.0
    %5062 = vmatpush2.xpose.msra.mxu0 0.0
    %5063 = vmatprep.subr.mxu0 0.0
    %5064 = vmatpush2.xpose.msra.mxu0 0.0
    %5065 = vmatprep.subr.mxu0 0.0
    %5066 = vmatpush2.xpose.msra.mxu0 0.0
    %5067 = vmatprep.subr.mxu0 0.0
    %5068 = vmatpush2.xpose.msra.mxu0 0.0
    %5069 = vmatprep.subr.mxu0 0.0
    %5070 = vmatpush2.xpose.msra.mxu0 0.0
    %5071 = vmatprep.subr.mxu0 0.0
    %5072 = vmatpush2.xpose.msra.mxu0 0.0
    %5073 = vmatprep.subr.mxu0 0.0
    %5074 = vmatpush2.xpose.msra.mxu0 0.0
    %5075 = vmatprep.subr.mxu0 0.0
    %5076 = vmatpush2.xpose.msra.mxu0 0.0
    %5077 = vmatprep.subr.mxu0 0.0
    %5078 = vmatpush2.xpose.msra.mxu0 0.0
    %5079 = vmatprep.subr.mxu0 0.0
    %5080 = vmatpush2.xpose.msra.mxu0 0.0
    %5081 = vmatprep.subr.mxu0 0.0
    %5082 = vmatpush2.xpose.msra.mxu0 0.0
    %5083 = vmatprep.subr.mxu0 0.0
    %5084 = vmatpush2.xpose.msra.mxu0 0.0
    %5085 = vmatprep.subr.mxu0 0.0
    %5086 = vmatpush2.xpose.msra.mxu0 0.0
    %5087 = vmatprep.mubr.f32.mxu0 0.0
    %5088 = vmatmul.mubr.f32.gmra.mxu0 %v5011
    %v5089 = vpop.f32.mrf.mxu0
    %v5090 = vadd.f32 0.0, %v5089
    %v5091 = vpop.f32.mrf.mxu0
    %5092 = vmatprep.mubr.f32.mxu0 0.0
    %5093 = vmatmul.mubr.f32.gmra.mxu0 %v5013
    %v5094 = vpop.f32.mrf.mxu0
    %v5095 = vadd.f32 0.0, %v5094
    %v5096 = vpop.f32.mrf.mxu0
    %5097 = vmatprep.mubr.f32.mxu0 0.0
    %5098 = vmatmul.mubr.f32.gmra.mxu0 %v5015
    %v5099 = vpop.f32.mrf.mxu0
    %v5100 = vadd.f32 0.0, %v5099
    %v5101 = vpop.f32.mrf.mxu0
    %5102 = vdwg.mxu0
    %v5103 = vmul.f32 %v5090, 0.35355338
    %v5104 = vmul.f32 %v5095, 0.35355338
    %v5105 = vmul.f32 %v5100, 0.35355338
    %v5106 = vsel %vm531, %v5103, -inf
    %5107 = vmax.xlane.f32.xlu0 %v5106
    %v5108 = vpop.xlane.xlu0 %5107
    %v5109 = vsel %vm531, %v5104, -inf
    %5110 = vmax.xlane.f32.xlu0 %v5109
    %v5111 = vpop.xlane.xlu0 %5110
    %v5112 = vsel %vm538, %v5105, -inf
    %5113 = vmax.xlane.f32.xlu0 %v5112
    %v5114 = vpop.xlane.xlu0 %5113
    %v5115 = vsub.f32 %v5103, %v5108
    %v5116 = vsub.f32 %v5104, %v5111
    %v5117 = vsub.f32 %v5105, %v5114
    %v5118 = vmul.f32 %v5115, 1.442695
    %v5119 = vpow.pop %v5118
    %v5120 = vmul.f32 %v5116, 1.442695
    %v5121 = vpow.pop %v5120
    %v5122 = vmul.f32 %v5117, 1.442695
    %v5123 = vpow.pop %v5122
    %v5124 = vsel %vm531, %v5119, 0.0
    %5125 = vadd.xlane.f32.xlu0 %v5124
    %v5126 = vpop.xlane.xlu0 %5125
    %v5127 = vsel %vm531, %v5121, 0.0
    %5128 = vadd.xlane.f32.xlu0 %v5127
    %v5129 = vpop.xlane.xlu0 %5128
    %v5130 = vsel %vm538, %v5123, 0.0
    %5131 = vadd.xlane.f32.xlu0 %v5130
    %v5132 = vpop.xlane.xlu0 %5131
    %v5133 = vrcp.pop %v5126
    %v5134 = vrcp.pop %v5129
    %v5135 = vrcp.pop %v5132
    %v5136 = vmul.f32 %v5119, %v5133
    %v5137 = vmul.f32 %v5121, %v5134
    %v5138 = vmul.f32 %v5123, %v5135
    %5139 = vrot.lane.b32.xlu0 %v5002, 64
    %v5140 = vpop.permute.xlu0 %5139
    %5141 = vrot.lane.b32.xlu0 %v5004, 64
    %v5142 = vpop.permute.xlu0 %5141
    %5143 = vrot.lane.b32.xlu0 %v5003, 64
    %v5144 = vpop.permute.xlu0 %5143
    %v5148 = vsel %vm531, %v5136, 0
    %v5151 = vsel %vm531, %v5137, 0
    %v5154 = vsel %vm531, %v5138, 0
    %v5156 = vsel %vm90, %v5144, 0
    %5158 = vmatprep.subr.mxu0 0.0
    %5159 = vmatpush1.msra.mxu0 0.0
    %5160 = vmatprep.subr.mxu0 0.0
    %5161 = vmatpush1.msra.mxu0 0.0
    %5162 = vmatprep.subr.mxu0 0.0
    %5163 = vmatpush1.msra.mxu0 0.0
    %5164 = vmatprep.subr.mxu0 0.0
    %5165 = vmatpush1.msra.mxu0 0.0
    %5166 = vmatprep.subr.mxu0 0.0
    %5167 = vmatpush1.msra.mxu0 0.0
    %5168 = vmatprep.subr.mxu0 0.0
    %5169 = vmatpush1.msra.mxu0 0.0
    %5170 = vmatprep.subr.mxu0 0.0
    %5171 = vmatpush1.msra.mxu0 0.0
    %5172 = vmatprep.subr.mxu0 0.0
    %5173 = vmatpush1.msra.mxu0 0.0
    %5174 = vmatprep.subr.mxu0 0.0
    %5175 = vmatpush1.msra.mxu0 0.0
    %5176 = vmatprep.subr.mxu0 0.0
    %5177 = vmatpush1.msra.mxu0 0.0
    %5178 = vmatprep.subr.mxu0 0.0
    %5179 = vmatpush1.msra.mxu0 0.0
    %5180 = vmatprep.subr.mxu0 0.0
    %5181 = vmatpush1.msra.mxu0 0.0
    %5182 = vmatprep.subr.mxu0 0.0
    %5183 = vmatpush1.msra.mxu0 0.0
    %5184 = vmatprep.subr.mxu0 0.0
    %5185 = vmatpush1.msra.mxu0 %v5156
    %5186 = vmatprep.subr.mxu0 0.0
    %5187 = vmatpush1.msra.mxu0 %v5142
    %5188 = vmatprep.subr.mxu0 0.0
    %5189 = vmatpush1.msra.mxu0 %v5140
    %5190 = vmatprep.subr.mxu0 0.0
    %5191 = vmatpush2.msra.mxu0 0.0
    %5192 = vmatprep.subr.mxu0 0.0
    %5193 = vmatpush2.msra.mxu0 0.0
    %5194 = vmatprep.subr.mxu0 0.0
    %5195 = vmatpush2.msra.mxu0 0.0
    %5196 = vmatprep.subr.mxu0 0.0
    %5197 = vmatpush2.msra.mxu0 0.0
    %5198 = vmatprep.subr.mxu0 0.0
    %5199 = vmatpush2.msra.mxu0 0.0
    %5200 = vmatprep.subr.mxu0 0.0
    %5201 = vmatpush2.msra.mxu0 0.0
    %5202 = vmatprep.subr.mxu0 0.0
    %5203 = vmatpush2.msra.mxu0 0.0
    %5204 = vmatprep.subr.mxu0 0.0
    %5205 = vmatpush2.msra.mxu0 0.0
    %5206 = vmatprep.subr.mxu0 0.0
    %5207 = vmatpush2.msra.mxu0 0.0
    %5208 = vmatprep.subr.mxu0 0.0
    %5209 = vmatpush2.msra.mxu0 0.0
    %5210 = vmatprep.subr.mxu0 0.0
    %5211 = vmatpush2.msra.mxu0 0.0
    %5212 = vmatprep.subr.mxu0 0.0
    %5213 = vmatpush2.msra.mxu0 0.0
    %5214 = vmatprep.subr.mxu0 0.0
    %5215 = vmatpush2.msra.mxu0 0.0
    %5216 = vmatprep.subr.mxu0 0.0
    %5217 = vmatpush2.msra.mxu0 0.0
    %5218 = vmatprep.subr.mxu0 0.0
    %5219 = vmatpush2.msra.mxu0 0.0
    %5220 = vmatprep.subr.mxu0 0.0
    %5221 = vmatpush2.msra.mxu0 0.0
    %5222 = vmatprep.mubr.f32.mxu0 0.0
    %5223 = vmatmul.mubr.f32.gmra.mxu0 %v5148
    %v5224 = vpop.f32.mrf.mxu0
    %v5225 = vadd.f32 0.0, %v5224
    %v5226 = vpop.f32.mrf.mxu0
    %5227 = vmatprep.mubr.f32.mxu0 0.0
    %5228 = vmatmul.mubr.f32.gmra.mxu0 %v5151
    %v5229 = vpop.f32.mrf.mxu0
    %v5230 = vadd.f32 0.0, %v5229
    %v5231 = vpop.f32.mrf.mxu0
    %5232 = vmatprep.mubr.f32.mxu0 0.0
    %5233 = vmatmul.mubr.f32.gmra.mxu0 %v5154
    %v5234 = vpop.f32.mrf.mxu0
    %v5235 = vadd.f32 0.0, %v5234
    %v5236 = vpop.f32.mrf.mxu0
    %5237 = vdwg.mxu0
    %5238 = vrot.lane.b32.xlu0 %v5002, 120
    %v5239 = vpop.permute.xlu0 %5238
    %5240 = vrot.lane.b32.xlu0 %v5004, 120
    %v5241 = vpop.permute.xlu0 %5240
    %5242 = vrot.lane.b32.xlu0 %v5003, 120
    %v5243 = vpop.permute.xlu0 %5242
    %5244 = vrot.lane.b32.xlu0 %v5002, 88
    %v5245 = vpop.permute.xlu0 %5244
    %5246 = vrot.lane.b32.xlu0 %v5004, 88
    %v5247 = vpop.permute.xlu0 %5246
    %5248 = vrot.lane.b32.xlu0 %v5003, 88
    %v5249 = vpop.permute.xlu0 %5248
    %v5250 = vsel %vm435, %v5239, 0
    %v5252 = vsel %vm435, %v5241, 0
    %v5254 = vsel %vm435, %v5243, 0
    %v5256 = vsel %vm435, %v5245, 0
    %v5258 = vsel %vm435, %v5247, 0
    %v5260 = vsel %vm435, %v5249, 0
    %5262 = vmatprep.subr.mxu0 0.0
    %5263 = vmatpush1.xpose.msra.mxu0 0.0
    %5264 = vmatprep.subr.mxu0 0.0
    %5265 = vmatpush1.xpose.msra.mxu0 0.0
    %5266 = vmatprep.subr.mxu0 0.0
    %5267 = vmatpush1.xpose.msra.mxu0 0.0
    %5268 = vmatprep.subr.mxu0 0.0
    %5269 = vmatpush1.xpose.msra.mxu0 0.0
    %5270 = vmatprep.subr.mxu0 0.0
    %5271 = vmatpush1.xpose.msra.mxu0 0.0
    %5272 = vmatprep.subr.mxu0 0.0
    %5273 = vmatpush1.xpose.msra.mxu0 0.0
    %5274 = vmatprep.subr.mxu0 0.0
    %5275 = vmatpush1.xpose.msra.mxu0 0.0
    %5276 = vmatprep.subr.mxu0 0.0
    %5277 = vmatpush1.xpose.msra.mxu0 0.0
    %5278 = vmatprep.subr.mxu0 0.0
    %5279 = vmatpush1.xpose.msra.mxu0 0.0
    %5280 = vmatprep.subr.mxu0 0.0
    %5281 = vmatpush1.xpose.msra.mxu0 0.0
    %5282 = vmatprep.subr.mxu0 0.0
    %5283 = vmatpush1.xpose.msra.mxu0 0.0
    %5284 = vmatprep.subr.mxu0 0.0
    %5285 = vmatpush1.xpose.msra.mxu0 0.0
    %5286 = vmatprep.subr.mxu0 0.0
    %5287 = vmatpush1.xpose.msra.mxu0 0.0
    %5288 = vmatprep.subr.mxu0 0.0
    %5289 = vmatpush1.xpose.msra.mxu0 %v5260
    %5290 = vmatprep.subr.mxu0 0.0
    %5291 = vmatpush1.xpose.msra.mxu0 %v5258
    %5292 = vmatprep.subr.mxu0 0.0
    %5293 = vmatpush1.xpose.msra.mxu0 %v5256
    %5294 = vmatprep.subr.mxu0 0.0
    %5295 = vmatpush2.xpose.msra.mxu0 0.0
    %5296 = vmatprep.subr.mxu0 0.0
    %5297 = vmatpush2.xpose.msra.mxu0 0.0
    %5298 = vmatprep.subr.mxu0 0.0
    %5299 = vmatpush2.xpose.msra.mxu0 0.0
    %5300 = vmatprep.subr.mxu0 0.0
    %5301 = vmatpush2.xpose.msra.mxu0 0.0
    %5302 = vmatprep.subr.mxu0 0.0
    %5303 = vmatpush2.xpose.msra.mxu0 0.0
    %5304 = vmatprep.subr.mxu0 0.0
    %5305 = vmatpush2.xpose.msra.mxu0 0.0
    %5306 = vmatprep.subr.mxu0 0.0
    %5307 = vmatpush2.xpose.msra.mxu0 0.0
    %5308 = vmatprep.subr.mxu0 0.0
    %5309 = vmatpush2.xpose.msra.mxu0 0.0
    %5310 = vmatprep.subr.mxu0 0.0
    %5311 = vmatpush2.xpose.msra.mxu0 0.0
    %5312 = vmatprep.subr.mxu0 0.0
    %5313 = vmatpush2.xpose.msra.mxu0 0.0
    %5314 = vmatprep.subr.mxu0 0.0
    %5315 = vmatpush2.xpose.msra.mxu0 0.0
    %5316 = vmatprep.subr.mxu0 0.0
    %5317 = vmatpush2.xpose.msra.mxu0 0.0
    %5318 = vmatprep.subr.mxu0 0.0
    %5319 = vmatpush2.xpose.msra.mxu0 0.0
    %5320 = vmatprep.subr.mxu0 0.0
    %5321 = vmatpush2.xpose.msra.mxu0 0.0
    %5322 = vmatprep.subr.mxu0 0.0
    %5323 = vmatpush2.xpose.msra.mxu0 0.0
    %5324 = vmatprep.subr.mxu0 0.0
    %5325 = vmatpush2.xpose.msra.mxu0 0.0
    %5326 = vmatprep.mubr.f32.mxu0 0.0
    %5327 = vmatmul.mubr.f32.gmra.mxu0 %v5250
    %v5328 = vpop.f32.mrf.mxu0
    %v5329 = vadd.f32 0.0, %v5328
    %v5330 = vpop.f32.mrf.mxu0
    %5331 = vmatprep.mubr.f32.mxu0 0.0
    %5332 = vmatmul.mubr.f32.gmra.mxu0 %v5252
    %v5333 = vpop.f32.mrf.mxu0
    %v5334 = vadd.f32 0.0, %v5333
    %v5335 = vpop.f32.mrf.mxu0
    %5336 = vmatprep.mubr.f32.mxu0 0.0
    %5337 = vmatmul.mubr.f32.gmra.mxu0 %v5254
    %v5338 = vpop.f32.mrf.mxu0
    %v5339 = vadd.f32 0.0, %v5338
    %v5340 = vpop.f32.mrf.mxu0
    %5341 = vdwg.mxu0
    %v5342 = vmul.f32 %v5329, 0.35355338
    %v5343 = vmul.f32 %v5334, 0.35355338
    %v5344 = vmul.f32 %v5339, 0.35355338
    %v5345 = vsel %vm531, %v5342, -inf
    %5346 = vmax.xlane.f32.xlu0 %v5345
    %v5347 = vpop.xlane.xlu0 %5346
    %v5348 = vsel %vm531, %v5343, -inf
    %5349 = vmax.xlane.f32.xlu0 %v5348
    %v5350 = vpop.xlane.xlu0 %5349
    %v5351 = vsel %vm538, %v5344, -inf
    %5352 = vmax.xlane.f32.xlu0 %v5351
    %v5353 = vpop.xlane.xlu0 %5352
    %v5354 = vsub.f32 %v5342, %v5347
    %v5355 = vsub.f32 %v5343, %v5350
    %v5356 = vsub.f32 %v5344, %v5353
    %v5357 = vmul.f32 %v5354, 1.442695
    %v5358 = vpow.pop %v5357
    %v5359 = vmul.f32 %v5355, 1.442695
    %v5360 = vpow.pop %v5359
    %v5361 = vmul.f32 %v5356, 1.442695
    %v5362 = vpow.pop %v5361
    %v5363 = vsel %vm531, %v5358, 0.0
    %5364 = vadd.xlane.f32.xlu0 %v5363
    %v5365 = vpop.xlane.xlu0 %5364
    %v5366 = vsel %vm531, %v5360, 0.0
    %5367 = vadd.xlane.f32.xlu0 %v5366
    %v5368 = vpop.xlane.xlu0 %5367
    %v5369 = vsel %vm538, %v5362, 0.0
    %5370 = vadd.xlane.f32.xlu0 %v5369
    %v5371 = vpop.xlane.xlu0 %5370
    %v5372 = vrcp.pop %v5365
    %v5373 = vrcp.pop %v5368
    %v5374 = vrcp.pop %v5371
    %v5375 = vmul.f32 %v5358, %v5372
    %v5376 = vmul.f32 %v5360, %v5373
    %v5377 = vmul.f32 %v5362, %v5374
    %5378 = vrot.lane.b32.xlu0 %v5002, 56
    %v5379 = vpop.permute.xlu0 %5378
    %5380 = vrot.lane.b32.xlu0 %v5004, 56
    %v5381 = vpop.permute.xlu0 %5380
    %5382 = vrot.lane.b32.xlu0 %v5003, 56
    %v5383 = vpop.permute.xlu0 %5382
    %v5387 = vsel %vm531, %v5375, 0
    %v5390 = vsel %vm531, %v5376, 0
    %v5393 = vsel %vm531, %v5377, 0
    %v5395 = vsel %vm90, %v5383, 0
    %5397 = vmatprep.subr.mxu0 0.0
    %5398 = vmatpush1.msra.mxu0 0.0
    %5399 = vmatprep.subr.mxu0 0.0
    %5400 = vmatpush1.msra.mxu0 0.0
    %5401 = vmatprep.subr.mxu0 0.0
    %5402 = vmatpush1.msra.mxu0 0.0
    %5403 = vmatprep.subr.mxu0 0.0
    %5404 = vmatpush1.msra.mxu0 0.0
    %5405 = vmatprep.subr.mxu0 0.0
    %5406 = vmatpush1.msra.mxu0 0.0
    %5407 = vmatprep.subr.mxu0 0.0
    %5408 = vmatpush1.msra.mxu0 0.0
    %5409 = vmatprep.subr.mxu0 0.0
    %5410 = vmatpush1.msra.mxu0 0.0
    %5411 = vmatprep.subr.mxu0 0.0
    %5412 = vmatpush1.msra.mxu0 0.0
    %5413 = vmatprep.subr.mxu0 0.0
    %5414 = vmatpush1.msra.mxu0 0.0
    %5415 = vmatprep.subr.mxu0 0.0
    %5416 = vmatpush1.msra.mxu0 0.0
    %5417 = vmatprep.subr.mxu0 0.0
    %5418 = vmatpush1.msra.mxu0 0.0
    %5419 = vmatprep.subr.mxu0 0.0
    %5420 = vmatpush1.msra.mxu0 0.0
    %5421 = vmatprep.subr.mxu0 0.0
    %5422 = vmatpush1.msra.mxu0 0.0
    %5423 = vmatprep.subr.mxu0 0.0
    %5424 = vmatpush1.msra.mxu0 %v5395
    %5425 = vmatprep.subr.mxu0 0.0
    %5426 = vmatpush1.msra.mxu0 %v5381
    %5427 = vmatprep.subr.mxu0 0.0
    %5428 = vmatpush1.msra.mxu0 %v5379
    %5429 = vmatprep.subr.mxu0 0.0
    %5430 = vmatpush2.msra.mxu0 0.0
    %5431 = vmatprep.subr.mxu0 0.0
    %5432 = vmatpush2.msra.mxu0 0.0
    %5433 = vmatprep.subr.mxu0 0.0
    %5434 = vmatpush2.msra.mxu0 0.0
    %5435 = vmatprep.subr.mxu0 0.0
    %5436 = vmatpush2.msra.mxu0 0.0
    %5437 = vmatprep.subr.mxu0 0.0
    %5438 = vmatpush2.msra.mxu0 0.0
    %5439 = vmatprep.subr.mxu0 0.0
    %5440 = vmatpush2.msra.mxu0 0.0
    %5441 = vmatprep.subr.mxu0 0.0
    %5442 = vmatpush2.msra.mxu0 0.0
    %5443 = vmatprep.subr.mxu0 0.0
    %5444 = vmatpush2.msra.mxu0 0.0
    %5445 = vmatprep.subr.mxu0 0.0
    %5446 = vmatpush2.msra.mxu0 0.0
    %5447 = vmatprep.subr.mxu0 0.0
    %5448 = vmatpush2.msra.mxu0 0.0
    %5449 = vmatprep.subr.mxu0 0.0
    %5450 = vmatpush2.msra.mxu0 0.0
    %5451 = vmatprep.subr.mxu0 0.0
    %5452 = vmatpush2.msra.mxu0 0.0
    %5453 = vmatprep.subr.mxu0 0.0
    %5454 = vmatpush2.msra.mxu0 0.0
    %5455 = vmatprep.subr.mxu0 0.0
    %5456 = vmatpush2.msra.mxu0 0.0
    %5457 = vmatprep.subr.mxu0 0.0
    %5458 = vmatpush2.msra.mxu0 0.0
    %5459 = vmatprep.subr.mxu0 0.0
    %5460 = vmatpush2.msra.mxu0 0.0
    %5461 = vmatprep.mubr.f32.mxu0 0.0
    %5462 = vmatmul.mubr.f32.gmra.mxu0 %v5387
    %v5463 = vpop.f32.mrf.mxu0
    %v5464 = vadd.f32 0.0, %v5463
    %v5465 = vpop.f32.mrf.mxu0
    %5466 = vmatprep.mubr.f32.mxu0 0.0
    %5467 = vmatmul.mubr.f32.gmra.mxu0 %v5390
    %v5468 = vpop.f32.mrf.mxu0
    %v5469 = vadd.f32 0.0, %v5468
    %v5470 = vpop.f32.mrf.mxu0
    %5471 = vmatprep.mubr.f32.mxu0 0.0
    %5472 = vmatmul.mubr.f32.gmra.mxu0 %v5393
    %v5473 = vpop.f32.mrf.mxu0
    %v5474 = vadd.f32 0.0, %v5473
    %v5475 = vpop.f32.mrf.mxu0
    %5476 = vdwg.mxu0
    %v5478 = vsel %vm435, %v5464, 0
    %v5481 = vsel %vm435, %v5469, 0
    %v5484 = vsel %vm435, %v5474, 0
    %5486 = vmatprep.subr.mxu0 0.0
    %5487 = vmatpush1.msra.mxu0 0.0
    %5488 = vmatprep.subr.mxu0 0.0
    %5489 = vmatpush1.msra.mxu0 0.0
    %5490 = vmatprep.subr.mxu0 0.0
    %5491 = vmatpush1.msra.mxu0 0.0
    %5492 = vmatprep.subr.mxu0 0.0
    %5493 = vmatpush1.msra.mxu0 0.0
    %5494 = vmatprep.subr.mxu0 0.0
    %5495 = vmatpush1.msra.mxu0 0.0
    %5496 = vmatprep.subr.mxu0 0.0
    %5497 = vmatpush1.msra.mxu0 0.0
    %5498 = vmatprep.subr.mxu0 0.0
    %5499 = vmatpush1.msra.mxu0 0.0
    %5500 = vmatprep.subr.mxu0 0.0
    %5501 = vmatpush1.msra.mxu0 0.0
    %5502 = vmatprep.subr.mxu0 0.0
    %5503 = vmatpush1.msra.mxu0 0.0
    %5504 = vmatprep.subr.mxu0 0.0
    %5505 = vmatpush1.msra.mxu0 0.0
    %5506 = vmatprep.subr.mxu0 0.0
    %5507 = vmatpush1.msra.mxu0 0.0
    %5508 = vmatprep.subr.mxu0 0.0
    %5509 = vmatpush1.msra.mxu0 0.0
    %5510 = vmatprep.subr.mxu0 0.0
    %5511 = vmatpush1.msra.mxu0 0.0
    %5512 = vmatprep.subr.mxu0 0.0
    %5513 = vmatpush1.msra.mxu0 0.0
    %5514 = vmatprep.subr.mxu0 0.0
    %5515 = vmatpush1.msra.mxu0 0.0
    %5516 = vmatprep.subr.mxu0 0.0
    %5517 = vmatpush1.msra.mxu0 %v3680
    %5518 = vmatprep.subr.mxu0 0.0
    %5519 = vmatpush2.msra.mxu0 0.0
    %5520 = vmatprep.subr.mxu0 0.0
    %5521 = vmatpush2.msra.mxu0 0.0
    %5522 = vmatprep.subr.mxu0 0.0
    %5523 = vmatpush2.msra.mxu0 0.0
    %5524 = vmatprep.subr.mxu0 0.0
    %5525 = vmatpush2.msra.mxu0 0.0
    %5526 = vmatprep.subr.mxu0 0.0
    %5527 = vmatpush2.msra.mxu0 0.0
    %5528 = vmatprep.subr.mxu0 0.0
    %5529 = vmatpush2.msra.mxu0 0.0
    %5530 = vmatprep.subr.mxu0 0.0
    %5531 = vmatpush2.msra.mxu0 0.0
    %5532 = vmatprep.subr.mxu0 0.0
    %5533 = vmatpush2.msra.mxu0 0.0
    %5534 = vmatprep.subr.mxu0 0.0
    %5535 = vmatpush2.msra.mxu0 0.0
    %5536 = vmatprep.subr.mxu0 0.0
    %5537 = vmatpush2.msra.mxu0 0.0
    %5538 = vmatprep.subr.mxu0 0.0
    %5539 = vmatpush2.msra.mxu0 0.0
    %5540 = vmatprep.subr.mxu0 0.0
    %5541 = vmatpush2.msra.mxu0 0.0
    %5542 = vmatprep.subr.mxu0 0.0
    %5543 = vmatpush2.msra.mxu0 0.0
    %5544 = vmatprep.subr.mxu0 0.0
    %5545 = vmatpush2.msra.mxu0 0.0
    %5546 = vmatprep.subr.mxu0 0.0
    %5547 = vmatpush2.msra.mxu0 0.0
    %5548 = vmatprep.subr.mxu0 0.0
    %5549 = vmatpush2.msra.mxu0 0.0
    %5550 = vmatprep.mubr.f32.mxu0 0.0
    %5551 = vmatmul.mubr.f32.gmra.mxu0 %v5478
    %v5552 = vpop.f32.mrf.mxu0
    %v5553 = vadd.f32 0.0, %v5552
    %v5554 = vpop.f32.mrf.mxu0
    %5555 = vmatprep.mubr.f32.mxu0 0.0
    %5556 = vmatmul.mubr.f32.gmra.mxu0 %v5481
    %v5557 = vpop.f32.mrf.mxu0
    %v5558 = vadd.f32 0.0, %v5557
    %v5559 = vpop.f32.mrf.mxu0
    %5560 = vmatprep.mubr.f32.mxu0 0.0
    %5561 = vmatmul.mubr.f32.gmra.mxu0 %v5484
    %v5562 = vpop.f32.mrf.mxu0
    %v5563 = vadd.f32 0.0, %v5562
    %v5564 = vpop.f32.mrf.mxu0
    %5565 = vdwg.mxu0
    %v5567 = vsel %vm435, %v5225, 0
    %v5570 = vsel %vm435, %v5230, 0
    %v5573 = vsel %vm435, %v5235, 0
    %5575 = vmatprep.subr.mxu0 0.0
    %5576 = vmatpush1.msra.mxu0 0.0
    %5577 = vmatprep.subr.mxu0 0.0
    %5578 = vmatpush1.msra.mxu0 0.0
    %5579 = vmatprep.subr.mxu0 0.0
    %5580 = vmatpush1.msra.mxu0 0.0
    %5581 = vmatprep.subr.mxu0 0.0
    %5582 = vmatpush1.msra.mxu0 0.0
    %5583 = vmatprep.subr.mxu0 0.0
    %5584 = vmatpush1.msra.mxu0 0.0
    %5585 = vmatprep.subr.mxu0 0.0
    %5586 = vmatpush1.msra.mxu0 0.0
    %5587 = vmatprep.subr.mxu0 0.0
    %5588 = vmatpush1.msra.mxu0 0.0
    %5589 = vmatprep.subr.mxu0 0.0
    %5590 = vmatpush1.msra.mxu0 0.0
    %5591 = vmatprep.subr.mxu0 0.0
    %5592 = vmatpush1.msra.mxu0 0.0
    %5593 = vmatprep.subr.mxu0 0.0
    %5594 = vmatpush1.msra.mxu0 0.0
    %5595 = vmatprep.subr.mxu0 0.0
    %5596 = vmatpush1.msra.mxu0 0.0
    %5597 = vmatprep.subr.mxu0 0.0
    %5598 = vmatpush1.msra.mxu0 0.0
    %5599 = vmatprep.subr.mxu0 0.0
    %5600 = vmatpush1.msra.mxu0 0.0
    %5601 = vmatprep.subr.mxu0 0.0
    %5602 = vmatpush1.msra.mxu0 0.0
    %5603 = vmatprep.subr.mxu0 0.0
    %5604 = vmatpush1.msra.mxu0 0.0
    %5605 = vmatprep.subr.mxu0 0.0
    %5606 = vmatpush1.msra.mxu0 %v3679
    %5607 = vmatprep.subr.mxu0 0.0
    %5608 = vmatpush2.msra.mxu0 0.0
    %5609 = vmatprep.subr.mxu0 0.0
    %5610 = vmatpush2.msra.mxu0 0.0
    %5611 = vmatprep.subr.mxu0 0.0
    %5612 = vmatpush2.msra.mxu0 0.0
    %5613 = vmatprep.subr.mxu0 0.0
    %5614 = vmatpush2.msra.mxu0 0.0
    %5615 = vmatprep.subr.mxu0 0.0
    %5616 = vmatpush2.msra.mxu0 0.0
    %5617 = vmatprep.subr.mxu0 0.0
    %5618 = vmatpush2.msra.mxu0 0.0
    %5619 = vmatprep.subr.mxu0 0.0
    %5620 = vmatpush2.msra.mxu0 0.0
    %5621 = vmatprep.subr.mxu0 0.0
    %5622 = vmatpush2.msra.mxu0 0.0
    %5623 = vmatprep.subr.mxu0 0.0
    %5624 = vmatpush2.msra.mxu0 0.0
    %5625 = vmatprep.subr.mxu0 0.0
    %5626 = vmatpush2.msra.mxu0 0.0
    %5627 = vmatprep.subr.mxu0 0.0
    %5628 = vmatpush2.msra.mxu0 0.0
    %5629 = vmatprep.subr.mxu0 0.0
    %5630 = vmatpush2.msra.mxu0 0.0
    %5631 = vmatprep.subr.mxu0 0.0
    %5632 = vmatpush2.msra.mxu0 0.0
    %5633 = vmatprep.subr.mxu0 0.0
    %5634 = vmatpush2.msra.mxu0 0.0
    %5635 = vmatprep.subr.mxu0 0.0
    %5636 = vmatpush2.msra.mxu0 0.0
    %5637 = vmatprep.subr.mxu0 0.0
    %5638 = vmatpush2.msra.mxu0 0.0
    %5639 = vmatprep.mubr.f32.mxu0 0.0
    %5640 = vmatmul.mubr.f32.gmra.mxu0 %v5567
    %v5641 = vpop.f32.mrf.mxu0
    %v5642 = vadd.f32 %v5553, %v5641
    %v5643 = vpop.f32.mrf.mxu0
    %5644 = vmatprep.mubr.f32.mxu0 0.0
    %5645 = vmatmul.mubr.f32.gmra.mxu0 %v5570
    %v5646 = vpop.f32.mrf.mxu0
    %v5647 = vadd.f32 %v5558, %v5646
    %v5648 = vpop.f32.mrf.mxu0
    %5649 = vmatprep.mubr.f32.mxu0 0.0
    %5650 = vmatmul.mubr.f32.gmra.mxu0 %v5573
    %v5651 = vpop.f32.mrf.mxu0
    %v5652 = vadd.f32 %v5563, %v5651
    %v5653 = vpop.f32.mrf.mxu0
    %5654 = vdwg.mxu0
    %5655 = vrot.lane.b32.xlu0 %v5002, 112
    %v5656 = vpop.permute.xlu0 %5655
    %5657 = vrot.lane.b32.xlu0 %v5004, 112
    %v5658 = vpop.permute.xlu0 %5657
    %5659 = vrot.lane.b32.xlu0 %v5003, 112
    %v5660 = vpop.permute.xlu0 %5659
    %5661 = vrot.lane.b32.xlu0 %v5002, 80
    %v5662 = vpop.permute.xlu0 %5661
    %5663 = vrot.lane.b32.xlu0 %v5004, 80
    %v5664 = vpop.permute.xlu0 %5663
    %5665 = vrot.lane.b32.xlu0 %v5003, 80
    %v5666 = vpop.permute.xlu0 %5665
    %v5667 = vsel %vm435, %v5656, 0
    %v5669 = vsel %vm435, %v5658, 0
    %v5671 = vsel %vm435, %v5660, 0
    %v5673 = vsel %vm435, %v5662, 0
    %v5675 = vsel %vm435, %v5664, 0
    %v5677 = vsel %vm435, %v5666, 0
    %5679 = vmatprep.subr.mxu0 0.0
    %5680 = vmatpush1.xpose.msra.mxu0 0.0
    %5681 = vmatprep.subr.mxu0 0.0
    %5682 = vmatpush1.xpose.msra.mxu0 0.0
    %5683 = vmatprep.subr.mxu0 0.0
    %5684 = vmatpush1.xpose.msra.mxu0 0.0
    %5685 = vmatprep.subr.mxu0 0.0
    %5686 = vmatpush1.xpose.msra.mxu0 0.0
    %5687 = vmatprep.subr.mxu0 0.0
    %5688 = vmatpush1.xpose.msra.mxu0 0.0
    %5689 = vmatprep.subr.mxu0 0.0
    %5690 = vmatpush1.xpose.msra.mxu0 0.0
    %5691 = vmatprep.subr.mxu0 0.0
    %5692 = vmatpush1.xpose.msra.mxu0 0.0
    %5693 = vmatprep.subr.mxu0 0.0
    %5694 = vmatpush1.xpose.msra.mxu0 0.0
    %5695 = vmatprep.subr.mxu0 0.0
    %5696 = vmatpush1.xpose.msra.mxu0 0.0
    %5697 = vmatprep.subr.mxu0 0.0
    %5698 = vmatpush1.xpose.msra.mxu0 0.0
    %5699 = vmatprep.subr.mxu0 0.0
    %5700 = vmatpush1.xpose.msra.mxu0 0.0
    %5701 = vmatprep.subr.mxu0 0.0
    %5702 = vmatpush1.xpose.msra.mxu0 0.0
    %5703 = vmatprep.subr.mxu0 0.0
    %5704 = vmatpush1.xpose.msra.mxu0 0.0
    %5705 = vmatprep.subr.mxu0 0.0
    %5706 = vmatpush1.xpose.msra.mxu0 %v5677
    %5707 = vmatprep.subr.mxu0 0.0
    %5708 = vmatpush1.xpose.msra.mxu0 %v5675
    %5709 = vmatprep.subr.mxu0 0.0
    %5710 = vmatpush1.xpose.msra.mxu0 %v5673
    %5711 = vmatprep.subr.mxu0 0.0
    %5712 = vmatpush2.xpose.msra.mxu0 0.0
    %5713 = vmatprep.subr.mxu0 0.0
    %5714 = vmatpush2.xpose.msra.mxu0 0.0
    %5715 = vmatprep.subr.mxu0 0.0
    %5716 = vmatpush2.xpose.msra.mxu0 0.0
    %5717 = vmatprep.subr.mxu0 0.0
    %5718 = vmatpush2.xpose.msra.mxu0 0.0
    %5719 = vmatprep.subr.mxu0 0.0
    %5720 = vmatpush2.xpose.msra.mxu0 0.0
    %5721 = vmatprep.subr.mxu0 0.0
    %5722 = vmatpush2.xpose.msra.mxu0 0.0
    %5723 = vmatprep.subr.mxu0 0.0
    %5724 = vmatpush2.xpose.msra.mxu0 0.0
    %5725 = vmatprep.subr.mxu0 0.0
    %5726 = vmatpush2.xpose.msra.mxu0 0.0
    %5727 = vmatprep.subr.mxu0 0.0
    %5728 = vmatpush2.xpose.msra.mxu0 0.0
    %5729 = vmatprep.subr.mxu0 0.0
    %5730 = vmatpush2.xpose.msra.mxu0 0.0
    %5731 = vmatprep.subr.mxu0 0.0
    %5732 = vmatpush2.xpose.msra.mxu0 0.0
    %5733 = vmatprep.subr.mxu0 0.0
    %5734 = vmatpush2.xpose.msra.mxu0 0.0
    %5735 = vmatprep.subr.mxu0 0.0
    %5736 = vmatpush2.xpose.msra.mxu0 0.0
    %5737 = vmatprep.subr.mxu0 0.0
    %5738 = vmatpush2.xpose.msra.mxu0 0.0
    %5739 = vmatprep.subr.mxu0 0.0
    %5740 = vmatpush2.xpose.msra.mxu0 0.0
    %5741 = vmatprep.subr.mxu0 0.0
    %5742 = vmatpush2.xpose.msra.mxu0 0.0
    %5743 = vmatprep.mubr.f32.mxu0 0.0
    %5744 = vmatmul.mubr.f32.gmra.mxu0 %v5667
    %v5745 = vpop.f32.mrf.mxu0
    %v5746 = vadd.f32 0.0, %v5745
    %v5747 = vpop.f32.mrf.mxu0
    %5748 = vmatprep.mubr.f32.mxu0 0.0
    %5749 = vmatmul.mubr.f32.gmra.mxu0 %v5669
    %v5750 = vpop.f32.mrf.mxu0
    %v5751 = vadd.f32 0.0, %v5750
    %v5752 = vpop.f32.mrf.mxu0
    %5753 = vmatprep.mubr.f32.mxu0 0.0
    %5754 = vmatmul.mubr.f32.gmra.mxu0 %v5671
    %v5755 = vpop.f32.mrf.mxu0
    %v5756 = vadd.f32 0.0, %v5755
    %v5757 = vpop.f32.mrf.mxu0
    %5758 = vdwg.mxu0
    %v5759 = vmul.f32 %v5746, 0.35355338
    %v5760 = vmul.f32 %v5751, 0.35355338
    %v5761 = vmul.f32 %v5756, 0.35355338
    %v5762 = vsel %vm531, %v5759, -inf
    %5763 = vmax.xlane.f32.xlu0 %v5762
    %v5764 = vpop.xlane.xlu0 %5763
    %v5765 = vsel %vm531, %v5760, -inf
    %5766 = vmax.xlane.f32.xlu0 %v5765
    %v5767 = vpop.xlane.xlu0 %5766
    %v5768 = vsel %vm538, %v5761, -inf
    %5769 = vmax.xlane.f32.xlu0 %v5768
    %v5770 = vpop.xlane.xlu0 %5769
    %v5771 = vsub.f32 %v5759, %v5764
    %v5772 = vsub.f32 %v5760, %v5767
    %v5773 = vsub.f32 %v5761, %v5770
    %v5774 = vmul.f32 %v5771, 1.442695
    %v5775 = vpow.pop %v5774
    %v5776 = vmul.f32 %v5772, 1.442695
    %v5777 = vpow.pop %v5776
    %v5778 = vmul.f32 %v5773, 1.442695
    %v5779 = vpow.pop %v5778
    %v5780 = vsel %vm531, %v5775, 0.0
    %5781 = vadd.xlane.f32.xlu0 %v5780
    %v5782 = vpop.xlane.xlu0 %5781
    %v5783 = vsel %vm531, %v5777, 0.0
    %5784 = vadd.xlane.f32.xlu0 %v5783
    %v5785 = vpop.xlane.xlu0 %5784
    %v5786 = vsel %vm538, %v5779, 0.0
    %5787 = vadd.xlane.f32.xlu0 %v5786
    %v5788 = vpop.xlane.xlu0 %5787
    %v5789 = vrcp.pop %v5782
    %v5790 = vrcp.pop %v5785
    %v5791 = vrcp.pop %v5788
    %v5792 = vmul.f32 %v5775, %v5789
    %v5793 = vmul.f32 %v5777, %v5790
    %v5794 = vmul.f32 %v5779, %v5791
    %5795 = vrot.lane.b32.xlu0 %v5002, 48
    %v5796 = vpop.permute.xlu0 %5795
    %5797 = vrot.lane.b32.xlu0 %v5004, 48
    %v5798 = vpop.permute.xlu0 %5797
    %5799 = vrot.lane.b32.xlu0 %v5003, 48
    %v5800 = vpop.permute.xlu0 %5799
    %v5804 = vsel %vm531, %v5792, 0
    %v5807 = vsel %vm531, %v5793, 0
    %v5810 = vsel %vm531, %v5794, 0
    %v5812 = vsel %vm90, %v5800, 0
    %5814 = vmatprep.subr.mxu0 0.0
    %5815 = vmatpush1.msra.mxu0 0.0
    %5816 = vmatprep.subr.mxu0 0.0
    %5817 = vmatpush1.msra.mxu0 0.0
    %5818 = vmatprep.subr.mxu0 0.0
    %5819 = vmatpush1.msra.mxu0 0.0
    %5820 = vmatprep.subr.mxu0 0.0
    %5821 = vmatpush1.msra.mxu0 0.0
    %5822 = vmatprep.subr.mxu0 0.0
    %5823 = vmatpush1.msra.mxu0 0.0
    %5824 = vmatprep.subr.mxu0 0.0
    %5825 = vmatpush1.msra.mxu0 0.0
    %5826 = vmatprep.subr.mxu0 0.0
    %5827 = vmatpush1.msra.mxu0 0.0
    %5828 = vmatprep.subr.mxu0 0.0
    %5829 = vmatpush1.msra.mxu0 0.0
    %5830 = vmatprep.subr.mxu0 0.0
    %5831 = vmatpush1.msra.mxu0 0.0
    %5832 = vmatprep.subr.mxu0 0.0
    %5833 = vmatpush1.msra.mxu0 0.0
    %5834 = vmatprep.subr.mxu0 0.0
    %5835 = vmatpush1.msra.mxu0 0.0
    %5836 = vmatprep.subr.mxu0 0.0
    %5837 = vmatpush1.msra.mxu0 0.0
    %5838 = vmatprep.subr.mxu0 0.0
    %5839 = vmatpush1.msra.mxu0 0.0
    %5840 = vmatprep.subr.mxu0 0.0
    %5841 = vmatpush1.msra.mxu0 %v5812
    %5842 = vmatprep.subr.mxu0 0.0
    %5843 = vmatpush1.msra.mxu0 %v5798
    %5844 = vmatprep.subr.mxu0 0.0
    %5845 = vmatpush1.msra.mxu0 %v5796
    %5846 = vmatprep.subr.mxu0 0.0
    %5847 = vmatpush2.msra.mxu0 0.0
    %5848 = vmatprep.subr.mxu0 0.0
    %5849 = vmatpush2.msra.mxu0 0.0
    %5850 = vmatprep.subr.mxu0 0.0
    %5851 = vmatpush2.msra.mxu0 0.0
    %5852 = vmatprep.subr.mxu0 0.0
    %5853 = vmatpush2.msra.mxu0 0.0
    %5854 = vmatprep.subr.mxu0 0.0
    %5855 = vmatpush2.msra.mxu0 0.0
    %5856 = vmatprep.subr.mxu0 0.0
    %5857 = vmatpush2.msra.mxu0 0.0
    %5858 = vmatprep.subr.mxu0 0.0
    %5859 = vmatpush2.msra.mxu0 0.0
    %5860 = vmatprep.subr.mxu0 0.0
    %5861 = vmatpush2.msra.mxu0 0.0
    %5862 = vmatprep.subr.mxu0 0.0
    %5863 = vmatpush2.msra.mxu0 0.0
    %5864 = vmatprep.subr.mxu0 0.0
    %5865 = vmatpush2.msra.mxu0 0.0
    %5866 = vmatprep.subr.mxu0 0.0
    %5867 = vmatpush2.msra.mxu0 0.0
    %5868 = vmatprep.subr.mxu0 0.0
    %5869 = vmatpush2.msra.mxu0 0.0
    %5870 = vmatprep.subr.mxu0 0.0
    %5871 = vmatpush2.msra.mxu0 0.0
    %5872 = vmatprep.subr.mxu0 0.0
    %5873 = vmatpush2.msra.mxu0 0.0
    %5874 = vmatprep.subr.mxu0 0.0
    %5875 = vmatpush2.msra.mxu0 0.0
    %5876 = vmatprep.subr.mxu0 0.0
    %5877 = vmatpush2.msra.mxu0 0.0
    %5878 = vmatprep.mubr.f32.mxu0 0.0
    %5879 = vmatmul.mubr.f32.gmra.mxu0 %v5804
    %v5880 = vpop.f32.mrf.mxu0
    %v5881 = vadd.f32 0.0, %v5880
    %v5882 = vpop.f32.mrf.mxu0
    %5883 = vmatprep.mubr.f32.mxu0 0.0
    %5884 = vmatmul.mubr.f32.gmra.mxu0 %v5807
    %v5885 = vpop.f32.mrf.mxu0
    %v5886 = vadd.f32 0.0, %v5885
    %v5887 = vpop.f32.mrf.mxu0
    %5888 = vmatprep.mubr.f32.mxu0 0.0
    %5889 = vmatmul.mubr.f32.gmra.mxu0 %v5810
    %v5890 = vpop.f32.mrf.mxu0
    %v5891 = vadd.f32 0.0, %v5890
    %v5892 = vpop.f32.mrf.mxu0
    %5893 = vdwg.mxu0
    %v5895 = vsel %vm435, %v5881, 0
    %v5898 = vsel %vm435, %v5886, 0
    %v5901 = vsel %vm435, %v5891, 0
    %5903 = vmatprep.subr.mxu0 0.0
    %5904 = vmatpush1.msra.mxu0 0.0
    %5905 = vmatprep.subr.mxu0 0.0
    %5906 = vmatpush1.msra.mxu0 0.0
    %5907 = vmatprep.subr.mxu0 0.0
    %5908 = vmatpush1.msra.mxu0 0.0
    %5909 = vmatprep.subr.mxu0 0.0
    %5910 = vmatpush1.msra.mxu0 0.0
    %5911 = vmatprep.subr.mxu0 0.0
    %5912 = vmatpush1.msra.mxu0 0.0
    %5913 = vmatprep.subr.mxu0 0.0
    %5914 = vmatpush1.msra.mxu0 0.0
    %5915 = vmatprep.subr.mxu0 0.0
    %5916 = vmatpush1.msra.mxu0 0.0
    %5917 = vmatprep.subr.mxu0 0.0
    %5918 = vmatpush1.msra.mxu0 0.0
    %5919 = vmatprep.subr.mxu0 0.0
    %5920 = vmatpush1.msra.mxu0 0.0
    %5921 = vmatprep.subr.mxu0 0.0
    %5922 = vmatpush1.msra.mxu0 0.0
    %5923 = vmatprep.subr.mxu0 0.0
    %5924 = vmatpush1.msra.mxu0 0.0
    %5925 = vmatprep.subr.mxu0 0.0
    %5926 = vmatpush1.msra.mxu0 0.0
    %5927 = vmatprep.subr.mxu0 0.0
    %5928 = vmatpush1.msra.mxu0 0.0
    %5929 = vmatprep.subr.mxu0 0.0
    %5930 = vmatpush1.msra.mxu0 0.0
    %5931 = vmatprep.subr.mxu0 0.0
    %5932 = vmatpush1.msra.mxu0 0.0
    %5933 = vmatprep.subr.mxu0 0.0
    %5934 = vmatpush1.msra.mxu0 %v3681
    %5935 = vmatprep.subr.mxu0 0.0
    %5936 = vmatpush2.msra.mxu0 0.0
    %5937 = vmatprep.subr.mxu0 0.0
    %5938 = vmatpush2.msra.mxu0 0.0
    %5939 = vmatprep.subr.mxu0 0.0
    %5940 = vmatpush2.msra.mxu0 0.0
    %5941 = vmatprep.subr.mxu0 0.0
    %5942 = vmatpush2.msra.mxu0 0.0
    %5943 = vmatprep.subr.mxu0 0.0
    %5944 = vmatpush2.msra.mxu0 0.0
    %5945 = vmatprep.subr.mxu0 0.0
    %5946 = vmatpush2.msra.mxu0 0.0
    %5947 = vmatprep.subr.mxu0 0.0
    %5948 = vmatpush2.msra.mxu0 0.0
    %5949 = vmatprep.subr.mxu0 0.0
    %5950 = vmatpush2.msra.mxu0 0.0
    %5951 = vmatprep.subr.mxu0 0.0
    %5952 = vmatpush2.msra.mxu0 0.0
    %5953 = vmatprep.subr.mxu0 0.0
    %5954 = vmatpush2.msra.mxu0 0.0
    %5955 = vmatprep.subr.mxu0 0.0
    %5956 = vmatpush2.msra.mxu0 0.0
    %5957 = vmatprep.subr.mxu0 0.0
    %5958 = vmatpush2.msra.mxu0 0.0
    %5959 = vmatprep.subr.mxu0 0.0
    %5960 = vmatpush2.msra.mxu0 0.0
    %5961 = vmatprep.subr.mxu0 0.0
    %5962 = vmatpush2.msra.mxu0 0.0
    %5963 = vmatprep.subr.mxu0 0.0
    %5964 = vmatpush2.msra.mxu0 0.0
    %5965 = vmatprep.subr.mxu0 0.0
    %5966 = vmatpush2.msra.mxu0 0.0
    %5967 = vmatprep.mubr.f32.mxu0 0.0
    %5968 = vmatmul.mubr.f32.gmra.mxu0 %v5895
    %v5969 = vpop.f32.mrf.mxu0
    %v5970 = vadd.f32 0.0, %v5969
    %v5971 = vpop.f32.mrf.mxu0
    %5972 = vmatprep.mubr.f32.mxu0 0.0
    %5973 = vmatmul.mubr.f32.gmra.mxu0 %v5898
    %v5974 = vpop.f32.mrf.mxu0
    %v5975 = vadd.f32 0.0, %v5974
    %v5976 = vpop.f32.mrf.mxu0
    %5977 = vmatprep.mubr.f32.mxu0 0.0
    %5978 = vmatmul.mubr.f32.gmra.mxu0 %v5901
    %v5979 = vpop.f32.mrf.mxu0
    %v5980 = vadd.f32 0.0, %v5979
    %v5981 = vpop.f32.mrf.mxu0
    %5982 = vdwg.mxu0
    %v5983 = vadd.f32 %v5642, %v5970
    %v5984 = vadd.f32 %v5647, %v5975
    %v5985 = vadd.f32 %v5652, %v5980
    %5986 = vrot.lane.b32.xlu0 %v5002, 104
    %v5987 = vpop.permute.xlu0 %5986
    %5988 = vrot.lane.b32.xlu0 %v5004, 104
    %v5989 = vpop.permute.xlu0 %5988
    %5990 = vrot.lane.b32.xlu0 %v5003, 104
    %v5991 = vpop.permute.xlu0 %5990
    %5992 = vrot.lane.b32.xlu0 %v5002, 72
    %v5993 = vpop.permute.xlu0 %5992
    %5994 = vrot.lane.b32.xlu0 %v5004, 72
    %v5995 = vpop.permute.xlu0 %5994
    %5996 = vrot.lane.b32.xlu0 %v5003, 72
    %v5997 = vpop.permute.xlu0 %5996
    %v5998 = vsel %vm435, %v5987, 0
    %v6000 = vsel %vm435, %v5989, 0
    %v6002 = vsel %vm435, %v5991, 0
    %v6004 = vsel %vm435, %v5993, 0
    %v6006 = vsel %vm435, %v5995, 0
    %v6008 = vsel %vm435, %v5997, 0
    %6010 = vmatprep.subr.mxu0 0.0
    %6011 = vmatpush1.xpose.msra.mxu0 0.0
    %6012 = vmatprep.subr.mxu0 0.0
    %6013 = vmatpush1.xpose.msra.mxu0 0.0
    %6014 = vmatprep.subr.mxu0 0.0
    %6015 = vmatpush1.xpose.msra.mxu0 0.0
    %6016 = vmatprep.subr.mxu0 0.0
    %6017 = vmatpush1.xpose.msra.mxu0 0.0
    %6018 = vmatprep.subr.mxu0 0.0
    %6019 = vmatpush1.xpose.msra.mxu0 0.0
    %6020 = vmatprep.subr.mxu0 0.0
    %6021 = vmatpush1.xpose.msra.mxu0 0.0
    %6022 = vmatprep.subr.mxu0 0.0
    %6023 = vmatpush1.xpose.msra.mxu0 0.0
    %6024 = vmatprep.subr.mxu0 0.0
    %6025 = vmatpush1.xpose.msra.mxu0 0.0
    %6026 = vmatprep.subr.mxu0 0.0
    %6027 = vmatpush1.xpose.msra.mxu0 0.0
    %6028 = vmatprep.subr.mxu0 0.0
    %6029 = vmatpush1.xpose.msra.mxu0 0.0
    %6030 = vmatprep.subr.mxu0 0.0
    %6031 = vmatpush1.xpose.msra.mxu0 0.0
    %6032 = vmatprep.subr.mxu0 0.0
    %6033 = vmatpush1.xpose.msra.mxu0 0.0
    %6034 = vmatprep.subr.mxu0 0.0
    %6035 = vmatpush1.xpose.msra.mxu0 0.0
    %6036 = vmatprep.subr.mxu0 0.0
    %6037 = vmatpush1.xpose.msra.mxu0 %v6008
    %6038 = vmatprep.subr.mxu0 0.0
    %6039 = vmatpush1.xpose.msra.mxu0 %v6006
    %6040 = vmatprep.subr.mxu0 0.0
    %6041 = vmatpush1.xpose.msra.mxu0 %v6004
    %6042 = vmatprep.subr.mxu0 0.0
    %6043 = vmatpush2.xpose.msra.mxu0 0.0
    %6044 = vmatprep.subr.mxu0 0.0
    %6045 = vmatpush2.xpose.msra.mxu0 0.0
    %6046 = vmatprep.subr.mxu0 0.0
    %6047 = vmatpush2.xpose.msra.mxu0 0.0
    %6048 = vmatprep.subr.mxu0 0.0
    %6049 = vmatpush2.xpose.msra.mxu0 0.0
    %6050 = vmatprep.subr.mxu0 0.0
    %6051 = vmatpush2.xpose.msra.mxu0 0.0
    %6052 = vmatprep.subr.mxu0 0.0
    %6053 = vmatpush2.xpose.msra.mxu0 0.0
    %6054 = vmatprep.subr.mxu0 0.0
    %6055 = vmatpush2.xpose.msra.mxu0 0.0
    %6056 = vmatprep.subr.mxu0 0.0
    %6057 = vmatpush2.xpose.msra.mxu0 0.0
    %6058 = vmatprep.subr.mxu0 0.0
    %6059 = vmatpush2.xpose.msra.mxu0 0.0
    %6060 = vmatprep.subr.mxu0 0.0
    %6061 = vmatpush2.xpose.msra.mxu0 0.0
    %6062 = vmatprep.subr.mxu0 0.0
    %6063 = vmatpush2.xpose.msra.mxu0 0.0
    %6064 = vmatprep.subr.mxu0 0.0
    %6065 = vmatpush2.xpose.msra.mxu0 0.0
    %6066 = vmatprep.subr.mxu0 0.0
    %6067 = vmatpush2.xpose.msra.mxu0 0.0
    %6068 = vmatprep.subr.mxu0 0.0
    %6069 = vmatpush2.xpose.msra.mxu0 0.0
    %6070 = vmatprep.subr.mxu0 0.0
    %6071 = vmatpush2.xpose.msra.mxu0 0.0
    %6072 = vmatprep.subr.mxu0 0.0
    %6073 = vmatpush2.xpose.msra.mxu0 0.0
    %6074 = vmatprep.mubr.f32.mxu0 0.0
    %6075 = vmatmul.mubr.f32.gmra.mxu0 %v5998
    %v6076 = vpop.f32.mrf.mxu0
    %v6077 = vadd.f32 0.0, %v6076
    %v6078 = vpop.f32.mrf.mxu0
    %6079 = vmatprep.mubr.f32.mxu0 0.0
    %6080 = vmatmul.mubr.f32.gmra.mxu0 %v6000
    %v6081 = vpop.f32.mrf.mxu0
    %v6082 = vadd.f32 0.0, %v6081
    %v6083 = vpop.f32.mrf.mxu0
    %6084 = vmatprep.mubr.f32.mxu0 0.0
    %6085 = vmatmul.mubr.f32.gmra.mxu0 %v6002
    %v6086 = vpop.f32.mrf.mxu0
    %v6087 = vadd.f32 0.0, %v6086
    %v6088 = vpop.f32.mrf.mxu0
    %6089 = vdwg.mxu0
    %v6090 = vmul.f32 %v6077, 0.35355338
    %v6091 = vmul.f32 %v6082, 0.35355338
    %v6092 = vmul.f32 %v6087, 0.35355338
    %v6093 = vsel %vm531, %v6090, -inf
    %6094 = vmax.xlane.f32.xlu0 %v6093
    %v6095 = vpop.xlane.xlu0 %6094
    %v6096 = vsel %vm531, %v6091, -inf
    %6097 = vmax.xlane.f32.xlu0 %v6096
    %v6098 = vpop.xlane.xlu0 %6097
    %v6099 = vsel %vm538, %v6092, -inf
    %6100 = vmax.xlane.f32.xlu0 %v6099
    %v6101 = vpop.xlane.xlu0 %6100
    %v6102 = vsub.f32 %v6090, %v6095
    %v6103 = vsub.f32 %v6091, %v6098
    %v6104 = vsub.f32 %v6092, %v6101
    %v6105 = vmul.f32 %v6102, 1.442695
    %v6106 = vpow.pop %v6105
    %v6107 = vmul.f32 %v6103, 1.442695
    %v6108 = vpow.pop %v6107
    %v6109 = vmul.f32 %v6104, 1.442695
    %v6110 = vpow.pop %v6109
    %v6111 = vsel %vm531, %v6106, 0.0
    %6112 = vadd.xlane.f32.xlu0 %v6111
    %v6113 = vpop.xlane.xlu0 %6112
    %v6114 = vsel %vm531, %v6108, 0.0
    %6115 = vadd.xlane.f32.xlu0 %v6114
    %v6116 = vpop.xlane.xlu0 %6115
    %v6117 = vsel %vm538, %v6110, 0.0
    %6118 = vadd.xlane.f32.xlu0 %v6117
    %v6119 = vpop.xlane.xlu0 %6118
    %v6120 = vrcp.pop %v6113
    %v6121 = vrcp.pop %v6116
    %v6122 = vrcp.pop %v6119
    %v6123 = vmul.f32 %v6106, %v6120
    %v6124 = vmul.f32 %v6108, %v6121
    %v6125 = vmul.f32 %v6110, %v6122
    %6126 = vrot.lane.b32.xlu0 %v5002, 40
    %v6127 = vpop.permute.xlu0 %6126
    %6128 = vrot.lane.b32.xlu0 %v5004, 40
    %v6129 = vpop.permute.xlu0 %6128
    %6130 = vrot.lane.b32.xlu0 %v5003, 40
    %v6131 = vpop.permute.xlu0 %6130
    %v6135 = vsel %vm531, %v6123, 0
    %v6138 = vsel %vm531, %v6124, 0
    %v6141 = vsel %vm531, %v6125, 0
    %v6143 = vsel %vm90, %v6131, 0
    %6145 = vmatprep.subr.mxu0 0.0
    %6146 = vmatpush1.msra.mxu0 0.0
    %6147 = vmatprep.subr.mxu0 0.0
    %6148 = vmatpush1.msra.mxu0 0.0
    %6149 = vmatprep.subr.mxu0 0.0
    %6150 = vmatpush1.msra.mxu0 0.0
    %6151 = vmatprep.subr.mxu0 0.0
    %6152 = vmatpush1.msra.mxu0 0.0
    %6153 = vmatprep.subr.mxu0 0.0
    %6154 = vmatpush1.msra.mxu0 0.0
    %6155 = vmatprep.subr.mxu0 0.0
    %6156 = vmatpush1.msra.mxu0 0.0
    %6157 = vmatprep.subr.mxu0 0.0
    %6158 = vmatpush1.msra.mxu0 0.0
    %6159 = vmatprep.subr.mxu0 0.0
    %6160 = vmatpush1.msra.mxu0 0.0
    %6161 = vmatprep.subr.mxu0 0.0
    %6162 = vmatpush1.msra.mxu0 0.0
    %6163 = vmatprep.subr.mxu0 0.0
    %6164 = vmatpush1.msra.mxu0 0.0
    %6165 = vmatprep.subr.mxu0 0.0
    %6166 = vmatpush1.msra.mxu0 0.0
    %6167 = vmatprep.subr.mxu0 0.0
    %6168 = vmatpush1.msra.mxu0 0.0
    %6169 = vmatprep.subr.mxu0 0.0
    %6170 = vmatpush1.msra.mxu0 0.0
    %6171 = vmatprep.subr.mxu0 0.0
    %6172 = vmatpush1.msra.mxu0 %v6143
    %6173 = vmatprep.subr.mxu0 0.0
    %6174 = vmatpush1.msra.mxu0 %v6129
    %6175 = vmatprep.subr.mxu0 0.0
    %6176 = vmatpush1.msra.mxu0 %v6127
    %6177 = vmatprep.subr.mxu0 0.0
    %6178 = vmatpush2.msra.mxu0 0.0
    %6179 = vmatprep.subr.mxu0 0.0
    %6180 = vmatpush2.msra.mxu0 0.0
    %6181 = vmatprep.subr.mxu0 0.0
    %6182 = vmatpush2.msra.mxu0 0.0
    %6183 = vmatprep.subr.mxu0 0.0
    %6184 = vmatpush2.msra.mxu0 0.0
    %6185 = vmatprep.subr.mxu0 0.0
    %6186 = vmatpush2.msra.mxu0 0.0
    %6187 = vmatprep.subr.mxu0 0.0
    %6188 = vmatpush2.msra.mxu0 0.0
    %6189 = vmatprep.subr.mxu0 0.0
    %6190 = vmatpush2.msra.mxu0 0.0
    %6191 = vmatprep.subr.mxu0 0.0
    %6192 = vmatpush2.msra.mxu0 0.0
    %6193 = vmatprep.subr.mxu0 0.0
    %6194 = vmatpush2.msra.mxu0 0.0
    %6195 = vmatprep.subr.mxu0 0.0
    %6196 = vmatpush2.msra.mxu0 0.0
    %6197 = vmatprep.subr.mxu0 0.0
    %6198 = vmatpush2.msra.mxu0 0.0
    %6199 = vmatprep.subr.mxu0 0.0
    %6200 = vmatpush2.msra.mxu0 0.0
    %6201 = vmatprep.subr.mxu0 0.0
    %6202 = vmatpush2.msra.mxu0 0.0
    %6203 = vmatprep.subr.mxu0 0.0
    %6204 = vmatpush2.msra.mxu0 0.0
    %6205 = vmatprep.subr.mxu0 0.0
    %6206 = vmatpush2.msra.mxu0 0.0
    %6207 = vmatprep.subr.mxu0 0.0
    %6208 = vmatpush2.msra.mxu0 0.0
    %6209 = vmatprep.mubr.f32.mxu0 0.0
    %6210 = vmatmul.mubr.f32.gmra.mxu0 %v6135
    %v6211 = vpop.f32.mrf.mxu0
    %v6212 = vadd.f32 0.0, %v6211
    %v6213 = vpop.f32.mrf.mxu0
    %6214 = vmatprep.mubr.f32.mxu0 0.0
    %6215 = vmatmul.mubr.f32.gmra.mxu0 %v6138
    %v6216 = vpop.f32.mrf.mxu0
    %v6217 = vadd.f32 0.0, %v6216
    %v6218 = vpop.f32.mrf.mxu0
    %6219 = vmatprep.mubr.f32.mxu0 0.0
    %6220 = vmatmul.mubr.f32.gmra.mxu0 %v6141
    %v6221 = vpop.f32.mrf.mxu0
    %v6222 = vadd.f32 0.0, %v6221
    %v6223 = vpop.f32.mrf.mxu0
    %6224 = vdwg.mxu0
    %v6226 = vsel %vm435, %v6212, 0
    %v6229 = vsel %vm435, %v6217, 0
    %v6232 = vsel %vm435, %v6222, 0
    %6234 = vmatprep.subr.mxu0 0.0
    %6235 = vmatpush1.msra.mxu0 0.0
    %6236 = vmatprep.subr.mxu0 0.0
    %6237 = vmatpush1.msra.mxu0 0.0
    %6238 = vmatprep.subr.mxu0 0.0
    %6239 = vmatpush1.msra.mxu0 0.0
    %6240 = vmatprep.subr.mxu0 0.0
    %6241 = vmatpush1.msra.mxu0 0.0
    %6242 = vmatprep.subr.mxu0 0.0
    %6243 = vmatpush1.msra.mxu0 0.0
    %6244 = vmatprep.subr.mxu0 0.0
    %6245 = vmatpush1.msra.mxu0 0.0
    %6246 = vmatprep.subr.mxu0 0.0
    %6247 = vmatpush1.msra.mxu0 0.0
    %6248 = vmatprep.subr.mxu0 0.0
    %6249 = vmatpush1.msra.mxu0 0.0
    %6250 = vmatprep.subr.mxu0 0.0
    %6251 = vmatpush1.msra.mxu0 0.0
    %6252 = vmatprep.subr.mxu0 0.0
    %6253 = vmatpush1.msra.mxu0 0.0
    %6254 = vmatprep.subr.mxu0 0.0
    %6255 = vmatpush1.msra.mxu0 0.0
    %6256 = vmatprep.subr.mxu0 0.0
    %6257 = vmatpush1.msra.mxu0 0.0
    %6258 = vmatprep.subr.mxu0 0.0
    %6259 = vmatpush1.msra.mxu0 0.0
    %6260 = vmatprep.subr.mxu0 0.0
    %6261 = vmatpush1.msra.mxu0 0.0
    %6262 = vmatprep.subr.mxu0 0.0
    %6263 = vmatpush1.msra.mxu0 0.0
    %6264 = vmatprep.subr.mxu0 0.0
    %6265 = vmatpush1.msra.mxu0 %v3682
    %6266 = vmatprep.subr.mxu0 0.0
    %6267 = vmatpush2.msra.mxu0 0.0
    %6268 = vmatprep.subr.mxu0 0.0
    %6269 = vmatpush2.msra.mxu0 0.0
    %6270 = vmatprep.subr.mxu0 0.0
    %6271 = vmatpush2.msra.mxu0 0.0
    %6272 = vmatprep.subr.mxu0 0.0
    %6273 = vmatpush2.msra.mxu0 0.0
    %6274 = vmatprep.subr.mxu0 0.0
    %6275 = vmatpush2.msra.mxu0 0.0
    %6276 = vmatprep.subr.mxu0 0.0
    %6277 = vmatpush2.msra.mxu0 0.0
    %6278 = vmatprep.subr.mxu0 0.0
    %6279 = vmatpush2.msra.mxu0 0.0
    %6280 = vmatprep.subr.mxu0 0.0
    %6281 = vmatpush2.msra.mxu0 0.0
    %6282 = vmatprep.subr.mxu0 0.0
    %6283 = vmatpush2.msra.mxu0 0.0
    %6284 = vmatprep.subr.mxu0 0.0
    %6285 = vmatpush2.msra.mxu0 0.0
    %6286 = vmatprep.subr.mxu0 0.0
    %6287 = vmatpush2.msra.mxu0 0.0
    %6288 = vmatprep.subr.mxu0 0.0
    %6289 = vmatpush2.msra.mxu0 0.0
    %6290 = vmatprep.subr.mxu0 0.0
    %6291 = vmatpush2.msra.mxu0 0.0
    %6292 = vmatprep.subr.mxu0 0.0
    %6293 = vmatpush2.msra.mxu0 0.0
    %6294 = vmatprep.subr.mxu0 0.0
    %6295 = vmatpush2.msra.mxu0 0.0
    %6296 = vmatprep.subr.mxu0 0.0
    %6297 = vmatpush2.msra.mxu0 0.0
    %6298 = vmatprep.mubr.f32.mxu0 0.0
    %6299 = vmatmul.mubr.f32.gmra.mxu0 %v6226
    %v6300 = vpop.f32.mrf.mxu0
    %v6301 = vadd.f32 0.0, %v6300
    %v6302 = vpop.f32.mrf.mxu0
    %6303 = vmatprep.mubr.f32.mxu0 0.0
    %6304 = vmatmul.mubr.f32.gmra.mxu0 %v6229
    %v6305 = vpop.f32.mrf.mxu0
    %v6306 = vadd.f32 0.0, %v6305
    %v6307 = vpop.f32.mrf.mxu0
    %6308 = vmatprep.mubr.f32.mxu0 0.0
    %6309 = vmatmul.mubr.f32.gmra.mxu0 %v6232
    %v6310 = vpop.f32.mrf.mxu0
    %v6311 = vadd.f32 0.0, %v6310
    %v6312 = vpop.f32.mrf.mxu0
    %6313 = vdwg.mxu0
    %v6314 = vadd.f32 %v5983, %v6301
    %v6315 = vadd.f32 %v5984, %v6306
    %v6316 = vadd.f32 %v5985, %v6311
    %v6320 = vrot.slane %v6314, 7
    %v6321 = vrot.slane %v6315, 7
    %v6322 = vsel %vm90, %v6320, %v6321
    %v6323 = vrot.slane %v6316, 7
    %v6324 = vsel %vm90, %v6321, %v6323
    %v6328 = vsel %vm90, %v4997, %v6320
    %s6329 = scalar_lea.vmem %s10, 1
    %v6330 = vld [vmem:[%s6329] sm:$0x1]
    %v6332 = vlaneseq
    %v6333 = vshrl.u32 %v6332, 7
    %v6334 = vsub.s32 0, %v6333
    %v6335 = vrot.slane %v6330, %v6334
    %v6337 = vadd.f32 %v4995, %v6335
    %v6338 = vadd.f32 %v4996, %v6335
    %v6339 = vadd.f32 %v6328, %v6335
    %v6340 = vadd.f32 %v6322, %v6335
    %v6341 = vadd.f32 %v6324, %v6335
    %v6342 = vadd.f32 %v3464, %v6337
    %v6343 = vadd.f32 %v3465, %v6338
    %v6344 = vadd.f32 %v3466, %v6339
    %v6345 = vadd.f32 %v3467, %v6340
    %v6346 = vadd.f32 %v3468, %v6341
    %s6347 = scalar_lea.vmem %s11, 1
    %v6348 = vld [vmem:[%s6347] sm:$0x1]
    %s6349 = scalar_lea.vmem %s12, 1
    %v6350 = vld [vmem:[%s6349] sm:$0x1]
    %v6351 = vsel %vm216, %v6342, 0.0
    %6352 = vadd.xlane.f32.xlu0 %v6351
    %v6353 = vpop.xlane.xlu0 %6352
    %v6354 = vsel %vm216, %v6343, 0.0
    %6355 = vadd.xlane.f32.xlu0 %v6354
    %v6356 = vpop.xlane.xlu0 %6355
    %v6357 = vsel %vm216, %v6344, 0.0
    %6358 = vadd.xlane.f32.xlu0 %v6357
    %v6359 = vpop.xlane.xlu0 %6358
    %v6360 = vsel %vm216, %v6345, 0.0
    %6361 = vadd.xlane.f32.xlu0 %v6360
    %v6362 = vpop.xlane.xlu0 %6361
    %v6363 = vsel %vm229, %v6346, 0.0
    %6364 = vadd.xlane.f32.xlu0 %v6363
    %v6365 = vpop.xlane.xlu0 %6364
    %v6366 = vmul.f32 %v6353, %v233
    %v6367 = vmul.f32 %v6356, %v233
    %v6368 = vmul.f32 %v6359, %v233
    %v6369 = vmul.f32 %v6362, %v233
    %v6370 = vmul.f32 %v6365, %v233
    %v6371 = vsub.f32 %v6342, %v6366
    %v6372 = vsub.f32 %v6343, %v6367
    %v6373 = vsub.f32 %v6344, %v6368
    %v6374 = vsub.f32 %v6345, %v6369
    %v6375 = vsub.f32 %v6346, %v6370
    %v6376 = vmul.f32 %v6371, %v6371
    %v6377 = vmul.f32 %v6372, %v6372
    %v6378 = vmul.f32 %v6373, %v6373
    %v6379 = vmul.f32 %v6374, %v6374
    %v6380 = vmul.f32 %v6375, %v6375
    %v6381 = vsel %vm216, %v6376, 0.0
    %6382 = vadd.xlane.f32.xlu0 %v6381
    %v6383 = vpop.xlane.xlu0 %6382
    %v6384 = vsel %vm216, %v6377, 0.0
    %6385 = vadd.xlane.f32.xlu0 %v6384
    %v6386 = vpop.xlane.xlu0 %6385
    %v6387 = vsel %vm216, %v6378, 0.0
    %6388 = vadd.xlane.f32.xlu0 %v6387
    %v6389 = vpop.xlane.xlu0 %6388
    %v6390 = vsel %vm216, %v6379, 0.0
    %6391 = vadd.xlane.f32.xlu0 %v6390
    %v6392 = vpop.xlane.xlu0 %6391
    %v6393 = vsel %vm229, %v6380, 0.0
    %6394 = vadd.xlane.f32.xlu0 %v6393
    %v6395 = vpop.xlane.xlu0 %6394
    %v6396 = vmul.f32 %v6383, %v233
    %v6397 = vmul.f32 %v6386, %v233
    %v6398 = vmul.f32 %v6389, %v233
    %v6399 = vmul.f32 %v6392, %v233
    %v6400 = vmul.f32 %v6395, %v233
    %v6401 = vadd.f32 %v6396, 1e-12
    %v6402 = vadd.f32 %v6397, 1e-12
    %v6403 = vadd.f32 %v6398, 1e-12
    %v6404 = vadd.f32 %v6399, 1e-12
    %v6405 = vadd.f32 %v6400, 1e-12
    %v6406 = vrsqrt.pop %v6401
    %v6407 = vrsqrt.pop %v6402
    %v6408 = vrsqrt.pop %v6403
    %v6409 = vrsqrt.pop %v6404
    %v6410 = vrsqrt.pop %v6405
    %v6411 = vmul.f32 %v6371, %v6406
    %v6412 = vmul.f32 %v6372, %v6407
    %v6413 = vmul.f32 %v6373, %v6408
    %v6414 = vmul.f32 %v6374, %v6409
    %v6415 = vmul.f32 %v6375, %v6410
    %v6417 = vlaneseq
    %v6418 = vshrl.u32 %v6417, 7
    %v6419 = vsub.s32 0, %v6418
    %v6420 = vrot.slane %v6348, %v6419
    %v6422 = vmul.f32 %v6411, %v6420
    %v6423 = vmul.f32 %v6412, %v6420
    %v6424 = vmul.f32 %v6413, %v6420
    %v6425 = vmul.f32 %v6414, %v6420
    %v6426 = vmul.f32 %v6415, %v6420
    %v6428 = vlaneseq
    %v6429 = vshrl.u32 %v6428, 7
    %v6430 = vsub.s32 0, %v6429
    %v6431 = vrot.slane %v6350, %v6430
    %v6433 = vadd.f32 %v6422, %v6431
    %v6434 = vadd.f32 %v6423, %v6431
    %v6435 = vadd.f32 %v6424, %v6431
    %v6436 = vadd.f32 %v6425, %v6431
    %v6437 = vadd.f32 %v6426, %v6431
    %s6438 = scalar_lea.vmem %s13, 32
    %v6439 = vld [vmem:[%s6438] sm:$0xff]
    %v6440 = vld [vmem:[%s6438 + $0x8] sm:$0xff]
    %v6441 = vld [vmem:[%s6438 + $0x10] sm:$0xff]
    %v6442 = vld [vmem:[%s6438 + $0x18] sm:$0xff]
    %s6443 = scalar_lea.vmem %s14, 1
    %v6444 = vld [vmem:[%s6443] sm:$0x1]
    %v6446 = vlaneseq
    %v6447 = vshrl.u32 %v6446, 7
    %v6448 = vsub.s32 0, %v6447
    %v6449 = vrot.slane %v6444, %v6448
    %v6452 = vsel %vm216, %v6433, 0
    %v6455 = vsel %vm216, %v6434, 0
    %v6458 = vsel %vm216, %v6435, 0
    %v6461 = vsel %vm216, %v6436, 0
    %v6464 = vsel %vm216, %v6437, 0
    %6466 = vmatprep.subr.mxu0 0.0
    %6467 = vmatpush1.msra.mxu0 0.0
    %6468 = vmatprep.subr.mxu0 0.0
    %6469 = vmatpush1.msra.mxu0 0.0
    %6470 = vmatprep.subr.mxu0 0.0
    %6471 = vmatpush1.msra.mxu0 0.0
    %6472 = vmatprep.subr.mxu0 0.0
    %6473 = vmatpush1.msra.mxu0 0.0
    %6474 = vmatprep.subr.mxu0 0.0
    %6475 = vmatpush1.msra.mxu0 0.0
    %6476 = vmatprep.subr.mxu0 0.0
    %6477 = vmatpush1.msra.mxu0 0.0
    %6478 = vmatprep.subr.mxu0 0.0
    %6479 = vmatpush1.msra.mxu0 0.0
    %6480 = vmatprep.subr.mxu0 0.0
    %6481 = vmatpush1.msra.mxu0 0.0
    %6482 = vmatprep.subr.mxu0 0.0
    %6483 = vmatpush1.msra.mxu0 0.0
    %6484 = vmatprep.subr.mxu0 0.0
    %6485 = vmatpush1.msra.mxu0 0.0
    %6486 = vmatprep.subr.mxu0 0.0
    %6487 = vmatpush1.msra.mxu0 0.0
    %6488 = vmatprep.subr.mxu0 0.0
    %6489 = vmatpush1.msra.mxu0 0.0
    %6490 = vmatprep.subr.mxu0 0.0
    %6491 = vmatpush1.msra.mxu0 %v6442
    %6492 = vmatprep.subr.mxu0 0.0
    %6493 = vmatpush1.msra.mxu0 %v6441
    %6494 = vmatprep.subr.mxu0 0.0
    %6495 = vmatpush1.msra.mxu0 %v6440
    %6496 = vmatprep.subr.mxu0 0.0
    %6497 = vmatpush1.msra.mxu0 %v6439
    %6498 = vmatprep.subr.mxu0 0.0
    %6499 = vmatpush2.msra.mxu0 0.0
    %6500 = vmatprep.subr.mxu0 0.0
    %6501 = vmatpush2.msra.mxu0 0.0
    %6502 = vmatprep.subr.mxu0 0.0
    %6503 = vmatpush2.msra.mxu0 0.0
    %6504 = vmatprep.subr.mxu0 0.0
    %6505 = vmatpush2.msra.mxu0 0.0
    %6506 = vmatprep.subr.mxu0 0.0
    %6507 = vmatpush2.msra.mxu0 0.0
    %6508 = vmatprep.subr.mxu0 0.0
    %6509 = vmatpush2.msra.mxu0 0.0
    %6510 = vmatprep.subr.mxu0 0.0
    %6511 = vmatpush2.msra.mxu0 0.0
    %6512 = vmatprep.subr.mxu0 0.0
    %6513 = vmatpush2.msra.mxu0 0.0
    %6514 = vmatprep.subr.mxu0 0.0
    %6515 = vmatpush2.msra.mxu0 0.0
    %6516 = vmatprep.subr.mxu0 0.0
    %6517 = vmatpush2.msra.mxu0 0.0
    %6518 = vmatprep.subr.mxu0 0.0
    %6519 = vmatpush2.msra.mxu0 0.0
    %6520 = vmatprep.subr.mxu0 0.0
    %6521 = vmatpush2.msra.mxu0 0.0
    %6522 = vmatprep.subr.mxu0 0.0
    %6523 = vmatpush2.msra.mxu0 0.0
    %6524 = vmatprep.subr.mxu0 0.0
    %6525 = vmatpush2.msra.mxu0 0.0
    %6526 = vmatprep.subr.mxu0 0.0
    %6527 = vmatpush2.msra.mxu0 0.0
    %6528 = vmatprep.subr.mxu0 0.0
    %6529 = vmatpush2.msra.mxu0 0.0
    %6530 = vmatprep.mubr.f32.mxu0 0.0
    %6531 = vmatmul.mubr.f32.gmra.mxu0 %v6452
    %v6532 = vpop.f32.mrf.mxu0
    %v6533 = vadd.f32 %v6449, %v6532
    %v6534 = vpop.f32.mrf.mxu0
    %6535 = vmatprep.mubr.f32.mxu0 0.0
    %6536 = vmatmul.mubr.f32.gmra.mxu0 %v6455
    %v6537 = vpop.f32.mrf.mxu0
    %v6538 = vadd.f32 %v6449, %v6537
    %v6539 = vpop.f32.mrf.mxu0
    %6540 = vmatprep.mubr.f32.mxu0 0.0
    %6541 = vmatmul.mubr.f32.gmra.mxu0 %v6458
    %v6542 = vpop.f32.mrf.mxu0
    %v6543 = vadd.f32 %v6449, %v6542
    %v6544 = vpop.f32.mrf.mxu0
    %6545 = vmatprep.mubr.f32.mxu0 0.0
    %6546 = vmatmul.mubr.f32.gmra.mxu0 %v6461
    %v6547 = vpop.f32.mrf.mxu0
    %v6548 = vadd.f32 %v6449, %v6547
    %v6549 = vpop.f32.mrf.mxu0
    %6550 = vmatprep.mubr.f32.mxu0 0.0
    %6551 = vmatmul.mubr.f32.gmra.mxu0 %v6464
    %v6552 = vpop.f32.mrf.mxu0
    %v6553 = vadd.f32 %v6449, %v6552
    %v6554 = vpop.f32.mrf.mxu0
    %6555 = vdwg.mxu0
    %v6556 = vmul.f32 %v6533, %v6533
    %v6557 = vmul.f32 %v6538, %v6538
    %v6558 = vmul.f32 %v6543, %v6543
    %v6559 = vmul.f32 %v6548, %v6548
    %v6560 = vmul.f32 %v6553, %v6553
    %v6561 = vmul.f32 %v6533, %v6556
    %v6562 = vmul.f32 %v6538, %v6557
    %v6563 = vmul.f32 %v6543, %v6558
    %v6564 = vmul.f32 %v6548, %v6559
    %v6565 = vmul.f32 %v6553, %v6560
    %v6566 = vmul.f32 %v6561, 0.044715
    %v6567 = vmul.f32 %v6562, 0.044715
    %v6568 = vmul.f32 %v6563, 0.044715
    %v6569 = vmul.f32 %v6564, 0.044715
    %v6570 = vmul.f32 %v6565, 0.044715
    %v6571 = vadd.f32 %v6533, %v6566
    %v6572 = vadd.f32 %v6538, %v6567
    %v6573 = vadd.f32 %v6543, %v6568
    %v6574 = vadd.f32 %v6548, %v6569
    %v6575 = vadd.f32 %v6553, %v6570
    %v6576 = vmul.f32 %v6571, 0.7978846
    %v6577 = vmul.f32 %v6572, 0.7978846
    %v6578 = vmul.f32 %v6573, 0.7978846
    %v6579 = vmul.f32 %v6574, 0.7978846
    %v6580 = vmul.f32 %v6575, 0.7978846
    %v6581 = vtanh.pop %v6576
    %v6582 = vtanh.pop %v6577
    %v6583 = vtanh.pop %v6578
    %v6584 = vtanh.pop %v6579
    %v6585 = vtanh.pop %v6580
    %v6586 = vadd.f32 %v6581, 1.0
    %v6587 = vadd.f32 %v6582, 1.0
    %v6588 = vadd.f32 %v6583, 1.0
    %v6589 = vadd.f32 %v6584, 1.0
    %v6590 = vadd.f32 %v6585, 1.0
    %v6591 = vmul.f32 %v6586, 0.5
    %v6592 = vmul.f32 %v6587, 0.5
    %v6593 = vmul.f32 %v6588, 0.5
    %v6594 = vmul.f32 %v6589, 0.5
    %v6595 = vmul.f32 %v6590, 0.5
    %v6596 = vmul.f32 %v6533, %v6591
    %v6597 = vmul.f32 %v6538, %v6592
    %v6598 = vmul.f32 %v6543, %v6593
    %v6599 = vmul.f32 %v6548, %v6594
    %v6600 = vmul.f32 %v6553, %v6595
    %s6601 = scalar_lea.vmem %s15, 64
    %v6602 = vld [vmem:[%s6601] sm:$0xff]
    %v6603 = vld [vmem:[%s6601 + $0x8] sm:$0xff]
    %v6604 = vld [vmem:[%s6601 + $0x10] sm:$0xff]
    %v6605 = vld [vmem:[%s6601 + $0x18] sm:$0xff]
    %v6606 = vld [vmem:[%s6601 + $0x20] sm:$0xff]
    %v6607 = vld [vmem:[%s6601 + $0x28] sm:$0xff]
    %v6608 = vld [vmem:[%s6601 + $0x30] sm:$0xff]
    %v6609 = vld [vmem:[%s6601 + $0x38] sm:$0xff]
    %s6610 = scalar_lea.vmem %s16, 1
    %v6611 = vld [vmem:[%s6610] sm:$0x1]
    %v6613 = vlaneseq
    %v6614 = vshrl.u32 %v6613, 7
    %v6615 = vsub.s32 0, %v6614
    %v6616 = vrot.slane %v6611, %v6615
    %v6619 = vsel %vm3358, %v6596, 0
    %v6622 = vsel %vm3358, %v6597, 0
    %v6625 = vsel %vm3358, %v6598, 0
    %v6628 = vsel %vm3358, %v6599, 0
    %v6631 = vsel %vm3358, %v6600, 0
    %6633 = vmatprep.subr.mxu0 0.0
    %6634 = vmatpush1.msra.mxu0 0.0
    %6635 = vmatprep.subr.mxu0 0.0
    %6636 = vmatpush1.msra.mxu0 0.0
    %6637 = vmatprep.subr.mxu0 0.0
    %6638 = vmatpush1.msra.mxu0 0.0
    %6639 = vmatprep.subr.mxu0 0.0
    %6640 = vmatpush1.msra.mxu0 0.0
    %6641 = vmatprep.subr.mxu0 0.0
    %6642 = vmatpush1.msra.mxu0 0.0
    %6643 = vmatprep.subr.mxu0 0.0
    %6644 = vmatpush1.msra.mxu0 0.0
    %6645 = vmatprep.subr.mxu0 0.0
    %6646 = vmatpush1.msra.mxu0 0.0
    %6647 = vmatprep.subr.mxu0 0.0
    %6648 = vmatpush1.msra.mxu0 0.0
    %6649 = vmatprep.subr.mxu0 0.0
    %6650 = vmatpush1.msra.mxu0 %v6609
    %6651 = vmatprep.subr.mxu0 0.0
    %6652 = vmatpush1.msra.mxu0 %v6608
    %6653 = vmatprep.subr.mxu0 0.0
    %6654 = vmatpush1.msra.mxu0 %v6607
    %6655 = vmatprep.subr.mxu0 0.0
    %6656 = vmatpush1.msra.mxu0 %v6606
    %6657 = vmatprep.subr.mxu0 0.0
    %6658 = vmatpush1.msra.mxu0 %v6605
    %6659 = vmatprep.subr.mxu0 0.0
    %6660 = vmatpush1.msra.mxu0 %v6604
    %6661 = vmatprep.subr.mxu0 0.0
    %6662 = vmatpush1.msra.mxu0 %v6603
    %6663 = vmatprep.subr.mxu0 0.0
    %6664 = vmatpush1.msra.mxu0 %v6602
    %6665 = vmatprep.subr.mxu0 0.0
    %6666 = vmatpush2.msra.mxu0 0.0
    %6667 = vmatprep.subr.mxu0 0.0
    %6668 = vmatpush2.msra.mxu0 0.0
    %6669 = vmatprep.subr.mxu0 0.0
    %6670 = vmatpush2.msra.mxu0 0.0
    %6671 = vmatprep.subr.mxu0 0.0
    %6672 = vmatpush2.msra.mxu0 0.0
    %6673 = vmatprep.subr.mxu0 0.0
    %6674 = vmatpush2.msra.mxu0 0.0
    %6675 = vmatprep.subr.mxu0 0.0
    %6676 = vmatpush2.msra.mxu0 0.0
    %6677 = vmatprep.subr.mxu0 0.0
    %6678 = vmatpush2.msra.mxu0 0.0
    %6679 = vmatprep.subr.mxu0 0.0
    %6680 = vmatpush2.msra.mxu0 0.0
    %6681 = vmatprep.subr.mxu0 0.0
    %6682 = vmatpush2.msra.mxu0 0.0
    %6683 = vmatprep.subr.mxu0 0.0
    %6684 = vmatpush2.msra.mxu0 0.0
    %6685 = vmatprep.subr.mxu0 0.0
    %6686 = vmatpush2.msra.mxu0 0.0
    %6687 = vmatprep.subr.mxu0 0.0
    %6688 = vmatpush2.msra.mxu0 0.0
    %6689 = vmatprep.subr.mxu0 0.0
    %6690 = vmatpush2.msra.mxu0 0.0
    %6691 = vmatprep.subr.mxu0 0.0
    %6692 = vmatpush2.msra.mxu0 0.0
    %6693 = vmatprep.subr.mxu0 0.0
    %6694 = vmatpush2.msra.mxu0 0.0
    %6695 = vmatprep.subr.mxu0 0.0
    %6696 = vmatpush2.msra.mxu0 0.0
    %6697 = vmatprep.mubr.f32.mxu0 0.0
    %6698 = vmatmul.mubr.f32.gmra.mxu0 %v6619
    %v6699 = vpop.f32.mrf.mxu0
    %v6700 = vadd.f32 %v6616, %v6699
    %v6701 = vpop.f32.mrf.mxu0
    %6702 = vmatprep.mubr.f32.mxu0 0.0
    %6703 = vmatmul.mubr.f32.gmra.mxu0 %v6622
    %v6704 = vpop.f32.mrf.mxu0
    %v6705 = vadd.f32 %v6616, %v6704
    %v6706 = vpop.f32.mrf.mxu0
    %6707 = vmatprep.mubr.f32.mxu0 0.0
    %6708 = vmatmul.mubr.f32.gmra.mxu0 %v6625
    %v6709 = vpop.f32.mrf.mxu0
    %v6710 = vadd.f32 %v6616, %v6709
    %v6711 = vpop.f32.mrf.mxu0
    %6712 = vmatprep.mubr.f32.mxu0 0.0
    %6713 = vmatmul.mubr.f32.gmra.mxu0 %v6628
    %v6714 = vpop.f32.mrf.mxu0
    %v6715 = vadd.f32 %v6616, %v6714
    %v6716 = vpop.f32.mrf.mxu0
    %6717 = vmatprep.mubr.f32.mxu0 0.0
    %6718 = vmatmul.mubr.f32.gmra.mxu0 %v6631
    %v6719 = vpop.f32.mrf.mxu0
    %v6720 = vadd.f32 %v6616, %v6719
    %v6721 = vpop.f32.mrf.mxu0
    %6722 = vdwg.mxu0
    %v6723 = vadd.f32 %v6342, %v6700
    %v6724 = vadd.f32 %v6343, %v6705
    %v6725 = vadd.f32 %v6344, %v6710
    %v6726 = vadd.f32 %v6345, %v6715
    %v6727 = vadd.f32 %v6346, %v6720
    %v6728 = vld [vmem:[%s17] sm:$0x1]
    %v6729 = vld [vmem:[%s18] sm:$0x1]
    %v6730 = vsel %vm216, %v6723, 0.0
    %6731 = vadd.xlane.f32.xlu0 %v6730
    %v6732 = vpop.xlane.xlu0 %6731
    %v6733 = vsel %vm216, %v6724, 0.0
    %6734 = vadd.xlane.f32.xlu0 %v6733
    %v6735 = vpop.xlane.xlu0 %6734
    %v6736 = vsel %vm216, %v6725, 0.0
    %6737 = vadd.xlane.f32.xlu0 %v6736
    %v6738 = vpop.xlane.xlu0 %6737
    %v6739 = vsel %vm216, %v6726, 0.0
    %6740 = vadd.xlane.f32.xlu0 %v6739
    %v6741 = vpop.xlane.xlu0 %6740
    %v6742 = vsel %vm229, %v6727, 0.0
    %6743 = vadd.xlane.f32.xlu0 %v6742
    %v6744 = vpop.xlane.xlu0 %6743
    %v6745 = vmul.f32 %v6732, %v233
    %v6746 = vmul.f32 %v6735, %v233
    %v6747 = vmul.f32 %v6738, %v233
    %v6748 = vmul.f32 %v6741, %v233
    %v6749 = vmul.f32 %v6744, %v233
    %v6750 = vsub.f32 %v6723, %v6745
    %v6751 = vsub.f32 %v6724, %v6746
    %v6752 = vsub.f32 %v6725, %v6747
    %v6753 = vsub.f32 %v6726, %v6748
    %v6754 = vsub.f32 %v6727, %v6749
    %v6755 = vmul.f32 %v6750, %v6750
    %v6756 = vmul.f32 %v6751, %v6751
    %v6757 = vmul.f32 %v6752, %v6752
    %v6758 = vmul.f32 %v6753, %v6753
    %v6759 = vmul.f32 %v6754, %v6754
    %v6760 = vsel %vm216, %v6755, 0.0
    %6761 = vadd.xlane.f32.xlu0 %v6760
    %v6762 = vpop.xlane.xlu0 %6761
    %v6763 = vsel %vm216, %v6756, 0.0
    %6764 = vadd.xlane.f32.xlu0 %v6763
    %v6765 = vpop.xlane.xlu0 %6764
    %v6766 = vsel %vm216, %v6757, 0.0
    %6767 = vadd.xlane.f32.xlu0 %v6766
    %v6768 = vpop.xlane.xlu0 %6767
    %v6769 = vsel %vm216, %v6758, 0.0
    %6770 = vadd.xlane.f32.xlu0 %v6769
    %v6771 = vpop.xlane.xlu0 %6770
    %v6772 = vsel %vm229, %v6759, 0.0
    %6773 = vadd.xlane.f32.xlu0 %v6772
    %v6774 = vpop.xlane.xlu0 %6773
    %v6775 = vmul.f32 %v6762, %v233
    %v6776 = vmul.f32 %v6765, %v233
    %v6777 = vmul.f32 %v6768, %v233
    %v6778 = vmul.f32 %v6771, %v233
    %v6779 = vmul.f32 %v6774, %v233
    %v6780 = vadd.f32 %v6775, 1e-12
    %v6781 = vadd.f32 %v6776, 1e-12
    %v6782 = vadd.f32 %v6777, 1e-12
    %v6783 = vadd.f32 %v6778, 1e-12
    %v6784 = vadd.f32 %v6779, 1e-12
    %v6785 = vrsqrt.pop %v6780
    %v6786 = vrsqrt.pop %v6781
    %v6787 = vrsqrt.pop %v6782
    %v6788 = vrsqrt.pop %v6783
    %v6789 = vrsqrt.pop %v6784
    %v6790 = vmul.f32 %v6750, %v6785
    %v6791 = vmul.f32 %v6751, %v6786
    %v6792 = vmul.f32 %v6752, %v6787
    %v6793 = vmul.f32 %v6753, %v6788
    %v6794 = vmul.f32 %v6754, %v6789
    %v6796 = vlaneseq
    %v6797 = vshrl.u32 %v6796, 7
    %v6798 = vsub.s32 0, %v6797
    %v6799 = vrot.slane %v6728, %v6798
    %v6801 = vmul.f32 %v6790, %v6799
    %v6802 = vmul.f32 %v6791, %v6799
    %v6803 = vmul.f32 %v6792, %v6799
    %v6804 = vmul.f32 %v6793, %v6799
    %v6805 = vmul.f32 %v6794, %v6799
    %v6807 = vlaneseq
    %v6808 = vshrl.u32 %v6807, 7
    %v6809 = vsub.s32 0, %v6808
    %v6810 = vrot.slane %v6729, %v6809
    %v6812 = vadd.f32 %v6801, %v6810
    %v6813 = vadd.f32 %v6802, %v6810
    %v6814 = vadd.f32 %v6803, %v6810
    %v6815 = vadd.f32 %v6804, %v6810
    %v6816 = vadd.f32 %v6805, %v6810
    %v6817 = vsel %vm216, %v6812, 0.0
    %v6818 = vsel %vm216, %v6813, 0.0
    %v6819 = vadd.f32 %v6817, %v6818
    %vm6820 = vcmask 253952
    %v6821 = vsel %vm6820, %v6814, 0.0
    %v6822 = vadd.f32 %v6819, %v6821
    %v6823 = vrot.slane %v6822, 4
    %v6824 = vadd.f32 %v6822, %v6823
    %v6825 = vrot.slane %v6824, 2
    %v6826 = vadd.f32 %v6824, %v6825
    %v6827 = vrot.slane %v6826, 1
    %v6828 = vadd.f32 %v6826, %v6827
    %v6829 = vrcp.pop 17.0
    %v6830 = vmul.f32 %v6828, %v6829
    %v6834 = vrot.slane %v6814, 1
    %v6835 = vrot.slane %v6815, 1
    %v6836 = vsel %vm1746, %v6834, %v6835
    %v6837 = vrot.slane %v6816, 1
    %v6838 = vsel %vm1746, %v6835, %v6837
    %v6842 = vsel %vm216, %v6836, 0.0
    %v6843 = vsel %vm216, %v6838, 0.0
    %v6844 = vadd.f32 %v6842, %v6843
    %v6845 = vsel %vm6820, %v6837, 0.0
    %v6846 = vadd.f32 %v6844, %v6845
    %v6847 = vrot.slane %v6846, 4
    %v6848 = vadd.f32 %v6846, %v6847
    %v6849 = vrot.slane %v6848, 2
    %v6850 = vadd.f32 %v6848, %v6849
    %v6851 = vrot.slane %v6850, 1
    %v6852 = vadd.f32 %v6850, %v6851
    %v6853 = vmul.f32 %v6852, %v6829
    %v6854 = vsel %vm90, %v6830, %v6853
    %6855 = vst.msk [vmem:[#allocation2] sm:$0x3] %vm229, %v6854
    // Predicated region
    $region78: #{transformer_dqn_forward.1} parent=1 // pred_check
      _
    $region79: #{transformer_dqn_forward.1} parent=1 // pred_check_branch
      %6857 = sbr.rel (0) target = $region81
    $region80: #{transformer_dqn_forward.1} parent=1 // pred_region
      %s6859 = ssub.s32 32, 32
      %6860 = vsyncadd [#allocation3], %s6859
      %s6862 = sshll.u32 [#allocation2], 4
      %s6863 = int_to_ptr.vmem [resolvable:$true] %s6862
      %6865 = dma.vmem_to_hbm [thread:$0]  %s6863, 32, %s19, [#allocation3]
    $region81: #{transformer_dqn_forward.1} parent=1 // pred_fallthru
      _
    // Predicated region
    $region82: #{transformer_dqn_forward.1} parent=1 // pred_check
      _
    $region83: #{transformer_dqn_forward.1} parent=1 // pred_check_branch
      %6867 = sbr.rel (0) target = $region85
    $region84: #{transformer_dqn_forward.1} parent=1 // pred_region
      %6868 = dma.done [#allocation3], 32
    $region85: #{transformer_dqn_forward.1} parent=1 // pred_fallthru
      _
    %6869 = vsyncpa [#allocation3], 1

</llo_original>
